<compile_context>
chip_gen: v6e
topology: v6e:2x2x1
jax: 0.10.0
libtpu: 0.0.40
codegen_flags: <defaults>
</compile_context>

<pallas_src>
import functools

import jax
import jax.numpy as jnp
from jax import lax
from jax.experimental import pallas as pl
from jax.experimental.pallas import tpu as pltpu


# ----------------------------------------------------------------------------
# Pallas kernels
# ----------------------------------------------------------------------------

def _conv_mm_kernel(a_ref, b_ref, o_ref):
    # a: (Cout, Kr) bf16, b: (Kr, tm) bf16 -> o: (Cout, tm) f32 (lane-dense)
    o_ref[...] = jnp.dot(a_ref[...], b_ref[...],
                         preferred_element_type=jnp.float32).astype(o_ref.dtype)


def _conv_mm_bias_kernel(a_ref, b_ref, bias_ref, o_ref):
    acc = jnp.dot(a_ref[...], b_ref[...], preferred_element_type=jnp.float32)
    o_ref[...] = (acc + bias_ref[...]).astype(o_ref.dtype)


def _choose_tile(M):
    # Lane-dense tiles (multiple of 128) with >=2 grid steps when possible so
    # the grid can shard across both v7x TensorCores; blocks stay <<VMEM.
    for tm in (512, 256, 128):
        if M % tm == 0 and M // tm >= 2:
            return tm
    return M


@functools.lru_cache(maxsize=None)
def _conv_mm_call(Cout, Kr, M, with_bias):
    tm = _choose_tile(M)
    nm = M // tm
    in_specs = [pl.BlockSpec((Cout, Kr), lambda i: (0, 0)),
                pl.BlockSpec((Kr, tm), lambda i: (0, i))]
    kernel = _conv_mm_kernel
    if with_bias:
        in_specs = in_specs + [pl.BlockSpec((Cout, 1), lambda i: (0, 0))]
        kernel = _conv_mm_bias_kernel
    return pl.pallas_call(
        kernel,
        out_shape=jax.ShapeDtypeStruct((Cout, M), jnp.float32),
        grid=(nm,),
        in_specs=in_specs,
        out_specs=pl.BlockSpec((Cout, tm), lambda i: (0, i)),
        compiler_params=pltpu.CompilerParams(
            dimension_semantics=("parallel",)),
    )


def _gn_prelu_kernel(y_ref, g_ref, b_ref, a_ref, o_ref):
    # One sample per grid step.  y block: (1, C, HW) -> (C, HW); params (C, 1).
    y = y_ref[0]
    mean = jnp.mean(y)
    var = jnp.mean(jnp.square(y - mean))          # two-pass (stable) variance
    z = (y - mean) * lax.rsqrt(var + 1e-5) * g_ref[...] + b_ref[...]
    o_ref[0] = jnp.where(z >= 0.0, z, a_ref[...] * z)


def _gn_prelu_res_kernel(y_ref, r_ref, g_ref, b_ref, a_ref, o_ref):
    y = y_ref[0]
    mean = jnp.mean(y)
    var = jnp.mean(jnp.square(y - mean))
    z = (y - mean) * lax.rsqrt(var + 1e-5) * g_ref[...] + b_ref[...]
    z = z + r_ref[0]                              # residual added before PReLU
    o_ref[0] = jnp.where(z >= 0.0, z, a_ref[...] * z)


@functools.lru_cache(maxsize=None)
def _gn_prelu_call(Nb, C, HW, with_res):
    act_spec = pl.BlockSpec((1, C, HW), lambda n: (n, 0, 0))
    par_spec = pl.BlockSpec((C, 1), lambda n: (0, 0))
    if with_res:
        kernel = _gn_prelu_res_kernel
        in_specs = [act_spec, act_spec, par_spec, par_spec, par_spec]
    else:
        kernel = _gn_prelu_kernel
        in_specs = [act_spec, par_spec, par_spec, par_spec]
    return pl.pallas_call(
        kernel,
        out_shape=jax.ShapeDtypeStruct((Nb, C, HW), jnp.float32),
        grid=(Nb,),
        in_specs=in_specs,
        out_specs=act_spec,
        compiler_params=pltpu.CompilerParams(
            dimension_semantics=("parallel",)),
    )


def _gc_kernel(x_ref, mw_ref, mb_ref, w1_ref, b1_ref, lg_ref, lb_ref,
               pa_ref, w2_ref, b2_ref, o_ref):
    # Fused GlobalContextBlock, one sample per grid step.
    x = x_ref[0]                                            # (C, HW)
    # 1x1 mask conv (C -> 1) fused in-kernel, then softmax over HW.
    logits = jnp.sum(x * mw_ref[...], axis=0, keepdims=True) + mb_ref[...]   # (1, HW)
    m = jnp.max(logits)
    p = jnp.exp(logits - m)
    p = p / jnp.sum(p)
    ctx = jnp.sum(x * p, axis=1, keepdims=True)             # (C, 1)
    # channel_add_conv: 1x1 conv -> LayerNorm([C/r,1,1]) -> PReLU -> 1x1 conv
    t = jnp.dot(w1_ref[...], ctx, preferred_element_type=jnp.float32) + b1_ref[...]
    mu = jnp.mean(t)
    var = jnp.mean(jnp.square(t - mu))
    t = (t - mu) * lax.rsqrt(var + 1e-5) * lg_ref[...] + lb_ref[...]
    t = jnp.where(t >= 0.0, t, pa_ref[...] * t)
    add = jnp.dot(w2_ref[...], t, preferred_element_type=jnp.float32) + b2_ref[...]
    o_ref[0] = x + add                                      # broadcast (C,1) over HW


@functools.lru_cache(maxsize=None)
def _gc_call(Nb, C, HW, Cr):
    act_spec = pl.BlockSpec((1, C, HW), lambda n: (n, 0, 0))
    return pl.pallas_call(
        _gc_kernel,
        out_shape=jax.ShapeDtypeStruct((Nb, C, HW), jnp.float32),
        grid=(Nb,),
        in_specs=[act_spec,
                  pl.BlockSpec((C, 1), lambda n: (0, 0)),     # mask_w
                  pl.BlockSpec((1, 1), lambda n: (0, 0)),     # mask_b
                  pl.BlockSpec((Cr, C), lambda n: (0, 0)),    # ca1_w
                  pl.BlockSpec((Cr, 1), lambda n: (0, 0)),    # ca1_b
                  pl.BlockSpec((Cr, 1), lambda n: (0, 0)),    # ln_g
                  pl.BlockSpec((Cr, 1), lambda n: (0, 0)),    # ln_b
                  pl.BlockSpec((Cr, 1), lambda n: (0, 0)),    # prelu alpha
                  pl.BlockSpec((C, Cr), lambda n: (0, 0)),    # ca2_w
                  pl.BlockSpec((C, 1), lambda n: (0, 0))],    # ca2_b
        out_specs=act_spec,
        compiler_params=pltpu.CompilerParams(
            dimension_semantics=("parallel",)),
    )


# ----------------------------------------------------------------------------
# Layer helpers (XLA glue around the Pallas kernels; fused under the outer jit)
# ----------------------------------------------------------------------------

def conv2d(x, w, *, dilation=1, bias=None):
    """stride-1 'same' conv.  x: (N,Cin,H,W) NCHW ; w: (Cout,Cin,K,K) OIHW."""
    Cout, Cin, K, _ = w.shape
    N, _, H, W = x.shape
    M = N * H * W
    if K == 1:
        b_mat = jnp.transpose(x, (1, 0, 2, 3)).reshape(Cin, M)
    else:
        pad = dilation * (K // 2)
        xp = jnp.pad(x, ((0, 0), (0, 0), (pad, pad), (pad, pad)))
        taps = [xp[:, :, ky * dilation:ky * dilation + H,
                   kx * dilation:kx * dilation + W]
                for ky in range(K) for kx in range(K)]
        # (K*K, N, Cin, H, W) -> (Cin, K*K, N, H, W) -> (Cin*K*K, N*H*W)
        b_mat = jnp.transpose(jnp.stack(taps, axis=0),
                              (2, 0, 1, 3, 4)).reshape(Cin * K * K, M)
    a_mat = w.reshape(Cout, Cin * K * K).astype(jnp.bfloat16)
    b_mat = b_mat.astype(jnp.bfloat16)
    if bias is None:
        y = _conv_mm_call(Cout, Cin * K * K, M, False)(a_mat, b_mat)
    else:
        y = _conv_mm_call(Cout, Cin * K * K, M, True)(
            a_mat, b_mat, bias.reshape(Cout, 1).astype(jnp.float32))
    return jnp.transpose(y.reshape(Cout, N, H, W), (1, 0, 2, 3))


def gn_prelu(y, gamma, beta, alpha, residual=None):
    """GroupNorm(groups=1) [+ residual] + per-channel PReLU.  NCHW in/out."""
    N, C, H, W = y.shape
    HW = H * W
    if residual is None:
        out = _gn_prelu_call(N, C, HW, False)(
            y.reshape(N, C, HW), gamma, beta, alpha)
    else:
        out = _gn_prelu_call(N, C, HW, True)(
            y.reshape(N, C, HW), residual.reshape(N, C, HW), gamma, beta, alpha)
    return out.reshape(N, C, H, W)


def gc_forward(p, x):
    """GlobalContextBlock, fully fused in one Pallas kernel per sample."""
    N, C, H, W = x.shape
    Cr = p['ca1_w'].shape[0]
    out = _gc_call(N, C, H * W, Cr)(
        x.reshape(N, C, H * W), p['mask_w'], p['mask_b'],
        p['ca1_w'], p['ca1_b'], p['ln_g'], p['ln_b'],
        p['ca_alpha'], p['ca2_w'], p['ca2_b'])
    return out.reshape(N, C, H, W)


def maxpool_3x3_s2(x):
    # nn.MaxPool2d(kernel_size=3, stride=2, padding=1), NCHW, pad value -inf.
    return lax.reduce_window(x, -jnp.inf, lax.max,
                             window_dimensions=(1, 1, 3, 3),
                             window_strides=(1, 1, 2, 2),
                             padding=((0, 0), (0, 0), (1, 1), (1, 1)))


def upsample_bilinear(x, Ht, Wt):
    # F.upsample(mode='bilinear') -> align_corners=False (half-pixel centers).
    N, C, _, _ = x.shape
    return jax.image.resize(x, (N, C, Ht, Wt), method='bilinear')


# ----------------------------------------------------------------------------
# Deterministic parameter construction (synthetic weights, not a checkpoint)
# ----------------------------------------------------------------------------

class ParamGen:
    def __init__(self, seed=0):
        self._key = jax.random.PRNGKey(seed)

    def _next(self):
        self._key, sub = jax.random.split(self._key)
        return sub

    def conv(self, k, cin, cout):
        scale = 1.0 / float(k * k * cin) ** 0.5
        return scale * jax.random.normal(self._next(), (cout, cin, k, k), jnp.float32)

    def matrix(self, rows, cols):
        scale = 1.0 / float(cols) ** 0.5
        return scale * jax.random.normal(self._next(), (rows, cols), jnp.float32)

    def bias_col(self, n):
        return 0.1 * jax.random.normal(self._next(), (n, 1), jnp.float32)


def make_rb_d(pg, C):
    return dict(c1=pg.conv(3, C, C), c2=pg.conv(3, C, C), c3=pg.conv(3, C, C),
                alpha=jnp.full((C, 1), 0.25, jnp.float32),
                gamma=jnp.ones((C, 1), jnp.float32),
                beta=jnp.zeros((C, 1), jnp.float32))


def make_rb_e(pg, C):
    lap = jnp.array([[0., 1., 0.], [1., -4., 1.], [0., 1., 0.]], jnp.float32)
    return dict(c1=pg.conv(3, C, C), c2=pg.conv(3, C, C), c3=pg.conv(3, C, C),
                ch=pg.conv(3, C, C), cl=pg.conv(3, C, C),
                lap=jnp.broadcast_to(lap[None, None, :, :], (C, C, 3, 3)),
                alpha=jnp.full((C, 1), 0.25, jnp.float32),
                gamma=jnp.ones((C, 1), jnp.float32),
                beta=jnp.zeros((C, 1), jnp.float32))


def make_gc(pg, C, r=4):
    Cr = C // r
    return dict(mask_w=pg.matrix(C, 1), mask_b=pg.bias_col(1),
                ca1_w=pg.matrix(Cr, C), ca1_b=pg.bias_col(Cr),
                ln_g=jnp.ones((Cr, 1), jnp.float32),
                ln_b=jnp.zeros((Cr, 1), jnp.float32),
                ca_alpha=jnp.full((Cr, 1), 0.25, jnp.float32),
                ca2_w=pg.matrix(C, Cr), ca2_b=pg.bias_col(C))


def make_nilb(pg, C):
    return dict(c1=pg.conv(3, C, C), c2=pg.conv(3, C, C), c3=pg.conv(3, C, C),
                gc1=make_gc(pg, C), gc2=make_gc(pg, C),
                alpha=jnp.full((C, 1), 0.25, jnp.float32),
                gamma=jnp.ones((C, 1), jnp.float32),
                beta=jnp.zeros((C, 1), jnp.float32))


def make_encoder(pg, c):
    return dict(e1=make_rb_e(pg, c), e2=make_rb_e(pg, 2 * c),
                e3=make_rb_e(pg, 4 * c), e4=make_rb_e(pg, 8 * c),
                t12=pg.conv(1, c, 2 * c), t23=pg.conv(1, 2 * c, 4 * c),
                t34=pg.conv(1, 4 * c, 8 * c))


def make_decoder(pg, c):
    return dict(d1=make_rb_d(pg, 8 * c), d2=make_rb_d(pg, 4 * c),
                d3=make_rb_d(pg, 2 * c), d4=make_rb_d(pg, c),
                t12=pg.conv(1, 8 * c, 4 * c), t23=pg.conv(1, 4 * c, 2 * c),
                t34=pg.conv(1, 2 * c, c))


def make_nil(pg, c):
    C = 8 * c
    return dict(m0=make_nilb(pg, C), m1=make_nilb(pg, C),
                m2=make_nilb(pg, C), m3=make_nilb(pg, C))


def make_main(pg, channel):
    # conv_e2r_8 / conv_e2r_4 exist in __init__ but are unused in forward -> skipped.
    return dict(conv_in=pg.conv(3, 3, channel),
                conv_out1=pg.conv(3, channel, 3),
                conv_out2=pg.conv(3, channel, 1),
                en=make_encoder(pg, channel),
                mid=make_nil(pg, channel),
                ede=make_decoder(pg, channel),
                de=make_decoder(pg, channel))


# ----------------------------------------------------------------------------
# Forward passes (mirror the PyTorch modules; all NCHW)
# ----------------------------------------------------------------------------

def rb_d_forward(p, x):
    x1 = gn_prelu(conv2d(x, p['c1']), p['gamma'], p['beta'], p['alpha'])
    x2 = gn_prelu(conv2d(x1, p['c2']), p['gamma'], p['beta'], p['alpha'])
    x3 = gn_prelu(conv2d(x2, p['c3']), p['gamma'], p['beta'], p['alpha'], residual=x)
    return x3


def rb_e_forward(p, x):
    x1 = gn_prelu(conv2d(x, p['c1']), p['gamma'], p['beta'], p['alpha'])
    x_lap = conv2d(x1, p['lap'])                      # dense Laplacian (as in reference)
    x_high = conv2d(x_lap, p['ch'], dilation=3)
    x_low = conv2d(x1 - x_lap, p['cl'], dilation=3)
    x2 = gn_prelu(conv2d(x1 + x_high + x_low, p['c2']), p['gamma'], p['beta'], p['alpha'])
    x3 = gn_prelu(conv2d(x2, p['c3']), p['gamma'], p['beta'], p['alpha'], residual=x)
    return x3, x_high


def nilb_forward(p, x):
    x1 = gn_prelu(conv2d(x, p['c1']), p['gamma'], p['beta'], p['alpha'])
    x1 = gc_forward(p['gc1'], x1)
    x2 = gn_prelu(conv2d(x1, p['c2']), p['gamma'], p['beta'], p['alpha'])
    x2 = gc_forward(p['gc2'], x2)
    x3 = gn_prelu(conv2d(x2, p['c3']), p['gamma'], p['beta'], p['alpha'], residual=x)
    return x3


def nil_forward(p, x, T, istraining=True):
    T = int(T)
    if istraining:
        if T == 0:
            return nilb_forward(p['m0'], x)
        elif T == 1:
            return nilb_forward(p['m1'], x)
        elif T == 2:
            return nilb_forward(p['m2'], x)
        elif T == 3:
            return (nilb_forward(p['m2'], nilb_forward(p['m1'], x)) +
                    nilb_forward(p['m1'], nilb_forward(p['m2'], x)))
        elif T == 4:
            return nilb_forward(p['m1'], nilb_forward(p['m0'], x))
        elif T == 5:
            return nilb_forward(p['m2'], nilb_forward(p['m0'], x))
        elif T == 6:
            xh = nilb_forward(p['m0'], x)
            a = nilb_forward(p['m2'], nilb_forward(p['m1'], xh))
            b = nilb_forward(p['m1'], nilb_forward(p['m2'], xh))
            return nilb_forward(p['m3'], a + b)
        raise ValueError("unsupported T")
    else:
        xh = nilb_forward(p['m0'], x)
        a = nilb_forward(p['m2'], nilb_forward(p['m1'], xh))
        b = nilb_forward(p['m1'], nilb_forward(p['m2'], xh))
        return nilb_forward(p['m3'], a + b)


def encoder_forward(p, x):
    e1_1, e1_2 = rb_e_forward(p['e1'], x)
    e2_1, e2_2 = rb_e_forward(p['e2'], conv2d(maxpool_3x3_s2(e1_1), p['t12']))
    e3_1, e3_2 = rb_e_forward(p['e3'], conv2d(maxpool_3x3_s2(e2_1), p['t23']))
    e4_1, e4_2 = rb_e_forward(p['e4'], conv2d(maxpool_3x3_s2(e3_1), p['t34']))
    return e1_1, e1_2, e2_1, e2_2, e3_1, e3_2, e4_1, e4_2


def decoder_forward(p, x, e4, e3, e2, e1):
    d1 = rb_d_forward(p['d1'], x + e4)
    d2 = rb_d_forward(p['d2'], upsample_bilinear(conv2d(d1, p['t12']),
                                                 e3.shape[2], e3.shape[3]) + e3)
    d3 = rb_d_forward(p['d3'], upsample_bilinear(conv2d(d2, p['t23']),
                                                 e2.shape[2], e2.shape[3]) + e2)
    d4 = rb_d_forward(p['d4'], upsample_bilinear(conv2d(d3, p['t34']),
                                                 e1.shape[2], e1.shape[3]) + e1)
    return d1, d2, d3, d4


@functools.partial(jax.jit, static_argnums=(2,))
def main_forward(params, x_nchw, T):
    """MainNetworkStructure.forward.  x: (N,3,H,W) -> ((N,3,H,W), (N,1,H,W))."""
    x = x_nchw.astype(jnp.float32)
    x_in = conv2d(x, params['conv_in'])
    (e11, e12, e21, e22, e31, e32, e41, e42) = encoder_forward(params['en'], x_in)
    xm = nil_forward(params['mid'], e41, T)
    ede1, ede2, ede3, ede4 = decoder_forward(params['ede'], xm, e42, e32, e22, e12)
    _, _, _, de4 = decoder_forward(params['de'], xm,
                                   e41 + ede1, e31 + ede2, e21 + ede3, e11 + ede4)
    out2 = conv2d(ede4, params['conv_out2'])
    out1 = conv2d(de4, params['conv_out1'])
    return out1, out2


# ----------------------------------------------------------------------------

if __name__ == "__main__":
    channel = 4
    pg = ParamGen(seed=0)
    params = make_main(pg, channel)

    key = jax.random.PRNGKey(0)
    x = jax.random.normal(key, (2, 3, 16, 16), jnp.float32)   # NCHW, like PyTorch
    T = 0

    out1, out2 = main_forward(params, x, T)
    out1 = jax.block_until_ready(out1)
    out2 = jax.block_until_ready(out2)

    assert out1.shape == (2, 3, 16, 16), out1.shape
    assert out2.shape == (2, 1, 16, 16), out2.shape
    assert bool(jnp.all(jnp.isfinite(out1))) and bool(jnp.all(jnp.isfinite(out2)))
    print("KERNEL_OK")
</pallas_src>

<mosaic_0001>
module attributes {stable_mosaic.version = 11 : i64} {
  func.func @_conv_mm_kernel(%arg0: i32, %arg1: memref<4x27xbf16, #tpu.memory_space<vmem>>, %arg2: memref<27x256xbf16, #tpu.memory_space<vmem>>, %arg3: memref<4x256xf32, #tpu.memory_space<vmem>>) attributes {dimension_semantics = [#tpu.dimension_semantics<parallel>], iteration_bounds = array<i64: 2>, scalar_prefetch = 0 : i64, scratch_operands = 0 : i64, tpu.core_type = #tpu.core_type<tc>, window_params = [{pipeline_mode = #tpu.pipeline_mode<synchronous>, transform_indices = @transform_0, window_bounds = array<i64: 4, 27>}, {transform_indices = @transform_1, window_bounds = array<i64: 27, 256>}, {transform_indices = @transform_2, window_bounds = array<i64: 4, 256>}]} {
    %c0 = arith.constant 0 : index
    %c0_0 = arith.constant 0 : index
    %0 = vector.load %arg1[%c0, %c0_0] : memref<4x27xbf16, #tpu.memory_space<vmem>>, vector<4x27xbf16>
    %c0_1 = arith.constant 0 : index
    %c0_2 = arith.constant 0 : index
    %1 = vector.load %arg2[%c0_1, %c0_2] : memref<27x256xbf16, #tpu.memory_space<vmem>>, vector<27x256xbf16>
    %cst = arith.constant dense<0.000000e+00> : vector<4x256xf32>
    %2 = tpu.matmul %0, %1, %cst {dimension_numbers = #tpu.dot_dimension_numbers<[1], [0], [0], [1], [0, 0, 1, 1], [], []>} : vector<4x27xbf16>, vector<27x256xbf16>, vector<4x256xf32> -> vector<4x256xf32>
    %c0_3 = arith.constant 0 : index
    %c0_4 = arith.constant 0 : index
    %3 = vector.load %arg3[%c0_3, %c0_4] : memref<4x256xf32, #tpu.memory_space<vmem>>, vector<4x256xf32>
    tpu.vector_store %arg3[%c0_3, %c0_4], %2 {strides = array<i32>} : memref<4x256xf32, #tpu.memory_space<vmem>>, vector<4x256xf32>,
    return
  }
  func.func @transform_0(%arg0: i32) -> (i32, i32) {
    %c0_i32 = arith.constant 0 : i32
    %c0_i32_0 = arith.constant 0 : i32
    %c0_i32_1 = arith.constant 0 : i32
    return %c0_i32, %c0_i32_0 : i32, i32
  }
  func.func @transform_1(%arg0: i32) -> (i32, i32) {
    %c0_i32 = arith.constant 0 : i32
    %c0_i32_0 = arith.constant 0 : i32
    return %c0_i32, %arg0 : i32, i32
  }
  func.func @transform_2(%arg0: i32) -> (i32, i32) {
    %c0_i32 = arith.constant 0 : i32
    %c0_i32_0 = arith.constant 0 : i32
    return %c0_i32, %arg0 : i32, i32
  }
}

module attributes {stable_mosaic.version = 11 : i64} {
  func.func @_conv_mm_kernel(%arg0: i32, %arg1: memref<4x36xbf16, #tpu.memory_space<vmem>>, %arg2: memref<36x256xbf16, #tpu.memory_space<vmem>>, %arg3: memref<4x256xf32, #tpu.memory_space<vmem>>) attributes {dimension_semantics = [#tpu.dimension_semantics<parallel>], iteration_bounds = array<i64: 2>, scalar_prefetch = 0 : i64, scratch_operands = 0 : i64, tpu.core_type = #tpu.core_type<tc>, window_params = [{pipeline_mode = #tpu.pipeline_mode<synchronous>, transform_indices = @transform_0, window_bounds = array<i64: 4, 36>}, {transform_indices = @transform_1, window_bounds = array<i64: 36, 256>}, {transform_indices = @transform_2, window_bounds = array<i64: 4, 256>}]} {
    %c0 = arith.constant 0 : index
    %c0_0 = arith.constant 0 : index
    %0 = vector.load %arg1[%c0, %c0_0] : memref<4x36xbf16, #tpu.memory_space<vmem>>, vector<4x36xbf16>
    %c0_1 = arith.constant 0 : index
    %c0_2 = arith.constant 0 : index
    %1 = vector.load %arg2[%c0_1, %c0_2] : memref<36x256xbf16, #tpu.memory_space<vmem>>, vector<36x256xbf16>
    %cst = arith.constant dense<0.000000e+00> : vector<4x256xf32>
    %2 = tpu.matmul %0, %1, %cst {dimension_numbers = #tpu.dot_dimension_numbers<[1], [0], [0], [1], [0, 0, 1, 1], [], []>} : vector<4x36xbf16>, vector<36x256xbf16>, vector<4x256xf32> -> vector<4x256xf32>
    %c0_3 = arith.constant 0 : index
    %c0_4 = arith.constant 0 : index
    %3 = vector.load %arg3[%c0_3, %c0_4] : memref<4x256xf32, #tpu.memory_space<vmem>>, vector<4x256xf32>
    tpu.vector_store %arg3[%c0_3, %c0_4], %2 {strides = array<i32>} : memref<4x256xf32, #tpu.memory_space<vmem>>, vector<4x256xf32>,
    return
  }
  func.func @transform_0(%arg0: i32) -> (i32, i32) {
    %c0_i32 = arith.constant 0 : i32
    %c0_i32_0 = arith.constant 0 : i32
    %c0_i32_1 = arith.constant 0 : i32
    return %c0_i32, %c0_i32_0 : i32, i32
  }
  func.func @transform_1(%arg0: i32) -> (i32, i32) {
    %c0_i32 = arith.constant 0 : i32
    %c0_i32_0 = arith.constant 0 : i32
    return %c0_i32, %arg0 : i32, i32
  }
  func.func @transform_2(%arg0: i32) -> (i32, i32) {
    %c0_i32 = arith.constant 0 : i32
    %c0_i32_0 = arith.constant 0 : i32
    return %c0_i32, %arg0 : i32, i32
  }
}

module attributes {stable_mosaic.version = 11 : i64} {
  func.func @_gn_prelu_kernel(%arg0: i32, %arg1: memref<1x4x256xf32, #tpu.memory_space<vmem>>, %arg2: memref<4x1xf32, #tpu.memory_space<vmem>>, %arg3: memref<4x1xf32, #tpu.memory_space<vmem>>, %arg4: memref<4x1xf32, #tpu.memory_space<vmem>>, %arg5: memref<1x4x256xf32, #tpu.memory_space<vmem>>) attributes {dimension_semantics = [#tpu.dimension_semantics<parallel>], iteration_bounds = array<i64: 2>, scalar_prefetch = 0 : i64, scratch_operands = 0 : i64, tpu.core_type = #tpu.core_type<tc>, window_params = [{transform_indices = @transform_0, window_bounds = array<i64: 1, 4, 256>}, {pipeline_mode = #tpu.pipeline_mode<synchronous>, transform_indices = @transform_1, window_bounds = array<i64: 4, 1>}, {pipeline_mode = #tpu.pipeline_mode<synchronous>, transform_indices = @transform_2, window_bounds = array<i64: 4, 1>}, {pipeline_mode = #tpu.pipeline_mode<synchronous>, transform_indices = @transform_3, window_bounds = array<i64: 4, 1>}, {transform_indices = @transform_4, window_bounds = array<i64: 1, 4, 256>}]} {
    %c0 = arith.constant 0 : index
    %c0_0 = arith.constant 0 : index
    %c0_1 = arith.constant 0 : index
    %0 = vector.load %arg1[%c0, %c0_0, %c0_1] : memref<1x4x256xf32, #tpu.memory_space<vmem>>, vector<1x4x256xf32>
    %1 = vector.shape_cast %0 : vector<1x4x256xf32> to vector<4x256xf32>
    %2 = vector.shape_cast %1 : vector<4x256xf32> to vector<1x4x256xf32>
    %cst = arith.constant dense<0.000000e+00> : vector<1xf32>
    %3 = vector.multi_reduction <add>, %2, %cst [1, 2] : vector<1x4x256xf32> to vector<1xf32>
    %4 = vector.shape_cast %3 : vector<1xf32> to vector<1x1x1xf32>
    %5 = vector.extract %4[0, 0, 0] : f32 from vector<1x1x1xf32>
    %cst_2 = arith.constant 1.024000e+03 : f32
    %6 = arith.divf %5, %cst_2 : f32
    %7 = vector.broadcast %6 : f32 to vector<4x256xf32>
    %8 = arith.subf %1, %7 : vector<4x256xf32>
    %9 = arith.mulf %8, %8 : vector<4x256xf32>
    %10 = vector.shape_cast %9 : vector<4x256xf32> to vector<1x4x256xf32>
    %cst_3 = arith.constant dense<0.000000e+00> : vector<1xf32>
    %11 = vector.multi_reduction <add>, %10, %cst_3 [1, 2] : vector<1x4x256xf32> to vector<1xf32>
    %12 = vector.shape_cast %11 : vector<1xf32> to vector<1x1x1xf32>
    %13 = vector.extract %12[0, 0, 0] : f32 from vector<1x1x1xf32>
    %cst_4 = arith.constant 1.024000e+03 : f32
    %14 = arith.divf %13, %cst_4 : f32
    %15 = vector.broadcast %6 : f32 to vector<4x256xf32>
    %16 = arith.subf %1, %15 : vector<4x256xf32>
    %cst_5 = arith.constant 9.99999974E-6 : f32
    %17 = arith.addf %14, %cst_5 : f32
    %18 = math.rsqrt %17 : f32
    %19 = vector.broadcast %18 : f32 to vector<4x256xf32>
    %20 = arith.mulf %16, %19 : vector<4x256xf32>
    %c0_6 = arith.constant 0 : index
    %c0_7 = arith.constant 0 : index
    %21 = vector.load %arg2[%c0_6, %c0_7] : memref<4x1xf32, #tpu.memory_space<vmem>>, vector<4x1xf32>
    %22 = vector.broadcast %21 : vector<4x1xf32> to vector<4x256xf32>
    %23 = arith.mulf %20, %22 : vector<4x256xf32>
    %c0_8 = arith.constant 0 : index
    %c0_9 = arith.constant 0 : index
    %24 = vector.load %arg3[%c0_8, %c0_9] : memref<4x1xf32, #tpu.memory_space<vmem>>, vector<4x1xf32>
    %25 = vector.broadcast %24 : vector<4x1xf32> to vector<4x256xf32>
    %26 = arith.addf %23, %25 : vector<4x256xf32>
    %cst_10 = arith.constant 0.000000e+00 : f32
    %27 = vector.broadcast %cst_10 : f32 to vector<4x256xf32>
    %28 = arith.cmpf oge, %26, %27 : vector<4x256xf32>
    %c0_11 = arith.constant 0 : index
    %c0_12 = arith.constant 0 : index
    %29 = vector.load %arg4[%c0_11, %c0_12] : memref<4x1xf32, #tpu.memory_space<vmem>>, vector<4x1xf32>
    %30 = vector.broadcast %29 : vector<4x1xf32> to vector<4x256xf32>
    %31 = arith.mulf %30, %26 : vector<4x256xf32>
    %32 = arith.select %28, %26, %31 : vector<4x256xi1>, vector<4x256xf32>
    %c0_13 = arith.constant 0 : index
    %c0_14 = arith.constant 0 : index
    %c0_15 = arith.constant 0 : index
    %33 = vector.load %arg5[%c0_13, %c0_14, %c0_15] : memref<1x4x256xf32, #tpu.memory_space<vmem>>, vector<1x4x256xf32>
    %34 = vector.shape_cast %33 : vector<1x4x256xf32> to vector<4x256xf32>
    %35 = vector.shape_cast %32 : vector<4x256xf32> to vector<1x4x256xf32>
    tpu.vector_store %arg5[%c0_13, %c0_14, %c0_15], %35 {strides = array<i32>} : memref<1x4x256xf32, #tpu.memory_space<vmem>>, vector<1x4x256xf32>,
    return
  }
  func.func @transform_0(%arg0: i32) -> (i32, i32, i32) {
    %c0_i32 = arith.constant 0 : i32
    %c0_i32_0 = arith.constant 0 : i32
    %c0_i32_1 = arith.constant 0 : i32
    return %arg0, %c0_i32, %c0_i32_0 : i32, i32, i32
  }
  func.func @transform_1(%arg0: i32) -> (i32, i32) {
    %c0_i32 = arith.constant 0 : i32
    %c0_i32_0 = arith.constant 0 : i32
    %c0_i32_1 = arith.constant 0 : i32
    return %c0_i32, %c0_i32_0 : i32, i32
  }
  func.func @transform_2(%arg0: i32) -> (i32, i32) {
    %c0_i32 = arith.constant 0 : i32
    %c0_i32_0 = arith.constant 0 : i32
    %c0_i32_1 = arith.constant 0 : i32
    return %c0_i32, %c0_i32_0 : i32, i32
  }
  func.func @transform_3(%arg0: i32) -> (i32, i32) {
    %c0_i32 = arith.constant 0 : i32
    %c0_i32_0 = arith.constant 0 : i32
    %c0_i32_1 = arith.constant 0 : i32
    return %c0_i32, %c0_i32_0 : i32, i32
  }
  func.func @transform_4(%arg0: i32) -> (i32, i32, i32) {
    %c0_i32 = arith.constant 0 : i32
    %c0_i32_0 = arith.constant 0 : i32
    %c0_i32_1 = arith.constant 0 : i32
    return %arg0, %c0_i32, %c0_i32_0 : i32, i32, i32
  }
}

module attributes {stable_mosaic.version = 11 : i64} {
  func.func @_gn_prelu_res_kernel(%arg0: i32, %arg1: memref<1x4x256xf32, #tpu.memory_space<vmem>>, %arg2: memref<1x4x256xf32, #tpu.memory_space<vmem>>, %arg3: memref<4x1xf32, #tpu.memory_space<vmem>>, %arg4: memref<4x1xf32, #tpu.memory_space<vmem>>, %arg5: memref<4x1xf32, #tpu.memory_space<vmem>>, %arg6: memref<1x4x256xf32, #tpu.memory_space<vmem>>) attributes {dimension_semantics = [#tpu.dimension_semantics<parallel>], iteration_bounds = array<i64: 2>, scalar_prefetch = 0 : i64, scratch_operands = 0 : i64, tpu.core_type = #tpu.core_type<tc>, window_params = [{transform_indices = @transform_0, window_bounds = array<i64: 1, 4, 256>}, {transform_indices = @transform_1, window_bounds = array<i64: 1, 4, 256>}, {pipeline_mode = #tpu.pipeline_mode<synchronous>, transform_indices = @transform_2, window_bounds = array<i64: 4, 1>}, {pipeline_mode = #tpu.pipeline_mode<synchronous>, transform_indices = @transform_3, window_bounds = array<i64: 4, 1>}, {pipeline_mode = #tpu.pipeline_mode<synchronous>, transform_indices = @transform_4, window_bounds = array<i64: 4, 1>}, {transform_indices = @transform_5, window_bounds = array<i64: 1, 4, 256>}]} {
    %c0 = arith.constant 0 : index
    %c0_0 = arith.constant 0 : index
    %c0_1 = arith.constant 0 : index
    %0 = vector.load %arg1[%c0, %c0_0, %c0_1] : memref<1x4x256xf32, #tpu.memory_space<vmem>>, vector<1x4x256xf32>
    %1 = vector.shape_cast %0 : vector<1x4x256xf32> to vector<4x256xf32>
    %2 = vector.shape_cast %1 : vector<4x256xf32> to vector<1x4x256xf32>
    %cst = arith.constant dense<0.000000e+00> : vector<1xf32>
    %3 = vector.multi_reduction <add>, %2, %cst [1, 2] : vector<1x4x256xf32> to vector<1xf32>
    %4 = vector.shape_cast %3 : vector<1xf32> to vector<1x1x1xf32>
    %5 = vector.extract %4[0, 0, 0] : f32 from vector<1x1x1xf32>
    %cst_2 = arith.constant 1.024000e+03 : f32
    %6 = arith.divf %5, %cst_2 : f32
    %7 = vector.broadcast %6 : f32 to vector<4x256xf32>
    %8 = arith.subf %1, %7 : vector<4x256xf32>
    %9 = arith.mulf %8, %8 : vector<4x256xf32>
    %10 = vector.shape_cast %9 : vector<4x256xf32> to vector<1x4x256xf32>
    %cst_3 = arith.constant dense<0.000000e+00> : vector<1xf32>
    %11 = vector.multi_reduction <add>, %10, %cst_3 [1, 2] : vector<1x4x256xf32> to vector<1xf32>
    %12 = vector.shape_cast %11 : vector<1xf32> to vector<1x1x1xf32>
    %13 = vector.extract %12[0, 0, 0] : f32 from vector<1x1x1xf32>
    %cst_4 = arith.constant 1.024000e+03 : f32
    %14 = arith.divf %13, %cst_4 : f32
    %15 = vector.broadcast %6 : f32 to vector<4x256xf32>
    %16 = arith.subf %1, %15 : vector<4x256xf32>
    %cst_5 = arith.constant 9.99999974E-6 : f32
    %17 = arith.addf %14, %cst_5 : f32
    %18 = math.rsqrt %17 : f32
    %19 = vector.broadcast %18 : f32 to vector<4x256xf32>
    %20 = arith.mulf %16, %19 : vector<4x256xf32>
    %c0_6 = arith.constant 0 : index
    %c0_7 = arith.constant 0 : index
    %21 = vector.load %arg3[%c0_6, %c0_7] : memref<4x1xf32, #tpu.memory_space<vmem>>, vector<4x1xf32>
    %22 = vector.broadcast %21 : vector<4x1xf32> to vector<4x256xf32>
    %23 = arith.mulf %20, %22 : vector<4x256xf32>
    %c0_8 = arith.constant 0 : index
    %c0_9 = arith.constant 0 : index
    %24 = vector.load %arg4[%c0_8, %c0_9] : memref<4x1xf32, #tpu.memory_space<vmem>>, vector<4x1xf32>
    %25 = vector.broadcast %24 : vector<4x1xf32> to vector<4x256xf32>
    %26 = arith.addf %23, %25 : vector<4x256xf32>
    %c0_10 = arith.constant 0 : index
    %c0_11 = arith.constant 0 : index
    %c0_12 = arith.constant 0 : index
    %27 = vector.load %arg2[%c0_10, %c0_11, %c0_12] : memref<1x4x256xf32, #tpu.memory_space<vmem>>, vector<1x4x256xf32>
    %28 = vector.shape_cast %27 : vector<1x4x256xf32> to vector<4x256xf32>
    %29 = arith.addf %26, %28 : vector<4x256xf32>
    %cst_13 = arith.constant 0.000000e+00 : f32
    %30 = vector.broadcast %cst_13 : f32 to vector<4x256xf32>
    %31 = arith.cmpf oge, %29, %30 : vector<4x256xf32>
    %c0_14 = arith.constant 0 : index
    %c0_15 = arith.constant 0 : index
    %32 = vector.load %arg5[%c0_14, %c0_15] : memref<4x1xf32, #tpu.memory_space<vmem>>, vector<4x1xf32>
    %33 = vector.broadcast %32 : vector<4x1xf32> to vector<4x256xf32>
    %34 = arith.mulf %33, %29 : vector<4x256xf32>
    %35 = arith.select %31, %29, %34 : vector<4x256xi1>, vector<4x256xf32>
    %c0_16 = arith.constant 0 : index
    %c0_17 = arith.constant 0 : index
    %c0_18 = arith.constant 0 : index
    %36 = vector.load %arg6[%c0_16, %c0_17, %c0_18] : memref<1x4x256xf32, #tpu.memory_space<vmem>>, vector<1x4x256xf32>
    %37 = vector.shape_cast %36 : vector<1x4x256xf32> to vector<4x256xf32>
    %38 = vector.shape_cast %35 : vector<4x256xf32> to vector<1x4x256xf32>
    tpu.vector_store %arg6[%c0_16, %c0_17, %c0_18], %38 {strides = array<i32>} : memref<1x4x256xf32, #tpu.memory_space<vmem>>, vector<1x4x256xf32>,
    return
  }
  func.func @transform_0(%arg0: i32) -> (i32, i32, i32) {
    %c0_i32 = arith.constant 0 : i32
    %c0_i32_0 = arith.constant 0 : i32
    %c0_i32_1 = arith.constant 0 : i32
    return %arg0, %c0_i32, %c0_i32_0 : i32, i32, i32
  }
  func.func @transform_1(%arg0: i32) -> (i32, i32, i32) {
    %c0_i32 = arith.constant 0 : i32
    %c0_i32_0 = arith.constant 0 : i32
    %c0_i32_1 = arith.constant 0 : i32
    return %arg0, %c0_i32, %c0_i32_0 : i32, i32, i32
  }
  func.func @transform_2(%arg0: i32) -> (i32, i32) {
    %c0_i32 = arith.constant 0 : i32
    %c0_i32_0 = arith.constant 0 : i32
    %c0_i32_1 = arith.constant 0 : i32
    return %c0_i32, %c0_i32_0 : i32, i32
  }
  func.func @transform_3(%arg0: i32) -> (i32, i32) {
    %c0_i32 = arith.constant 0 : i32
    %c0_i32_0 = arith.constant 0 : i32
    %c0_i32_1 = arith.constant 0 : i32
    return %c0_i32, %c0_i32_0 : i32, i32
  }
  func.func @transform_4(%arg0: i32) -> (i32, i32) {
    %c0_i32 = arith.constant 0 : i32
    %c0_i32_0 = arith.constant 0 : i32
    %c0_i32_1 = arith.constant 0 : i32
    return %c0_i32, %c0_i32_0 : i32, i32
  }
  func.func @transform_5(%arg0: i32) -> (i32, i32, i32) {
    %c0_i32 = arith.constant 0 : i32
    %c0_i32_0 = arith.constant 0 : i32
    %c0_i32_1 = arith.constant 0 : i32
    return %arg0, %c0_i32, %c0_i32_0 : i32, i32, i32
  }
}

module attributes {stable_mosaic.version = 11 : i64} {
  func.func @_conv_mm_kernel(%arg0: i32, %arg1: memref<8x4xbf16, #tpu.memory_space<vmem>>, %arg2: memref<4x128xbf16, #tpu.memory_space<vmem>>, %arg3: memref<8x128xf32, #tpu.memory_space<vmem>>) attributes {dimension_semantics = [#tpu.dimension_semantics<parallel>], iteration_bounds = array<i64: 1>, scalar_prefetch = 0 : i64, scratch_operands = 0 : i64, tpu.core_type = #tpu.core_type<tc>, window_params = [{pipeline_mode = #tpu.pipeline_mode<synchronous>, transform_indices = @transform_0, window_bounds = array<i64: 8, 4>}, {transform_indices = @transform_1, window_bounds = array<i64: 4, 128>}, {transform_indices = @transform_2, window_bounds = array<i64: 8, 128>}]} {
    %c0 = arith.constant 0 : index
    %c0_0 = arith.constant 0 : index
    %0 = vector.load %arg1[%c0, %c0_0] : memref<8x4xbf16, #tpu.memory_space<vmem>>, vector<8x4xbf16>
    %c0_1 = arith.constant 0 : index
    %c0_2 = arith.constant 0 : index
    %1 = vector.load %arg2[%c0_1, %c0_2] : memref<4x128xbf16, #tpu.memory_space<vmem>>, vector<4x128xbf16>
    %cst = arith.constant dense<0.000000e+00> : vector<8x128xf32>
    %2 = tpu.matmul %0, %1, %cst {dimension_numbers = #tpu.dot_dimension_numbers<[1], [0], [0], [1], [0, 0, 1, 1], [], []>} : vector<8x4xbf16>, vector<4x128xbf16>, vector<8x128xf32> -> vector<8x128xf32>
    %c0_3 = arith.constant 0 : index
    %c0_4 = arith.constant 0 : index
    %3 = vector.load %arg3[%c0_3, %c0_4] : memref<8x128xf32, #tpu.memory_space<vmem>>, vector<8x128xf32>
    tpu.vector_store %arg3[%c0_3, %c0_4], %2 {strides = array<i32>} : memref<8x128xf32, #tpu.memory_space<vmem>>, vector<8x128xf32>,
    return
  }
  func.func @transform_0(%arg0: i32) -> (i32, i32) {
    %c0_i32 = arith.constant 0 : i32
    %c0_i32_0 = arith.constant 0 : i32
    %c0_i32_1 = arith.constant 0 : i32
    return %c0_i32, %c0_i32_0 : i32, i32
  }
  func.func @transform_1(%arg0: i32) -> (i32, i32) {
    %c0_i32 = arith.constant 0 : i32
    %c0_i32_0 = arith.constant 0 : i32
    return %c0_i32, %arg0 : i32, i32
  }
  func.func @transform_2(%arg0: i32) -> (i32, i32) {
    %c0_i32 = arith.constant 0 : i32
    %c0_i32_0 = arith.constant 0 : i32
    return %c0_i32, %arg0 : i32, i32
  }
}

module attributes {stable_mosaic.version = 11 : i64} {
  func.func @_conv_mm_kernel(%arg0: i32, %arg1: memref<8x72xbf16, #tpu.memory_space<vmem>>, %arg2: memref<72x128xbf16, #tpu.memory_space<vmem>>, %arg3: memref<8x128xf32, #tpu.memory_space<vmem>>) attributes {dimension_semantics = [#tpu.dimension_semantics<parallel>], iteration_bounds = array<i64: 1>, scalar_prefetch = 0 : i64, scratch_operands = 0 : i64, tpu.core_type = #tpu.core_type<tc>, window_params = [{pipeline_mode = #tpu.pipeline_mode<synchronous>, transform_indices = @transform_0, window_bounds = array<i64: 8, 72>}, {transform_indices = @transform_1, window_bounds = array<i64: 72, 128>}, {transform_indices = @transform_2, window_bounds = array<i64: 8, 128>}]} {
    %c0 = arith.constant 0 : index
    %c0_0 = arith.constant 0 : index
    %0 = vector.load %arg1[%c0, %c0_0] : memref<8x72xbf16, #tpu.memory_space<vmem>>, vector<8x72xbf16>
    %c0_1 = arith.constant 0 : index
    %c0_2 = arith.constant 0 : index
    %1 = vector.load %arg2[%c0_1, %c0_2] : memref<72x128xbf16, #tpu.memory_space<vmem>>, vector<72x128xbf16>
    %cst = arith.constant dense<0.000000e+00> : vector<8x128xf32>
    %2 = tpu.matmul %0, %1, %cst {dimension_numbers = #tpu.dot_dimension_numbers<[1], [0], [0], [1], [0, 0, 1, 1], [], []>} : vector<8x72xbf16>, vector<72x128xbf16>, vector<8x128xf32> -> vector<8x128xf32>
    %c0_3 = arith.constant 0 : index
    %c0_4 = arith.constant 0 : index
    %3 = vector.load %arg3[%c0_3, %c0_4] : memref<8x128xf32, #tpu.memory_space<vmem>>, vector<8x128xf32>
    tpu.vector_store %arg3[%c0_3, %c0_4], %2 {strides = array<i32>} : memref<8x128xf32, #tpu.memory_space<vmem>>, vector<8x128xf32>,
    return
  }
  func.func @transform_0(%arg0: i32) -> (i32, i32) {
    %c0_i32 = arith.constant 0 : i32
    %c0_i32_0 = arith.constant 0 : i32
    %c0_i32_1 = arith.constant 0 : i32
    return %c0_i32, %c0_i32_0 : i32, i32
  }
  func.func @transform_1(%arg0: i32) -> (i32, i32) {
    %c0_i32 = arith.constant 0 : i32
    %c0_i32_0 = arith.constant 0 : i32
    return %c0_i32, %arg0 : i32, i32
  }
  func.func @transform_2(%arg0: i32) -> (i32, i32) {
    %c0_i32 = arith.constant 0 : i32
    %c0_i32_0 = arith.constant 0 : i32
    return %c0_i32, %arg0 : i32, i32
  }
}

module attributes {stable_mosaic.version = 11 : i64} {
  func.func @_gn_prelu_kernel(%arg0: i32, %arg1: memref<1x8x64xf32, #tpu.memory_space<vmem>>, %arg2: memref<8x1xf32, #tpu.memory_space<vmem>>, %arg3: memref<8x1xf32, #tpu.memory_space<vmem>>, %arg4: memref<8x1xf32, #tpu.memory_space<vmem>>, %arg5: memref<1x8x64xf32, #tpu.memory_space<vmem>>) attributes {dimension_semantics = [#tpu.dimension_semantics<parallel>], iteration_bounds = array<i64: 2>, scalar_prefetch = 0 : i64, scratch_operands = 0 : i64, tpu.core_type = #tpu.core_type<tc>, window_params = [{transform_indices = @transform_0, window_bounds = array<i64: 1, 8, 64>}, {pipeline_mode = #tpu.pipeline_mode<synchronous>, transform_indices = @transform_1, window_bounds = array<i64: 8, 1>}, {pipeline_mode = #tpu.pipeline_mode<synchronous>, transform_indices = @transform_2, window_bounds = array<i64: 8, 1>}, {pipeline_mode = #tpu.pipeline_mode<synchronous>, transform_indices = @transform_3, window_bounds = array<i64: 8, 1>}, {transform_indices = @transform_4, window_bounds = array<i64: 1, 8, 64>}]} {
    %c0 = arith.constant 0 : index
    %c0_0 = arith.constant 0 : index
    %c0_1 = arith.constant 0 : index
    %0 = vector.load %arg1[%c0, %c0_0, %c0_1] : memref<1x8x64xf32, #tpu.memory_space<vmem>>, vector<1x8x64xf32>
    %1 = vector.shape_cast %0 : vector<1x8x64xf32> to vector<8x64xf32>
    %2 = vector.shape_cast %1 : vector<8x64xf32> to vector<1x8x64xf32>
    %cst = arith.constant dense<0.000000e+00> : vector<1xf32>
    %3 = vector.multi_reduction <add>, %2, %cst [1, 2] : vector<1x8x64xf32> to vector<1xf32>
    %4 = vector.shape_cast %3 : vector<1xf32> to vector<1x1x1xf32>
    %5 = vector.extract %4[0, 0, 0] : f32 from vector<1x1x1xf32>
    %cst_2 = arith.constant 5.120000e+02 : f32
    %6 = arith.divf %5, %cst_2 : f32
    %7 = vector.broadcast %6 : f32 to vector<8x64xf32>
    %8 = arith.subf %1, %7 : vector<8x64xf32>
    %9 = arith.mulf %8, %8 : vector<8x64xf32>
    %10 = vector.shape_cast %9 : vector<8x64xf32> to vector<1x8x64xf32>
    %cst_3 = arith.constant dense<0.000000e+00> : vector<1xf32>
    %11 = vector.multi_reduction <add>, %10, %cst_3 [1, 2] : vector<1x8x64xf32> to vector<1xf32>
    %12 = vector.shape_cast %11 : vector<1xf32> to vector<1x1x1xf32>
    %13 = vector.extract %12[0, 0, 0] : f32 from vector<1x1x1xf32>
    %cst_4 = arith.constant 5.120000e+02 : f32
    %14 = arith.divf %13, %cst_4 : f32
    %15 = vector.broadcast %6 : f32 to vector<8x64xf32>
    %16 = arith.subf %1, %15 : vector<8x64xf32>
    %cst_5 = arith.constant 9.99999974E-6 : f32
    %17 = arith.addf %14, %cst_5 : f32
    %18 = math.rsqrt %17 : f32
    %19 = vector.broadcast %18 : f32 to vector<8x64xf32>
    %20 = arith.mulf %16, %19 : vector<8x64xf32>
    %c0_6 = arith.constant 0 : index
    %c0_7 = arith.constant 0 : index
    %21 = vector.load %arg2[%c0_6, %c0_7] : memref<8x1xf32, #tpu.memory_space<vmem>>, vector<8x1xf32>
    %22 = vector.broadcast %21 : vector<8x1xf32> to vector<8x64xf32>
    %23 = arith.mulf %20, %22 : vector<8x64xf32>
    %c0_8 = arith.constant 0 : index
    %c0_9 = arith.constant 0 : index
    %24 = vector.load %arg3[%c0_8, %c0_9] : memref<8x1xf32, #tpu.memory_space<vmem>>, vector<8x1xf32>
    %25 = vector.broadcast %24 : vector<8x1xf32> to vector<8x64xf32>
    %26 = arith.addf %23, %25 : vector<8x64xf32>
    %cst_10 = arith.constant 0.000000e+00 : f32
    %27 = vector.broadcast %cst_10 : f32 to vector<8x64xf32>
    %28 = arith.cmpf oge, %26, %27 : vector<8x64xf32>
    %c0_11 = arith.constant 0 : index
    %c0_12 = arith.constant 0 : index
    %29 = vector.load %arg4[%c0_11, %c0_12] : memref<8x1xf32, #tpu.memory_space<vmem>>, vector<8x1xf32>
    %30 = vector.broadcast %29 : vector<8x1xf32> to vector<8x64xf32>
    %31 = arith.mulf %30, %26 : vector<8x64xf32>
    %32 = arith.select %28, %26, %31 : vector<8x64xi1>, vector<8x64xf32>
    %c0_13 = arith.constant 0 : index
    %c0_14 = arith.constant 0 : index
    %c0_15 = arith.constant 0 : index
    %33 = vector.load %arg5[%c0_13, %c0_14, %c0_15] : memref<1x8x64xf32, #tpu.memory_space<vmem>>, vector<1x8x64xf32>
    %34 = vector.shape_cast %33 : vector<1x8x64xf32> to vector<8x64xf32>
    %35 = vector.shape_cast %32 : vector<8x64xf32> to vector<1x8x64xf32>
    tpu.vector_store %arg5[%c0_13, %c0_14, %c0_15], %35 {strides = array<i32>} : memref<1x8x64xf32, #tpu.memory_space<vmem>>, vector<1x8x64xf32>,
    return
  }
  func.func @transform_0(%arg0: i32) -> (i32, i32, i32) {
    %c0_i32 = arith.constant 0 : i32
    %c0_i32_0 = arith.constant 0 : i32
    %c0_i32_1 = arith.constant 0 : i32
    return %arg0, %c0_i32, %c0_i32_0 : i32, i32, i32
  }
  func.func @transform_1(%arg0: i32) -> (i32, i32) {
    %c0_i32 = arith.constant 0 : i32
    %c0_i32_0 = arith.constant 0 : i32
    %c0_i32_1 = arith.constant 0 : i32
    return %c0_i32, %c0_i32_0 : i32, i32
  }
  func.func @transform_2(%arg0: i32) -> (i32, i32) {
    %c0_i32 = arith.constant 0 : i32
    %c0_i32_0 = arith.constant 0 : i32
    %c0_i32_1 = arith.constant 0 : i32
    return %c0_i32, %c0_i32_0 : i32, i32
  }
  func.func @transform_3(%arg0: i32) -> (i32, i32) {
    %c0_i32 = arith.constant 0 : i32
    %c0_i32_0 = arith.constant 0 : i32
    %c0_i32_1 = arith.constant 0 : i32
    return %c0_i32, %c0_i32_0 : i32, i32
  }
  func.func @transform_4(%arg0: i32) -> (i32, i32, i32) {
    %c0_i32 = arith.constant 0 : i32
    %c0_i32_0 = arith.constant 0 : i32
    %c0_i32_1 = arith.constant 0 : i32
    return %arg0, %c0_i32, %c0_i32_0 : i32, i32, i32
  }
}

module attributes {stable_mosaic.version = 11 : i64} {
  func.func @_gn_prelu_res_kernel(%arg0: i32, %arg1: memref<1x8x64xf32, #tpu.memory_space<vmem>>, %arg2: memref<1x8x64xf32, #tpu.memory_space<vmem>>, %arg3: memref<8x1xf32, #tpu.memory_space<vmem>>, %arg4: memref<8x1xf32, #tpu.memory_space<vmem>>, %arg5: memref<8x1xf32, #tpu.memory_space<vmem>>, %arg6: memref<1x8x64xf32, #tpu.memory_space<vmem>>) attributes {dimension_semantics = [#tpu.dimension_semantics<parallel>], iteration_bounds = array<i64: 2>, scalar_prefetch = 0 : i64, scratch_operands = 0 : i64, tpu.core_type = #tpu.core_type<tc>, window_params = [{transform_indices = @transform_0, window_bounds = array<i64: 1, 8, 64>}, {transform_indices = @transform_1, window_bounds = array<i64: 1, 8, 64>}, {pipeline_mode = #tpu.pipeline_mode<synchronous>, transform_indices = @transform_2, window_bounds = array<i64: 8, 1>}, {pipeline_mode = #tpu.pipeline_mode<synchronous>, transform_indices = @transform_3, window_bounds = array<i64: 8, 1>}, {pipeline_mode = #tpu.pipeline_mode<synchronous>, transform_indices = @transform_4, window_bounds = array<i64: 8, 1>}, {transform_indices = @transform_5, window_bounds = array<i64: 1, 8, 64>}]} {
    %c0 = arith.constant 0 : index
    %c0_0 = arith.constant 0 : index
    %c0_1 = arith.constant 0 : index
    %0 = vector.load %arg1[%c0, %c0_0, %c0_1] : memref<1x8x64xf32, #tpu.memory_space<vmem>>, vector<1x8x64xf32>
    %1 = vector.shape_cast %0 : vector<1x8x64xf32> to vector<8x64xf32>
    %2 = vector.shape_cast %1 : vector<8x64xf32> to vector<1x8x64xf32>
    %cst = arith.constant dense<0.000000e+00> : vector<1xf32>
    %3 = vector.multi_reduction <add>, %2, %cst [1, 2] : vector<1x8x64xf32> to vector<1xf32>
    %4 = vector.shape_cast %3 : vector<1xf32> to vector<1x1x1xf32>
    %5 = vector.extract %4[0, 0, 0] : f32 from vector<1x1x1xf32>
    %cst_2 = arith.constant 5.120000e+02 : f32
    %6 = arith.divf %5, %cst_2 : f32
    %7 = vector.broadcast %6 : f32 to vector<8x64xf32>
    %8 = arith.subf %1, %7 : vector<8x64xf32>
    %9 = arith.mulf %8, %8 : vector<8x64xf32>
    %10 = vector.shape_cast %9 : vector<8x64xf32> to vector<1x8x64xf32>
    %cst_3 = arith.constant dense<0.000000e+00> : vector<1xf32>
    %11 = vector.multi_reduction <add>, %10, %cst_3 [1, 2] : vector<1x8x64xf32> to vector<1xf32>
    %12 = vector.shape_cast %11 : vector<1xf32> to vector<1x1x1xf32>
    %13 = vector.extract %12[0, 0, 0] : f32 from vector<1x1x1xf32>
    %cst_4 = arith.constant 5.120000e+02 : f32
    %14 = arith.divf %13, %cst_4 : f32
    %15 = vector.broadcast %6 : f32 to vector<8x64xf32>
    %16 = arith.subf %1, %15 : vector<8x64xf32>
    %cst_5 = arith.constant 9.99999974E-6 : f32
    %17 = arith.addf %14, %cst_5 : f32
    %18 = math.rsqrt %17 : f32
    %19 = vector.broadcast %18 : f32 to vector<8x64xf32>
    %20 = arith.mulf %16, %19 : vector<8x64xf32>
    %c0_6 = arith.constant 0 : index
    %c0_7 = arith.constant 0 : index
    %21 = vector.load %arg3[%c0_6, %c0_7] : memref<8x1xf32, #tpu.memory_space<vmem>>, vector<8x1xf32>
    %22 = vector.broadcast %21 : vector<8x1xf32> to vector<8x64xf32>
    %23 = arith.mulf %20, %22 : vector<8x64xf32>
    %c0_8 = arith.constant 0 : index
    %c0_9 = arith.constant 0 : index
    %24 = vector.load %arg4[%c0_8, %c0_9] : memref<8x1xf32, #tpu.memory_space<vmem>>, vector<8x1xf32>
    %25 = vector.broadcast %24 : vector<8x1xf32> to vector<8x64xf32>
    %26 = arith.addf %23, %25 : vector<8x64xf32>
    %c0_10 = arith.constant 0 : index
    %c0_11 = arith.constant 0 : index
    %c0_12 = arith.constant 0 : index
    %27 = vector.load %arg2[%c0_10, %c0_11, %c0_12] : memref<1x8x64xf32, #tpu.memory_space<vmem>>, vector<1x8x64xf32>
    %28 = vector.shape_cast %27 : vector<1x8x64xf32> to vector<8x64xf32>
    %29 = arith.addf %26, %28 : vector<8x64xf32>
    %cst_13 = arith.constant 0.000000e+00 : f32
    %30 = vector.broadcast %cst_13 : f32 to vector<8x64xf32>
    %31 = arith.cmpf oge, %29, %30 : vector<8x64xf32>
    %c0_14 = arith.constant 0 : index
    %c0_15 = arith.constant 0 : index
    %32 = vector.load %arg5[%c0_14, %c0_15] : memref<8x1xf32, #tpu.memory_space<vmem>>, vector<8x1xf32>
    %33 = vector.broadcast %32 : vector<8x1xf32> to vector<8x64xf32>
    %34 = arith.mulf %33, %29 : vector<8x64xf32>
    %35 = arith.select %31, %29, %34 : vector<8x64xi1>, vector<8x64xf32>
    %c0_16 = arith.constant 0 : index
    %c0_17 = arith.constant 0 : index
    %c0_18 = arith.constant 0 : index
    %36 = vector.load %arg6[%c0_16, %c0_17, %c0_18] : memref<1x8x64xf32, #tpu.memory_space<vmem>>, vector<1x8x64xf32>
    %37 = vector.shape_cast %36 : vector<1x8x64xf32> to vector<8x64xf32>
    %38 = vector.shape_cast %35 : vector<8x64xf32> to vector<1x8x64xf32>
    tpu.vector_store %arg6[%c0_16, %c0_17, %c0_18], %38 {strides = array<i32>} : memref<1x8x64xf32, #tpu.memory_space<vmem>>, vector<1x8x64xf32>,
    return
  }
  func.func @transform_0(%arg0: i32) -> (i32, i32, i32) {
    %c0_i32 = arith.constant 0 : i32
    %c0_i32_0 = arith.constant 0 : i32
    %c0_i32_1 = arith.constant 0 : i32
    return %arg0, %c0_i32, %c0_i32_0 : i32, i32, i32
  }
  func.func @transform_1(%arg0: i32) -> (i32, i32, i32) {
    %c0_i32 = arith.constant 0 : i32
    %c0_i32_0 = arith.constant 0 : i32
    %c0_i32_1 = arith.constant 0 : i32
    return %arg0, %c0_i32, %c0_i32_0 : i32, i32, i32
  }
  func.func @transform_2(%arg0: i32) -> (i32, i32) {
    %c0_i32 = arith.constant 0 : i32
    %c0_i32_0 = arith.constant 0 : i32
    %c0_i32_1 = arith.constant 0 : i32
    return %c0_i32, %c0_i32_0 : i32, i32
  }
  func.func @transform_3(%arg0: i32) -> (i32, i32) {
    %c0_i32 = arith.constant 0 : i32
    %c0_i32_0 = arith.constant 0 : i32
    %c0_i32_1 = arith.constant 0 : i32
    return %c0_i32, %c0_i32_0 : i32, i32
  }
  func.func @transform_4(%arg0: i32) -> (i32, i32) {
    %c0_i32 = arith.constant 0 : i32
    %c0_i32_0 = arith.constant 0 : i32
    %c0_i32_1 = arith.constant 0 : i32
    return %c0_i32, %c0_i32_0 : i32, i32
  }
  func.func @transform_5(%arg0: i32) -> (i32, i32, i32) {
    %c0_i32 = arith.constant 0 : i32
    %c0_i32_0 = arith.constant 0 : i32
    %c0_i32_1 = arith.constant 0 : i32
    return %arg0, %c0_i32, %c0_i32_0 : i32, i32, i32
  }
}

module attributes {stable_mosaic.version = 11 : i64} {
  func.func @_conv_mm_kernel(%arg0: i32, %arg1: memref<16x8xbf16, #tpu.memory_space<vmem>>, %arg2: memref<8x32xbf16, #tpu.memory_space<vmem>>, %arg3: memref<16x32xf32, #tpu.memory_space<vmem>>) attributes {dimension_semantics = [#tpu.dimension_semantics<parallel>], iteration_bounds = array<i64: 1>, scalar_prefetch = 0 : i64, scratch_operands = 0 : i64, tpu.core_type = #tpu.core_type<tc>, window_params = [{pipeline_mode = #tpu.pipeline_mode<synchronous>, transform_indices = @transform_0, window_bounds = array<i64: 16, 8>}, {transform_indices = @transform_1, window_bounds = array<i64: 8, 32>}, {transform_indices = @transform_2, window_bounds = array<i64: 16, 32>}]} {
    %c0 = arith.constant 0 : index
    %c0_0 = arith.constant 0 : index
    %0 = vector.load %arg1[%c0, %c0_0] : memref<16x8xbf16, #tpu.memory_space<vmem>>, vector<16x8xbf16>
    %c0_1 = arith.constant 0 : index
    %c0_2 = arith.constant 0 : index
    %1 = vector.load %arg2[%c0_1, %c0_2] : memref<8x32xbf16, #tpu.memory_space<vmem>>, vector<8x32xbf16>
    %cst = arith.constant dense<0.000000e+00> : vector<16x32xf32>
    %2 = tpu.matmul %0, %1, %cst {dimension_numbers = #tpu.dot_dimension_numbers<[1], [0], [0], [1], [0, 0, 1, 1], [], []>} : vector<16x8xbf16>, vector<8x32xbf16>, vector<16x32xf32> -> vector<16x32xf32>
    %c0_3 = arith.constant 0 : index
    %c0_4 = arith.constant 0 : index
    %3 = vector.load %arg3[%c0_3, %c0_4] : memref<16x32xf32, #tpu.memory_space<vmem>>, vector<16x32xf32>
    tpu.vector_store %arg3[%c0_3, %c0_4], %2 {strides = array<i32>} : memref<16x32xf32, #tpu.memory_space<vmem>>, vector<16x32xf32>,
    return
  }
  func.func @transform_0(%arg0: i32) -> (i32, i32) {
    %c0_i32 = arith.constant 0 : i32
    %c0_i32_0 = arith.constant 0 : i32
    %c0_i32_1 = arith.constant 0 : i32
    return %c0_i32, %c0_i32_0 : i32, i32
  }
  func.func @transform_1(%arg0: i32) -> (i32, i32) {
    %c0_i32 = arith.constant 0 : i32
    %c0_i32_0 = arith.constant 0 : i32
    return %c0_i32, %arg0 : i32, i32
  }
  func.func @transform_2(%arg0: i32) -> (i32, i32) {
    %c0_i32 = arith.constant 0 : i32
    %c0_i32_0 = arith.constant 0 : i32
    return %c0_i32, %arg0 : i32, i32
  }
}

module attributes {stable_mosaic.version = 11 : i64} {
  func.func @_conv_mm_kernel(%arg0: i32, %arg1: memref<16x144xbf16, #tpu.memory_space<vmem>>, %arg2: memref<144x32xbf16, #tpu.memory_space<vmem>>, %arg3: memref<16x32xf32, #tpu.memory_space<vmem>>) attributes {dimension_semantics = [#tpu.dimension_semantics<parallel>], iteration_bounds = array<i64: 1>, scalar_prefetch = 0 : i64, scratch_operands = 0 : i64, tpu.core_type = #tpu.core_type<tc>, window_params = [{pipeline_mode = #tpu.pipeline_mode<synchronous>, transform_indices = @transform_0, window_bounds = array<i64: 16, 144>}, {transform_indices = @transform_1, window_bounds = array<i64: 144, 32>}, {transform_indices = @transform_2, window_bounds = array<i64: 16, 32>}]} {
    %c0 = arith.constant 0 : index
    %c0_0 = arith.constant 0 : index
    %0 = vector.load %arg1[%c0, %c0_0] : memref<16x144xbf16, #tpu.memory_space<vmem>>, vector<16x144xbf16>
    %c0_1 = arith.constant 0 : index
    %c0_2 = arith.constant 0 : index
    %1 = vector.load %arg2[%c0_1, %c0_2] : memref<144x32xbf16, #tpu.memory_space<vmem>>, vector<144x32xbf16>
    %cst = arith.constant dense<0.000000e+00> : vector<16x32xf32>
    %2 = tpu.matmul %0, %1, %cst {dimension_numbers = #tpu.dot_dimension_numbers<[1], [0], [0], [1], [0, 0, 1, 1], [], []>} : vector<16x144xbf16>, vector<144x32xbf16>, vector<16x32xf32> -> vector<16x32xf32>
    %c0_3 = arith.constant 0 : index
    %c0_4 = arith.constant 0 : index
    %3 = vector.load %arg3[%c0_3, %c0_4] : memref<16x32xf32, #tpu.memory_space<vmem>>, vector<16x32xf32>
    tpu.vector_store %arg3[%c0_3, %c0_4], %2 {strides = array<i32>} : memref<16x32xf32, #tpu.memory_space<vmem>>, vector<16x32xf32>,
    return
  }
  func.func @transform_0(%arg0: i32) -> (i32, i32) {
    %c0_i32 = arith.constant 0 : i32
    %c0_i32_0 = arith.constant 0 : i32
    %c0_i32_1 = arith.constant 0 : i32
    return %c0_i32, %c0_i32_0 : i32, i32
  }
  func.func @transform_1(%arg0: i32) -> (i32, i32) {
    %c0_i32 = arith.constant 0 : i32
    %c0_i32_0 = arith.constant 0 : i32
    return %c0_i32, %arg0 : i32, i32
  }
  func.func @transform_2(%arg0: i32) -> (i32, i32) {
    %c0_i32 = arith.constant 0 : i32
    %c0_i32_0 = arith.constant 0 : i32
    return %c0_i32, %arg0 : i32, i32
  }
}

module attributes {stable_mosaic.version = 11 : i64} {
  func.func @_gn_prelu_kernel(%arg0: i32, %arg1: memref<1x16x16xf32, #tpu.memory_space<vmem>>, %arg2: memref<16x1xf32, #tpu.memory_space<vmem>>, %arg3: memref<16x1xf32, #tpu.memory_space<vmem>>, %arg4: memref<16x1xf32, #tpu.memory_space<vmem>>, %arg5: memref<1x16x16xf32, #tpu.memory_space<vmem>>) attributes {dimension_semantics = [#tpu.dimension_semantics<parallel>], iteration_bounds = array<i64: 2>, scalar_prefetch = 0 : i64, scratch_operands = 0 : i64, tpu.core_type = #tpu.core_type<tc>, window_params = [{transform_indices = @transform_0, window_bounds = array<i64: 1, 16, 16>}, {pipeline_mode = #tpu.pipeline_mode<synchronous>, transform_indices = @transform_1, window_bounds = array<i64: 16, 1>}, {pipeline_mode = #tpu.pipeline_mode<synchronous>, transform_indices = @transform_2, window_bounds = array<i64: 16, 1>}, {pipeline_mode = #tpu.pipeline_mode<synchronous>, transform_indices = @transform_3, window_bounds = array<i64: 16, 1>}, {transform_indices = @transform_4, window_bounds = array<i64: 1, 16, 16>}]} {
    %c0 = arith.constant 0 : index
    %c0_0 = arith.constant 0 : index
    %c0_1 = arith.constant 0 : index
    %0 = vector.load %arg1[%c0, %c0_0, %c0_1] : memref<1x16x16xf32, #tpu.memory_space<vmem>>, vector<1x16x16xf32>
    %1 = vector.shape_cast %0 : vector<1x16x16xf32> to vector<16x16xf32>
    %2 = vector.shape_cast %1 : vector<16x16xf32> to vector<1x16x16xf32>
    %cst = arith.constant dense<0.000000e+00> : vector<1xf32>
    %3 = vector.multi_reduction <add>, %2, %cst [1, 2] : vector<1x16x16xf32> to vector<1xf32>
    %4 = vector.shape_cast %3 : vector<1xf32> to vector<1x1x1xf32>
    %5 = vector.extract %4[0, 0, 0] : f32 from vector<1x1x1xf32>
    %cst_2 = arith.constant 2.560000e+02 : f32
    %6 = arith.divf %5, %cst_2 : f32
    %7 = vector.broadcast %6 : f32 to vector<16x16xf32>
    %8 = arith.subf %1, %7 : vector<16x16xf32>
    %9 = arith.mulf %8, %8 : vector<16x16xf32>
    %10 = vector.shape_cast %9 : vector<16x16xf32> to vector<1x16x16xf32>
    %cst_3 = arith.constant dense<0.000000e+00> : vector<1xf32>
    %11 = vector.multi_reduction <add>, %10, %cst_3 [1, 2] : vector<1x16x16xf32> to vector<1xf32>
    %12 = vector.shape_cast %11 : vector<1xf32> to vector<1x1x1xf32>
    %13 = vector.extract %12[0, 0, 0] : f32 from vector<1x1x1xf32>
    %cst_4 = arith.constant 2.560000e+02 : f32
    %14 = arith.divf %13, %cst_4 : f32
    %15 = vector.broadcast %6 : f32 to vector<16x16xf32>
    %16 = arith.subf %1, %15 : vector<16x16xf32>
    %cst_5 = arith.constant 9.99999974E-6 : f32
    %17 = arith.addf %14, %cst_5 : f32
    %18 = math.rsqrt %17 : f32
    %19 = vector.broadcast %18 : f32 to vector<16x16xf32>
    %20 = arith.mulf %16, %19 : vector<16x16xf32>
    %c0_6 = arith.constant 0 : index
    %c0_7 = arith.constant 0 : index
    %21 = vector.load %arg2[%c0_6, %c0_7] : memref<16x1xf32, #tpu.memory_space<vmem>>, vector<16x1xf32>
    %22 = vector.broadcast %21 : vector<16x1xf32> to vector<16x16xf32>
    %23 = arith.mulf %20, %22 : vector<16x16xf32>
    %c0_8 = arith.constant 0 : index
    %c0_9 = arith.constant 0 : index
    %24 = vector.load %arg3[%c0_8, %c0_9] : memref<16x1xf32, #tpu.memory_space<vmem>>, vector<16x1xf32>
    %25 = vector.broadcast %24 : vector<16x1xf32> to vector<16x16xf32>
    %26 = arith.addf %23, %25 : vector<16x16xf32>
    %cst_10 = arith.constant 0.000000e+00 : f32
    %27 = vector.broadcast %cst_10 : f32 to vector<16x16xf32>
    %28 = arith.cmpf oge, %26, %27 : vector<16x16xf32>
    %c0_11 = arith.constant 0 : index
    %c0_12 = arith.constant 0 : index
    %29 = vector.load %arg4[%c0_11, %c0_12] : memref<16x1xf32, #tpu.memory_space<vmem>>, vector<16x1xf32>
    %30 = vector.broadcast %29 : vector<16x1xf32> to vector<16x16xf32>
    %31 = arith.mulf %30, %26 : vector<16x16xf32>
    %32 = arith.select %28, %26, %31 : vector<16x16xi1>, vector<16x16xf32>
    %c0_13 = arith.constant 0 : index
    %c0_14 = arith.constant 0 : index
    %c0_15 = arith.constant 0 : index
    %33 = vector.load %arg5[%c0_13, %c0_14, %c0_15] : memref<1x16x16xf32, #tpu.memory_space<vmem>>, vector<1x16x16xf32>
    %34 = vector.shape_cast %33 : vector<1x16x16xf32> to vector<16x16xf32>
    %35 = vector.shape_cast %32 : vector<16x16xf32> to vector<1x16x16xf32>
    tpu.vector_store %arg5[%c0_13, %c0_14, %c0_15], %35 {strides = array<i32>} : memref<1x16x16xf32, #tpu.memory_space<vmem>>, vector<1x16x16xf32>,
    return
  }
  func.func @transform_0(%arg0: i32) -> (i32, i32, i32) {
    %c0_i32 = arith.constant 0 : i32
    %c0_i32_0 = arith.constant 0 : i32
    %c0_i32_1 = arith.constant 0 : i32
    return %arg0, %c0_i32, %c0_i32_0 : i32, i32, i32
  }
  func.func @transform_1(%arg0: i32) -> (i32, i32) {
    %c0_i32 = arith.constant 0 : i32
    %c0_i32_0 = arith.constant 0 : i32
    %c0_i32_1 = arith.constant 0 : i32
    return %c0_i32, %c0_i32_0 : i32, i32
  }
  func.func @transform_2(%arg0: i32) -> (i32, i32) {
    %c0_i32 = arith.constant 0 : i32
    %c0_i32_0 = arith.constant 0 : i32
    %c0_i32_1 = arith.constant 0 : i32
    return %c0_i32, %c0_i32_0 : i32, i32
  }
  func.func @transform_3(%arg0: i32) -> (i32, i32) {
    %c0_i32 = arith.constant 0 : i32
    %c0_i32_0 = arith.constant 0 : i32
    %c0_i32_1 = arith.constant 0 : i32
    return %c0_i32, %c0_i32_0 : i32, i32
  }
  func.func @transform_4(%arg0: i32) -> (i32, i32, i32) {
    %c0_i32 = arith.constant 0 : i32
    %c0_i32_0 = arith.constant 0 : i32
    %c0_i32_1 = arith.constant 0 : i32
    return %arg0, %c0_i32, %c0_i32_0 : i32, i32, i32
  }
}

module attributes {stable_mosaic.version = 11 : i64} {
  func.func @_gn_prelu_res_kernel(%arg0: i32, %arg1: memref<1x16x16xf32, #tpu.memory_space<vmem>>, %arg2: memref<1x16x16xf32, #tpu.memory_space<vmem>>, %arg3: memref<16x1xf32, #tpu.memory_space<vmem>>, %arg4: memref<16x1xf32, #tpu.memory_space<vmem>>, %arg5: memref<16x1xf32, #tpu.memory_space<vmem>>, %arg6: memref<1x16x16xf32, #tpu.memory_space<vmem>>) attributes {dimension_semantics = [#tpu.dimension_semantics<parallel>], iteration_bounds = array<i64: 2>, scalar_prefetch = 0 : i64, scratch_operands = 0 : i64, tpu.core_type = #tpu.core_type<tc>, window_params = [{transform_indices = @transform_0, window_bounds = array<i64: 1, 16, 16>}, {transform_indices = @transform_1, window_bounds = array<i64: 1, 16, 16>}, {pipeline_mode = #tpu.pipeline_mode<synchronous>, transform_indices = @transform_2, window_bounds = array<i64: 16, 1>}, {pipeline_mode = #tpu.pipeline_mode<synchronous>, transform_indices = @transform_3, window_bounds = array<i64: 16, 1>}, {pipeline_mode = #tpu.pipeline_mode<synchronous>, transform_indices = @transform_4, window_bounds = array<i64: 16, 1>}, {transform_indices = @transform_5, window_bounds = array<i64: 1, 16, 16>}]} {
    %c0 = arith.constant 0 : index
    %c0_0 = arith.constant 0 : index
    %c0_1 = arith.constant 0 : index
    %0 = vector.load %arg1[%c0, %c0_0, %c0_1] : memref<1x16x16xf32, #tpu.memory_space<vmem>>, vector<1x16x16xf32>
    %1 = vector.shape_cast %0 : vector<1x16x16xf32> to vector<16x16xf32>
    %2 = vector.shape_cast %1 : vector<16x16xf32> to vector<1x16x16xf32>
    %cst = arith.constant dense<0.000000e+00> : vector<1xf32>
    %3 = vector.multi_reduction <add>, %2, %cst [1, 2] : vector<1x16x16xf32> to vector<1xf32>
    %4 = vector.shape_cast %3 : vector<1xf32> to vector<1x1x1xf32>
    %5 = vector.extract %4[0, 0, 0] : f32 from vector<1x1x1xf32>
    %cst_2 = arith.constant 2.560000e+02 : f32
    %6 = arith.divf %5, %cst_2 : f32
    %7 = vector.broadcast %6 : f32 to vector<16x16xf32>
    %8 = arith.subf %1, %7 : vector<16x16xf32>
    %9 = arith.mulf %8, %8 : vector<16x16xf32>
    %10 = vector.shape_cast %9 : vector<16x16xf32> to vector<1x16x16xf32>
    %cst_3 = arith.constant dense<0.000000e+00> : vector<1xf32>
    %11 = vector.multi_reduction <add>, %10, %cst_3 [1, 2] : vector<1x16x16xf32> to vector<1xf32>
    %12 = vector.shape_cast %11 : vector<1xf32> to vector<1x1x1xf32>
    %13 = vector.extract %12[0, 0, 0] : f32 from vector<1x1x1xf32>
    %cst_4 = arith.constant 2.560000e+02 : f32
    %14 = arith.divf %13, %cst_4 : f32
    %15 = vector.broadcast %6 : f32 to vector<16x16xf32>
    %16 = arith.subf %1, %15 : vector<16x16xf32>
    %cst_5 = arith.constant 9.99999974E-6 : f32
    %17 = arith.addf %14, %cst_5 : f32
    %18 = math.rsqrt %17 : f32
    %19 = vector.broadcast %18 : f32 to vector<16x16xf32>
    %20 = arith.mulf %16, %19 : vector<16x16xf32>
    %c0_6 = arith.constant 0 : index
    %c0_7 = arith.constant 0 : index
    %21 = vector.load %arg3[%c0_6, %c0_7] : memref<16x1xf32, #tpu.memory_space<vmem>>, vector<16x1xf32>
    %22 = vector.broadcast %21 : vector<16x1xf32> to vector<16x16xf32>
    %23 = arith.mulf %20, %22 : vector<16x16xf32>
    %c0_8 = arith.constant 0 : index
    %c0_9 = arith.constant 0 : index
    %24 = vector.load %arg4[%c0_8, %c0_9] : memref<16x1xf32, #tpu.memory_space<vmem>>, vector<16x1xf32>
    %25 = vector.broadcast %24 : vector<16x1xf32> to vector<16x16xf32>
    %26 = arith.addf %23, %25 : vector<16x16xf32>
    %c0_10 = arith.constant 0 : index
    %c0_11 = arith.constant 0 : index
    %c0_12 = arith.constant 0 : index
    %27 = vector.load %arg2[%c0_10, %c0_11, %c0_12] : memref<1x16x16xf32, #tpu.memory_space<vmem>>, vector<1x16x16xf32>
    %28 = vector.shape_cast %27 : vector<1x16x16xf32> to vector<16x16xf32>
    %29 = arith.addf %26, %28 : vector<16x16xf32>
    %cst_13 = arith.constant 0.000000e+00 : f32
    %30 = vector.broadcast %cst_13 : f32 to vector<16x16xf32>
    %31 = arith.cmpf oge, %29, %30 : vector<16x16xf32>
    %c0_14 = arith.constant 0 : index
    %c0_15 = arith.constant 0 : index
    %32 = vector.load %arg5[%c0_14, %c0_15] : memref<16x1xf32, #tpu.memory_space<vmem>>, vector<16x1xf32>
    %33 = vector.broadcast %32 : vector<16x1xf32> to vector<16x16xf32>
    %34 = arith.mulf %33, %29 : vector<16x16xf32>
    %35 = arith.select %31, %29, %34 : vector<16x16xi1>, vector<16x16xf32>
    %c0_16 = arith.constant 0 : index
    %c0_17 = arith.constant 0 : index
    %c0_18 = arith.constant 0 : index
    %36 = vector.load %arg6[%c0_16, %c0_17, %c0_18] : memref<1x16x16xf32, #tpu.memory_space<vmem>>, vector<1x16x16xf32>
    %37 = vector.shape_cast %36 : vector<1x16x16xf32> to vector<16x16xf32>
    %38 = vector.shape_cast %35 : vector<16x16xf32> to vector<1x16x16xf32>
    tpu.vector_store %arg6[%c0_16, %c0_17, %c0_18], %38 {strides = array<i32>} : memref<1x16x16xf32, #tpu.memory_space<vmem>>, vector<1x16x16xf32>,
    return
  }
  func.func @transform_0(%arg0: i32) -> (i32, i32, i32) {
    %c0_i32 = arith.constant 0 : i32
    %c0_i32_0 = arith.constant 0 : i32
    %c0_i32_1 = arith.constant 0 : i32
    return %arg0, %c0_i32, %c0_i32_0 : i32, i32, i32
  }
  func.func @transform_1(%arg0: i32) -> (i32, i32, i32) {
    %c0_i32 = arith.constant 0 : i32
    %c0_i32_0 = arith.constant 0 : i32
    %c0_i32_1 = arith.constant 0 : i32
    return %arg0, %c0_i32, %c0_i32_0 : i32, i32, i32
  }
  func.func @transform_2(%arg0: i32) -> (i32, i32) {
    %c0_i32 = arith.constant 0 : i32
    %c0_i32_0 = arith.constant 0 : i32
    %c0_i32_1 = arith.constant 0 : i32
    return %c0_i32, %c0_i32_0 : i32, i32
  }
  func.func @transform_3(%arg0: i32) -> (i32, i32) {
    %c0_i32 = arith.constant 0 : i32
    %c0_i32_0 = arith.constant 0 : i32
    %c0_i32_1 = arith.constant 0 : i32
    return %c0_i32, %c0_i32_0 : i32, i32
  }
  func.func @transform_4(%arg0: i32) -> (i32, i32) {
    %c0_i32 = arith.constant 0 : i32
    %c0_i32_0 = arith.constant 0 : i32
    %c0_i32_1 = arith.constant 0 : i32
    return %c0_i32, %c0_i32_0 : i32, i32
  }
  func.func @transform_5(%arg0: i32) -> (i32, i32, i32) {
    %c0_i32 = arith.constant 0 : i32
    %c0_i32_0 = arith.constant 0 : i32
    %c0_i32_1 = arith.constant 0 : i32
    return %arg0, %c0_i32, %c0_i32_0 : i32, i32, i32
  }
}

module attributes {stable_mosaic.version = 11 : i64} {
  func.func @_conv_mm_kernel(%arg0: i32, %arg1: memref<32x16xbf16, #tpu.memory_space<vmem>>, %arg2: memref<16x8xbf16, #tpu.memory_space<vmem>>, %arg3: memref<32x8xf32, #tpu.memory_space<vmem>>) attributes {dimension_semantics = [#tpu.dimension_semantics<parallel>], iteration_bounds = array<i64: 1>, scalar_prefetch = 0 : i64, scratch_operands = 0 : i64, tpu.core_type = #tpu.core_type<tc>, window_params = [{pipeline_mode = #tpu.pipeline_mode<synchronous>, transform_indices = @transform_0, window_bounds = array<i64: 32, 16>}, {transform_indices = @transform_1, window_bounds = array<i64: 16, 8>}, {transform_indices = @transform_2, window_bounds = array<i64: 32, 8>}]} {
    %c0 = arith.constant 0 : index
    %c0_0 = arith.constant 0 : index
    %0 = vector.load %arg1[%c0, %c0_0] : memref<32x16xbf16, #tpu.memory_space<vmem>>, vector<32x16xbf16>
    %c0_1 = arith.constant 0 : index
    %c0_2 = arith.constant 0 : index
    %1 = vector.load %arg2[%c0_1, %c0_2] : memref<16x8xbf16, #tpu.memory_space<vmem>>, vector<16x8xbf16>
    %cst = arith.constant dense<0.000000e+00> : vector<32x8xf32>
    %2 = tpu.matmul %0, %1, %cst {dimension_numbers = #tpu.dot_dimension_numbers<[1], [0], [0], [1], [0, 0, 1, 1], [], []>} : vector<32x16xbf16>, vector<16x8xbf16>, vector<32x8xf32> -> vector<32x8xf32>
    %c0_3 = arith.constant 0 : index
    %c0_4 = arith.constant 0 : index
    %3 = vector.load %arg3[%c0_3, %c0_4] : memref<32x8xf32, #tpu.memory_space<vmem>>, vector<32x8xf32>
    tpu.vector_store %arg3[%c0_3, %c0_4], %2 {strides = array<i32>} : memref<32x8xf32, #tpu.memory_space<vmem>>, vector<32x8xf32>,
    return
  }
  func.func @transform_0(%arg0: i32) -> (i32, i32) {
    %c0_i32 = arith.constant 0 : i32
    %c0_i32_0 = arith.constant 0 : i32
    %c0_i32_1 = arith.constant 0 : i32
    return %c0_i32, %c0_i32_0 : i32, i32
  }
  func.func @transform_1(%arg0: i32) -> (i32, i32) {
    %c0_i32 = arith.constant 0 : i32
    %c0_i32_0 = arith.constant 0 : i32
    return %c0_i32, %arg0 : i32, i32
  }
  func.func @transform_2(%arg0: i32) -> (i32, i32) {
    %c0_i32 = arith.constant 0 : i32
    %c0_i32_0 = arith.constant 0 : i32
    return %c0_i32, %arg0 : i32, i32
  }
}

module attributes {stable_mosaic.version = 11 : i64} {
  func.func @_conv_mm_kernel(%arg0: i32, %arg1: memref<32x288xbf16, #tpu.memory_space<vmem>>, %arg2: memref<288x8xbf16, #tpu.memory_space<vmem>>, %arg3: memref<32x8xf32, #tpu.memory_space<vmem>>) attributes {dimension_semantics = [#tpu.dimension_semantics<parallel>], iteration_bounds = array<i64: 1>, scalar_prefetch = 0 : i64, scratch_operands = 0 : i64, tpu.core_type = #tpu.core_type<tc>, window_params = [{pipeline_mode = #tpu.pipeline_mode<synchronous>, transform_indices = @transform_0, window_bounds = array<i64: 32, 288>}, {transform_indices = @transform_1, window_bounds = array<i64: 288, 8>}, {transform_indices = @transform_2, window_bounds = array<i64: 32, 8>}]} {
    %c0 = arith.constant 0 : index
    %c0_0 = arith.constant 0 : index
    %0 = vector.load %arg1[%c0, %c0_0] : memref<32x288xbf16, #tpu.memory_space<vmem>>, vector<32x288xbf16>
    %c0_1 = arith.constant 0 : index
    %c0_2 = arith.constant 0 : index
    %1 = vector.load %arg2[%c0_1, %c0_2] : memref<288x8xbf16, #tpu.memory_space<vmem>>, vector<288x8xbf16>
    %cst = arith.constant dense<0.000000e+00> : vector<32x8xf32>
    %2 = tpu.matmul %0, %1, %cst {dimension_numbers = #tpu.dot_dimension_numbers<[1], [0], [0], [1], [0, 0, 1, 1], [], []>} : vector<32x288xbf16>, vector<288x8xbf16>, vector<32x8xf32> -> vector<32x8xf32>
    %c0_3 = arith.constant 0 : index
    %c0_4 = arith.constant 0 : index
    %3 = vector.load %arg3[%c0_3, %c0_4] : memref<32x8xf32, #tpu.memory_space<vmem>>, vector<32x8xf32>
    tpu.vector_store %arg3[%c0_3, %c0_4], %2 {strides = array<i32>} : memref<32x8xf32, #tpu.memory_space<vmem>>, vector<32x8xf32>,
    return
  }
  func.func @transform_0(%arg0: i32) -> (i32, i32) {
    %c0_i32 = arith.constant 0 : i32
    %c0_i32_0 = arith.constant 0 : i32
    %c0_i32_1 = arith.constant 0 : i32
    return %c0_i32, %c0_i32_0 : i32, i32
  }
  func.func @transform_1(%arg0: i32) -> (i32, i32) {
    %c0_i32 = arith.constant 0 : i32
    %c0_i32_0 = arith.constant 0 : i32
    return %c0_i32, %arg0 : i32, i32
  }
  func.func @transform_2(%arg0: i32) -> (i32, i32) {
    %c0_i32 = arith.constant 0 : i32
    %c0_i32_0 = arith.constant 0 : i32
    return %c0_i32, %arg0 : i32, i32
  }
}

module attributes {stable_mosaic.version = 11 : i64} {
  func.func @_gn_prelu_kernel(%arg0: i32, %arg1: memref<1x32x4xf32, #tpu.memory_space<vmem>>, %arg2: memref<32x1xf32, #tpu.memory_space<vmem>>, %arg3: memref<32x1xf32, #tpu.memory_space<vmem>>, %arg4: memref<32x1xf32, #tpu.memory_space<vmem>>, %arg5: memref<1x32x4xf32, #tpu.memory_space<vmem>>) attributes {dimension_semantics = [#tpu.dimension_semantics<parallel>], iteration_bounds = array<i64: 2>, scalar_prefetch = 0 : i64, scratch_operands = 0 : i64, tpu.core_type = #tpu.core_type<tc>, window_params = [{transform_indices = @transform_0, window_bounds = array<i64: 1, 32, 4>}, {pipeline_mode = #tpu.pipeline_mode<synchronous>, transform_indices = @transform_1, window_bounds = array<i64: 32, 1>}, {pipeline_mode = #tpu.pipeline_mode<synchronous>, transform_indices = @transform_2, window_bounds = array<i64: 32, 1>}, {pipeline_mode = #tpu.pipeline_mode<synchronous>, transform_indices = @transform_3, window_bounds = array<i64: 32, 1>}, {transform_indices = @transform_4, window_bounds = array<i64: 1, 32, 4>}]} {
    %c0 = arith.constant 0 : index
    %c0_0 = arith.constant 0 : index
    %c0_1 = arith.constant 0 : index
    %0 = vector.load %arg1[%c0, %c0_0, %c0_1] : memref<1x32x4xf32, #tpu.memory_space<vmem>>, vector<1x32x4xf32>
    %1 = vector.shape_cast %0 : vector<1x32x4xf32> to vector<32x4xf32>
    %2 = vector.shape_cast %1 : vector<32x4xf32> to vector<1x32x4xf32>
    %cst = arith.constant dense<0.000000e+00> : vector<1xf32>
    %3 = vector.multi_reduction <add>, %2, %cst [1, 2] : vector<1x32x4xf32> to vector<1xf32>
    %4 = vector.shape_cast %3 : vector<1xf32> to vector<1x1x1xf32>
    %5 = vector.extract %4[0, 0, 0] : f32 from vector<1x1x1xf32>
    %cst_2 = arith.constant 1.280000e+02 : f32
    %6 = arith.divf %5, %cst_2 : f32
    %7 = vector.broadcast %6 : f32 to vector<32x4xf32>
    %8 = arith.subf %1, %7 : vector<32x4xf32>
    %9 = arith.mulf %8, %8 : vector<32x4xf32>
    %10 = vector.shape_cast %9 : vector<32x4xf32> to vector<1x32x4xf32>
    %cst_3 = arith.constant dense<0.000000e+00> : vector<1xf32>
    %11 = vector.multi_reduction <add>, %10, %cst_3 [1, 2] : vector<1x32x4xf32> to vector<1xf32>
    %12 = vector.shape_cast %11 : vector<1xf32> to vector<1x1x1xf32>
    %13 = vector.extract %12[0, 0, 0] : f32 from vector<1x1x1xf32>
    %cst_4 = arith.constant 1.280000e+02 : f32
    %14 = arith.divf %13, %cst_4 : f32
    %15 = vector.broadcast %6 : f32 to vector<32x4xf32>
    %16 = arith.subf %1, %15 : vector<32x4xf32>
    %cst_5 = arith.constant 9.99999974E-6 : f32
    %17 = arith.addf %14, %cst_5 : f32
    %18 = math.rsqrt %17 : f32
    %19 = vector.broadcast %18 : f32 to vector<32x4xf32>
    %20 = arith.mulf %16, %19 : vector<32x4xf32>
    %c0_6 = arith.constant 0 : index
    %c0_7 = arith.constant 0 : index
    %21 = vector.load %arg2[%c0_6, %c0_7] : memref<32x1xf32, #tpu.memory_space<vmem>>, vector<32x1xf32>
    %22 = vector.broadcast %21 : vector<32x1xf32> to vector<32x4xf32>
    %23 = arith.mulf %20, %22 : vector<32x4xf32>
    %c0_8 = arith.constant 0 : index
    %c0_9 = arith.constant 0 : index
    %24 = vector.load %arg3[%c0_8, %c0_9] : memref<32x1xf32, #tpu.memory_space<vmem>>, vector<32x1xf32>
    %25 = vector.broadcast %24 : vector<32x1xf32> to vector<32x4xf32>
    %26 = arith.addf %23, %25 : vector<32x4xf32>
    %cst_10 = arith.constant 0.000000e+00 : f32
    %27 = vector.broadcast %cst_10 : f32 to vector<32x4xf32>
    %28 = arith.cmpf oge, %26, %27 : vector<32x4xf32>
    %c0_11 = arith.constant 0 : index
    %c0_12 = arith.constant 0 : index
    %29 = vector.load %arg4[%c0_11, %c0_12] : memref<32x1xf32, #tpu.memory_space<vmem>>, vector<32x1xf32>
    %30 = vector.broadcast %29 : vector<32x1xf32> to vector<32x4xf32>
    %31 = arith.mulf %30, %26 : vector<32x4xf32>
    %32 = arith.select %28, %26, %31 : vector<32x4xi1>, vector<32x4xf32>
    %c0_13 = arith.constant 0 : index
    %c0_14 = arith.constant 0 : index
    %c0_15 = arith.constant 0 : index
    %33 = vector.load %arg5[%c0_13, %c0_14, %c0_15] : memref<1x32x4xf32, #tpu.memory_space<vmem>>, vector<1x32x4xf32>
    %34 = vector.shape_cast %33 : vector<1x32x4xf32> to vector<32x4xf32>
    %35 = vector.shape_cast %32 : vector<32x4xf32> to vector<1x32x4xf32>
    tpu.vector_store %arg5[%c0_13, %c0_14, %c0_15], %35 {strides = array<i32>} : memref<1x32x4xf32, #tpu.memory_space<vmem>>, vector<1x32x4xf32>,
    return
  }
  func.func @transform_0(%arg0: i32) -> (i32, i32, i32) {
    %c0_i32 = arith.constant 0 : i32
    %c0_i32_0 = arith.constant 0 : i32
    %c0_i32_1 = arith.constant 0 : i32
    return %arg0, %c0_i32, %c0_i32_0 : i32, i32, i32
  }
  func.func @transform_1(%arg0: i32) -> (i32, i32) {
    %c0_i32 = arith.constant 0 : i32
    %c0_i32_0 = arith.constant 0 : i32
    %c0_i32_1 = arith.constant 0 : i32
    return %c0_i32, %c0_i32_0 : i32, i32
  }
  func.func @transform_2(%arg0: i32) -> (i32, i32) {
    %c0_i32 = arith.constant 0 : i32
    %c0_i32_0 = arith.constant 0 : i32
    %c0_i32_1 = arith.constant 0 : i32
    return %c0_i32, %c0_i32_0 : i32, i32
  }
  func.func @transform_3(%arg0: i32) -> (i32, i32) {
    %c0_i32 = arith.constant 0 : i32
    %c0_i32_0 = arith.constant 0 : i32
    %c0_i32_1 = arith.constant 0 : i32
    return %c0_i32, %c0_i32_0 : i32, i32
  }
  func.func @transform_4(%arg0: i32) -> (i32, i32, i32) {
    %c0_i32 = arith.constant 0 : i32
    %c0_i32_0 = arith.constant 0 : i32
    %c0_i32_1 = arith.constant 0 : i32
    return %arg0, %c0_i32, %c0_i32_0 : i32, i32, i32
  }
}

module attributes {stable_mosaic.version = 11 : i64} {
  func.func @_gn_prelu_res_kernel(%arg0: i32, %arg1: memref<1x32x4xf32, #tpu.memory_space<vmem>>, %arg2: memref<1x32x4xf32, #tpu.memory_space<vmem>>, %arg3: memref<32x1xf32, #tpu.memory_space<vmem>>, %arg4: memref<32x1xf32, #tpu.memory_space<vmem>>, %arg5: memref<32x1xf32, #tpu.memory_space<vmem>>, %arg6: memref<1x32x4xf32, #tpu.memory_space<vmem>>) attributes {dimension_semantics = [#tpu.dimension_semantics<parallel>], iteration_bounds = array<i64: 2>, scalar_prefetch = 0 : i64, scratch_operands = 0 : i64, tpu.core_type = #tpu.core_type<tc>, window_params = [{transform_indices = @transform_0, window_bounds = array<i64: 1, 32, 4>}, {transform_indices = @transform_1, window_bounds = array<i64: 1, 32, 4>}, {pipeline_mode = #tpu.pipeline_mode<synchronous>, transform_indices = @transform_2, window_bounds = array<i64: 32, 1>}, {pipeline_mode = #tpu.pipeline_mode<synchronous>, transform_indices = @transform_3, window_bounds = array<i64: 32, 1>}, {pipeline_mode = #tpu.pipeline_mode<synchronous>, transform_indices = @transform_4, window_bounds = array<i64: 32, 1>}, {transform_indices = @transform_5, window_bounds = array<i64: 1, 32, 4>}]} {
    %c0 = arith.constant 0 : index
    %c0_0 = arith.constant 0 : index
    %c0_1 = arith.constant 0 : index
    %0 = vector.load %arg1[%c0, %c0_0, %c0_1] : memref<1x32x4xf32, #tpu.memory_space<vmem>>, vector<1x32x4xf32>
    %1 = vector.shape_cast %0 : vector<1x32x4xf32> to vector<32x4xf32>
    %2 = vector.shape_cast %1 : vector<32x4xf32> to vector<1x32x4xf32>
    %cst = arith.constant dense<0.000000e+00> : vector<1xf32>
    %3 = vector.multi_reduction <add>, %2, %cst [1, 2] : vector<1x32x4xf32> to vector<1xf32>
    %4 = vector.shape_cast %3 : vector<1xf32> to vector<1x1x1xf32>
    %5 = vector.extract %4[0, 0, 0] : f32 from vector<1x1x1xf32>
    %cst_2 = arith.constant 1.280000e+02 : f32
    %6 = arith.divf %5, %cst_2 : f32
    %7 = vector.broadcast %6 : f32 to vector<32x4xf32>
    %8 = arith.subf %1, %7 : vector<32x4xf32>
    %9 = arith.mulf %8, %8 : vector<32x4xf32>
    %10 = vector.shape_cast %9 : vector<32x4xf32> to vector<1x32x4xf32>
    %cst_3 = arith.constant dense<0.000000e+00> : vector<1xf32>
    %11 = vector.multi_reduction <add>, %10, %cst_3 [1, 2] : vector<1x32x4xf32> to vector<1xf32>
    %12 = vector.shape_cast %11 : vector<1xf32> to vector<1x1x1xf32>
    %13 = vector.extract %12[0, 0, 0] : f32 from vector<1x1x1xf32>
    %cst_4 = arith.constant 1.280000e+02 : f32
    %14 = arith.divf %13, %cst_4 : f32
    %15 = vector.broadcast %6 : f32 to vector<32x4xf32>
    %16 = arith.subf %1, %15 : vector<32x4xf32>
    %cst_5 = arith.constant 9.99999974E-6 : f32
    %17 = arith.addf %14, %cst_5 : f32
    %18 = math.rsqrt %17 : f32
    %19 = vector.broadcast %18 : f32 to vector<32x4xf32>
    %20 = arith.mulf %16, %19 : vector<32x4xf32>
    %c0_6 = arith.constant 0 : index
    %c0_7 = arith.constant 0 : index
    %21 = vector.load %arg3[%c0_6, %c0_7] : memref<32x1xf32, #tpu.memory_space<vmem>>, vector<32x1xf32>
    %22 = vector.broadcast %21 : vector<32x1xf32> to vector<32x4xf32>
    %23 = arith.mulf %20, %22 : vector<32x4xf32>
    %c0_8 = arith.constant 0 : index
    %c0_9 = arith.constant 0 : index
    %24 = vector.load %arg4[%c0_8, %c0_9] : memref<32x1xf32, #tpu.memory_space<vmem>>, vector<32x1xf32>
    %25 = vector.broadcast %24 : vector<32x1xf32> to vector<32x4xf32>
    %26 = arith.addf %23, %25 : vector<32x4xf32>
    %c0_10 = arith.constant 0 : index
    %c0_11 = arith.constant 0 : index
    %c0_12 = arith.constant 0 : index
    %27 = vector.load %arg2[%c0_10, %c0_11, %c0_12] : memref<1x32x4xf32, #tpu.memory_space<vmem>>, vector<1x32x4xf32>
    %28 = vector.shape_cast %27 : vector<1x32x4xf32> to vector<32x4xf32>
    %29 = arith.addf %26, %28 : vector<32x4xf32>
    %cst_13 = arith.constant 0.000000e+00 : f32
    %30 = vector.broadcast %cst_13 : f32 to vector<32x4xf32>
    %31 = arith.cmpf oge, %29, %30 : vector<32x4xf32>
    %c0_14 = arith.constant 0 : index
    %c0_15 = arith.constant 0 : index
    %32 = vector.load %arg5[%c0_14, %c0_15] : memref<32x1xf32, #tpu.memory_space<vmem>>, vector<32x1xf32>
    %33 = vector.broadcast %32 : vector<32x1xf32> to vector<32x4xf32>
    %34 = arith.mulf %33, %29 : vector<32x4xf32>
    %35 = arith.select %31, %29, %34 : vector<32x4xi1>, vector<32x4xf32>
    %c0_16 = arith.constant 0 : index
    %c0_17 = arith.constant 0 : index
    %c0_18 = arith.constant 0 : index
    %36 = vector.load %arg6[%c0_16, %c0_17, %c0_18] : memref<1x32x4xf32, #tpu.memory_space<vmem>>, vector<1x32x4xf32>
    %37 = vector.shape_cast %36 : vector<1x32x4xf32> to vector<32x4xf32>
    %38 = vector.shape_cast %35 : vector<32x4xf32> to vector<1x32x4xf32>
    tpu.vector_store %arg6[%c0_16, %c0_17, %c0_18], %38 {strides = array<i32>} : memref<1x32x4xf32, #tpu.memory_space<vmem>>, vector<1x32x4xf32>,
    return
  }
  func.func @transform_0(%arg0: i32) -> (i32, i32, i32) {
    %c0_i32 = arith.constant 0 : i32
    %c0_i32_0 = arith.constant 0 : i32
    %c0_i32_1 = arith.constant 0 : i32
    return %arg0, %c0_i32, %c0_i32_0 : i32, i32, i32
  }
  func.func @transform_1(%arg0: i32) -> (i32, i32, i32) {
    %c0_i32 = arith.constant 0 : i32
    %c0_i32_0 = arith.constant 0 : i32
    %c0_i32_1 = arith.constant 0 : i32
    return %arg0, %c0_i32, %c0_i32_0 : i32, i32, i32
  }
  func.func @transform_2(%arg0: i32) -> (i32, i32) {
    %c0_i32 = arith.constant 0 : i32
    %c0_i32_0 = arith.constant 0 : i32
    %c0_i32_1 = arith.constant 0 : i32
    return %c0_i32, %c0_i32_0 : i32, i32
  }
  func.func @transform_3(%arg0: i32) -> (i32, i32) {
    %c0_i32 = arith.constant 0 : i32
    %c0_i32_0 = arith.constant 0 : i32
    %c0_i32_1 = arith.constant 0 : i32
    return %c0_i32, %c0_i32_0 : i32, i32
  }
  func.func @transform_4(%arg0: i32) -> (i32, i32) {
    %c0_i32 = arith.constant 0 : i32
    %c0_i32_0 = arith.constant 0 : i32
    %c0_i32_1 = arith.constant 0 : i32
    return %c0_i32, %c0_i32_0 : i32, i32
  }
  func.func @transform_5(%arg0: i32) -> (i32, i32, i32) {
    %c0_i32 = arith.constant 0 : i32
    %c0_i32_0 = arith.constant 0 : i32
    %c0_i32_1 = arith.constant 0 : i32
    return %arg0, %c0_i32, %c0_i32_0 : i32, i32, i32
  }
}

module attributes {stable_mosaic.version = 11 : i64} {
  func.func @_gc_kernel(%arg0: i32, %arg1: memref<1x32x4xf32, #tpu.memory_space<vmem>>, %arg2: memref<32x1xf32, #tpu.memory_space<vmem>>, %arg3: memref<1x1xf32, #tpu.memory_space<vmem>>, %arg4: memref<8x32xf32, #tpu.memory_space<vmem>>, %arg5: memref<8x1xf32, #tpu.memory_space<vmem>>, %arg6: memref<8x1xf32, #tpu.memory_space<vmem>>, %arg7: memref<8x1xf32, #tpu.memory_space<vmem>>, %arg8: memref<8x1xf32, #tpu.memory_space<vmem>>, %arg9: memref<32x8xf32, #tpu.memory_space<vmem>>, %arg10: memref<32x1xf32, #tpu.memory_space<vmem>>, %arg11: memref<1x32x4xf32, #tpu.memory_space<vmem>>) attributes {dimension_semantics = [#tpu.dimension_semantics<parallel>], iteration_bounds = array<i64: 2>, scalar_prefetch = 0 : i64, scratch_operands = 0 : i64, tpu.core_type = #tpu.core_type<tc>, window_params = [{transform_indices = @transform_0, window_bounds = array<i64: 1, 32, 4>}, {pipeline_mode = #tpu.pipeline_mode<synchronous>, transform_indices = @transform_1, window_bounds = array<i64: 32, 1>}, {pipeline_mode = #tpu.pipeline_mode<synchronous>, transform_indices = @transform_2, window_bounds = array<i64: 1, 1>}, {pipeline_mode = #tpu.pipeline_mode<synchronous>, transform_indices = @transform_3, window_bounds = array<i64: 8, 32>}, {pipeline_mode = #tpu.pipeline_mode<synchronous>, transform_indices = @transform_4, window_bounds = array<i64: 8, 1>}, {pipeline_mode = #tpu.pipeline_mode<synchronous>, transform_indices = @transform_5, window_bounds = array<i64: 8, 1>}, {pipeline_mode = #tpu.pipeline_mode<synchronous>, transform_indices = @transform_6, window_bounds = array<i64: 8, 1>}, {pipeline_mode = #tpu.pipeline_mode<synchronous>, transform_indices = @transform_7, window_bounds = array<i64: 8, 1>}, {pipeline_mode = #tpu.pipeline_mode<synchronous>, transform_indices = @transform_8, window_bounds = array<i64: 32, 8>}, {pipeline_mode = #tpu.pipeline_mode<synchronous>, transform_indices = @transform_9, window_bounds = array<i64: 32, 1>}, {transform_indices = @transform_10, window_bounds = array<i64: 1, 32, 4>}]} {
    %c0 = arith.constant 0 : index
    %c0_0 = arith.constant 0 : index
    %c0_1 = arith.constant 0 : index
    %0 = vector.load %arg1[%c0, %c0_0, %c0_1] : memref<1x32x4xf32, #tpu.memory_space<vmem>>, vector<1x32x4xf32>
    %1 = vector.shape_cast %0 : vector<1x32x4xf32> to vector<32x4xf32>
    %c0_2 = arith.constant 0 : index
    %c0_3 = arith.constant 0 : index
    %2 = vector.load %arg2[%c0_2, %c0_3] : memref<32x1xf32, #tpu.memory_space<vmem>>, vector<32x1xf32>
    %3 = vector.broadcast %2 : vector<32x1xf32> to vector<32x4xf32>
    %4 = arith.mulf %1, %3 : vector<32x4xf32>
    %cst = arith.constant dense<0.000000e+00> : vector<4xf32>
    %5 = vector.multi_reduction <add>, %4, %cst [0] : vector<32x4xf32> to vector<4xf32>
    %6 = vector.shape_cast %5 : vector<4xf32> to vector<1x4xf32>
    %c0_4 = arith.constant 0 : index
    %c0_5 = arith.constant 0 : index
    %7 = vector.load %arg3[%c0_4, %c0_5] : memref<1x1xf32, #tpu.memory_space<vmem>>, vector<1x1xf32>
    %8 = vector.broadcast %7 : vector<1x1xf32> to vector<1x4xf32>
    %9 = arith.addf %6, %8 : vector<1x4xf32>
    %10 = vector.shape_cast %9 : vector<1x4xf32> to vector<1x1x4xf32>
    %cst_6 = arith.constant dense<0xFF800000> : vector<1xf32>
    %11 = vector.multi_reduction <maximumf>, %10, %cst_6 [1, 2] : vector<1x1x4xf32> to vector<1xf32>
    %12 = vector.shape_cast %11 : vector<1xf32> to vector<1x1x1xf32>
    %13 = vector.extract %12[0, 0, 0] : f32 from vector<1x1x1xf32>
    %14 = vector.broadcast %13 : f32 to vector<1x4xf32>
    %15 = arith.subf %9, %14 : vector<1x4xf32>
    %16 = math.exp %15 : vector<1x4xf32>
    %17 = vector.shape_cast %16 : vector<1x4xf32> to vector<1x1x4xf32>
    %cst_7 = arith.constant dense<0.000000e+00> : vector<1xf32>
    %18 = vector.multi_reduction <add>, %17, %cst_7 [1, 2] : vector<1x1x4xf32> to vector<1xf32>
    %19 = vector.shape_cast %18 : vector<1xf32> to vector<1x1x1xf32>
    %20 = vector.extract %19[0, 0, 0] : f32 from vector<1x1x1xf32>
    %21 = vector.broadcast %20 : f32 to vector<1x4xf32>
    %22 = arith.divf %16, %21 : vector<1x4xf32>
    %23 = vector.broadcast %22 : vector<1x4xf32> to vector<32x4xf32>
    %24 = arith.mulf %1, %23 : vector<32x4xf32>
    %cst_8 = arith.constant dense<0.000000e+00> : vector<32xf32>
    %25 = vector.multi_reduction <add>, %24, %cst_8 [1] : vector<32x4xf32> to vector<32xf32>
    %26 = vector.shape_cast %25 : vector<32xf32> to vector<32x1xf32>
    %c0_9 = arith.constant 0 : index
    %c0_10 = arith.constant 0 : index
    %27 = vector.load %arg4[%c0_9, %c0_10] : memref<8x32xf32, #tpu.memory_space<vmem>>, vector<8x32xf32>
    %cst_11 = arith.constant dense<0.000000e+00> : vector<8x1xf32>
    %28 = tpu.matmul %27, %26, %cst_11 {dimension_numbers = #tpu.dot_dimension_numbers<[1], [0], [0], [1], [0, 0, 1, 1], [], []>} : vector<8x32xf32>, vector<32x1xf32>, vector<8x1xf32> -> vector<8x1xf32>
    %c0_12 = arith.constant 0 : index
    %c0_13 = arith.constant 0 : index
    %29 = vector.load %arg5[%c0_12, %c0_13] : memref<8x1xf32, #tpu.memory_space<vmem>>, vector<8x1xf32>
    %30 = arith.addf %28, %29 : vector<8x1xf32>
    %31 = vector.shape_cast %30 : vector<8x1xf32> to vector<1x8x1xf32>
    %cst_14 = arith.constant dense<0.000000e+00> : vector<1xf32>
    %32 = vector.multi_reduction <add>, %31, %cst_14 [1, 2] : vector<1x8x1xf32> to vector<1xf32>
    %33 = vector.shape_cast %32 : vector<1xf32> to vector<1x1x1xf32>
    %34 = vector.extract %33[0, 0, 0] : f32 from vector<1x1x1xf32>
    %cst_15 = arith.constant 8.000000e+00 : f32
    %35 = arith.divf %34, %cst_15 : f32
    %36 = vector.broadcast %35 : f32 to vector<8x1xf32>
    %37 = arith.subf %30, %36 : vector<8x1xf32>
    %38 = arith.mulf %37, %37 : vector<8x1xf32>
    %39 = vector.shape_cast %38 : vector<8x1xf32> to vector<1x8x1xf32>
    %cst_16 = arith.constant dense<0.000000e+00> : vector<1xf32>
    %40 = vector.multi_reduction <add>, %39, %cst_16 [1, 2] : vector<1x8x1xf32> to vector<1xf32>
    %41 = vector.shape_cast %40 : vector<1xf32> to vector<1x1x1xf32>
    %42 = vector.extract %41[0, 0, 0] : f32 from vector<1x1x1xf32>
    %cst_17 = arith.constant 8.000000e+00 : f32
    %43 = arith.divf %42, %cst_17 : f32
    %44 = vector.broadcast %35 : f32 to vector<8x1xf32>
    %45 = arith.subf %30, %44 : vector<8x1xf32>
    %cst_18 = arith.constant 9.99999974E-6 : f32
    %46 = arith.addf %43, %cst_18 : f32
    %47 = math.rsqrt %46 : f32
    %48 = vector.broadcast %47 : f32 to vector<8x1xf32>
    %49 = arith.mulf %45, %48 : vector<8x1xf32>
    %c0_19 = arith.constant 0 : index
    %c0_20 = arith.constant 0 : index
    %50 = vector.load %arg6[%c0_19, %c0_20] : memref<8x1xf32, #tpu.memory_space<vmem>>, vector<8x1xf32>
    %51 = arith.mulf %49, %50 : vector<8x1xf32>
    %c0_21 = arith.constant 0 : index
    %c0_22 = arith.constant 0 : index
    %52 = vector.load %arg7[%c0_21, %c0_22] : memref<8x1xf32, #tpu.memory_space<vmem>>, vector<8x1xf32>
    %53 = arith.addf %51, %52 : vector<8x1xf32>
    %cst_23 = arith.constant 0.000000e+00 : f32
    %54 = vector.broadcast %cst_23 : f32 to vector<8x1xf32>
    %55 = arith.cmpf oge, %53, %54 : vector<8x1xf32>
    %c0_24 = arith.constant 0 : index
    %c0_25 = arith.constant 0 : index
    %56 = vector.load %arg8[%c0_24, %c0_25] : memref<8x1xf32, #tpu.memory_space<vmem>>, vector<8x1xf32>
    %57 = arith.mulf %56, %53 : vector<8x1xf32>
    %58 = arith.select %55, %53, %57 : vector<8x1xi1>, vector<8x1xf32>
    %c0_26 = arith.constant 0 : index
    %c0_27 = arith.constant 0 : index
    %59 = vector.load %arg9[%c0_26, %c0_27] : memref<32x8xf32, #tpu.memory_space<vmem>>, vector<32x8xf32>
    %cst_28 = arith.constant dense<0.000000e+00> : vector<32x1xf32>
    %60 = tpu.matmul %59, %58, %cst_28 {dimension_numbers = #tpu.dot_dimension_numbers<[1], [0], [0], [1], [0, 0, 1, 1], [], []>} : vector<32x8xf32>, vector<8x1xf32>, vector<32x1xf32> -> vector<32x1xf32>
    %c0_29 = arith.constant 0 : index
    %c0_30 = arith.constant 0 : index
    %61 = vector.load %arg10[%c0_29, %c0_30] : memref<32x1xf32, #tpu.memory_space<vmem>>, vector<32x1xf32>
    %62 = arith.addf %60, %61 : vector<32x1xf32>
    %63 = vector.broadcast %62 : vector<32x1xf32> to vector<32x4xf32>
    %64 = arith.addf %1, %63 : vector<32x4xf32>
    %c0_31 = arith.constant 0 : index
    %c0_32 = arith.constant 0 : index
    %c0_33 = arith.constant 0 : index
    %65 = vector.load %arg11[%c0_31, %c0_32, %c0_33] : memref<1x32x4xf32, #tpu.memory_space<vmem>>, vector<1x32x4xf32>
    %66 = vector.shape_cast %65 : vector<1x32x4xf32> to vector<32x4xf32>
    %67 = vector.shape_cast %64 : vector<32x4xf32> to vector<1x32x4xf32>
    tpu.vector_store %arg11[%c0_31, %c0_32, %c0_33], %67 {strides = array<i32>} : memref<1x32x4xf32, #tpu.memory_space<vmem>>, vector<1x32x4xf32>,
    return
  }
  func.func @transform_0(%arg0: i32) -> (i32, i32, i32) {
    %c0_i32 = arith.constant 0 : i32
    %c0_i32_0 = arith.constant 0 : i32
    %c0_i32_1 = arith.constant 0 : i32
    return %arg0, %c0_i32, %c0_i32_0 : i32, i32, i32
  }
  func.func @transform_1(%arg0: i32) -> (i32, i32) {
    %c0_i32 = arith.constant 0 : i32
    %c0_i32_0 = arith.constant 0 : i32
    %c0_i32_1 = arith.constant 0 : i32
    return %c0_i32, %c0_i32_0 : i32, i32
  }
  func.func @transform_2(%arg0: i32) -> (i32, i32) {
    %c0_i32 = arith.constant 0 : i32
    %c0_i32_0 = arith.constant 0 : i32
    %c0_i32_1 = arith.constant 0 : i32
    return %c0_i32, %c0_i32_0 : i32, i32
  }
  func.func @transform_3(%arg0: i32) -> (i32, i32) {
    %c0_i32 = arith.constant 0 : i32
    %c0_i32_0 = arith.constant 0 : i32
    %c0_i32_1 = arith.constant 0 : i32
    return %c0_i32, %c0_i32_0 : i32, i32
  }
  func.func @transform_4(%arg0: i32) -> (i32, i32) {
    %c0_i32 = arith.constant 0 : i32
    %c0_i32_0 = arith.constant 0 : i32
    %c0_i32_1 = arith.constant 0 : i32
    return %c0_i32, %c0_i32_0 : i32, i32
  }
  func.func @transform_5(%arg0: i32) -> (i32, i32) {
    %c0_i32 = arith.constant 0 : i32
    %c0_i32_0 = arith.constant 0 : i32
    %c0_i32_1 = arith.constant 0 : i32
    return %c0_i32, %c0_i32_0 : i32, i32
  }
  func.func @transform_6(%arg0: i32) -> (i32, i32) {
    %c0_i32 = arith.constant 0 : i32
    %c0_i32_0 = arith.constant 0 : i32
    %c0_i32_1 = arith.constant 0 : i32
    return %c0_i32, %c0_i32_0 : i32, i32
  }
  func.func @transform_7(%arg0: i32) -> (i32, i32) {
    %c0_i32 = arith.constant 0 : i32
    %c0_i32_0 = arith.constant 0 : i32
    %c0_i32_1 = arith.constant 0 : i32
    return %c0_i32, %c0_i32_0 : i32, i32
  }
  func.func @transform_8(%arg0: i32) -> (i32, i32) {
    %c0_i32 = arith.constant 0 : i32
    %c0_i32_0 = arith.constant 0 : i32
    %c0_i32_1 = arith.constant 0 : i32
    return %c0_i32, %c0_i32_0 : i32, i32
  }
  func.func @transform_9(%arg0: i32) -> (i32, i32) {
    %c0_i32 = arith.constant 0 : i32
    %c0_i32_0 = arith.constant 0 : i32
    %c0_i32_1 = arith.constant 0 : i32
    return %c0_i32, %c0_i32_0 : i32, i32
  }
  func.func @transform_10(%arg0: i32) -> (i32, i32, i32) {
    %c0_i32 = arith.constant 0 : i32
    %c0_i32_0 = arith.constant 0 : i32
    %c0_i32_1 = arith.constant 0 : i32
    return %arg0, %c0_i32, %c0_i32_0 : i32, i32, i32
  }
}

module attributes {stable_mosaic.version = 11 : i64} {
  func.func @_conv_mm_kernel(%arg0: i32, %arg1: memref<16x32xbf16, #tpu.memory_space<vmem>>, %arg2: memref<32x8xbf16, #tpu.memory_space<vmem>>, %arg3: memref<16x8xf32, #tpu.memory_space<vmem>>) attributes {dimension_semantics = [#tpu.dimension_semantics<parallel>], iteration_bounds = array<i64: 1>, scalar_prefetch = 0 : i64, scratch_operands = 0 : i64, tpu.core_type = #tpu.core_type<tc>, window_params = [{pipeline_mode = #tpu.pipeline_mode<synchronous>, transform_indices = @transform_0, window_bounds = array<i64: 16, 32>}, {transform_indices = @transform_1, window_bounds = array<i64: 32, 8>}, {transform_indices = @transform_2, window_bounds = array<i64: 16, 8>}]} {
    %c0 = arith.constant 0 : index
    %c0_0 = arith.constant 0 : index
    %0 = vector.load %arg1[%c0, %c0_0] : memref<16x32xbf16, #tpu.memory_space<vmem>>, vector<16x32xbf16>
    %c0_1 = arith.constant 0 : index
    %c0_2 = arith.constant 0 : index
    %1 = vector.load %arg2[%c0_1, %c0_2] : memref<32x8xbf16, #tpu.memory_space<vmem>>, vector<32x8xbf16>
    %cst = arith.constant dense<0.000000e+00> : vector<16x8xf32>
    %2 = tpu.matmul %0, %1, %cst {dimension_numbers = #tpu.dot_dimension_numbers<[1], [0], [0], [1], [0, 0, 1, 1], [], []>} : vector<16x32xbf16>, vector<32x8xbf16>, vector<16x8xf32> -> vector<16x8xf32>
    %c0_3 = arith.constant 0 : index
    %c0_4 = arith.constant 0 : index
    %3 = vector.load %arg3[%c0_3, %c0_4] : memref<16x8xf32, #tpu.memory_space<vmem>>, vector<16x8xf32>
    tpu.vector_store %arg3[%c0_3, %c0_4], %2 {strides = array<i32>} : memref<16x8xf32, #tpu.memory_space<vmem>>, vector<16x8xf32>,
    return
  }
  func.func @transform_0(%arg0: i32) -> (i32, i32) {
    %c0_i32 = arith.constant 0 : i32
    %c0_i32_0 = arith.constant 0 : i32
    %c0_i32_1 = arith.constant 0 : i32
    return %c0_i32, %c0_i32_0 : i32, i32
  }
  func.func @transform_1(%arg0: i32) -> (i32, i32) {
    %c0_i32 = arith.constant 0 : i32
    %c0_i32_0 = arith.constant 0 : i32
    return %c0_i32, %arg0 : i32, i32
  }
  func.func @transform_2(%arg0: i32) -> (i32, i32) {
    %c0_i32 = arith.constant 0 : i32
    %c0_i32_0 = arith.constant 0 : i32
    return %c0_i32, %arg0 : i32, i32
  }
}

module attributes {stable_mosaic.version = 11 : i64} {
  func.func @_conv_mm_kernel(%arg0: i32, %arg1: memref<8x16xbf16, #tpu.memory_space<vmem>>, %arg2: memref<16x32xbf16, #tpu.memory_space<vmem>>, %arg3: memref<8x32xf32, #tpu.memory_space<vmem>>) attributes {dimension_semantics = [#tpu.dimension_semantics<parallel>], iteration_bounds = array<i64: 1>, scalar_prefetch = 0 : i64, scratch_operands = 0 : i64, tpu.core_type = #tpu.core_type<tc>, window_params = [{pipeline_mode = #tpu.pipeline_mode<synchronous>, transform_indices = @transform_0, window_bounds = array<i64: 8, 16>}, {transform_indices = @transform_1, window_bounds = array<i64: 16, 32>}, {transform_indices = @transform_2, window_bounds = array<i64: 8, 32>}]} {
    %c0 = arith.constant 0 : index
    %c0_0 = arith.constant 0 : index
    %0 = vector.load %arg1[%c0, %c0_0] : memref<8x16xbf16, #tpu.memory_space<vmem>>, vector<8x16xbf16>
    %c0_1 = arith.constant 0 : index
    %c0_2 = arith.constant 0 : index
    %1 = vector.load %arg2[%c0_1, %c0_2] : memref<16x32xbf16, #tpu.memory_space<vmem>>, vector<16x32xbf16>
    %cst = arith.constant dense<0.000000e+00> : vector<8x32xf32>
    %2 = tpu.matmul %0, %1, %cst {dimension_numbers = #tpu.dot_dimension_numbers<[1], [0], [0], [1], [0, 0, 1, 1], [], []>} : vector<8x16xbf16>, vector<16x32xbf16>, vector<8x32xf32> -> vector<8x32xf32>
    %c0_3 = arith.constant 0 : index
    %c0_4 = arith.constant 0 : index
    %3 = vector.load %arg3[%c0_3, %c0_4] : memref<8x32xf32, #tpu.memory_space<vmem>>, vector<8x32xf32>
    tpu.vector_store %arg3[%c0_3, %c0_4], %2 {strides = array<i32>} : memref<8x32xf32, #tpu.memory_space<vmem>>, vector<8x32xf32>,
    return
  }
  func.func @transform_0(%arg0: i32) -> (i32, i32) {
    %c0_i32 = arith.constant 0 : i32
    %c0_i32_0 = arith.constant 0 : i32
    %c0_i32_1 = arith.constant 0 : i32
    return %c0_i32, %c0_i32_0 : i32, i32
  }
  func.func @transform_1(%arg0: i32) -> (i32, i32) {
    %c0_i32 = arith.constant 0 : i32
    %c0_i32_0 = arith.constant 0 : i32
    return %c0_i32, %arg0 : i32, i32
  }
  func.func @transform_2(%arg0: i32) -> (i32, i32) {
    %c0_i32 = arith.constant 0 : i32
    %c0_i32_0 = arith.constant 0 : i32
    return %c0_i32, %arg0 : i32, i32
  }
}

module attributes {stable_mosaic.version = 11 : i64} {
  func.func @_conv_mm_kernel(%arg0: i32, %arg1: memref<4x8xbf16, #tpu.memory_space<vmem>>, %arg2: memref<8x128xbf16, #tpu.memory_space<vmem>>, %arg3: memref<4x128xf32, #tpu.memory_space<vmem>>) attributes {dimension_semantics = [#tpu.dimension_semantics<parallel>], iteration_bounds = array<i64: 1>, scalar_prefetch = 0 : i64, scratch_operands = 0 : i64, tpu.core_type = #tpu.core_type<tc>, window_params = [{pipeline_mode = #tpu.pipeline_mode<synchronous>, transform_indices = @transform_0, window_bounds = array<i64: 4, 8>}, {transform_indices = @transform_1, window_bounds = array<i64: 8, 128>}, {transform_indices = @transform_2, window_bounds = array<i64: 4, 128>}]} {
    %c0 = arith.constant 0 : index
    %c0_0 = arith.constant 0 : index
    %0 = vector.load %arg1[%c0, %c0_0] : memref<4x8xbf16, #tpu.memory_space<vmem>>, vector<4x8xbf16>
    %c0_1 = arith.constant 0 : index
    %c0_2 = arith.constant 0 : index
    %1 = vector.load %arg2[%c0_1, %c0_2] : memref<8x128xbf16, #tpu.memory_space<vmem>>, vector<8x128xbf16>
    %cst = arith.constant dense<0.000000e+00> : vector<4x128xf32>
    %2 = tpu.matmul %0, %1, %cst {dimension_numbers = #tpu.dot_dimension_numbers<[1], [0], [0], [1], [0, 0, 1, 1], [], []>} : vector<4x8xbf16>, vector<8x128xbf16>, vector<4x128xf32> -> vector<4x128xf32>
    %c0_3 = arith.constant 0 : index
    %c0_4 = arith.constant 0 : index
    %3 = vector.load %arg3[%c0_3, %c0_4] : memref<4x128xf32, #tpu.memory_space<vmem>>, vector<4x128xf32>
    tpu.vector_store %arg3[%c0_3, %c0_4], %2 {strides = array<i32>} : memref<4x128xf32, #tpu.memory_space<vmem>>, vector<4x128xf32>,
    return
  }
  func.func @transform_0(%arg0: i32) -> (i32, i32) {
    %c0_i32 = arith.constant 0 : i32
    %c0_i32_0 = arith.constant 0 : i32
    %c0_i32_1 = arith.constant 0 : i32
    return %c0_i32, %c0_i32_0 : i32, i32
  }
  func.func @transform_1(%arg0: i32) -> (i32, i32) {
    %c0_i32 = arith.constant 0 : i32
    %c0_i32_0 = arith.constant 0 : i32
    return %c0_i32, %arg0 : i32, i32
  }
  func.func @transform_2(%arg0: i32) -> (i32, i32) {
    %c0_i32 = arith.constant 0 : i32
    %c0_i32_0 = arith.constant 0 : i32
    return %c0_i32, %arg0 : i32, i32
  }
}

module attributes {stable_mosaic.version = 11 : i64} {
  func.func @_conv_mm_kernel(%arg0: i32, %arg1: memref<1x36xbf16, #tpu.memory_space<vmem>>, %arg2: memref<36x256xbf16, #tpu.memory_space<vmem>>, %arg3: memref<1x256xf32, #tpu.memory_space<vmem>>) attributes {dimension_semantics = [#tpu.dimension_semantics<parallel>], iteration_bounds = array<i64: 2>, scalar_prefetch = 0 : i64, scratch_operands = 0 : i64, tpu.core_type = #tpu.core_type<tc>, window_params = [{pipeline_mode = #tpu.pipeline_mode<synchronous>, transform_indices = @transform_0, window_bounds = array<i64: 1, 36>}, {transform_indices = @transform_1, window_bounds = array<i64: 36, 256>}, {transform_indices = @transform_2, window_bounds = array<i64: 1, 256>}]} {
    %c0 = arith.constant 0 : index
    %c0_0 = arith.constant 0 : index
    %0 = vector.load %arg1[%c0, %c0_0] : memref<1x36xbf16, #tpu.memory_space<vmem>>, vector<1x36xbf16>
    %c0_1 = arith.constant 0 : index
    %c0_2 = arith.constant 0 : index
    %1 = vector.load %arg2[%c0_1, %c0_2] : memref<36x256xbf16, #tpu.memory_space<vmem>>, vector<36x256xbf16>
    %cst = arith.constant dense<0.000000e+00> : vector<1x256xf32>
    %2 = tpu.matmul %0, %1, %cst {dimension_numbers = #tpu.dot_dimension_numbers<[1], [0], [0], [1], [0, 0, 1, 1], [], []>} : vector<1x36xbf16>, vector<36x256xbf16>, vector<1x256xf32> -> vector<1x256xf32>
    %c0_3 = arith.constant 0 : index
    %c0_4 = arith.constant 0 : index
    %3 = vector.load %arg3[%c0_3, %c0_4] : memref<1x256xf32, #tpu.memory_space<vmem>>, vector<1x256xf32>
    tpu.vector_store %arg3[%c0_3, %c0_4], %2 {strides = array<i32>} : memref<1x256xf32, #tpu.memory_space<vmem>>, vector<1x256xf32>,
    return
  }
  func.func @transform_0(%arg0: i32) -> (i32, i32) {
    %c0_i32 = arith.constant 0 : i32
    %c0_i32_0 = arith.constant 0 : i32
    %c0_i32_1 = arith.constant 0 : i32
    return %c0_i32, %c0_i32_0 : i32, i32
  }
  func.func @transform_1(%arg0: i32) -> (i32, i32) {
    %c0_i32 = arith.constant 0 : i32
    %c0_i32_0 = arith.constant 0 : i32
    return %c0_i32, %arg0 : i32, i32
  }
  func.func @transform_2(%arg0: i32) -> (i32, i32) {
    %c0_i32 = arith.constant 0 : i32
    %c0_i32_0 = arith.constant 0 : i32
    return %c0_i32, %arg0 : i32, i32
  }
}

module attributes {stable_mosaic.version = 11 : i64} {
  func.func @_conv_mm_kernel(%arg0: i32, %arg1: memref<3x36xbf16, #tpu.memory_space<vmem>>, %arg2: memref<36x256xbf16, #tpu.memory_space<vmem>>, %arg3: memref<3x256xf32, #tpu.memory_space<vmem>>) attributes {dimension_semantics = [#tpu.dimension_semantics<parallel>], iteration_bounds = array<i64: 2>, scalar_prefetch = 0 : i64, scratch_operands = 0 : i64, tpu.core_type = #tpu.core_type<tc>, window_params = [{pipeline_mode = #tpu.pipeline_mode<synchronous>, transform_indices = @transform_0, window_bounds = array<i64: 3, 36>}, {transform_indices = @transform_1, window_bounds = array<i64: 36, 256>}, {transform_indices = @transform_2, window_bounds = array<i64: 3, 256>}]} {
    %c0 = arith.constant 0 : index
    %c0_0 = arith.constant 0 : index
    %0 = vector.load %arg1[%c0, %c0_0] : memref<3x36xbf16, #tpu.memory_space<vmem>>, vector<3x36xbf16>
    %c0_1 = arith.constant 0 : index
    %c0_2 = arith.constant 0 : index
    %1 = vector.load %arg2[%c0_1, %c0_2] : memref<36x256xbf16, #tpu.memory_space<vmem>>, vector<36x256xbf16>
    %cst = arith.constant dense<0.000000e+00> : vector<3x256xf32>
    %2 = tpu.matmul %0, %1, %cst {dimension_numbers = #tpu.dot_dimension_numbers<[1], [0], [0], [1], [0, 0, 1, 1], [], []>} : vector<3x36xbf16>, vector<36x256xbf16>, vector<3x256xf32> -> vector<3x256xf32>
    %c0_3 = arith.constant 0 : index
    %c0_4 = arith.constant 0 : index
    %3 = vector.load %arg3[%c0_3, %c0_4] : memref<3x256xf32, #tpu.memory_space<vmem>>, vector<3x256xf32>
    tpu.vector_store %arg3[%c0_3, %c0_4], %2 {strides = array<i32>} : memref<3x256xf32, #tpu.memory_space<vmem>>, vector<3x256xf32>,
    return
  }
  func.func @transform_0(%arg0: i32) -> (i32, i32) {
    %c0_i32 = arith.constant 0 : i32
    %c0_i32_0 = arith.constant 0 : i32
    %c0_i32_1 = arith.constant 0 : i32
    return %c0_i32, %c0_i32_0 : i32, i32
  }
  func.func @transform_1(%arg0: i32) -> (i32, i32) {
    %c0_i32 = arith.constant 0 : i32
    %c0_i32_0 = arith.constant 0 : i32
    return %c0_i32, %arg0 : i32, i32
  }
  func.func @transform_2(%arg0: i32) -> (i32, i32) {
    %c0_i32 = arith.constant 0 : i32
    %c0_i32_0 = arith.constant 0 : i32
    return %c0_i32, %arg0 : i32, i32
  }
}

</mosaic_0001>

<llo_original>
// kernel: main_forward.104
$region0: #{main_forward.104}
  #allocation0 [shape = 'u32[]', space=smem, size = 0x4, offset = 0x4, fixed_abs, tag = 'smem constant byte address 0x4 - core index']
  #allocation1 [shape = 'u32[144,128]{1,0:T(1,128)}', space=vmem, size = 0x12000, scoped, tag = 'internal scratch']
  %s0 = inlined_call_operand.vmem [shape: bf16[4,27], index: 0, kind: input, shape index: {}]
  %s1 = inlined_call_operand.vmem [shape: bf16[27,512], index: 1, kind: input, shape index: {}]
  %s2 = inlined_call_operand.vmem [shape: f32[4,512], index: 2, kind: output, shape index: {}]
  %s3 = sld [smem:[#allocation0]]
  $region79: #{main_forward.104} parent=0
    _
  %s5 = ssub.s32 1, %s3
  %s6 = scalar_select 0, %s5, %s3
  $region1: #{main_forward.104} parent=0
    #allocation2 [shape = 'u8[32768]{0}', space=vmem, size = 0x8000, scoped, tag = 'input window, operand 1']
    loop: start=0, step=1, limit=4
    $region2: #{main_forward.104} parent=1 // loop_pre_header
      _
    $region3: #{main_forward.104} parent=1 // loop_header
      %s8 = sphi 0, %s12
      %p9 = scmp.ge.s32.totalorder %s8, 4
      %s16 = sphi 0, %s16
      %s18 = sphi 0, %s16
      %s19 = sphi 0, %s18
      %s33 = sphi 0, %s19
      %s39 = sphi 0, %s41
      %s42 = sphi 0, %s39
      %s43 = sphi 0, %s42
      %s59 = sphi 0, %s43
      %s65 = sphi 0, %s67
      %s68 = sphi 0, %s65
      %s69 = sphi 0, %s68
      %s85 = sphi 0, %s69
    $region4: #{main_forward.104} parent=1 // loop_header_branch
      %11 = sbr.rel (%p9) target = $region8
    $region5: #{main_forward.104} parent=1 // loop_body
      %s13 = ssub.s32 %s8, 1
      %s14 = ssub.s32 %s8, 2
      %s15 = sadd.s32 %s8, 1
      %s17 = sadd.s32 %s16, 1
      %p20 = scmp.eq.s32.totalorder %s8, 1
      %p21 = scmp.ne.s32.totalorder %s16, %s18
      %p22 = scmp.eq.s32.totalorder %s8, 0
      %p23 = por %p21, %p22
      %p24 = scmp.ne.s32.totalorder %s16, %s18
      %p25 = scmp.eq.s32.totalorder %s13, 1
      %p26 = por %p24, %p25
      %p27 = scmp.ne.s32.totalorder %s18, %s19
      %p28 = scmp.eq.s32.totalorder %s13, 0
      %p29 = por %p27, %p28
      %p30 = scmp.ne.s32.totalorder %s18, %s19
      %p31 = scmp.eq.s32.totalorder %s14, 1
      %p32 = por %p30, %p31
      %p34 = scmp.ne.s32.totalorder %s19, %s33
      %p35 = scmp.eq.s32.totalorder %s14, 0
      %p36 = por %p34, %p35
      %s37 = ssub.s32 %s8, %s15
      %p38 = scmp.eq.s32.totalorder %s37, 0
      %s40 = sadd.s32 %s39, 1
      %s41 = scalar_select %p38, %s39, %s40
      %p44 = pneg %p38
      %p45 = scmp.eq.s32.totalorder %s8, 1
      %p46 = por %p44, %p45
      %p47 = scmp.ne.s32.totalorder %s39, %s42
      %p48 = scmp.eq.s32.totalorder %s8, 0
      %p49 = por %p47, %p48
      %p50 = scmp.ne.s32.totalorder %s39, %s42
      %p51 = scmp.eq.s32.totalorder %s13, 1
      %p52 = por %p50, %p51
      %p53 = scmp.ne.s32.totalorder %s42, %s43
      %p54 = scmp.eq.s32.totalorder %s13, 0
      %p55 = por %p53, %p54
      %p56 = scmp.ne.s32.totalorder %s42, %s43
      %p57 = scmp.eq.s32.totalorder %s14, 1
      %p58 = por %p56, %p57
      %p60 = scmp.ne.s32.totalorder %s43, %s59
      %p61 = scmp.eq.s32.totalorder %s14, 0
      %p62 = por %p60, %p61
      %s63 = ssub.s32 %s8, %s15
      %p64 = scmp.eq.s32.totalorder %s63, 0
      %s66 = sadd.s32 %s65, 1
      %s67 = scalar_select %p64, %s65, %s66
      %p70 = pneg %p64
      %p71 = scmp.eq.s32.totalorder %s8, 1
      %p72 = por %p70, %p71
      %p73 = scmp.ne.s32.totalorder %s65, %s68
      %p74 = scmp.eq.s32.totalorder %s8, 0
      %p75 = por %p73, %p74
      %p76 = scmp.ne.s32.totalorder %s65, %s68
      %p77 = scmp.eq.s32.totalorder %s13, 1
      %p78 = por %p76, %p77
      %p79 = scmp.ne.s32.totalorder %s68, %s69
      %p80 = scmp.eq.s32.totalorder %s13, 0
      %p81 = por %p79, %p80
      %p82 = scmp.ne.s32.totalorder %s68, %s69
      %p83 = scmp.eq.s32.totalorder %s14, 1
      %p84 = por %p82, %p83
      %p86 = scmp.ne.s32.totalorder %s69, %s85
      %p87 = scmp.eq.s32.totalorder %s14, 0
      %p88 = por %p86, %p87
      %p89 = scmp.le.s32.totalorder 1, %s8
      %p90 = scmp.lt.s32.totalorder %s8, 3
      %p91 = pnand %p89, %p90
      %p92 = pneg %p91
      // Predicated region
      $region9: #{main_forward.104} parent=5 // pred_check
        _
      $region10: #{main_forward.104} parent=5 // pred_check_branch
        %94 = sbr.rel (%p91) target = $region12
      $region11: #{main_forward.104} parent=5 // pred_region
        %s95 = ssub.s32 %s8, 1
        // Predicated region
        $region13: #{main_forward.104} parent=11 // pred_check
          %p96 = pneg %p29
        $region14: #{main_forward.104} parent=11 // pred_check_branch
          %98 = sbr.rel (%p96) target = $region16
        $region15: #{main_forward.104} parent=11 // pred_region
          _
        $region16: #{main_forward.104} parent=11 // pred_fallthru
          _
      $region12: #{main_forward.104} parent=5 // pred_fallthru
        _
      %p99 = scmp.lt.s32.totalorder %s8, 2
      // Predicated region
      $region17: #{main_forward.104} parent=5 // pred_check
        %p100 = pneg %p99
      $region18: #{main_forward.104} parent=5 // pred_check_branch
        %102 = sbr.rel (%p100) target = $region20
      $region19: #{main_forward.104} parent=5 // pred_region
        // Predicated region
        $region21: #{main_forward.104} parent=19 // pred_check
          %p103 = pneg %p49
        $region22: #{main_forward.104} parent=19 // pred_check_branch
          %105 = sbr.rel (%p103) target = $region24
        $region23: #{main_forward.104} parent=19 // pred_region
          %s106 = sand.u32 %s39, 1
          %s107 = sand.u32 %s39, 1
          %s108 = smul.addr %s107, 32
          %s109 = scalar_lea.vmem [#allocation2], %s108
          %s110 = smul.u32 2, %s8
          %s111 = smul.addr %s110, 4
          %s112 = scalar_lea.vmem %s1, %s111
          // Predicated region
          $region25: #{main_forward.104} parent=23 // pred_check
            _
          $region26: #{main_forward.104} parent=23 // pred_check_branch
            %114 = sbr.rel (0) target = $region28
          $region27: #{main_forward.104} parent=23 // pred_region
            // Predicated region
            $region29: #{main_forward.104} parent=27 // pred_check
              _
            $region30: #{main_forward.104} parent=27 // pred_check_branch
              %116 = sbr.rel (0) target = $region32
            $region31: #{main_forward.104} parent=27 // pred_region
              // Predicated region
              $region44: #{main_forward.104} parent=31 // pred_check
                _
              $region45: #{main_forward.104} parent=31 // pred_check_branch
                %138 = sbr.rel (0) target = $region47
              $region46: #{main_forward.104} parent=31 // pred_region
                loop: start=0, step=1, limit=1
                $region48: #{main_forward.104} parent=46 // loop_pre_header
                  _
                $region49: #{main_forward.104} parent=46 // loop_header
                  %s140 = sphi 0, %s144
                  %p141 = scmp.ge.s32.totalorder %s140, 1
                  %s145 = sphi %s112, %s112
                  %s146 = sphi %s109, %s109
                $region50: #{main_forward.104} parent=46 // loop_header_branch
                  %143 = sbr.rel (%p141) target = $region54
                $region51: #{main_forward.104} parent=46 // loop_body
                  %v147 = vld [vmem:[%s145] sm:$0xff]
                  %148 = vst [vmem:[%s146] sm:$0xff] %v147
                  %v149 = vld [vmem:[%s145 + $0x10] sm:$0xff]
                  %150 = vst [vmem:[%s146 + $0x8] sm:$0xff] %v149
                  %v151 = vld [vmem:[%s145 + $0x20] sm:$0xff]
                  %152 = vst [vmem:[%s146 + $0x10] sm:$0xff] %v151
                  %v153 = vld [vmem:[%s145 + $0x30] sm:$0xff]
                  %154 = vst [vmem:[%s146 + $0x18] sm:$0xff] %v153
                $region52: #{main_forward.104} parent=46 // loop_footer
                  %s144 = sadd.s32 1, %s140
                $region53: #{main_forward.104} parent=46 // loop_footer_branch
                  %139 = sbr.rel target = $region49
                $region54: #{main_forward.104} parent=46 // loop_exit
                  _
              $region47: #{main_forward.104} parent=31 // pred_fallthru
                _
              // Predicated region
              $region55: #{main_forward.104} parent=31 // pred_check
                _
              $region56: #{main_forward.104} parent=31 // pred_check_branch
                %156 = sbr.rel target = $region58
              $region57: #{main_forward.104} parent=31 // pred_region
                _
              $region58: #{main_forward.104} parent=31 // pred_fallthru
                _
            $region32: #{main_forward.104} parent=27 // pred_fallthru
              _
            // Predicated region
            $region33: #{main_forward.104} parent=27 // pred_check
              _
            $region34: #{main_forward.104} parent=27 // pred_check_branch
              %118 = sbr.rel target = $region36
            $region35: #{main_forward.104} parent=27 // pred_region
              %s120 = ssub.s32 256, 1
              loop: start=0, step=1, limit=1
              $region37: #{main_forward.104} parent=35 // loop_pre_header
                _
              $region38: #{main_forward.104} parent=35 // loop_header
                %s122 = sphi 0, %s126
                %p123 = scmp.ge.s32.totalorder %s122, 1
                %s127 = sphi %s112, %s112
                %s128 = sphi %s109, %s109
              $region39: #{main_forward.104} parent=35 // loop_header_branch
                %125 = sbr.rel (%p123) target = $region43
              $region40: #{main_forward.104} parent=35 // loop_body
                %v129 = vld [vmem:[%s127] sm:%s120]
                %130 = vst [vmem:[%s128] sm:%s120] %v129
                %v131 = vld [vmem:[%s127 + $0x10] sm:%s120]
                %132 = vst [vmem:[%s128 + $0x8] sm:%s120] %v131
                %v133 = vld [vmem:[%s127 + $0x20] sm:%s120]
                %134 = vst [vmem:[%s128 + $0x10] sm:%s120] %v133
                %v135 = vld [vmem:[%s127 + $0x30] sm:%s120]
                %136 = vst [vmem:[%s128 + $0x18] sm:%s120] %v135
              $region41: #{main_forward.104} parent=35 // loop_footer
                %s126 = sadd.s32 1, %s122
              $region42: #{main_forward.104} parent=35 // loop_footer_branch
                %121 = sbr.rel target = $region38
              $region43: #{main_forward.104} parent=35 // loop_exit
                _
            $region36: #{main_forward.104} parent=27 // pred_fallthru
              _
          $region28: #{main_forward.104} parent=23 // pred_fallthru
            _
          %157 = vnop
        $region24: #{main_forward.104} parent=19 // pred_fallthru
          _
      $region20: #{main_forward.104} parent=5 // pred_fallthru
        _
      %p158 = scmp.le.s32.totalorder 1, %s8
      %p159 = scmp.lt.s32.totalorder %s8, 3
      %p160 = pnand %p158, %p159
      %p161 = pneg %p160
      // Predicated region
      $region59: #{main_forward.104} parent=5 // pred_check
        _
      $region60: #{main_forward.104} parent=5 // pred_check_branch
        %163 = sbr.rel (%p160) target = $region62
      $region61: #{main_forward.104} parent=5 // pred_region
        %s164 = ssub.s32 %s8, 1
        %s165 = sand.u32 %s42, 1
        %s166 = sand.u32 %s42, 1
        %s167 = smul.addr %s166, 32
        %s168 = scalar_lea.vmem [#allocation2], %s167
        // Predicated region
        $region63: #{main_forward.104} parent=61 // pred_check
          %p169 = pneg %p55
        $region64: #{main_forward.104} parent=61 // pred_check_branch
          %171 = sbr.rel (%p169) target = $region66
        $region65: #{main_forward.104} parent=61 // pred_region
          _
        $region66: #{main_forward.104} parent=61 // pred_fallthru
          _
        %p172 = pneg %p29
        %p173 = pneg %p26
        %s174 = sand.u32 %s42, 1
        %s175 = sand.u32 %s42, 1
        %s176 = smul.addr %s175, 32
        %s177 = scalar_lea.vmem [#allocation2], %s176
        %p178 = pneg %p55
        %p179 = pneg %p52
        %p180 = pneg %p81
        %p181 = pneg %p78
        %s182 = smul.u32 2, %s13
        %p183 = scmp.lt.s32.totalorder %s182, 3
        %s184 = scalar_select %p183, %s182, 3
        %s185 = smul.addr %s184, 4
        %s186 = scalar_lea.vmem %s2, %s185
        %s187 = smul.u32 2, %s13
        %s188 = smul.u32 2, %s13
        %p189 = scmp.lt.s32.totalorder %s188, 3
        %s190 = scalar_select %p189, %s188, 3
        %s191 = smul.addr %s190, 4
        %s192 = scalar_lea.vmem %s2, %s191
        %s193 = smul.u32 2, %s13
        %v195 = vld [vmem:[%s0] sm:$0x3]
        %v196 = vld [vmem:[%s168] sm:$0xff]
        %v197 = vld [vmem:[%s168 + $0x8] sm:$0xff]
        %v198 = vld [vmem:[%s168 + $0x10] sm:$0xff]
        %v199 = vld [vmem:[%s168 + $0x18] sm:$0x33]
        %v204 = vunpack.c.l.b16 %v196
        %v205 = vunpack.c.h.b16 %v196
        %v206 = vunpack.c.l.b16 %v197
        %v207 = vunpack.c.h.b16 %v197
        %v208 = vunpack.c.l.b16 %v198
        %v209 = vunpack.c.h.b16 %v198
        %v210 = vunpack.c.l.b16 %v199
        %v211 = vunpack.c.h.b16 %v199
        %v212 = vpack.c.b16 %v206, %v204
        %v213 = vpack.c.b16 %v207, %v205
        %v214 = vpack.c.b16 %v210, %v208
        %v215 = vpack.c.b16 %v211, %v209
        %vm218 = vcmask 220160
        %v220 = vsel %vm218, %v195, 0
        %vm222 = vcmask 1044480
        %vm223 = vcmask 1045504
        %v224 = vsel %vm222, 4294967295, 65535
        %v225 = vsel %vm223, %v224, 0
        %v227 = vand.u32 %v214, %v225
        %v230 = vand.u32 %v215, %v225
        %232 = vmatprep.subr.bf16.mxu0 0
        %233 = vmatpush1.bf16.msra.mxu0 0
        %234 = vmatprep.subr.bf16.mxu0 0
        %235 = vmatpush1.bf16.msra.mxu0 0
        %236 = vmatprep.subr.bf16.mxu0 0
        %237 = vmatpush1.bf16.msra.mxu0 0
        %238 = vmatprep.subr.bf16.mxu0 0
        %239 = vmatpush1.bf16.msra.mxu0 0
        %240 = vmatprep.subr.bf16.mxu0 0
        %241 = vmatpush1.bf16.msra.mxu0 0
        %242 = vmatprep.subr.bf16.mxu0 0
        %243 = vmatpush1.bf16.msra.mxu0 0
        %244 = vmatprep.subr.bf16.mxu0 %v230
        %245 = vmatpush1.bf16.msra.mxu0 %v227
        %246 = vmatprep.subr.bf16.mxu0 %v213
        %247 = vmatpush1.bf16.msra.mxu0 %v212
        %248 = vmatprep.subr.bf16.mxu0 0
        %249 = vmatpush2.bf16.msra.mxu0 0
        %250 = vmatprep.subr.bf16.mxu0 0
        %251 = vmatpush2.bf16.msra.mxu0 0
        %252 = vmatprep.subr.bf16.mxu0 0
        %253 = vmatpush2.bf16.msra.mxu0 0
        %254 = vmatprep.subr.bf16.mxu0 0
        %255 = vmatpush2.bf16.msra.mxu0 0
        %256 = vmatprep.subr.bf16.mxu0 0
        %257 = vmatpush2.bf16.msra.mxu0 0
        %258 = vmatprep.subr.bf16.mxu0 0
        %259 = vmatpush2.bf16.msra.mxu0 0
        %260 = vmatprep.subr.bf16.mxu0 0
        %261 = vmatpush2.bf16.msra.mxu0 0
        %262 = vmatprep.subr.bf16.mxu0 0
        %263 = vmatpush2.bf16.msra.mxu0 0
        %264 = vmatprep.mubr.bf16.mxu0 0
        %265 = vmatmul.mubr.bf16.gmra.mxu0 %v220
        %v266 = vpop.f32.mrf.mxu0
        %v267 = vadd.f32 0.0, %v266
        %v268 = vpop.f32.mrf.mxu0
        %v269 = vadd.f32 0.0, %v268
        %v270 = vpop.f32.mrf.mxu0
        %v271 = vpop.f32.mrf.mxu0
        %272 = vdwg.mxu0
        %v275 = vcombine.low %v267, %v269
        %277 = vst [vmem:[%s192] sm:$0xff] %v275
        %s278 = smul.u32 2, %s13
        %p279 = scmp.lt.s32.totalorder %s278, 3
        %s280 = scalar_select %p279, %s278, 3
        %s281 = smul.addr %s280, 4
        %s282 = scalar_lea.vmem %s2, %s281
        // Predicated region
        $region67: #{main_forward.104} parent=61 // pred_check
          %p283 = pneg %p78
        $region68: #{main_forward.104} parent=61 // pred_check_branch
          %285 = sbr.rel (%p283) target = $region70
        $region69: #{main_forward.104} parent=61 // pred_region
          %s286 = smul.u32 2, %s13
        $region70: #{main_forward.104} parent=61 // pred_fallthru
          _
      $region62: #{main_forward.104} parent=5 // pred_fallthru
        _
      %p287 = scmp.le.s32.totalorder 2, %s8
      // Predicated region
      $region71: #{main_forward.104} parent=5 // pred_check
        %p288 = pneg %p287
      $region72: #{main_forward.104} parent=5 // pred_check_branch
        %290 = sbr.rel (%p288) target = $region74
      $region73: #{main_forward.104} parent=5 // pred_region
        %s291 = ssub.s32 %s8, 2
        // Predicated region
        $region75: #{main_forward.104} parent=73 // pred_check
          %p292 = pneg %p84
        $region76: #{main_forward.104} parent=73 // pred_check_branch
          %294 = sbr.rel (%p292) target = $region78
        $region77: #{main_forward.104} parent=73 // pred_region
          %s295 = smul.u32 2, %s14
          %p296 = scmp.lt.s32.totalorder %s295, 3
          %s297 = scalar_select %p296, %s295, 3
          %s298 = smul.addr %s297, 4
          %s299 = scalar_lea.vmem %s2, %s298
        $region78: #{main_forward.104} parent=73 // pred_fallthru
          _
      $region74: #{main_forward.104} parent=5 // pred_fallthru
        _
    $region6: #{main_forward.104} parent=1 // loop_footer
      %s12 = sadd.s32 1, %s8
    $region7: #{main_forward.104} parent=1 // loop_footer_branch
      %7 = sbr.rel target = $region3
    $region8: #{main_forward.104} parent=1 // loop_exit
      _

// kernel: main_forward.105
$region0: #{main_forward.105}
  #allocation0 [shape = 'u32[]', space=smem, size = 0x4, offset = 0x4, fixed_abs, tag = 'smem constant byte address 0x4 - core index']
  #allocation1 [shape = 'u32[144,128]{1,0:T(1,128)}', space=vmem, size = 0x12000, scoped, tag = 'internal scratch']
  %s0 = inlined_call_operand.vmem [shape: bf16[4,36], index: 0, kind: input, shape index: {}]
  %s1 = inlined_call_operand.vmem [shape: bf16[36,512], index: 1, kind: input, shape index: {}]
  %s2 = inlined_call_operand.vmem [shape: f32[4,512], index: 2, kind: output, shape index: {}]
  %s3 = sld [smem:[#allocation0]]
  $region79: #{main_forward.105} parent=0
    _
  %s5 = ssub.s32 1, %s3
  %s6 = scalar_select 0, %s5, %s3
  $region1: #{main_forward.105} parent=0
    #allocation2 [shape = 'u8[40960]{0}', space=vmem, size = 0xa000, scoped, tag = 'input window, operand 1']
    loop: start=0, step=1, limit=4
    $region2: #{main_forward.105} parent=1 // loop_pre_header
      _
    $region3: #{main_forward.105} parent=1 // loop_header
      %s8 = sphi 0, %s12
      %p9 = scmp.ge.s32.totalorder %s8, 4
      %s16 = sphi 0, %s16
      %s18 = sphi 0, %s16
      %s19 = sphi 0, %s18
      %s33 = sphi 0, %s19
      %s39 = sphi 0, %s41
      %s42 = sphi 0, %s39
      %s43 = sphi 0, %s42
      %s59 = sphi 0, %s43
      %s65 = sphi 0, %s67
      %s68 = sphi 0, %s65
      %s69 = sphi 0, %s68
      %s85 = sphi 0, %s69
    $region4: #{main_forward.105} parent=1 // loop_header_branch
      %11 = sbr.rel (%p9) target = $region8
    $region5: #{main_forward.105} parent=1 // loop_body
      %s13 = ssub.s32 %s8, 1
      %s14 = ssub.s32 %s8, 2
      %s15 = sadd.s32 %s8, 1
      %s17 = sadd.s32 %s16, 1
      %p20 = scmp.eq.s32.totalorder %s8, 1
      %p21 = scmp.ne.s32.totalorder %s16, %s18
      %p22 = scmp.eq.s32.totalorder %s8, 0
      %p23 = por %p21, %p22
      %p24 = scmp.ne.s32.totalorder %s16, %s18
      %p25 = scmp.eq.s32.totalorder %s13, 1
      %p26 = por %p24, %p25
      %p27 = scmp.ne.s32.totalorder %s18, %s19
      %p28 = scmp.eq.s32.totalorder %s13, 0
      %p29 = por %p27, %p28
      %p30 = scmp.ne.s32.totalorder %s18, %s19
      %p31 = scmp.eq.s32.totalorder %s14, 1
      %p32 = por %p30, %p31
      %p34 = scmp.ne.s32.totalorder %s19, %s33
      %p35 = scmp.eq.s32.totalorder %s14, 0
      %p36 = por %p34, %p35
      %s37 = ssub.s32 %s8, %s15
      %p38 = scmp.eq.s32.totalorder %s37, 0
      %s40 = sadd.s32 %s39, 1
      %s41 = scalar_select %p38, %s39, %s40
      %p44 = pneg %p38
      %p45 = scmp.eq.s32.totalorder %s8, 1
      %p46 = por %p44, %p45
      %p47 = scmp.ne.s32.totalorder %s39, %s42
      %p48 = scmp.eq.s32.totalorder %s8, 0
      %p49 = por %p47, %p48
      %p50 = scmp.ne.s32.totalorder %s39, %s42
      %p51 = scmp.eq.s32.totalorder %s13, 1
      %p52 = por %p50, %p51
      %p53 = scmp.ne.s32.totalorder %s42, %s43
      %p54 = scmp.eq.s32.totalorder %s13, 0
      %p55 = por %p53, %p54
      %p56 = scmp.ne.s32.totalorder %s42, %s43
      %p57 = scmp.eq.s32.totalorder %s14, 1
      %p58 = por %p56, %p57
      %p60 = scmp.ne.s32.totalorder %s43, %s59
      %p61 = scmp.eq.s32.totalorder %s14, 0
      %p62 = por %p60, %p61
      %s63 = ssub.s32 %s8, %s15
      %p64 = scmp.eq.s32.totalorder %s63, 0
      %s66 = sadd.s32 %s65, 1
      %s67 = scalar_select %p64, %s65, %s66
      %p70 = pneg %p64
      %p71 = scmp.eq.s32.totalorder %s8, 1
      %p72 = por %p70, %p71
      %p73 = scmp.ne.s32.totalorder %s65, %s68
      %p74 = scmp.eq.s32.totalorder %s8, 0
      %p75 = por %p73, %p74
      %p76 = scmp.ne.s32.totalorder %s65, %s68
      %p77 = scmp.eq.s32.totalorder %s13, 1
      %p78 = por %p76, %p77
      %p79 = scmp.ne.s32.totalorder %s68, %s69
      %p80 = scmp.eq.s32.totalorder %s13, 0
      %p81 = por %p79, %p80
      %p82 = scmp.ne.s32.totalorder %s68, %s69
      %p83 = scmp.eq.s32.totalorder %s14, 1
      %p84 = por %p82, %p83
      %p86 = scmp.ne.s32.totalorder %s69, %s85
      %p87 = scmp.eq.s32.totalorder %s14, 0
      %p88 = por %p86, %p87
      %p89 = scmp.le.s32.totalorder 1, %s8
      %p90 = scmp.lt.s32.totalorder %s8, 3
      %p91 = pnand %p89, %p90
      %p92 = pneg %p91
      // Predicated region
      $region9: #{main_forward.105} parent=5 // pred_check
        _
      $region10: #{main_forward.105} parent=5 // pred_check_branch
        %94 = sbr.rel (%p91) target = $region12
      $region11: #{main_forward.105} parent=5 // pred_region
        %s95 = ssub.s32 %s8, 1
        // Predicated region
        $region13: #{main_forward.105} parent=11 // pred_check
          %p96 = pneg %p29
        $region14: #{main_forward.105} parent=11 // pred_check_branch
          %98 = sbr.rel (%p96) target = $region16
        $region15: #{main_forward.105} parent=11 // pred_region
          _
        $region16: #{main_forward.105} parent=11 // pred_fallthru
          _
      $region12: #{main_forward.105} parent=5 // pred_fallthru
        _
      %p99 = scmp.lt.s32.totalorder %s8, 2
      // Predicated region
      $region17: #{main_forward.105} parent=5 // pred_check
        %p100 = pneg %p99
      $region18: #{main_forward.105} parent=5 // pred_check_branch
        %102 = sbr.rel (%p100) target = $region20
      $region19: #{main_forward.105} parent=5 // pred_region
        // Predicated region
        $region21: #{main_forward.105} parent=19 // pred_check
          %p103 = pneg %p49
        $region22: #{main_forward.105} parent=19 // pred_check_branch
          %105 = sbr.rel (%p103) target = $region24
        $region23: #{main_forward.105} parent=19 // pred_region
          %s106 = sand.u32 %s39, 1
          %s107 = sand.u32 %s39, 1
          %s108 = smul.addr %s107, 40
          %s109 = scalar_lea.vmem [#allocation2], %s108
          %s110 = smul.u32 2, %s8
          %s111 = smul.addr %s110, 4
          %s112 = scalar_lea.vmem %s1, %s111
          // Predicated region
          $region25: #{main_forward.105} parent=23 // pred_check
            _
          $region26: #{main_forward.105} parent=23 // pred_check_branch
            %114 = sbr.rel (0) target = $region28
          $region27: #{main_forward.105} parent=23 // pred_region
            // Predicated region
            $region29: #{main_forward.105} parent=27 // pred_check
              _
            $region30: #{main_forward.105} parent=27 // pred_check_branch
              %116 = sbr.rel (0) target = $region32
            $region31: #{main_forward.105} parent=27 // pred_region
              // Predicated region
              $region44: #{main_forward.105} parent=31 // pred_check
                _
              $region45: #{main_forward.105} parent=31 // pred_check_branch
                %140 = sbr.rel (0) target = $region47
              $region46: #{main_forward.105} parent=31 // pred_region
                loop: start=0, step=1, limit=1
                $region48: #{main_forward.105} parent=46 // loop_pre_header
                  _
                $region49: #{main_forward.105} parent=46 // loop_header
                  %s142 = sphi 0, %s146
                  %p143 = scmp.ge.s32.totalorder %s142, 1
                  %s147 = sphi %s112, %s112
                  %s148 = sphi %s109, %s109
                $region50: #{main_forward.105} parent=46 // loop_header_branch
                  %145 = sbr.rel (%p143) target = $region54
                $region51: #{main_forward.105} parent=46 // loop_body
                  %v149 = vld [vmem:[%s147] sm:$0xff]
                  %150 = vst [vmem:[%s148] sm:$0xff] %v149
                  %v151 = vld [vmem:[%s147 + $0x10] sm:$0xff]
                  %152 = vst [vmem:[%s148 + $0x8] sm:$0xff] %v151
                  %v153 = vld [vmem:[%s147 + $0x20] sm:$0xff]
                  %154 = vst [vmem:[%s148 + $0x10] sm:$0xff] %v153
                  %v155 = vld [vmem:[%s147 + $0x30] sm:$0xff]
                  %156 = vst [vmem:[%s148 + $0x18] sm:$0xff] %v155
                  %v157 = vld [vmem:[%s147 + $0x40] sm:$0xff]
                  %158 = vst [vmem:[%s148 + $0x20] sm:$0xff] %v157
                $region52: #{main_forward.105} parent=46 // loop_footer
                  %s146 = sadd.s32 1, %s142
                $region53: #{main_forward.105} parent=46 // loop_footer_branch
                  %141 = sbr.rel target = $region49
                $region54: #{main_forward.105} parent=46 // loop_exit
                  _
              $region47: #{main_forward.105} parent=31 // pred_fallthru
                _
              // Predicated region
              $region55: #{main_forward.105} parent=31 // pred_check
                _
              $region56: #{main_forward.105} parent=31 // pred_check_branch
                %160 = sbr.rel target = $region58
              $region57: #{main_forward.105} parent=31 // pred_region
                _
              $region58: #{main_forward.105} parent=31 // pred_fallthru
                _
            $region32: #{main_forward.105} parent=27 // pred_fallthru
              _
            // Predicated region
            $region33: #{main_forward.105} parent=27 // pred_check
              _
            $region34: #{main_forward.105} parent=27 // pred_check_branch
              %118 = sbr.rel target = $region36
            $region35: #{main_forward.105} parent=27 // pred_region
              %s120 = ssub.s32 256, 1
              loop: start=0, step=1, limit=1
              $region37: #{main_forward.105} parent=35 // loop_pre_header
                _
              $region38: #{main_forward.105} parent=35 // loop_header
                %s122 = sphi 0, %s126
                %p123 = scmp.ge.s32.totalorder %s122, 1
                %s127 = sphi %s112, %s112
                %s128 = sphi %s109, %s109
              $region39: #{main_forward.105} parent=35 // loop_header_branch
                %125 = sbr.rel (%p123) target = $region43
              $region40: #{main_forward.105} parent=35 // loop_body
                %v129 = vld [vmem:[%s127] sm:%s120]
                %130 = vst [vmem:[%s128] sm:%s120] %v129
                %v131 = vld [vmem:[%s127 + $0x10] sm:%s120]
                %132 = vst [vmem:[%s128 + $0x8] sm:%s120] %v131
                %v133 = vld [vmem:[%s127 + $0x20] sm:%s120]
                %134 = vst [vmem:[%s128 + $0x10] sm:%s120] %v133
                %v135 = vld [vmem:[%s127 + $0x30] sm:%s120]
                %136 = vst [vmem:[%s128 + $0x18] sm:%s120] %v135
                %v137 = vld [vmem:[%s127 + $0x40] sm:%s120]
                %138 = vst [vmem:[%s128 + $0x20] sm:%s120] %v137
              $region41: #{main_forward.105} parent=35 // loop_footer
                %s126 = sadd.s32 1, %s122
              $region42: #{main_forward.105} parent=35 // loop_footer_branch
                %121 = sbr.rel target = $region38
              $region43: #{main_forward.105} parent=35 // loop_exit
                _
            $region36: #{main_forward.105} parent=27 // pred_fallthru
              _
          $region28: #{main_forward.105} parent=23 // pred_fallthru
            _
          %161 = vnop
        $region24: #{main_forward.105} parent=19 // pred_fallthru
          _
      $region20: #{main_forward.105} parent=5 // pred_fallthru
        _
      %p162 = scmp.le.s32.totalorder 1, %s8
      %p163 = scmp.lt.s32.totalorder %s8, 3
      %p164 = pnand %p162, %p163
      %p165 = pneg %p164
      // Predicated region
      $region59: #{main_forward.105} parent=5 // pred_check
        _
      $region60: #{main_forward.105} parent=5 // pred_check_branch
        %167 = sbr.rel (%p164) target = $region62
      $region61: #{main_forward.105} parent=5 // pred_region
        %s168 = ssub.s32 %s8, 1
        %s169 = sand.u32 %s42, 1
        %s170 = sand.u32 %s42, 1
        %s171 = smul.addr %s170, 40
        %s172 = scalar_lea.vmem [#allocation2], %s171
        // Predicated region
        $region63: #{main_forward.105} parent=61 // pred_check
          %p173 = pneg %p55
        $region64: #{main_forward.105} parent=61 // pred_check_branch
          %175 = sbr.rel (%p173) target = $region66
        $region65: #{main_forward.105} parent=61 // pred_region
          _
        $region66: #{main_forward.105} parent=61 // pred_fallthru
          _
        %p176 = pneg %p29
        %p177 = pneg %p26
        %s178 = sand.u32 %s42, 1
        %s179 = sand.u32 %s42, 1
        %s180 = smul.addr %s179, 40
        %s181 = scalar_lea.vmem [#allocation2], %s180
        %p182 = pneg %p55
        %p183 = pneg %p52
        %p184 = pneg %p81
        %p185 = pneg %p78
        %s186 = smul.u32 2, %s13
        %p187 = scmp.lt.s32.totalorder %s186, 3
        %s188 = scalar_select %p187, %s186, 3
        %s189 = smul.addr %s188, 4
        %s190 = scalar_lea.vmem %s2, %s189
        %s191 = smul.u32 2, %s13
        %s192 = smul.u32 2, %s13
        %p193 = scmp.lt.s32.totalorder %s192, 3
        %s194 = scalar_select %p193, %s192, 3
        %s195 = smul.addr %s194, 4
        %s196 = scalar_lea.vmem %s2, %s195
        %s197 = smul.u32 2, %s13
        %v199 = vld [vmem:[%s0] sm:$0x3]
        %v200 = vld [vmem:[%s172] sm:$0xff]
        %v201 = vld [vmem:[%s172 + $0x8] sm:$0xff]
        %v202 = vld [vmem:[%s172 + $0x10] sm:$0xff]
        %v203 = vld [vmem:[%s172 + $0x18] sm:$0xff]
        %v204 = vld [vmem:[%s172 + $0x20] sm:$0x33]
        %v210 = vunpack.c.l.b16 %v200
        %v211 = vunpack.c.h.b16 %v200
        %v212 = vunpack.c.l.b16 %v201
        %v213 = vunpack.c.h.b16 %v201
        %v214 = vunpack.c.l.b16 %v202
        %v215 = vunpack.c.h.b16 %v202
        %v216 = vunpack.c.l.b16 %v203
        %v217 = vunpack.c.h.b16 %v203
        %v218 = vunpack.c.l.b16 %v204
        %v219 = vunpack.c.h.b16 %v204
        %v220 = vpack.c.b16 %v212, %v210
        %v221 = vpack.c.b16 %v213, %v211
        %v222 = vpack.c.b16 %v216, %v214
        %v223 = vpack.c.b16 %v217, %v215
        %v224 = vpack.c.b16 %v218, %v218
        %v225 = vpack.c.b16 %v219, %v219
        %vm230 = vcmask 293888
        %v232 = vsel %vm230, %v199, 0
        %vm234 = vcmask 1041408
        %v236 = vsel %vm234, %v224, 0
        %v239 = vsel %vm234, %v225, 0
        %241 = vmatprep.subr.bf16.mxu0 0
        %242 = vmatpush1.bf16.msra.mxu0 0
        %243 = vmatprep.subr.bf16.mxu0 0
        %244 = vmatpush1.bf16.msra.mxu0 0
        %245 = vmatprep.subr.bf16.mxu0 0
        %246 = vmatpush1.bf16.msra.mxu0 0
        %247 = vmatprep.subr.bf16.mxu0 0
        %248 = vmatpush1.bf16.msra.mxu0 0
        %249 = vmatprep.subr.bf16.mxu0 0
        %250 = vmatpush1.bf16.msra.mxu0 0
        %251 = vmatprep.subr.bf16.mxu0 %v239
        %252 = vmatpush1.bf16.msra.mxu0 %v236
        %253 = vmatprep.subr.bf16.mxu0 %v223
        %254 = vmatpush1.bf16.msra.mxu0 %v222
        %255 = vmatprep.subr.bf16.mxu0 %v221
        %256 = vmatpush1.bf16.msra.mxu0 %v220
        %257 = vmatprep.subr.bf16.mxu0 0
        %258 = vmatpush2.bf16.msra.mxu0 0
        %259 = vmatprep.subr.bf16.mxu0 0
        %260 = vmatpush2.bf16.msra.mxu0 0
        %261 = vmatprep.subr.bf16.mxu0 0
        %262 = vmatpush2.bf16.msra.mxu0 0
        %263 = vmatprep.subr.bf16.mxu0 0
        %264 = vmatpush2.bf16.msra.mxu0 0
        %265 = vmatprep.subr.bf16.mxu0 0
        %266 = vmatpush2.bf16.msra.mxu0 0
        %267 = vmatprep.subr.bf16.mxu0 0
        %268 = vmatpush2.bf16.msra.mxu0 0
        %269 = vmatprep.subr.bf16.mxu0 0
        %270 = vmatpush2.bf16.msra.mxu0 0
        %271 = vmatprep.subr.bf16.mxu0 0
        %272 = vmatpush2.bf16.msra.mxu0 0
        %273 = vmatprep.mubr.bf16.mxu0 0
        %274 = vmatmul.mubr.bf16.gmra.mxu0 %v232
        %v275 = vpop.f32.mrf.mxu0
        %v276 = vadd.f32 0.0, %v275
        %v277 = vpop.f32.mrf.mxu0
        %v278 = vadd.f32 0.0, %v277
        %v279 = vpop.f32.mrf.mxu0
        %v280 = vpop.f32.mrf.mxu0
        %281 = vdwg.mxu0
        %v284 = vcombine.low %v276, %v278
        %286 = vst [vmem:[%s196] sm:$0xff] %v284
        %s287 = smul.u32 2, %s13
        %p288 = scmp.lt.s32.totalorder %s287, 3
        %s289 = scalar_select %p288, %s287, 3
        %s290 = smul.addr %s289, 4
        %s291 = scalar_lea.vmem %s2, %s290
        // Predicated region
        $region67: #{main_forward.105} parent=61 // pred_check
          %p292 = pneg %p78
        $region68: #{main_forward.105} parent=61 // pred_check_branch
          %294 = sbr.rel (%p292) target = $region70
        $region69: #{main_forward.105} parent=61 // pred_region
          %s295 = smul.u32 2, %s13
        $region70: #{main_forward.105} parent=61 // pred_fallthru
          _
      $region62: #{main_forward.105} parent=5 // pred_fallthru
        _
      %p296 = scmp.le.s32.totalorder 2, %s8
      // Predicated region
      $region71: #{main_forward.105} parent=5 // pred_check
        %p297 = pneg %p296
      $region72: #{main_forward.105} parent=5 // pred_check_branch
        %299 = sbr.rel (%p297) target = $region74
      $region73: #{main_forward.105} parent=5 // pred_region
        %s300 = ssub.s32 %s8, 2
        // Predicated region
        $region75: #{main_forward.105} parent=73 // pred_check
          %p301 = pneg %p84
        $region76: #{main_forward.105} parent=73 // pred_check_branch
          %303 = sbr.rel (%p301) target = $region78
        $region77: #{main_forward.105} parent=73 // pred_region
          %s304 = smul.u32 2, %s14
          %p305 = scmp.lt.s32.totalorder %s304, 3
          %s306 = scalar_select %p305, %s304, 3
          %s307 = smul.addr %s306, 4
          %s308 = scalar_lea.vmem %s2, %s307
        $region78: #{main_forward.105} parent=73 // pred_fallthru
          _
      $region74: #{main_forward.105} parent=5 // pred_fallthru
        _
    $region6: #{main_forward.105} parent=1 // loop_footer
      %s12 = sadd.s32 1, %s8
    $region7: #{main_forward.105} parent=1 // loop_footer_branch
      %7 = sbr.rel target = $region3
    $region8: #{main_forward.105} parent=1 // loop_exit
      _

// kernel: main_forward.106
$region0: #{main_forward.106}
  #allocation0 [shape = 'u32[]', space=smem, size = 0x4, offset = 0x4, fixed_abs, tag = 'smem constant byte address 0x4 - core index']
  #allocation1 [shape = 'u32[144,128]{1,0:T(1,128)}', space=vmem, size = 0x12000, scoped, tag = 'internal scratch']
  %s0 = inlined_call_operand.vmem [shape: f32[2,4,256], index: 0, kind: input, shape index: {}]
  %s1 = inlined_call_operand.vmem [shape: f32[4,1], index: 1, kind: input, shape index: {}]
  %s2 = inlined_call_operand.vmem [shape: f32[4,1], index: 2, kind: input, shape index: {}]
  %s3 = inlined_call_operand.vmem [shape: f32[4,1], index: 3, kind: input, shape index: {}]
  %s4 = inlined_call_operand.vmem [shape: f32[2,4,256], index: 4, kind: output, shape index: {}]
  %s5 = sld [smem:[#allocation0]]
  $region49: #{main_forward.106} parent=0
    _
  %s7 = ssub.s32 1, %s5
  %s8 = scalar_select 0, %s7, %s5
  loop: start=0, step=1, limit=4
  $region2: #{main_forward.106} parent=0 // loop_pre_header
    _
  $region3: #{main_forward.106} parent=0 // loop_header
    %s10 = sphi 0, %s14
    %p11 = scmp.ge.s32.totalorder %s10, 4
    %s20 = sphi 0, %s22
    %s23 = sphi 0, %s20
    %s24 = sphi 0, %s23
    %s40 = sphi 0, %s24
    %s44 = sphi 0, %s44
    %s46 = sphi 0, %s44
    %s47 = sphi 0, %s46
    %s61 = sphi 0, %s47
    %s65 = sphi 0, %s65
    %s67 = sphi 0, %s65
    %s68 = sphi 0, %s67
    %s82 = sphi 0, %s68
    %s86 = sphi 0, %s86
    %s88 = sphi 0, %s86
    %s89 = sphi 0, %s88
    %s103 = sphi 0, %s89
    %s109 = sphi 0, %s111
    %s112 = sphi 0, %s109
    %s113 = sphi 0, %s112
    %s129 = sphi 0, %s113
  $region4: #{main_forward.106} parent=0 // loop_header_branch
    %13 = sbr.rel (%p11) target = $region8
  $region5: #{main_forward.106} parent=0 // loop_body
    %s15 = ssub.s32 %s10, 1
    %s16 = ssub.s32 %s10, 2
    %s17 = sadd.s32 %s10, 1
    %s18 = ssub.s32 %s10, %s17
    %p19 = scmp.eq.s32.totalorder %s18, 0
    %s21 = sadd.s32 %s20, 1
    %s22 = scalar_select %p19, %s20, %s21
    %p25 = pneg %p19
    %p26 = scmp.eq.s32.totalorder %s10, 1
    %p27 = por %p25, %p26
    %p28 = scmp.ne.s32.totalorder %s20, %s23
    %p29 = scmp.eq.s32.totalorder %s10, 0
    %p30 = por %p28, %p29
    %p31 = scmp.ne.s32.totalorder %s20, %s23
    %p32 = scmp.eq.s32.totalorder %s15, 1
    %p33 = por %p31, %p32
    %p34 = scmp.ne.s32.totalorder %s23, %s24
    %p35 = scmp.eq.s32.totalorder %s15, 0
    %p36 = por %p34, %p35
    %p37 = scmp.ne.s32.totalorder %s23, %s24
    %p38 = scmp.eq.s32.totalorder %s16, 1
    %p39 = por %p37, %p38
    %p41 = scmp.ne.s32.totalorder %s24, %s40
    %p42 = scmp.eq.s32.totalorder %s16, 0
    %p43 = por %p41, %p42
    %s45 = sadd.s32 %s44, 1
    %p48 = scmp.eq.s32.totalorder %s10, 1
    %p49 = scmp.ne.s32.totalorder %s44, %s46
    %p50 = scmp.eq.s32.totalorder %s10, 0
    %p51 = por %p49, %p50
    %p52 = scmp.ne.s32.totalorder %s44, %s46
    %p53 = scmp.eq.s32.totalorder %s15, 1
    %p54 = por %p52, %p53
    %p55 = scmp.ne.s32.totalorder %s46, %s47
    %p56 = scmp.eq.s32.totalorder %s15, 0
    %p57 = por %p55, %p56
    %p58 = scmp.ne.s32.totalorder %s46, %s47
    %p59 = scmp.eq.s32.totalorder %s16, 1
    %p60 = por %p58, %p59
    %p62 = scmp.ne.s32.totalorder %s47, %s61
    %p63 = scmp.eq.s32.totalorder %s16, 0
    %p64 = por %p62, %p63
    %s66 = sadd.s32 %s65, 1
    %p69 = scmp.eq.s32.totalorder %s10, 1
    %p70 = scmp.ne.s32.totalorder %s65, %s67
    %p71 = scmp.eq.s32.totalorder %s10, 0
    %p72 = por %p70, %p71
    %p73 = scmp.ne.s32.totalorder %s65, %s67
    %p74 = scmp.eq.s32.totalorder %s15, 1
    %p75 = por %p73, %p74
    %p76 = scmp.ne.s32.totalorder %s67, %s68
    %p77 = scmp.eq.s32.totalorder %s15, 0
    %p78 = por %p76, %p77
    %p79 = scmp.ne.s32.totalorder %s67, %s68
    %p80 = scmp.eq.s32.totalorder %s16, 1
    %p81 = por %p79, %p80
    %p83 = scmp.ne.s32.totalorder %s68, %s82
    %p84 = scmp.eq.s32.totalorder %s16, 0
    %p85 = por %p83, %p84
    %s87 = sadd.s32 %s86, 1
    %p90 = scmp.eq.s32.totalorder %s10, 1
    %p91 = scmp.ne.s32.totalorder %s86, %s88
    %p92 = scmp.eq.s32.totalorder %s10, 0
    %p93 = por %p91, %p92
    %p94 = scmp.ne.s32.totalorder %s86, %s88
    %p95 = scmp.eq.s32.totalorder %s15, 1
    %p96 = por %p94, %p95
    %p97 = scmp.ne.s32.totalorder %s88, %s89
    %p98 = scmp.eq.s32.totalorder %s15, 0
    %p99 = por %p97, %p98
    %p100 = scmp.ne.s32.totalorder %s88, %s89
    %p101 = scmp.eq.s32.totalorder %s16, 1
    %p102 = por %p100, %p101
    %p104 = scmp.ne.s32.totalorder %s89, %s103
    %p105 = scmp.eq.s32.totalorder %s16, 0
    %p106 = por %p104, %p105
    %s107 = ssub.s32 %s10, %s17
    %p108 = scmp.eq.s32.totalorder %s107, 0
    %s110 = sadd.s32 %s109, 1
    %s111 = scalar_select %p108, %s109, %s110
    %p114 = pneg %p108
    %p115 = scmp.eq.s32.totalorder %s10, 1
    %p116 = por %p114, %p115
    %p117 = scmp.ne.s32.totalorder %s109, %s112
    %p118 = scmp.eq.s32.totalorder %s10, 0
    %p119 = por %p117, %p118
    %p120 = scmp.ne.s32.totalorder %s109, %s112
    %p121 = scmp.eq.s32.totalorder %s15, 1
    %p122 = por %p120, %p121
    %p123 = scmp.ne.s32.totalorder %s112, %s113
    %p124 = scmp.eq.s32.totalorder %s15, 0
    %p125 = por %p123, %p124
    %p126 = scmp.ne.s32.totalorder %s112, %s113
    %p127 = scmp.eq.s32.totalorder %s16, 1
    %p128 = por %p126, %p127
    %p130 = scmp.ne.s32.totalorder %s113, %s129
    %p131 = scmp.eq.s32.totalorder %s16, 0
    %p132 = por %p130, %p131
    %p133 = scmp.le.s32.totalorder 1, %s10
    %p134 = scmp.lt.s32.totalorder %s10, 3
    %p135 = pnand %p133, %p134
    %p136 = pneg %p135
    // Predicated region
    $region9: #{main_forward.106} parent=5 // pred_check
      _
    $region10: #{main_forward.106} parent=5 // pred_check_branch
      %138 = sbr.rel (%p135) target = $region12
    $region11: #{main_forward.106} parent=5 // pred_region
      %s139 = ssub.s32 %s10, 1
      // Predicated region
      $region13: #{main_forward.106} parent=11 // pred_check
        %p140 = pneg %p57
      $region14: #{main_forward.106} parent=11 // pred_check_branch
        %142 = sbr.rel (%p140) target = $region16
      $region15: #{main_forward.106} parent=11 // pred_region
        _
      $region16: #{main_forward.106} parent=11 // pred_fallthru
        _
      // Predicated region
      $region17: #{main_forward.106} parent=11 // pred_check
        %p143 = pneg %p78
      $region18: #{main_forward.106} parent=11 // pred_check_branch
        %145 = sbr.rel (%p143) target = $region20
      $region19: #{main_forward.106} parent=11 // pred_region
        _
      $region20: #{main_forward.106} parent=11 // pred_fallthru
        _
      // Predicated region
      $region21: #{main_forward.106} parent=11 // pred_check
        %p146 = pneg %p99
      $region22: #{main_forward.106} parent=11 // pred_check_branch
        %148 = sbr.rel (%p146) target = $region24
      $region23: #{main_forward.106} parent=11 // pred_region
        _
      $region24: #{main_forward.106} parent=11 // pred_fallthru
        _
    $region12: #{main_forward.106} parent=5 // pred_fallthru
      _
    %p149 = scmp.lt.s32.totalorder %s10, 2
    // Predicated region
    $region25: #{main_forward.106} parent=5 // pred_check
      %p150 = pneg %p149
    $region26: #{main_forward.106} parent=5 // pred_check_branch
      %152 = sbr.rel (%p150) target = $region28
    $region27: #{main_forward.106} parent=5 // pred_region
      // Predicated region
      $region29: #{main_forward.106} parent=27 // pred_check
        %p153 = pneg %p30
      $region30: #{main_forward.106} parent=27 // pred_check_branch
        %155 = sbr.rel (%p153) target = $region32
      $region31: #{main_forward.106} parent=27 // pred_region
        %p156 = scmp.lt.s32.totalorder %s10, 1
        %s157 = scalar_select %p156, %s10, 1
        %s158 = smul.addr %s157, 2
        %s159 = smul.addr %s158, 4
        %s160 = scalar_lea.vmem %s0, %s159
      $region32: #{main_forward.106} parent=27 // pred_fallthru
        _
    $region28: #{main_forward.106} parent=5 // pred_fallthru
      _
    %p161 = scmp.le.s32.totalorder 1, %s10
    %p162 = scmp.lt.s32.totalorder %s10, 3
    %p163 = pnand %p161, %p162
    %p164 = pneg %p163
    // Predicated region
    $region33: #{main_forward.106} parent=5 // pred_check
      _
    $region34: #{main_forward.106} parent=5 // pred_check_branch
      %166 = sbr.rel (%p163) target = $region36
    $region35: #{main_forward.106} parent=5 // pred_region
      %s167 = ssub.s32 %s10, 1
      %p168 = scmp.lt.s32.totalorder %s15, 1
      %s169 = scalar_select %p168, %s15, 1
      %s170 = smul.addr %s169, 2
      %s171 = smul.addr %s170, 4
      %s172 = scalar_lea.vmem %s0, %s171
      %p173 = pneg %p36
      %p174 = pneg %p33
      %p175 = pneg %p57
      %p176 = pneg %p54
      %p177 = pneg %p78
      %p178 = pneg %p75
      %p179 = pneg %p99
      %p180 = pneg %p96
      %p181 = pneg %p125
      %p182 = pneg %p122
      %p183 = scmp.lt.s32.totalorder %s15, 1
      %s184 = scalar_select %p183, %s15, 1
      %s185 = smul.addr %s184, 2
      %s186 = smul.addr %s185, 4
      %s187 = scalar_lea.vmem %s4, %s186
      %p188 = scmp.lt.s32.totalorder %s15, 1
      %s189 = scalar_select %p188, %s15, 1
      %s190 = smul.addr %s189, 2
      %s191 = smul.addr %s190, 4
      %s192 = scalar_lea.vmem %s0, %s191
      %p193 = scmp.lt.s32.totalorder %s15, 1
      %s194 = scalar_select %p193, %s15, 1
      %s195 = smul.addr %s194, 2
      %s196 = smul.addr %s195, 4
      %s197 = scalar_lea.vmem %s4, %s196
      %v198 = vld [vmem:[%s192] sm:$0xff]
      %v200 = vcombine.high %v198, %v198
      %vm202 = vcmask 1043456
      %v203 = vsel %vm202, %v198, 0.0
      %v204 = vsel %vm202, %v200, 0.0
      %v205 = vadd.f32 %v203, %v204
      %206 = vadd.xlane.f32.xlu0 %v205
      %v207 = vpop.xlane.xlu0 %206
      %v208 = vrot.slane %v207, 4
      %v209 = vadd.f32 %v207, %v208
      %v210 = vrot.slane %v209, 2
      %v211 = vadd.f32 %v209, %v210
      %v212 = vrot.slane %v211, 1
      %v213 = vadd.f32 %v211, %v212
      %s214 = vtos %v213
      %v215 = vrcp.pop 1024.0
      %s216 = vtos %v215
      %s217 = smul.f32 %s214, %s216
      %v218 = vstv %s217
      %v219 = vsub.f32 %v198, %v218
      %v220 = vmul.f32 %v219, %v219
      %v222 = vcombine.high %v220, %v220
      %v224 = vsel %vm202, %v220, 0.0
      %v225 = vsel %vm202, %v222, 0.0
      %v226 = vadd.f32 %v224, %v225
      %227 = vadd.xlane.f32.xlu0 %v226
      %v228 = vpop.xlane.xlu0 %227
      %v229 = vrot.slane %v228, 4
      %v230 = vadd.f32 %v228, %v229
      %v231 = vrot.slane %v230, 2
      %v232 = vadd.f32 %v230, %v231
      %v233 = vrot.slane %v232, 1
      %v234 = vadd.f32 %v232, %v233
      %s235 = vtos %v234
      %v236 = vrcp.pop 1024.0
      %s237 = vtos %v236
      %s238 = smul.f32 %s235, %s237
      %s239 = sadd.f32 %s238, 1e-05
      %v240 = vstv %s239
      %v241 = vrsqrt.pop %v240
      %s242 = vtos %v241
      %v243 = vstv %s242
      %v244 = vmul.f32 %v219, %v243
      %v245 = vld [vmem:[%s1] sm:$0xf]
      %247 = vset.pattern.permute.xlu0 0
      %248 = vperm.xlu0 %247, %v245
      %v249 = vpop.permute.xlu0 %248
      %v251 = vunpack.c.l.s4 839922192
      %v252 = vunpack.c.0.s8 %v251
      %v253 = vlaneseq
      %v254 = vshrl.u32 %v253, 7
      %v255 = vsub.s32 %v252, %v254
      %v256 = vrot.slane %v249, %v255
      %v258 = vmul.f32 %v244, %v256
      %v259 = vld [vmem:[%s2] sm:$0xf]
      %261 = vset.pattern.permute.xlu0 0
      %262 = vperm.xlu0 %261, %v259
      %v263 = vpop.permute.xlu0 %262
      %v265 = vunpack.c.l.s4 839922192
      %v266 = vunpack.c.0.s8 %v265
      %v267 = vlaneseq
      %v268 = vshrl.u32 %v267, 7
      %v269 = vsub.s32 %v266, %v268
      %v270 = vrot.slane %v263, %v269
      %v272 = vadd.f32 %v258, %v270
      %vm273 = vcmp.ge.f32.partialorder %v272, 0.0
      %v274 = vld [vmem:[%s3] sm:$0xf]
      %276 = vset.pattern.permute.xlu0 0
      %277 = vperm.xlu0 %276, %v274
      %v278 = vpop.permute.xlu0 %277
      %v281 = vcombine.high %v272, %v272
      %v283 = vmul.f32 %v278, %v272
      %v284 = vmul.f32 %v278, %v281
      %v287 = vcombine.low %v283, %v284
      %v289 = vsel %vm273, %v272, %v287
      %290 = vst [vmem:[%s197] sm:$0xff] %v289
      %p291 = scmp.lt.s32.totalorder %s15, 1
      %s292 = scalar_select %p291, %s15, 1
      %s293 = smul.addr %s292, 2
      %s294 = smul.addr %s293, 4
      %s295 = scalar_lea.vmem %s4, %s294
      // Predicated region
      $region37: #{main_forward.106} parent=35 // pred_check
        %p296 = pneg %p122
      $region38: #{main_forward.106} parent=35 // pred_check_branch
        %298 = sbr.rel (%p296) target = $region40
      $region39: #{main_forward.106} parent=35 // pred_region
        _
      $region40: #{main_forward.106} parent=35 // pred_fallthru
        _
    $region36: #{main_forward.106} parent=5 // pred_fallthru
      _
    %p299 = scmp.le.s32.totalorder 2, %s10
    // Predicated region
    $region41: #{main_forward.106} parent=5 // pred_check
      %p300 = pneg %p299
    $region42: #{main_forward.106} parent=5 // pred_check_branch
      %302 = sbr.rel (%p300) target = $region44
    $region43: #{main_forward.106} parent=5 // pred_region
      %s303 = ssub.s32 %s10, 2
      // Predicated region
      $region45: #{main_forward.106} parent=43 // pred_check
        %p304 = pneg %p128
      $region46: #{main_forward.106} parent=43 // pred_check_branch
        %306 = sbr.rel (%p304) target = $region48
      $region47: #{main_forward.106} parent=43 // pred_region
        %p307 = scmp.lt.s32.totalorder %s16, 1
        %s308 = scalar_select %p307, %s16, 1
        %s309 = smul.addr %s308, 2
        %s310 = smul.addr %s309, 4
        %s311 = scalar_lea.vmem %s4, %s310
      $region48: #{main_forward.106} parent=43 // pred_fallthru
        _
    $region44: #{main_forward.106} parent=5 // pred_fallthru
      _
  $region6: #{main_forward.106} parent=0 // loop_footer
    %s14 = sadd.s32 1, %s10
  $region7: #{main_forward.106} parent=0 // loop_footer_branch
    %9 = sbr.rel target = $region3
  $region8: #{main_forward.106} parent=0 // loop_exit
    _

// kernel: main_forward.114
$region0: #{main_forward.114}
  #allocation0 [shape = 'u32[]', space=smem, size = 0x4, offset = 0x4, fixed_abs, tag = 'smem constant byte address 0x4 - core index']
  #allocation1 [shape = 'u32[144,128]{1,0:T(1,128)}', space=vmem, size = 0x12000, scoped, tag = 'internal scratch']
  %s0 = inlined_call_operand.vmem [shape: bf16[8,4], index: 0, kind: input, shape index: {}]
  %s1 = inlined_call_operand.vmem [shape: bf16[4,128], index: 1, kind: input, shape index: {}]
  %s2 = inlined_call_operand.vmem [shape: f32[8,128], index: 2, kind: output, shape index: {}]
  %s3 = sld [smem:[#allocation0]]
  $region18: #{main_forward.114} parent=0
    _
  %s5 = ssub.s32 1, %s3
  %s6 = scalar_select 0, %s5, %s3
  // Predicated region
  $region2: #{main_forward.114} parent=0 // pred_check
    _
  $region3: #{main_forward.114} parent=0 // pred_check_branch
    %8 = sbr.rel (0) target = $region5
  $region4: #{main_forward.114} parent=0 // pred_region
    _
  $region5: #{main_forward.114} parent=0 // pred_fallthru
    _
  // Predicated region
  $region6: #{main_forward.114} parent=0 // pred_check
    _
  $region7: #{main_forward.114} parent=0 // pred_check_branch
    %10 = sbr.rel (0) target = $region9
  $region8: #{main_forward.114} parent=0 // pred_region
    _
  $region9: #{main_forward.114} parent=0 // pred_fallthru
    _
  %v12 = vld [vmem:[%s0] sm:$0xf]
  %v13 = vld [vmem:[%s1] sm:$0x3]
  %vm14 = vcmask 31744
  %v16 = vsel %vm14, %v12, 0
  %vm18 = vcmask 1041408
  %v20 = vsel %vm18, %v13, 0
  %22 = vmatprep.subr.bf16.mxu0 0
  %23 = vmatpush1.bf16.msra.mxu0 0
  %24 = vmatprep.subr.bf16.mxu0 0
  %25 = vmatpush1.bf16.msra.mxu0 0
  %26 = vmatprep.subr.bf16.mxu0 0
  %27 = vmatpush1.bf16.msra.mxu0 0
  %28 = vmatprep.subr.bf16.mxu0 0
  %29 = vmatpush1.bf16.msra.mxu0 0
  %30 = vmatprep.subr.bf16.mxu0 0
  %31 = vmatpush1.bf16.msra.mxu0 0
  %32 = vmatprep.subr.bf16.mxu0 0
  %33 = vmatpush1.bf16.msra.mxu0 0
  %34 = vmatprep.subr.bf16.mxu0 0
  %35 = vmatpush1.bf16.msra.mxu0 0
  %36 = vmatprep.subr.bf16.mxu0 0
  %37 = vmatpush1.bf16.msra.mxu0 %v20
  %38 = vmatprep.subr.bf16.mxu0 0
  %39 = vmatpush2.bf16.msra.mxu0 0
  %40 = vmatprep.subr.bf16.mxu0 0
  %41 = vmatpush2.bf16.msra.mxu0 0
  %42 = vmatprep.subr.bf16.mxu0 0
  %43 = vmatpush2.bf16.msra.mxu0 0
  %44 = vmatprep.subr.bf16.mxu0 0
  %45 = vmatpush2.bf16.msra.mxu0 0
  %46 = vmatprep.subr.bf16.mxu0 0
  %47 = vmatpush2.bf16.msra.mxu0 0
  %48 = vmatprep.subr.bf16.mxu0 0
  %49 = vmatpush2.bf16.msra.mxu0 0
  %50 = vmatprep.subr.bf16.mxu0 0
  %51 = vmatpush2.bf16.msra.mxu0 0
  %52 = vmatprep.subr.bf16.mxu0 0
  %53 = vmatpush2.bf16.msra.mxu0 0
  %54 = vmatprep.mubr.bf16.mxu0 0
  %55 = vmatmul.mubr.bf16.gmra.mxu0 %v16
  %v56 = vpop.f32.mrf.mxu0
  %v57 = vadd.f32 0.0, %v56
  %v58 = vpop.f32.mrf.mxu0
  %v59 = vpop.f32.mrf.mxu0
  %v60 = vpop.f32.mrf.mxu0
  %61 = vdwg.mxu0
  %62 = vst [vmem:[%s2] sm:$0xff] %v57
  // Predicated region
  $region10: #{main_forward.114} parent=0 // pred_check
    _
  $region11: #{main_forward.114} parent=0 // pred_check_branch
    %64 = sbr.rel (0) target = $region13
  $region12: #{main_forward.114} parent=0 // pred_region
    _
  $region13: #{main_forward.114} parent=0 // pred_fallthru
    _
  // Predicated region
  $region14: #{main_forward.114} parent=0 // pred_check
    _
  $region15: #{main_forward.114} parent=0 // pred_check_branch
    %66 = sbr.rel (0) target = $region17
  $region16: #{main_forward.114} parent=0 // pred_region
    _
  $region17: #{main_forward.114} parent=0 // pred_fallthru
    _

// kernel: main_forward.113
$region0: #{main_forward.113}
  #allocation0 [shape = 'u32[]', space=smem, size = 0x4, offset = 0x4, fixed_abs, tag = 'smem constant byte address 0x4 - core index']
  #allocation1 [shape = 'u32[144,128]{1,0:T(1,128)}', space=vmem, size = 0x12000, scoped, tag = 'internal scratch']
  %s0 = inlined_call_operand.vmem [shape: f32[2,4,256], index: 0, kind: input, shape index: {}]
  %s1 = inlined_call_operand.vmem [shape: f32[2,4,256], index: 1, kind: input, shape index: {}]
  %s2 = inlined_call_operand.vmem [shape: f32[4,1], index: 2, kind: input, shape index: {}]
  %s3 = inlined_call_operand.vmem [shape: f32[4,1], index: 3, kind: input, shape index: {}]
  %s4 = inlined_call_operand.vmem [shape: f32[4,1], index: 4, kind: input, shape index: {}]
  %s5 = inlined_call_operand.vmem [shape: f32[2,4,256], index: 5, kind: output, shape index: {}]
  %s6 = sld [smem:[#allocation0]]
  $region53: #{main_forward.113} parent=0
    _
  %s8 = ssub.s32 1, %s6
  %s9 = scalar_select 0, %s8, %s6
  loop: start=0, step=1, limit=4
  $region2: #{main_forward.113} parent=0 // loop_pre_header
    _
  $region3: #{main_forward.113} parent=0 // loop_header
    %s11 = sphi 0, %s15
    %p12 = scmp.ge.s32.totalorder %s11, 4
    %s21 = sphi 0, %s23
    %s24 = sphi 0, %s21
    %s25 = sphi 0, %s24
    %s41 = sphi 0, %s25
    %s47 = sphi 0, %s49
    %s50 = sphi 0, %s47
    %s51 = sphi 0, %s50
    %s67 = sphi 0, %s51
    %s71 = sphi 0, %s71
    %s73 = sphi 0, %s71
    %s74 = sphi 0, %s73
    %s88 = sphi 0, %s74
    %s92 = sphi 0, %s92
    %s94 = sphi 0, %s92
    %s95 = sphi 0, %s94
    %s109 = sphi 0, %s95
    %s113 = sphi 0, %s113
    %s115 = sphi 0, %s113
    %s116 = sphi 0, %s115
    %s130 = sphi 0, %s116
    %s136 = sphi 0, %s138
    %s139 = sphi 0, %s136
    %s140 = sphi 0, %s139
    %s156 = sphi 0, %s140
  $region4: #{main_forward.113} parent=0 // loop_header_branch
    %14 = sbr.rel (%p12) target = $region8
  $region5: #{main_forward.113} parent=0 // loop_body
    %s16 = ssub.s32 %s11, 1
    %s17 = ssub.s32 %s11, 2
    %s18 = sadd.s32 %s11, 1
    %s19 = ssub.s32 %s11, %s18
    %p20 = scmp.eq.s32.totalorder %s19, 0
    %s22 = sadd.s32 %s21, 1
    %s23 = scalar_select %p20, %s21, %s22
    %p26 = pneg %p20
    %p27 = scmp.eq.s32.totalorder %s11, 1
    %p28 = por %p26, %p27
    %p29 = scmp.ne.s32.totalorder %s21, %s24
    %p30 = scmp.eq.s32.totalorder %s11, 0
    %p31 = por %p29, %p30
    %p32 = scmp.ne.s32.totalorder %s21, %s24
    %p33 = scmp.eq.s32.totalorder %s16, 1
    %p34 = por %p32, %p33
    %p35 = scmp.ne.s32.totalorder %s24, %s25
    %p36 = scmp.eq.s32.totalorder %s16, 0
    %p37 = por %p35, %p36
    %p38 = scmp.ne.s32.totalorder %s24, %s25
    %p39 = scmp.eq.s32.totalorder %s17, 1
    %p40 = por %p38, %p39
    %p42 = scmp.ne.s32.totalorder %s25, %s41
    %p43 = scmp.eq.s32.totalorder %s17, 0
    %p44 = por %p42, %p43
    %s45 = ssub.s32 %s11, %s18
    %p46 = scmp.eq.s32.totalorder %s45, 0
    %s48 = sadd.s32 %s47, 1
    %s49 = scalar_select %p46, %s47, %s48
    %p52 = pneg %p46
    %p53 = scmp.eq.s32.totalorder %s11, 1
    %p54 = por %p52, %p53
    %p55 = scmp.ne.s32.totalorder %s47, %s50
    %p56 = scmp.eq.s32.totalorder %s11, 0
    %p57 = por %p55, %p56
    %p58 = scmp.ne.s32.totalorder %s47, %s50
    %p59 = scmp.eq.s32.totalorder %s16, 1
    %p60 = por %p58, %p59
    %p61 = scmp.ne.s32.totalorder %s50, %s51
    %p62 = scmp.eq.s32.totalorder %s16, 0
    %p63 = por %p61, %p62
    %p64 = scmp.ne.s32.totalorder %s50, %s51
    %p65 = scmp.eq.s32.totalorder %s17, 1
    %p66 = por %p64, %p65
    %p68 = scmp.ne.s32.totalorder %s51, %s67
    %p69 = scmp.eq.s32.totalorder %s17, 0
    %p70 = por %p68, %p69
    %s72 = sadd.s32 %s71, 1
    %p75 = scmp.eq.s32.totalorder %s11, 1
    %p76 = scmp.ne.s32.totalorder %s71, %s73
    %p77 = scmp.eq.s32.totalorder %s11, 0
    %p78 = por %p76, %p77
    %p79 = scmp.ne.s32.totalorder %s71, %s73
    %p80 = scmp.eq.s32.totalorder %s16, 1
    %p81 = por %p79, %p80
    %p82 = scmp.ne.s32.totalorder %s73, %s74
    %p83 = scmp.eq.s32.totalorder %s16, 0
    %p84 = por %p82, %p83
    %p85 = scmp.ne.s32.totalorder %s73, %s74
    %p86 = scmp.eq.s32.totalorder %s17, 1
    %p87 = por %p85, %p86
    %p89 = scmp.ne.s32.totalorder %s74, %s88
    %p90 = scmp.eq.s32.totalorder %s17, 0
    %p91 = por %p89, %p90
    %s93 = sadd.s32 %s92, 1
    %p96 = scmp.eq.s32.totalorder %s11, 1
    %p97 = scmp.ne.s32.totalorder %s92, %s94
    %p98 = scmp.eq.s32.totalorder %s11, 0
    %p99 = por %p97, %p98
    %p100 = scmp.ne.s32.totalorder %s92, %s94
    %p101 = scmp.eq.s32.totalorder %s16, 1
    %p102 = por %p100, %p101
    %p103 = scmp.ne.s32.totalorder %s94, %s95
    %p104 = scmp.eq.s32.totalorder %s16, 0
    %p105 = por %p103, %p104
    %p106 = scmp.ne.s32.totalorder %s94, %s95
    %p107 = scmp.eq.s32.totalorder %s17, 1
    %p108 = por %p106, %p107
    %p110 = scmp.ne.s32.totalorder %s95, %s109
    %p111 = scmp.eq.s32.totalorder %s17, 0
    %p112 = por %p110, %p111
    %s114 = sadd.s32 %s113, 1
    %p117 = scmp.eq.s32.totalorder %s11, 1
    %p118 = scmp.ne.s32.totalorder %s113, %s115
    %p119 = scmp.eq.s32.totalorder %s11, 0
    %p120 = por %p118, %p119
    %p121 = scmp.ne.s32.totalorder %s113, %s115
    %p122 = scmp.eq.s32.totalorder %s16, 1
    %p123 = por %p121, %p122
    %p124 = scmp.ne.s32.totalorder %s115, %s116
    %p125 = scmp.eq.s32.totalorder %s16, 0
    %p126 = por %p124, %p125
    %p127 = scmp.ne.s32.totalorder %s115, %s116
    %p128 = scmp.eq.s32.totalorder %s17, 1
    %p129 = por %p127, %p128
    %p131 = scmp.ne.s32.totalorder %s116, %s130
    %p132 = scmp.eq.s32.totalorder %s17, 0
    %p133 = por %p131, %p132
    %s134 = ssub.s32 %s11, %s18
    %p135 = scmp.eq.s32.totalorder %s134, 0
    %s137 = sadd.s32 %s136, 1
    %s138 = scalar_select %p135, %s136, %s137
    %p141 = pneg %p135
    %p142 = scmp.eq.s32.totalorder %s11, 1
    %p143 = por %p141, %p142
    %p144 = scmp.ne.s32.totalorder %s136, %s139
    %p145 = scmp.eq.s32.totalorder %s11, 0
    %p146 = por %p144, %p145
    %p147 = scmp.ne.s32.totalorder %s136, %s139
    %p148 = scmp.eq.s32.totalorder %s16, 1
    %p149 = por %p147, %p148
    %p150 = scmp.ne.s32.totalorder %s139, %s140
    %p151 = scmp.eq.s32.totalorder %s16, 0
    %p152 = por %p150, %p151
    %p153 = scmp.ne.s32.totalorder %s139, %s140
    %p154 = scmp.eq.s32.totalorder %s17, 1
    %p155 = por %p153, %p154
    %p157 = scmp.ne.s32.totalorder %s140, %s156
    %p158 = scmp.eq.s32.totalorder %s17, 0
    %p159 = por %p157, %p158
    %p160 = scmp.le.s32.totalorder 1, %s11
    %p161 = scmp.lt.s32.totalorder %s11, 3
    %p162 = pnand %p160, %p161
    %p163 = pneg %p162
    // Predicated region
    $region9: #{main_forward.113} parent=5 // pred_check
      _
    $region10: #{main_forward.113} parent=5 // pred_check_branch
      %165 = sbr.rel (%p162) target = $region12
    $region11: #{main_forward.113} parent=5 // pred_region
      %s166 = ssub.s32 %s11, 1
      // Predicated region
      $region13: #{main_forward.113} parent=11 // pred_check
        %p167 = pneg %p84
      $region14: #{main_forward.113} parent=11 // pred_check_branch
        %169 = sbr.rel (%p167) target = $region16
      $region15: #{main_forward.113} parent=11 // pred_region
        _
      $region16: #{main_forward.113} parent=11 // pred_fallthru
        _
      // Predicated region
      $region17: #{main_forward.113} parent=11 // pred_check
        %p170 = pneg %p105
      $region18: #{main_forward.113} parent=11 // pred_check_branch
        %172 = sbr.rel (%p170) target = $region20
      $region19: #{main_forward.113} parent=11 // pred_region
        _
      $region20: #{main_forward.113} parent=11 // pred_fallthru
        _
      // Predicated region
      $region21: #{main_forward.113} parent=11 // pred_check
        %p173 = pneg %p126
      $region22: #{main_forward.113} parent=11 // pred_check_branch
        %175 = sbr.rel (%p173) target = $region24
      $region23: #{main_forward.113} parent=11 // pred_region
        _
      $region24: #{main_forward.113} parent=11 // pred_fallthru
        _
    $region12: #{main_forward.113} parent=5 // pred_fallthru
      _
    %p176 = scmp.lt.s32.totalorder %s11, 2
    // Predicated region
    $region25: #{main_forward.113} parent=5 // pred_check
      %p177 = pneg %p176
    $region26: #{main_forward.113} parent=5 // pred_check_branch
      %179 = sbr.rel (%p177) target = $region28
    $region27: #{main_forward.113} parent=5 // pred_region
      // Predicated region
      $region29: #{main_forward.113} parent=27 // pred_check
        %p180 = pneg %p31
      $region30: #{main_forward.113} parent=27 // pred_check_branch
        %182 = sbr.rel (%p180) target = $region32
      $region31: #{main_forward.113} parent=27 // pred_region
        %p183 = scmp.lt.s32.totalorder %s11, 1
        %s184 = scalar_select %p183, %s11, 1
        %s185 = smul.addr %s184, 2
        %s186 = smul.addr %s185, 4
        %s187 = scalar_lea.vmem %s0, %s186
      $region32: #{main_forward.113} parent=27 // pred_fallthru
        _
      // Predicated region
      $region33: #{main_forward.113} parent=27 // pred_check
        %p188 = pneg %p57
      $region34: #{main_forward.113} parent=27 // pred_check_branch
        %190 = sbr.rel (%p188) target = $region36
      $region35: #{main_forward.113} parent=27 // pred_region
        %p191 = scmp.lt.s32.totalorder %s11, 1
        %s192 = scalar_select %p191, %s11, 1
        %s193 = smul.addr %s192, 2
        %s194 = smul.addr %s193, 4
        %s195 = scalar_lea.vmem %s1, %s194
      $region36: #{main_forward.113} parent=27 // pred_fallthru
        _
    $region28: #{main_forward.113} parent=5 // pred_fallthru
      _
    %p196 = scmp.le.s32.totalorder 1, %s11
    %p197 = scmp.lt.s32.totalorder %s11, 3
    %p198 = pnand %p196, %p197
    %p199 = pneg %p198
    // Predicated region
    $region37: #{main_forward.113} parent=5 // pred_check
      _
    $region38: #{main_forward.113} parent=5 // pred_check_branch
      %201 = sbr.rel (%p198) target = $region40
    $region39: #{main_forward.113} parent=5 // pred_region
      %s202 = ssub.s32 %s11, 1
      %p203 = scmp.lt.s32.totalorder %s16, 1
      %s204 = scalar_select %p203, %s16, 1
      %s205 = smul.addr %s204, 2
      %s206 = smul.addr %s205, 4
      %s207 = scalar_lea.vmem %s0, %s206
      %p208 = pneg %p37
      %p209 = pneg %p34
      %p210 = scmp.lt.s32.totalorder %s16, 1
      %s211 = scalar_select %p210, %s16, 1
      %s212 = smul.addr %s211, 2
      %s213 = smul.addr %s212, 4
      %s214 = scalar_lea.vmem %s1, %s213
      %p215 = pneg %p63
      %p216 = pneg %p60
      %p217 = pneg %p84
      %p218 = pneg %p81
      %p219 = pneg %p105
      %p220 = pneg %p102
      %p221 = pneg %p126
      %p222 = pneg %p123
      %p223 = pneg %p152
      %p224 = pneg %p149
      %p225 = scmp.lt.s32.totalorder %s16, 1
      %s226 = scalar_select %p225, %s16, 1
      %s227 = smul.addr %s226, 2
      %s228 = smul.addr %s227, 4
      %s229 = scalar_lea.vmem %s5, %s228
      %p230 = scmp.lt.s32.totalorder %s16, 1
      %s231 = scalar_select %p230, %s16, 1
      %s232 = smul.addr %s231, 2
      %s233 = smul.addr %s232, 4
      %s234 = scalar_lea.vmem %s0, %s233
      %p235 = scmp.lt.s32.totalorder %s16, 1
      %s236 = scalar_select %p235, %s16, 1
      %s237 = smul.addr %s236, 2
      %s238 = smul.addr %s237, 4
      %s239 = scalar_lea.vmem %s1, %s238
      %p240 = scmp.lt.s32.totalorder %s16, 1
      %s241 = scalar_select %p240, %s16, 1
      %s242 = smul.addr %s241, 2
      %s243 = smul.addr %s242, 4
      %s244 = scalar_lea.vmem %s5, %s243
      %v245 = vld [vmem:[%s234] sm:$0xff]
      %v247 = vcombine.high %v245, %v245
      %vm249 = vcmask 1043456
      %v250 = vsel %vm249, %v245, 0.0
      %v251 = vsel %vm249, %v247, 0.0
      %v252 = vadd.f32 %v250, %v251
      %253 = vadd.xlane.f32.xlu0 %v252
      %v254 = vpop.xlane.xlu0 %253
      %v255 = vrot.slane %v254, 4
      %v256 = vadd.f32 %v254, %v255
      %v257 = vrot.slane %v256, 2
      %v258 = vadd.f32 %v256, %v257
      %v259 = vrot.slane %v258, 1
      %v260 = vadd.f32 %v258, %v259
      %s261 = vtos %v260
      %v262 = vrcp.pop 1024.0
      %s263 = vtos %v262
      %s264 = smul.f32 %s261, %s263
      %v265 = vstv %s264
      %v266 = vsub.f32 %v245, %v265
      %v267 = vmul.f32 %v266, %v266
      %v269 = vcombine.high %v267, %v267
      %v271 = vsel %vm249, %v267, 0.0
      %v272 = vsel %vm249, %v269, 0.0
      %v273 = vadd.f32 %v271, %v272
      %274 = vadd.xlane.f32.xlu0 %v273
      %v275 = vpop.xlane.xlu0 %274
      %v276 = vrot.slane %v275, 4
      %v277 = vadd.f32 %v275, %v276
      %v278 = vrot.slane %v277, 2
      %v279 = vadd.f32 %v277, %v278
      %v280 = vrot.slane %v279, 1
      %v281 = vadd.f32 %v279, %v280
      %s282 = vtos %v281
      %v283 = vrcp.pop 1024.0
      %s284 = vtos %v283
      %s285 = smul.f32 %s282, %s284
      %s286 = sadd.f32 %s285, 1e-05
      %v287 = vstv %s286
      %v288 = vrsqrt.pop %v287
      %s289 = vtos %v288
      %v290 = vstv %s289
      %v291 = vmul.f32 %v266, %v290
      %v292 = vld [vmem:[%s2] sm:$0xf]
      %294 = vset.pattern.permute.xlu0 0
      %295 = vperm.xlu0 %294, %v292
      %v296 = vpop.permute.xlu0 %295
      %v298 = vunpack.c.l.s4 839922192
      %v299 = vunpack.c.0.s8 %v298
      %v300 = vlaneseq
      %v301 = vshrl.u32 %v300, 7
      %v302 = vsub.s32 %v299, %v301
      %v303 = vrot.slane %v296, %v302
      %v305 = vmul.f32 %v291, %v303
      %v306 = vld [vmem:[%s3] sm:$0xf]
      %308 = vset.pattern.permute.xlu0 0
      %309 = vperm.xlu0 %308, %v306
      %v310 = vpop.permute.xlu0 %309
      %v312 = vunpack.c.l.s4 839922192
      %v313 = vunpack.c.0.s8 %v312
      %v314 = vlaneseq
      %v315 = vshrl.u32 %v314, 7
      %v316 = vsub.s32 %v313, %v315
      %v317 = vrot.slane %v310, %v316
      %v319 = vadd.f32 %v305, %v317
      %v320 = vld [vmem:[%s239] sm:$0xff]
      %v321 = vadd.f32 %v319, %v320
      %vm322 = vcmp.ge.f32.partialorder %v321, 0.0
      %v323 = vld [vmem:[%s4] sm:$0xf]
      %325 = vset.pattern.permute.xlu0 0
      %326 = vperm.xlu0 %325, %v323
      %v327 = vpop.permute.xlu0 %326
      %v330 = vcombine.high %v321, %v321
      %v332 = vmul.f32 %v327, %v321
      %v333 = vmul.f32 %v327, %v330
      %v336 = vcombine.low %v332, %v333
      %v338 = vsel %vm322, %v321, %v336
      %339 = vst [vmem:[%s244] sm:$0xff] %v338
      %p340 = scmp.lt.s32.totalorder %s16, 1
      %s341 = scalar_select %p340, %s16, 1
      %s342 = smul.addr %s341, 2
      %s343 = smul.addr %s342, 4
      %s344 = scalar_lea.vmem %s5, %s343
      // Predicated region
      $region41: #{main_forward.113} parent=39 // pred_check
        %p345 = pneg %p149
      $region42: #{main_forward.113} parent=39 // pred_check_branch
        %347 = sbr.rel (%p345) target = $region44
      $region43: #{main_forward.113} parent=39 // pred_region
        _
      $region44: #{main_forward.113} parent=39 // pred_fallthru
        _
    $region40: #{main_forward.113} parent=5 // pred_fallthru
      _
    %p348 = scmp.le.s32.totalorder 2, %s11
    // Predicated region
    $region45: #{main_forward.113} parent=5 // pred_check
      %p349 = pneg %p348
    $region46: #{main_forward.113} parent=5 // pred_check_branch
      %351 = sbr.rel (%p349) target = $region48
    $region47: #{main_forward.113} parent=5 // pred_region
      %s352 = ssub.s32 %s11, 2
      // Predicated region
      $region49: #{main_forward.113} parent=47 // pred_check
        %p353 = pneg %p155
      $region50: #{main_forward.113} parent=47 // pred_check_branch
        %355 = sbr.rel (%p353) target = $region52
      $region51: #{main_forward.113} parent=47 // pred_region
        %p356 = scmp.lt.s32.totalorder %s17, 1
        %s357 = scalar_select %p356, %s17, 1
        %s358 = smul.addr %s357, 2
        %s359 = smul.addr %s358, 4
        %s360 = scalar_lea.vmem %s5, %s359
      $region52: #{main_forward.113} parent=47 // pred_fallthru
        _
    $region48: #{main_forward.113} parent=5 // pred_fallthru
      _
  $region6: #{main_forward.113} parent=0 // loop_footer
    %s15 = sadd.s32 1, %s11
  $region7: #{main_forward.113} parent=0 // loop_footer_branch
    %10 = sbr.rel target = $region3
  $region8: #{main_forward.113} parent=0 // loop_exit
    _

// kernel: main_forward.115
$region0: #{main_forward.115}
  #allocation0 [shape = 'u32[]', space=smem, size = 0x4, offset = 0x4, fixed_abs, tag = 'smem constant byte address 0x4 - core index']
  #allocation1 [shape = 'u32[144,128]{1,0:T(1,128)}', space=vmem, size = 0x12000, scoped, tag = 'internal scratch']
  %s0 = inlined_call_operand.vmem [shape: bf16[8,72], index: 0, kind: input, shape index: {}]
  %s1 = inlined_call_operand.vmem [shape: bf16[72,128], index: 1, kind: input, shape index: {}]
  %s2 = inlined_call_operand.vmem [shape: f32[8,128], index: 2, kind: output, shape index: {}]
  %s3 = sld [smem:[#allocation0]]
  $region18: #{main_forward.115} parent=0
    _
  %s5 = ssub.s32 1, %s3
  %s6 = scalar_select 0, %s5, %s3
  // Predicated region
  $region2: #{main_forward.115} parent=0 // pred_check
    _
  $region3: #{main_forward.115} parent=0 // pred_check_branch
    %8 = sbr.rel (0) target = $region5
  $region4: #{main_forward.115} parent=0 // pred_region
    _
  $region5: #{main_forward.115} parent=0 // pred_fallthru
    _
  // Predicated region
  $region6: #{main_forward.115} parent=0 // pred_check
    _
  $region7: #{main_forward.115} parent=0 // pred_check_branch
    %10 = sbr.rel (0) target = $region9
  $region8: #{main_forward.115} parent=0 // pred_region
    _
  $region9: #{main_forward.115} parent=0 // pred_fallthru
    _
  %v12 = vld [vmem:[%s0] sm:$0xf]
  %v13 = vld [vmem:[%s1] sm:$0xf]
  %v14 = vld [vmem:[%s1 + $0x4] sm:$0xf]
  %v15 = vld [vmem:[%s1 + $0x8] sm:$0xf]
  %v16 = vld [vmem:[%s1 + $0xc] sm:$0xf]
  %v17 = vld [vmem:[%s1 + $0x10] sm:$0xf]
  %v18 = vld [vmem:[%s1 + $0x14] sm:$0xf]
  %v19 = vld [vmem:[%s1 + $0x18] sm:$0xf]
  %v20 = vld [vmem:[%s1 + $0x1c] sm:$0xf]
  %v21 = vld [vmem:[%s1 + $0x20] sm:$0xf]
  %v31 = vunpack.c.l.b16 %v13
  %v32 = vunpack.c.l.b16 %v14
  %v33 = vunpack.c.l.b16 %v15
  %v34 = vunpack.c.l.b16 %v16
  %v35 = vunpack.c.l.b16 %v17
  %v36 = vunpack.c.l.b16 %v18
  %v37 = vunpack.c.l.b16 %v19
  %v38 = vunpack.c.l.b16 %v20
  %v39 = vunpack.c.l.b16 %v21
  %v40 = vpack.c.b16 %v32, %v31
  %v41 = vpack.c.b16 %v34, %v33
  %v42 = vpack.c.b16 %v36, %v35
  %v43 = vpack.c.b16 %v38, %v37
  %v44 = vpack.c.b16 %v39, %v39
  %vm49 = vcmask 588800
  %v51 = vsel %vm49, %v12, 0
  %vm53 = vcmask 1043456
  %v55 = vsel %vm53, %v44, 0
  %57 = vmatprep.subr.bf16.mxu0 0
  %58 = vmatpush1.bf16.msra.mxu0 0
  %59 = vmatprep.subr.bf16.mxu0 0
  %60 = vmatpush1.bf16.msra.mxu0 0
  %61 = vmatprep.subr.bf16.mxu0 0
  %62 = vmatpush1.bf16.msra.mxu0 0
  %63 = vmatprep.subr.bf16.mxu0 0
  %64 = vmatpush1.bf16.msra.mxu0 %v55
  %65 = vmatprep.subr.bf16.mxu0 0
  %66 = vmatpush1.bf16.msra.mxu0 %v43
  %67 = vmatprep.subr.bf16.mxu0 0
  %68 = vmatpush1.bf16.msra.mxu0 %v42
  %69 = vmatprep.subr.bf16.mxu0 0
  %70 = vmatpush1.bf16.msra.mxu0 %v41
  %71 = vmatprep.subr.bf16.mxu0 0
  %72 = vmatpush1.bf16.msra.mxu0 %v40
  %73 = vmatprep.subr.bf16.mxu0 0
  %74 = vmatpush2.bf16.msra.mxu0 0
  %75 = vmatprep.subr.bf16.mxu0 0
  %76 = vmatpush2.bf16.msra.mxu0 0
  %77 = vmatprep.subr.bf16.mxu0 0
  %78 = vmatpush2.bf16.msra.mxu0 0
  %79 = vmatprep.subr.bf16.mxu0 0
  %80 = vmatpush2.bf16.msra.mxu0 0
  %81 = vmatprep.subr.bf16.mxu0 0
  %82 = vmatpush2.bf16.msra.mxu0 0
  %83 = vmatprep.subr.bf16.mxu0 0
  %84 = vmatpush2.bf16.msra.mxu0 0
  %85 = vmatprep.subr.bf16.mxu0 0
  %86 = vmatpush2.bf16.msra.mxu0 0
  %87 = vmatprep.subr.bf16.mxu0 0
  %88 = vmatpush2.bf16.msra.mxu0 0
  %89 = vmatprep.mubr.bf16.mxu0 0
  %90 = vmatmul.mubr.bf16.gmra.mxu0 %v51
  %v91 = vpop.f32.mrf.mxu0
  %v92 = vadd.f32 0.0, %v91
  %v93 = vpop.f32.mrf.mxu0
  %v94 = vpop.f32.mrf.mxu0
  %v95 = vpop.f32.mrf.mxu0
  %96 = vdwg.mxu0
  %97 = vst [vmem:[%s2] sm:$0xff] %v92
  // Predicated region
  $region10: #{main_forward.115} parent=0 // pred_check
    _
  $region11: #{main_forward.115} parent=0 // pred_check_branch
    %99 = sbr.rel (0) target = $region13
  $region12: #{main_forward.115} parent=0 // pred_region
    _
  $region13: #{main_forward.115} parent=0 // pred_fallthru
    _
  // Predicated region
  $region14: #{main_forward.115} parent=0 // pred_check
    _
  $region15: #{main_forward.115} parent=0 // pred_check_branch
    %101 = sbr.rel (0) target = $region17
  $region16: #{main_forward.115} parent=0 // pred_region
    _
  $region17: #{main_forward.115} parent=0 // pred_fallthru
    _

// kernel: main_forward.116
$region0: #{main_forward.116}
  #allocation0 [shape = 'u32[]', space=smem, size = 0x4, offset = 0x4, fixed_abs, tag = 'smem constant byte address 0x4 - core index']
  #allocation1 [shape = 'u32[144,128]{1,0:T(1,128)}', space=vmem, size = 0x12000, scoped, tag = 'internal scratch']
  %s0 = inlined_call_operand.vmem [shape: f32[2,8,64], index: 0, kind: input, shape index: {}]
  %s1 = inlined_call_operand.vmem [shape: f32[8,1], index: 1, kind: input, shape index: {}]
  %s2 = inlined_call_operand.vmem [shape: f32[8,1], index: 2, kind: input, shape index: {}]
  %s3 = inlined_call_operand.vmem [shape: f32[8,1], index: 3, kind: input, shape index: {}]
  %s4 = inlined_call_operand.vmem [shape: f32[2,8,64], index: 4, kind: output, shape index: {}]
  %s5 = sld [smem:[#allocation0]]
  $region49: #{main_forward.116} parent=0
    _
  %s7 = ssub.s32 1, %s5
  %s8 = scalar_select 0, %s7, %s5
  loop: start=0, step=1, limit=4
  $region2: #{main_forward.116} parent=0 // loop_pre_header
    _
  $region3: #{main_forward.116} parent=0 // loop_header
    %s10 = sphi 0, %s14
    %p11 = scmp.ge.s32.totalorder %s10, 4
    %s20 = sphi 0, %s22
    %s23 = sphi 0, %s20
    %s24 = sphi 0, %s23
    %s40 = sphi 0, %s24
    %s44 = sphi 0, %s44
    %s46 = sphi 0, %s44
    %s47 = sphi 0, %s46
    %s61 = sphi 0, %s47
    %s65 = sphi 0, %s65
    %s67 = sphi 0, %s65
    %s68 = sphi 0, %s67
    %s82 = sphi 0, %s68
    %s86 = sphi 0, %s86
    %s88 = sphi 0, %s86
    %s89 = sphi 0, %s88
    %s103 = sphi 0, %s89
    %s109 = sphi 0, %s111
    %s112 = sphi 0, %s109
    %s113 = sphi 0, %s112
    %s129 = sphi 0, %s113
  $region4: #{main_forward.116} parent=0 // loop_header_branch
    %13 = sbr.rel (%p11) target = $region8
  $region5: #{main_forward.116} parent=0 // loop_body
    %s15 = ssub.s32 %s10, 1
    %s16 = ssub.s32 %s10, 2
    %s17 = sadd.s32 %s10, 1
    %s18 = ssub.s32 %s10, %s17
    %p19 = scmp.eq.s32.totalorder %s18, 0
    %s21 = sadd.s32 %s20, 1
    %s22 = scalar_select %p19, %s20, %s21
    %p25 = pneg %p19
    %p26 = scmp.eq.s32.totalorder %s10, 1
    %p27 = por %p25, %p26
    %p28 = scmp.ne.s32.totalorder %s20, %s23
    %p29 = scmp.eq.s32.totalorder %s10, 0
    %p30 = por %p28, %p29
    %p31 = scmp.ne.s32.totalorder %s20, %s23
    %p32 = scmp.eq.s32.totalorder %s15, 1
    %p33 = por %p31, %p32
    %p34 = scmp.ne.s32.totalorder %s23, %s24
    %p35 = scmp.eq.s32.totalorder %s15, 0
    %p36 = por %p34, %p35
    %p37 = scmp.ne.s32.totalorder %s23, %s24
    %p38 = scmp.eq.s32.totalorder %s16, 1
    %p39 = por %p37, %p38
    %p41 = scmp.ne.s32.totalorder %s24, %s40
    %p42 = scmp.eq.s32.totalorder %s16, 0
    %p43 = por %p41, %p42
    %s45 = sadd.s32 %s44, 1
    %p48 = scmp.eq.s32.totalorder %s10, 1
    %p49 = scmp.ne.s32.totalorder %s44, %s46
    %p50 = scmp.eq.s32.totalorder %s10, 0
    %p51 = por %p49, %p50
    %p52 = scmp.ne.s32.totalorder %s44, %s46
    %p53 = scmp.eq.s32.totalorder %s15, 1
    %p54 = por %p52, %p53
    %p55 = scmp.ne.s32.totalorder %s46, %s47
    %p56 = scmp.eq.s32.totalorder %s15, 0
    %p57 = por %p55, %p56
    %p58 = scmp.ne.s32.totalorder %s46, %s47
    %p59 = scmp.eq.s32.totalorder %s16, 1
    %p60 = por %p58, %p59
    %p62 = scmp.ne.s32.totalorder %s47, %s61
    %p63 = scmp.eq.s32.totalorder %s16, 0
    %p64 = por %p62, %p63
    %s66 = sadd.s32 %s65, 1
    %p69 = scmp.eq.s32.totalorder %s10, 1
    %p70 = scmp.ne.s32.totalorder %s65, %s67
    %p71 = scmp.eq.s32.totalorder %s10, 0
    %p72 = por %p70, %p71
    %p73 = scmp.ne.s32.totalorder %s65, %s67
    %p74 = scmp.eq.s32.totalorder %s15, 1
    %p75 = por %p73, %p74
    %p76 = scmp.ne.s32.totalorder %s67, %s68
    %p77 = scmp.eq.s32.totalorder %s15, 0
    %p78 = por %p76, %p77
    %p79 = scmp.ne.s32.totalorder %s67, %s68
    %p80 = scmp.eq.s32.totalorder %s16, 1
    %p81 = por %p79, %p80
    %p83 = scmp.ne.s32.totalorder %s68, %s82
    %p84 = scmp.eq.s32.totalorder %s16, 0
    %p85 = por %p83, %p84
    %s87 = sadd.s32 %s86, 1
    %p90 = scmp.eq.s32.totalorder %s10, 1
    %p91 = scmp.ne.s32.totalorder %s86, %s88
    %p92 = scmp.eq.s32.totalorder %s10, 0
    %p93 = por %p91, %p92
    %p94 = scmp.ne.s32.totalorder %s86, %s88
    %p95 = scmp.eq.s32.totalorder %s15, 1
    %p96 = por %p94, %p95
    %p97 = scmp.ne.s32.totalorder %s88, %s89
    %p98 = scmp.eq.s32.totalorder %s15, 0
    %p99 = por %p97, %p98
    %p100 = scmp.ne.s32.totalorder %s88, %s89
    %p101 = scmp.eq.s32.totalorder %s16, 1
    %p102 = por %p100, %p101
    %p104 = scmp.ne.s32.totalorder %s89, %s103
    %p105 = scmp.eq.s32.totalorder %s16, 0
    %p106 = por %p104, %p105
    %s107 = ssub.s32 %s10, %s17
    %p108 = scmp.eq.s32.totalorder %s107, 0
    %s110 = sadd.s32 %s109, 1
    %s111 = scalar_select %p108, %s109, %s110
    %p114 = pneg %p108
    %p115 = scmp.eq.s32.totalorder %s10, 1
    %p116 = por %p114, %p115
    %p117 = scmp.ne.s32.totalorder %s109, %s112
    %p118 = scmp.eq.s32.totalorder %s10, 0
    %p119 = por %p117, %p118
    %p120 = scmp.ne.s32.totalorder %s109, %s112
    %p121 = scmp.eq.s32.totalorder %s15, 1
    %p122 = por %p120, %p121
    %p123 = scmp.ne.s32.totalorder %s112, %s113
    %p124 = scmp.eq.s32.totalorder %s15, 0
    %p125 = por %p123, %p124
    %p126 = scmp.ne.s32.totalorder %s112, %s113
    %p127 = scmp.eq.s32.totalorder %s16, 1
    %p128 = por %p126, %p127
    %p130 = scmp.ne.s32.totalorder %s113, %s129
    %p131 = scmp.eq.s32.totalorder %s16, 0
    %p132 = por %p130, %p131
    %p133 = scmp.le.s32.totalorder 1, %s10
    %p134 = scmp.lt.s32.totalorder %s10, 3
    %p135 = pnand %p133, %p134
    %p136 = pneg %p135
    // Predicated region
    $region9: #{main_forward.116} parent=5 // pred_check
      _
    $region10: #{main_forward.116} parent=5 // pred_check_branch
      %138 = sbr.rel (%p135) target = $region12
    $region11: #{main_forward.116} parent=5 // pred_region
      %s139 = ssub.s32 %s10, 1
      // Predicated region
      $region13: #{main_forward.116} parent=11 // pred_check
        %p140 = pneg %p57
      $region14: #{main_forward.116} parent=11 // pred_check_branch
        %142 = sbr.rel (%p140) target = $region16
      $region15: #{main_forward.116} parent=11 // pred_region
        _
      $region16: #{main_forward.116} parent=11 // pred_fallthru
        _
      // Predicated region
      $region17: #{main_forward.116} parent=11 // pred_check
        %p143 = pneg %p78
      $region18: #{main_forward.116} parent=11 // pred_check_branch
        %145 = sbr.rel (%p143) target = $region20
      $region19: #{main_forward.116} parent=11 // pred_region
        _
      $region20: #{main_forward.116} parent=11 // pred_fallthru
        _
      // Predicated region
      $region21: #{main_forward.116} parent=11 // pred_check
        %p146 = pneg %p99
      $region22: #{main_forward.116} parent=11 // pred_check_branch
        %148 = sbr.rel (%p146) target = $region24
      $region23: #{main_forward.116} parent=11 // pred_region
        _
      $region24: #{main_forward.116} parent=11 // pred_fallthru
        _
    $region12: #{main_forward.116} parent=5 // pred_fallthru
      _
    %p149 = scmp.lt.s32.totalorder %s10, 2
    // Predicated region
    $region25: #{main_forward.116} parent=5 // pred_check
      %p150 = pneg %p149
    $region26: #{main_forward.116} parent=5 // pred_check_branch
      %152 = sbr.rel (%p150) target = $region28
    $region27: #{main_forward.116} parent=5 // pred_region
      // Predicated region
      $region29: #{main_forward.116} parent=27 // pred_check
        %p153 = pneg %p30
      $region30: #{main_forward.116} parent=27 // pred_check_branch
        %155 = sbr.rel (%p153) target = $region32
      $region31: #{main_forward.116} parent=27 // pred_region
        %p156 = scmp.lt.s32.totalorder %s10, 1
        %s157 = scalar_select %p156, %s10, 1
        %s158 = smul.addr %s157, 8
        %s159 = scalar_lea.vmem %s0, %s158
      $region32: #{main_forward.116} parent=27 // pred_fallthru
        _
    $region28: #{main_forward.116} parent=5 // pred_fallthru
      _
    %p160 = scmp.le.s32.totalorder 1, %s10
    %p161 = scmp.lt.s32.totalorder %s10, 3
    %p162 = pnand %p160, %p161
    %p163 = pneg %p162
    // Predicated region
    $region33: #{main_forward.116} parent=5 // pred_check
      _
    $region34: #{main_forward.116} parent=5 // pred_check_branch
      %165 = sbr.rel (%p162) target = $region36
    $region35: #{main_forward.116} parent=5 // pred_region
      %s166 = ssub.s32 %s10, 1
      %p167 = scmp.lt.s32.totalorder %s15, 1
      %s168 = scalar_select %p167, %s15, 1
      %s169 = smul.addr %s168, 8
      %s170 = scalar_lea.vmem %s0, %s169
      %p171 = pneg %p36
      %p172 = pneg %p33
      %p173 = pneg %p57
      %p174 = pneg %p54
      %p175 = pneg %p78
      %p176 = pneg %p75
      %p177 = pneg %p99
      %p178 = pneg %p96
      %p179 = pneg %p125
      %p180 = pneg %p122
      %p181 = scmp.lt.s32.totalorder %s15, 1
      %s182 = scalar_select %p181, %s15, 1
      %s183 = smul.addr %s182, 8
      %s184 = scalar_lea.vmem %s4, %s183
      %p185 = scmp.lt.s32.totalorder %s15, 1
      %s186 = scalar_select %p185, %s15, 1
      %s187 = smul.addr %s186, 8
      %s188 = scalar_lea.vmem %s0, %s187
      %p189 = scmp.lt.s32.totalorder %s15, 1
      %s190 = scalar_select %p189, %s15, 1
      %s191 = smul.addr %s190, 8
      %s192 = scalar_lea.vmem %s4, %s191
      %v193 = vld [vmem:[%s188] sm:$0xff]
      %vm194 = vcmask 523264
      %v195 = vsel %vm194, %v193, 0.0
      %196 = vadd.xlane.f32.xlu0 %v195
      %v197 = vpop.xlane.xlu0 %196
      %v198 = vrot.slane %v197, 4
      %v199 = vadd.f32 %v197, %v198
      %v200 = vrot.slane %v199, 2
      %v201 = vadd.f32 %v199, %v200
      %v202 = vrot.slane %v201, 1
      %v203 = vadd.f32 %v201, %v202
      %s204 = vtos %v203
      %v205 = vrcp.pop 512.0
      %s206 = vtos %v205
      %s207 = smul.f32 %s204, %s206
      %v208 = vstv %s207
      %v209 = vsub.f32 %v193, %v208
      %v210 = vmul.f32 %v209, %v209
      %v211 = vsel %vm194, %v210, 0.0
      %212 = vadd.xlane.f32.xlu0 %v211
      %v213 = vpop.xlane.xlu0 %212
      %v214 = vrot.slane %v213, 4
      %v215 = vadd.f32 %v213, %v214
      %v216 = vrot.slane %v215, 2
      %v217 = vadd.f32 %v215, %v216
      %v218 = vrot.slane %v217, 1
      %v219 = vadd.f32 %v217, %v218
      %s220 = vtos %v219
      %v221 = vrcp.pop 512.0
      %s222 = vtos %v221
      %s223 = smul.f32 %s220, %s222
      %s224 = sadd.f32 %s223, 1e-05
      %v225 = vstv %s224
      %v226 = vrsqrt.pop %v225
      %s227 = vtos %v226
      %v228 = vstv %s227
      %v229 = vmul.f32 %v209, %v228
      %v230 = vld [vmem:[%s1] sm:$0xff]
      %232 = vset.pattern.permute.xlu0 0
      %233 = vperm.xlu0 %232, %v230
      %v234 = vpop.permute.xlu0 %233
      %v236 = vmul.f32 %v229, %v234
      %v237 = vld [vmem:[%s2] sm:$0xff]
      %239 = vset.pattern.permute.xlu0 0
      %240 = vperm.xlu0 %239, %v237
      %v241 = vpop.permute.xlu0 %240
      %v243 = vadd.f32 %v236, %v241
      %vm244 = vcmp.ge.f32.partialorder %v243, 0.0
      %v245 = vld [vmem:[%s3] sm:$0xff]
      %247 = vset.pattern.permute.xlu0 0
      %248 = vperm.xlu0 %247, %v245
      %v249 = vpop.permute.xlu0 %248
      %v251 = vmul.f32 %v249, %v243
      %v252 = vsel %vm244, %v243, %v251
      %253 = vst.msk [vmem:[%s192] sm:$0xff] %vm194, %v252
      %p254 = scmp.lt.s32.totalorder %s15, 1
      %s255 = scalar_select %p254, %s15, 1
      %s256 = smul.addr %s255, 8
      %s257 = scalar_lea.vmem %s4, %s256
      // Predicated region
      $region37: #{main_forward.116} parent=35 // pred_check
        %p258 = pneg %p122
      $region38: #{main_forward.116} parent=35 // pred_check_branch
        %260 = sbr.rel (%p258) target = $region40
      $region39: #{main_forward.116} parent=35 // pred_region
        _
      $region40: #{main_forward.116} parent=35 // pred_fallthru
        _
    $region36: #{main_forward.116} parent=5 // pred_fallthru
      _
    %p261 = scmp.le.s32.totalorder 2, %s10
    // Predicated region
    $region41: #{main_forward.116} parent=5 // pred_check
      %p262 = pneg %p261
    $region42: #{main_forward.116} parent=5 // pred_check_branch
      %264 = sbr.rel (%p262) target = $region44
    $region43: #{main_forward.116} parent=5 // pred_region
      %s265 = ssub.s32 %s10, 2
      // Predicated region
      $region45: #{main_forward.116} parent=43 // pred_check
        %p266 = pneg %p128
      $region46: #{main_forward.116} parent=43 // pred_check_branch
        %268 = sbr.rel (%p266) target = $region48
      $region47: #{main_forward.116} parent=43 // pred_region
        %p269 = scmp.lt.s32.totalorder %s16, 1
        %s270 = scalar_select %p269, %s16, 1
        %s271 = smul.addr %s270, 8
        %s272 = scalar_lea.vmem %s4, %s271
      $region48: #{main_forward.116} parent=43 // pred_fallthru
        _
    $region44: #{main_forward.116} parent=5 // pred_fallthru
      _
  $region6: #{main_forward.116} parent=0 // loop_footer
    %s14 = sadd.s32 1, %s10
  $region7: #{main_forward.116} parent=0 // loop_footer_branch
    %9 = sbr.rel target = $region3
  $region8: #{main_forward.116} parent=0 // loop_exit
    _

// kernel: main_forward.123
$region0: #{main_forward.123}
  #allocation0 [shape = 'u32[]', space=smem, size = 0x4, offset = 0x4, fixed_abs, tag = 'smem constant byte address 0x4 - core index']
  #allocation1 [shape = 'u32[144,128]{1,0:T(1,128)}', space=vmem, size = 0x12000, scoped, tag = 'internal scratch']
  %s0 = inlined_call_operand.vmem [shape: f32[2,8,64], index: 0, kind: input, shape index: {}]
  %s1 = inlined_call_operand.vmem [shape: f32[2,8,64], index: 1, kind: input, shape index: {}]
  %s2 = inlined_call_operand.vmem [shape: f32[8,1], index: 2, kind: input, shape index: {}]
  %s3 = inlined_call_operand.vmem [shape: f32[8,1], index: 3, kind: input, shape index: {}]
  %s4 = inlined_call_operand.vmem [shape: f32[8,1], index: 4, kind: input, shape index: {}]
  %s5 = inlined_call_operand.vmem [shape: f32[2,8,64], index: 5, kind: output, shape index: {}]
  %s6 = sld [smem:[#allocation0]]
  $region53: #{main_forward.123} parent=0
    _
  %s8 = ssub.s32 1, %s6
  %s9 = scalar_select 0, %s8, %s6
  loop: start=0, step=1, limit=4
  $region2: #{main_forward.123} parent=0 // loop_pre_header
    _
  $region3: #{main_forward.123} parent=0 // loop_header
    %s11 = sphi 0, %s15
    %p12 = scmp.ge.s32.totalorder %s11, 4
    %s21 = sphi 0, %s23
    %s24 = sphi 0, %s21
    %s25 = sphi 0, %s24
    %s41 = sphi 0, %s25
    %s47 = sphi 0, %s49
    %s50 = sphi 0, %s47
    %s51 = sphi 0, %s50
    %s67 = sphi 0, %s51
    %s71 = sphi 0, %s71
    %s73 = sphi 0, %s71
    %s74 = sphi 0, %s73
    %s88 = sphi 0, %s74
    %s92 = sphi 0, %s92
    %s94 = sphi 0, %s92
    %s95 = sphi 0, %s94
    %s109 = sphi 0, %s95
    %s113 = sphi 0, %s113
    %s115 = sphi 0, %s113
    %s116 = sphi 0, %s115
    %s130 = sphi 0, %s116
    %s136 = sphi 0, %s138
    %s139 = sphi 0, %s136
    %s140 = sphi 0, %s139
    %s156 = sphi 0, %s140
  $region4: #{main_forward.123} parent=0 // loop_header_branch
    %14 = sbr.rel (%p12) target = $region8
  $region5: #{main_forward.123} parent=0 // loop_body
    %s16 = ssub.s32 %s11, 1
    %s17 = ssub.s32 %s11, 2
    %s18 = sadd.s32 %s11, 1
    %s19 = ssub.s32 %s11, %s18
    %p20 = scmp.eq.s32.totalorder %s19, 0
    %s22 = sadd.s32 %s21, 1
    %s23 = scalar_select %p20, %s21, %s22
    %p26 = pneg %p20
    %p27 = scmp.eq.s32.totalorder %s11, 1
    %p28 = por %p26, %p27
    %p29 = scmp.ne.s32.totalorder %s21, %s24
    %p30 = scmp.eq.s32.totalorder %s11, 0
    %p31 = por %p29, %p30
    %p32 = scmp.ne.s32.totalorder %s21, %s24
    %p33 = scmp.eq.s32.totalorder %s16, 1
    %p34 = por %p32, %p33
    %p35 = scmp.ne.s32.totalorder %s24, %s25
    %p36 = scmp.eq.s32.totalorder %s16, 0
    %p37 = por %p35, %p36
    %p38 = scmp.ne.s32.totalorder %s24, %s25
    %p39 = scmp.eq.s32.totalorder %s17, 1
    %p40 = por %p38, %p39
    %p42 = scmp.ne.s32.totalorder %s25, %s41
    %p43 = scmp.eq.s32.totalorder %s17, 0
    %p44 = por %p42, %p43
    %s45 = ssub.s32 %s11, %s18
    %p46 = scmp.eq.s32.totalorder %s45, 0
    %s48 = sadd.s32 %s47, 1
    %s49 = scalar_select %p46, %s47, %s48
    %p52 = pneg %p46
    %p53 = scmp.eq.s32.totalorder %s11, 1
    %p54 = por %p52, %p53
    %p55 = scmp.ne.s32.totalorder %s47, %s50
    %p56 = scmp.eq.s32.totalorder %s11, 0
    %p57 = por %p55, %p56
    %p58 = scmp.ne.s32.totalorder %s47, %s50
    %p59 = scmp.eq.s32.totalorder %s16, 1
    %p60 = por %p58, %p59
    %p61 = scmp.ne.s32.totalorder %s50, %s51
    %p62 = scmp.eq.s32.totalorder %s16, 0
    %p63 = por %p61, %p62
    %p64 = scmp.ne.s32.totalorder %s50, %s51
    %p65 = scmp.eq.s32.totalorder %s17, 1
    %p66 = por %p64, %p65
    %p68 = scmp.ne.s32.totalorder %s51, %s67
    %p69 = scmp.eq.s32.totalorder %s17, 0
    %p70 = por %p68, %p69
    %s72 = sadd.s32 %s71, 1
    %p75 = scmp.eq.s32.totalorder %s11, 1
    %p76 = scmp.ne.s32.totalorder %s71, %s73
    %p77 = scmp.eq.s32.totalorder %s11, 0
    %p78 = por %p76, %p77
    %p79 = scmp.ne.s32.totalorder %s71, %s73
    %p80 = scmp.eq.s32.totalorder %s16, 1
    %p81 = por %p79, %p80
    %p82 = scmp.ne.s32.totalorder %s73, %s74
    %p83 = scmp.eq.s32.totalorder %s16, 0
    %p84 = por %p82, %p83
    %p85 = scmp.ne.s32.totalorder %s73, %s74
    %p86 = scmp.eq.s32.totalorder %s17, 1
    %p87 = por %p85, %p86
    %p89 = scmp.ne.s32.totalorder %s74, %s88
    %p90 = scmp.eq.s32.totalorder %s17, 0
    %p91 = por %p89, %p90
    %s93 = sadd.s32 %s92, 1
    %p96 = scmp.eq.s32.totalorder %s11, 1
    %p97 = scmp.ne.s32.totalorder %s92, %s94
    %p98 = scmp.eq.s32.totalorder %s11, 0
    %p99 = por %p97, %p98
    %p100 = scmp.ne.s32.totalorder %s92, %s94
    %p101 = scmp.eq.s32.totalorder %s16, 1
    %p102 = por %p100, %p101
    %p103 = scmp.ne.s32.totalorder %s94, %s95
    %p104 = scmp.eq.s32.totalorder %s16, 0
    %p105 = por %p103, %p104
    %p106 = scmp.ne.s32.totalorder %s94, %s95
    %p107 = scmp.eq.s32.totalorder %s17, 1
    %p108 = por %p106, %p107
    %p110 = scmp.ne.s32.totalorder %s95, %s109
    %p111 = scmp.eq.s32.totalorder %s17, 0
    %p112 = por %p110, %p111
    %s114 = sadd.s32 %s113, 1
    %p117 = scmp.eq.s32.totalorder %s11, 1
    %p118 = scmp.ne.s32.totalorder %s113, %s115
    %p119 = scmp.eq.s32.totalorder %s11, 0
    %p120 = por %p118, %p119
    %p121 = scmp.ne.s32.totalorder %s113, %s115
    %p122 = scmp.eq.s32.totalorder %s16, 1
    %p123 = por %p121, %p122
    %p124 = scmp.ne.s32.totalorder %s115, %s116
    %p125 = scmp.eq.s32.totalorder %s16, 0
    %p126 = por %p124, %p125
    %p127 = scmp.ne.s32.totalorder %s115, %s116
    %p128 = scmp.eq.s32.totalorder %s17, 1
    %p129 = por %p127, %p128
    %p131 = scmp.ne.s32.totalorder %s116, %s130
    %p132 = scmp.eq.s32.totalorder %s17, 0
    %p133 = por %p131, %p132
    %s134 = ssub.s32 %s11, %s18
    %p135 = scmp.eq.s32.totalorder %s134, 0
    %s137 = sadd.s32 %s136, 1
    %s138 = scalar_select %p135, %s136, %s137
    %p141 = pneg %p135
    %p142 = scmp.eq.s32.totalorder %s11, 1
    %p143 = por %p141, %p142
    %p144 = scmp.ne.s32.totalorder %s136, %s139
    %p145 = scmp.eq.s32.totalorder %s11, 0
    %p146 = por %p144, %p145
    %p147 = scmp.ne.s32.totalorder %s136, %s139
    %p148 = scmp.eq.s32.totalorder %s16, 1
    %p149 = por %p147, %p148
    %p150 = scmp.ne.s32.totalorder %s139, %s140
    %p151 = scmp.eq.s32.totalorder %s16, 0
    %p152 = por %p150, %p151
    %p153 = scmp.ne.s32.totalorder %s139, %s140
    %p154 = scmp.eq.s32.totalorder %s17, 1
    %p155 = por %p153, %p154
    %p157 = scmp.ne.s32.totalorder %s140, %s156
    %p158 = scmp.eq.s32.totalorder %s17, 0
    %p159 = por %p157, %p158
    %p160 = scmp.le.s32.totalorder 1, %s11
    %p161 = scmp.lt.s32.totalorder %s11, 3
    %p162 = pnand %p160, %p161
    %p163 = pneg %p162
    // Predicated region
    $region9: #{main_forward.123} parent=5 // pred_check
      _
    $region10: #{main_forward.123} parent=5 // pred_check_branch
      %165 = sbr.rel (%p162) target = $region12
    $region11: #{main_forward.123} parent=5 // pred_region
      %s166 = ssub.s32 %s11, 1
      // Predicated region
      $region13: #{main_forward.123} parent=11 // pred_check
        %p167 = pneg %p84
      $region14: #{main_forward.123} parent=11 // pred_check_branch
        %169 = sbr.rel (%p167) target = $region16
      $region15: #{main_forward.123} parent=11 // pred_region
        _
      $region16: #{main_forward.123} parent=11 // pred_fallthru
        _
      // Predicated region
      $region17: #{main_forward.123} parent=11 // pred_check
        %p170 = pneg %p105
      $region18: #{main_forward.123} parent=11 // pred_check_branch
        %172 = sbr.rel (%p170) target = $region20
      $region19: #{main_forward.123} parent=11 // pred_region
        _
      $region20: #{main_forward.123} parent=11 // pred_fallthru
        _
      // Predicated region
      $region21: #{main_forward.123} parent=11 // pred_check
        %p173 = pneg %p126
      $region22: #{main_forward.123} parent=11 // pred_check_branch
        %175 = sbr.rel (%p173) target = $region24
      $region23: #{main_forward.123} parent=11 // pred_region
        _
      $region24: #{main_forward.123} parent=11 // pred_fallthru
        _
    $region12: #{main_forward.123} parent=5 // pred_fallthru
      _
    %p176 = scmp.lt.s32.totalorder %s11, 2
    // Predicated region
    $region25: #{main_forward.123} parent=5 // pred_check
      %p177 = pneg %p176
    $region26: #{main_forward.123} parent=5 // pred_check_branch
      %179 = sbr.rel (%p177) target = $region28
    $region27: #{main_forward.123} parent=5 // pred_region
      // Predicated region
      $region29: #{main_forward.123} parent=27 // pred_check
        %p180 = pneg %p31
      $region30: #{main_forward.123} parent=27 // pred_check_branch
        %182 = sbr.rel (%p180) target = $region32
      $region31: #{main_forward.123} parent=27 // pred_region
        %p183 = scmp.lt.s32.totalorder %s11, 1
        %s184 = scalar_select %p183, %s11, 1
        %s185 = smul.addr %s184, 8
        %s186 = scalar_lea.vmem %s0, %s185
      $region32: #{main_forward.123} parent=27 // pred_fallthru
        _
      // Predicated region
      $region33: #{main_forward.123} parent=27 // pred_check
        %p187 = pneg %p57
      $region34: #{main_forward.123} parent=27 // pred_check_branch
        %189 = sbr.rel (%p187) target = $region36
      $region35: #{main_forward.123} parent=27 // pred_region
        %p190 = scmp.lt.s32.totalorder %s11, 1
        %s191 = scalar_select %p190, %s11, 1
        %s192 = smul.addr %s191, 8
        %s193 = scalar_lea.vmem %s1, %s192
      $region36: #{main_forward.123} parent=27 // pred_fallthru
        _
    $region28: #{main_forward.123} parent=5 // pred_fallthru
      _
    %p194 = scmp.le.s32.totalorder 1, %s11
    %p195 = scmp.lt.s32.totalorder %s11, 3
    %p196 = pnand %p194, %p195
    %p197 = pneg %p196
    // Predicated region
    $region37: #{main_forward.123} parent=5 // pred_check
      _
    $region38: #{main_forward.123} parent=5 // pred_check_branch
      %199 = sbr.rel (%p196) target = $region40
    $region39: #{main_forward.123} parent=5 // pred_region
      %s200 = ssub.s32 %s11, 1
      %p201 = scmp.lt.s32.totalorder %s16, 1
      %s202 = scalar_select %p201, %s16, 1
      %s203 = smul.addr %s202, 8
      %s204 = scalar_lea.vmem %s0, %s203
      %p205 = pneg %p37
      %p206 = pneg %p34
      %p207 = scmp.lt.s32.totalorder %s16, 1
      %s208 = scalar_select %p207, %s16, 1
      %s209 = smul.addr %s208, 8
      %s210 = scalar_lea.vmem %s1, %s209
      %p211 = pneg %p63
      %p212 = pneg %p60
      %p213 = pneg %p84
      %p214 = pneg %p81
      %p215 = pneg %p105
      %p216 = pneg %p102
      %p217 = pneg %p126
      %p218 = pneg %p123
      %p219 = pneg %p152
      %p220 = pneg %p149
      %p221 = scmp.lt.s32.totalorder %s16, 1
      %s222 = scalar_select %p221, %s16, 1
      %s223 = smul.addr %s222, 8
      %s224 = scalar_lea.vmem %s5, %s223
      %p225 = scmp.lt.s32.totalorder %s16, 1
      %s226 = scalar_select %p225, %s16, 1
      %s227 = smul.addr %s226, 8
      %s228 = scalar_lea.vmem %s0, %s227
      %p229 = scmp.lt.s32.totalorder %s16, 1
      %s230 = scalar_select %p229, %s16, 1
      %s231 = smul.addr %s230, 8
      %s232 = scalar_lea.vmem %s1, %s231
      %p233 = scmp.lt.s32.totalorder %s16, 1
      %s234 = scalar_select %p233, %s16, 1
      %s235 = smul.addr %s234, 8
      %s236 = scalar_lea.vmem %s5, %s235
      %v237 = vld [vmem:[%s228] sm:$0xff]
      %vm238 = vcmask 523264
      %v239 = vsel %vm238, %v237, 0.0
      %240 = vadd.xlane.f32.xlu0 %v239
      %v241 = vpop.xlane.xlu0 %240
      %v242 = vrot.slane %v241, 4
      %v243 = vadd.f32 %v241, %v242
      %v244 = vrot.slane %v243, 2
      %v245 = vadd.f32 %v243, %v244
      %v246 = vrot.slane %v245, 1
      %v247 = vadd.f32 %v245, %v246
      %s248 = vtos %v247
      %v249 = vrcp.pop 512.0
      %s250 = vtos %v249
      %s251 = smul.f32 %s248, %s250
      %v252 = vstv %s251
      %v253 = vsub.f32 %v237, %v252
      %v254 = vmul.f32 %v253, %v253
      %v255 = vsel %vm238, %v254, 0.0
      %256 = vadd.xlane.f32.xlu0 %v255
      %v257 = vpop.xlane.xlu0 %256
      %v258 = vrot.slane %v257, 4
      %v259 = vadd.f32 %v257, %v258
      %v260 = vrot.slane %v259, 2
      %v261 = vadd.f32 %v259, %v260
      %v262 = vrot.slane %v261, 1
      %v263 = vadd.f32 %v261, %v262
      %s264 = vtos %v263
      %v265 = vrcp.pop 512.0
      %s266 = vtos %v265
      %s267 = smul.f32 %s264, %s266
      %s268 = sadd.f32 %s267, 1e-05
      %v269 = vstv %s268
      %v270 = vrsqrt.pop %v269
      %s271 = vtos %v270
      %v272 = vstv %s271
      %v273 = vmul.f32 %v253, %v272
      %v274 = vld [vmem:[%s2] sm:$0xff]
      %276 = vset.pattern.permute.xlu0 0
      %277 = vperm.xlu0 %276, %v274
      %v278 = vpop.permute.xlu0 %277
      %v280 = vmul.f32 %v273, %v278
      %v281 = vld [vmem:[%s3] sm:$0xff]
      %283 = vset.pattern.permute.xlu0 0
      %284 = vperm.xlu0 %283, %v281
      %v285 = vpop.permute.xlu0 %284
      %v287 = vadd.f32 %v280, %v285
      %v288 = vld [vmem:[%s232] sm:$0xff]
      %v289 = vadd.f32 %v287, %v288
      %vm290 = vcmp.ge.f32.partialorder %v289, 0.0
      %v291 = vld [vmem:[%s4] sm:$0xff]
      %293 = vset.pattern.permute.xlu0 0
      %294 = vperm.xlu0 %293, %v291
      %v295 = vpop.permute.xlu0 %294
      %v297 = vmul.f32 %v295, %v289
      %v298 = vsel %vm290, %v289, %v297
      %299 = vst.msk [vmem:[%s236] sm:$0xff] %vm238, %v298
      %p300 = scmp.lt.s32.totalorder %s16, 1
      %s301 = scalar_select %p300, %s16, 1
      %s302 = smul.addr %s301, 8
      %s303 = scalar_lea.vmem %s5, %s302
      // Predicated region
      $region41: #{main_forward.123} parent=39 // pred_check
        %p304 = pneg %p149
      $region42: #{main_forward.123} parent=39 // pred_check_branch
        %306 = sbr.rel (%p304) target = $region44
      $region43: #{main_forward.123} parent=39 // pred_region
        _
      $region44: #{main_forward.123} parent=39 // pred_fallthru
        _
    $region40: #{main_forward.123} parent=5 // pred_fallthru
      _
    %p307 = scmp.le.s32.totalorder 2, %s11
    // Predicated region
    $region45: #{main_forward.123} parent=5 // pred_check
      %p308 = pneg %p307
    $region46: #{main_forward.123} parent=5 // pred_check_branch
      %310 = sbr.rel (%p308) target = $region48
    $region47: #{main_forward.123} parent=5 // pred_region
      %s311 = ssub.s32 %s11, 2
      // Predicated region
      $region49: #{main_forward.123} parent=47 // pred_check
        %p312 = pneg %p155
      $region50: #{main_forward.123} parent=47 // pred_check_branch
        %314 = sbr.rel (%p312) target = $region52
      $region51: #{main_forward.123} parent=47 // pred_region
        %p315 = scmp.lt.s32.totalorder %s17, 1
        %s316 = scalar_select %p315, %s17, 1
        %s317 = smul.addr %s316, 8
        %s318 = scalar_lea.vmem %s5, %s317
      $region52: #{main_forward.123} parent=47 // pred_fallthru
        _
    $region48: #{main_forward.123} parent=5 // pred_fallthru
      _
  $region6: #{main_forward.123} parent=0 // loop_footer
    %s15 = sadd.s32 1, %s11
  $region7: #{main_forward.123} parent=0 // loop_footer_branch
    %10 = sbr.rel target = $region3
  $region8: #{main_forward.123} parent=0 // loop_exit
    _

// kernel: main_forward.124
$region0: #{main_forward.124}
  #allocation0 [shape = 'u32[]', space=smem, size = 0x4, offset = 0x4, fixed_abs, tag = 'smem constant byte address 0x4 - core index']
  #allocation1 [shape = 'u32[144,128]{1,0:T(1,128)}', space=vmem, size = 0x12000, scoped, tag = 'internal scratch']
  %s0 = inlined_call_operand.vmem [shape: bf16[16,8], index: 0, kind: input, shape index: {}]
  %s1 = inlined_call_operand.vmem [shape: bf16[8,32], index: 1, kind: input, shape index: {}]
  %s2 = inlined_call_operand.vmem [shape: f32[16,32], index: 2, kind: output, shape index: {}]
  %s3 = sld [smem:[#allocation0]]
  $region18: #{main_forward.124} parent=0
    _
  %s5 = ssub.s32 1, %s3
  %s6 = scalar_select 0, %s5, %s3
  // Predicated region
  $region2: #{main_forward.124} parent=0 // pred_check
    _
  $region3: #{main_forward.124} parent=0 // pred_check_branch
    %8 = sbr.rel (0) target = $region5
  $region4: #{main_forward.124} parent=0 // pred_region
    _
  $region5: #{main_forward.124} parent=0 // pred_fallthru
    _
  // Predicated region
  $region6: #{main_forward.124} parent=0 // pred_check
    _
  $region7: #{main_forward.124} parent=0 // pred_check_branch
    %10 = sbr.rel (0) target = $region9
  $region8: #{main_forward.124} parent=0 // pred_region
    _
  $region9: #{main_forward.124} parent=0 // pred_fallthru
    _
  %v12 = vld [vmem:[%s0] sm:$0xf]
  %v13 = vld [vmem:[%s0 + $0x4] sm:$0xf]
  %v14 = vld [vmem:[%s1] sm:$0xf]
  %v17 = vunpack.c.l.b16 %v12
  %v18 = vunpack.c.l.b16 %v13
  %v19 = vpack.c.b16 %v18, %v17
  %vm20 = vcmask 64512
  %v22 = vsel %vm20, %v19, 0
  %vm24 = vcmask 1043456
  %v26 = vsel %vm24, %v14, 0
  %28 = vmatprep.subr.bf16.mxu0 0
  %29 = vmatpush1.bf16.msra.mxu0 0
  %30 = vmatprep.subr.bf16.mxu0 0
  %31 = vmatpush1.bf16.msra.mxu0 0
  %32 = vmatprep.subr.bf16.mxu0 0
  %33 = vmatpush1.bf16.msra.mxu0 0
  %34 = vmatprep.subr.bf16.mxu0 0
  %35 = vmatpush1.bf16.msra.mxu0 0
  %36 = vmatprep.subr.bf16.mxu0 0
  %37 = vmatpush1.bf16.msra.mxu0 0
  %38 = vmatprep.subr.bf16.mxu0 0
  %39 = vmatpush1.bf16.msra.mxu0 0
  %40 = vmatprep.subr.bf16.mxu0 0
  %41 = vmatpush1.bf16.msra.mxu0 0
  %42 = vmatprep.subr.bf16.mxu0 0
  %43 = vmatpush1.bf16.msra.mxu0 %v26
  %44 = vmatprep.subr.bf16.mxu0 0
  %45 = vmatpush2.bf16.msra.mxu0 0
  %46 = vmatprep.subr.bf16.mxu0 0
  %47 = vmatpush2.bf16.msra.mxu0 0
  %48 = vmatprep.subr.bf16.mxu0 0
  %49 = vmatpush2.bf16.msra.mxu0 0
  %50 = vmatprep.subr.bf16.mxu0 0
  %51 = vmatpush2.bf16.msra.mxu0 0
  %52 = vmatprep.subr.bf16.mxu0 0
  %53 = vmatpush2.bf16.msra.mxu0 0
  %54 = vmatprep.subr.bf16.mxu0 0
  %55 = vmatpush2.bf16.msra.mxu0 0
  %56 = vmatprep.subr.bf16.mxu0 0
  %57 = vmatpush2.bf16.msra.mxu0 0
  %58 = vmatprep.subr.bf16.mxu0 0
  %59 = vmatpush2.bf16.msra.mxu0 0
  %60 = vmatprep.mubr.bf16.mxu0 0
  %61 = vmatmul.mubr.bf16.gmra.mxu0 %v22
  %v62 = vpop.f32.mrf.mxu0
  %v63 = vadd.f32 0.0, %v62
  %v64 = vpop.f32.mrf.mxu0
  %v65 = vpop.f32.mrf.mxu0
  %v66 = vadd.f32 0.0, %v65
  %v67 = vpop.f32.mrf.mxu0
  %68 = vdwg.mxu0
  %vm69 = vcmask 261120
  %70 = vst.msk [vmem:[%s2] sm:$0xff] %vm69, %v63
  %71 = vst.msk [vmem:[%s2 + $0x8] sm:$0xff] %vm69, %v66
  // Predicated region
  $region10: #{main_forward.124} parent=0 // pred_check
    _
  $region11: #{main_forward.124} parent=0 // pred_check_branch
    %73 = sbr.rel (0) target = $region13
  $region12: #{main_forward.124} parent=0 // pred_region
    _
  $region13: #{main_forward.124} parent=0 // pred_fallthru
    _
  // Predicated region
  $region14: #{main_forward.124} parent=0 // pred_check
    _
  $region15: #{main_forward.124} parent=0 // pred_check_branch
    %75 = sbr.rel (0) target = $region17
  $region16: #{main_forward.124} parent=0 // pred_region
    _
  $region17: #{main_forward.124} parent=0 // pred_fallthru
    _

// kernel: main_forward.125
$region0: #{main_forward.125}
  #allocation0 [shape = 'u32[]', space=smem, size = 0x4, offset = 0x4, fixed_abs, tag = 'smem constant byte address 0x4 - core index']
  #allocation1 [shape = 'u32[144,128]{1,0:T(1,128)}', space=vmem, size = 0x12000, scoped, tag = 'internal scratch']
  %s0 = inlined_call_operand.vmem [shape: bf16[16,144], index: 0, kind: input, shape index: {}]
  %s1 = inlined_call_operand.vmem [shape: bf16[144,32], index: 1, kind: input, shape index: {}]
  %s2 = inlined_call_operand.vmem [shape: f32[16,32], index: 2, kind: output, shape index: {}]
  %s3 = sld [smem:[#allocation0]]
  $region18: #{main_forward.125} parent=0
    _
  %s5 = ssub.s32 1, %s3
  %s6 = scalar_select 0, %s5, %s3
  // Predicated region
  $region2: #{main_forward.125} parent=0 // pred_check
    _
  $region3: #{main_forward.125} parent=0 // pred_check_branch
    %8 = sbr.rel (0) target = $region5
  $region4: #{main_forward.125} parent=0 // pred_region
    _
  $region5: #{main_forward.125} parent=0 // pred_fallthru
    _
  // Predicated region
  $region6: #{main_forward.125} parent=0 // pred_check
    _
  $region7: #{main_forward.125} parent=0 // pred_check_branch
    %10 = sbr.rel (0) target = $region9
  $region8: #{main_forward.125} parent=0 // pred_region
    _
  $region9: #{main_forward.125} parent=0 // pred_fallthru
    _
  %v12 = vld [vmem:[%s0] sm:$0xff]
  %v13 = vld [vmem:[%s0 + $0x8] sm:$0xff]
  %v14 = vld [vmem:[%s1] sm:$0xf]
  %v15 = vld [vmem:[%s1 + $0x4] sm:$0xf]
  %v16 = vld [vmem:[%s1 + $0x8] sm:$0xf]
  %v17 = vld [vmem:[%s1 + $0xc] sm:$0xf]
  %v18 = vld [vmem:[%s1 + $0x10] sm:$0xf]
  %v19 = vld [vmem:[%s1 + $0x14] sm:$0xf]
  %v20 = vld [vmem:[%s1 + $0x18] sm:$0xf]
  %v21 = vld [vmem:[%s1 + $0x1c] sm:$0xf]
  %v22 = vld [vmem:[%s1 + $0x20] sm:$0xf]
  %v23 = vld [vmem:[%s1 + $0x24] sm:$0xf]
  %v24 = vld [vmem:[%s1 + $0x28] sm:$0xf]
  %v25 = vld [vmem:[%s1 + $0x2c] sm:$0xf]
  %v26 = vld [vmem:[%s1 + $0x30] sm:$0xf]
  %v27 = vld [vmem:[%s1 + $0x34] sm:$0xf]
  %v28 = vld [vmem:[%s1 + $0x38] sm:$0xf]
  %v29 = vld [vmem:[%s1 + $0x3c] sm:$0xf]
  %v30 = vld [vmem:[%s1 + $0x40] sm:$0xf]
  %v31 = vld [vmem:[%s1 + $0x44] sm:$0xf]
  %v34 = vunpack.c.l.b16 %v12
  %v35 = vunpack.c.h.b16 %v12
  %v36 = vunpack.c.l.b16 %v13
  %v37 = vunpack.c.h.b16 %v13
  %v38 = vpack.c.b16 %v36, %v34
  %v39 = vpack.c.b16 %v37, %v35
  %v59 = vunpack.c.l.b16 %v14
  %v60 = vunpack.c.l.b16 %v15
  %v61 = vunpack.c.l.b16 %v16
  %v62 = vunpack.c.l.b16 %v17
  %v63 = vunpack.c.l.b16 %v18
  %v64 = vunpack.c.l.b16 %v19
  %v65 = vunpack.c.l.b16 %v20
  %v66 = vunpack.c.l.b16 %v21
  %v67 = vunpack.c.l.b16 %v22
  %v68 = vunpack.c.l.b16 %v23
  %v69 = vunpack.c.l.b16 %v24
  %v70 = vunpack.c.l.b16 %v25
  %v71 = vunpack.c.l.b16 %v26
  %v72 = vunpack.c.l.b16 %v27
  %v73 = vunpack.c.l.b16 %v28
  %v74 = vunpack.c.l.b16 %v29
  %v75 = vunpack.c.l.b16 %v30
  %v76 = vunpack.c.l.b16 %v31
  %v77 = vpack.c.b16 %v60, %v59
  %v78 = vpack.c.b16 %v62, %v61
  %v79 = vpack.c.b16 %v64, %v63
  %v80 = vpack.c.b16 %v66, %v65
  %v81 = vpack.c.b16 %v68, %v67
  %v82 = vpack.c.b16 %v70, %v69
  %v83 = vpack.c.b16 %v72, %v71
  %v84 = vpack.c.b16 %v74, %v73
  %v85 = vpack.c.b16 %v76, %v75
  %vm95 = vcmask 130048
  %v97 = vsel %vm95, %v39, 0
  %99 = vmatprep.subr.bf16.mxu0 0
  %100 = vmatpush1.bf16.msra.mxu0 %v84
  %101 = vmatprep.subr.bf16.mxu0 0
  %102 = vmatpush1.bf16.msra.mxu0 %v83
  %103 = vmatprep.subr.bf16.mxu0 0
  %104 = vmatpush1.bf16.msra.mxu0 %v82
  %105 = vmatprep.subr.bf16.mxu0 0
  %106 = vmatpush1.bf16.msra.mxu0 %v81
  %107 = vmatprep.subr.bf16.mxu0 0
  %108 = vmatpush1.bf16.msra.mxu0 %v80
  %109 = vmatprep.subr.bf16.mxu0 0
  %110 = vmatpush1.bf16.msra.mxu0 %v79
  %111 = vmatprep.subr.bf16.mxu0 0
  %112 = vmatpush1.bf16.msra.mxu0 %v78
  %113 = vmatprep.subr.bf16.mxu0 0
  %114 = vmatpush1.bf16.msra.mxu0 %v77
  %115 = vmatprep.subr.bf16.mxu0 0
  %116 = vmatpush2.bf16.msra.mxu0 0
  %117 = vmatprep.subr.bf16.mxu0 0
  %118 = vmatpush2.bf16.msra.mxu0 0
  %119 = vmatprep.subr.bf16.mxu0 0
  %120 = vmatpush2.bf16.msra.mxu0 0
  %121 = vmatprep.subr.bf16.mxu0 0
  %122 = vmatpush2.bf16.msra.mxu0 0
  %123 = vmatprep.subr.bf16.mxu0 0
  %124 = vmatpush2.bf16.msra.mxu0 0
  %125 = vmatprep.subr.bf16.mxu0 0
  %126 = vmatpush2.bf16.msra.mxu0 0
  %127 = vmatprep.subr.bf16.mxu0 0
  %128 = vmatpush2.bf16.msra.mxu0 0
  %129 = vmatprep.subr.bf16.mxu0 0
  %130 = vmatpush2.bf16.msra.mxu0 %v85
  %131 = vmatprep.mubr.bf16.mxu0 %v97
  %132 = vmatmul.mubr.bf16.gmra.mxu0 %v38
  %v133 = vpop.f32.mrf.mxu0
  %v134 = vadd.f32 0.0, %v133
  %v135 = vpop.f32.mrf.mxu0
  %v136 = vpop.f32.mrf.mxu0
  %v137 = vadd.f32 0.0, %v136
  %v138 = vpop.f32.mrf.mxu0
  %139 = vdwg.mxu0
  %vm140 = vcmask 261120
  %141 = vst.msk [vmem:[%s2] sm:$0xff] %vm140, %v134
  %142 = vst.msk [vmem:[%s2 + $0x8] sm:$0xff] %vm140, %v137
  // Predicated region
  $region10: #{main_forward.125} parent=0 // pred_check
    _
  $region11: #{main_forward.125} parent=0 // pred_check_branch
    %144 = sbr.rel (0) target = $region13
  $region12: #{main_forward.125} parent=0 // pred_region
    _
  $region13: #{main_forward.125} parent=0 // pred_fallthru
    _
  // Predicated region
  $region14: #{main_forward.125} parent=0 // pred_check
    _
  $region15: #{main_forward.125} parent=0 // pred_check_branch
    %146 = sbr.rel (0) target = $region17
  $region16: #{main_forward.125} parent=0 // pred_region
    _
  $region17: #{main_forward.125} parent=0 // pred_fallthru
    _

// kernel: sub.114
$region0: #{sub.114}
  #allocation0 [shape = 's32[1]{0}', space=sflag, size = 0x4, scoped, tag = 'scoped memory for sub.114']
  %s0 = inlined_call_operand.vmem [shape: f32[2,16,4,4], index: 0, kind: input, shape index: {}]
  %s1 = inlined_call_operand.vmem [shape: f32[2,16,4,4], index: 1, kind: input, shape index: {}]
  %s2 = inlined_call_operand.vmem [shape: bf16[2,16,4,4], index: 2, kind: output, shape index: {}]
  %v3 = vld [vmem:[%s0] sm:$0xf]
  %v4 = vld [vmem:[%s1] sm:$0xf]
  %5 = xla_tuple %v3, %v4
  %6 = xla_tuple %5
  %v7 = vsub.f32 %v3, %v4
  %8 = xla_tuple %v7
  %v9 = vpack.c.bf16 0.0, %v7
  %10 = vst [vmem:[%s2] sm:$0x3] %v9
  %s11 = scalar_lea.vmem %s0, 16
  %v12 = vld [vmem:[%s11] sm:$0xf]
  %s13 = scalar_lea.vmem %s1, 16
  %v14 = vld [vmem:[%s13] sm:$0xf]
  %15 = xla_tuple %v12, %v14
  %16 = xla_tuple %15
  %v17 = vsub.f32 %v12, %v14
  %18 = xla_tuple %v17
  %s19 = scalar_lea.vmem %s2, 8
  %v20 = vpack.c.bf16 0.0, %v17
  %21 = vst [vmem:[%s19] sm:$0x3] %v20
  %s22 = scalar_lea.vmem %s0, 4
  %v23 = vld [vmem:[%s22] sm:$0xf]
  %s24 = scalar_lea.vmem %s1, 4
  %v25 = vld [vmem:[%s24] sm:$0xf]
  %26 = xla_tuple %v23, %v25
  %27 = xla_tuple %26
  %v28 = vsub.f32 %v23, %v25
  %29 = xla_tuple %v28
  %s30 = scalar_lea.vmem %s2, 2
  %v31 = vpack.c.bf16 0.0, %v28
  %32 = vst [vmem:[%s30] sm:$0x3] %v31
  %s33 = scalar_lea.vmem %s0, 20
  %v34 = vld [vmem:[%s33] sm:$0xf]
  %s35 = scalar_lea.vmem %s1, 20
  %v36 = vld [vmem:[%s35] sm:$0xf]
  %37 = xla_tuple %v34, %v36
  %38 = xla_tuple %37
  %v39 = vsub.f32 %v34, %v36
  %40 = xla_tuple %v39
  %s41 = scalar_lea.vmem %s2, 10
  %v42 = vpack.c.bf16 0.0, %v39
  %43 = vst [vmem:[%s41] sm:$0x3] %v42
  %s44 = scalar_lea.vmem %s0, 8
  %v45 = vld [vmem:[%s44] sm:$0xf]
  %s46 = scalar_lea.vmem %s1, 8
  %v47 = vld [vmem:[%s46] sm:$0xf]
  %48 = xla_tuple %v45, %v47
  %49 = xla_tuple %48
  %v50 = vsub.f32 %v45, %v47
  %51 = xla_tuple %v50
  %s52 = scalar_lea.vmem %s2, 4
  %v53 = vpack.c.bf16 0.0, %v50
  %54 = vst [vmem:[%s52] sm:$0x3] %v53
  %s55 = scalar_lea.vmem %s0, 24
  %v56 = vld [vmem:[%s55] sm:$0xf]
  %s57 = scalar_lea.vmem %s1, 24
  %v58 = vld [vmem:[%s57] sm:$0xf]
  %59 = xla_tuple %v56, %v58
  %60 = xla_tuple %59
  %v61 = vsub.f32 %v56, %v58
  %62 = xla_tuple %v61
  %s63 = scalar_lea.vmem %s2, 12
  %v64 = vpack.c.bf16 0.0, %v61
  %65 = vst [vmem:[%s63] sm:$0x3] %v64
  %s66 = scalar_lea.vmem %s0, 12
  %v67 = vld [vmem:[%s66] sm:$0xf]
  %s68 = scalar_lea.vmem %s1, 12
  %v69 = vld [vmem:[%s68] sm:$0xf]
  %70 = xla_tuple %v67, %v69
  %71 = xla_tuple %70
  %v72 = vsub.f32 %v67, %v69
  %73 = xla_tuple %v72
  %s74 = scalar_lea.vmem %s2, 6
  %v75 = vpack.c.bf16 0.0, %v72
  %76 = vst [vmem:[%s74] sm:$0x3] %v75
  %s77 = scalar_lea.vmem %s0, 28
  %v78 = vld [vmem:[%s77] sm:$0xf]
  %s79 = scalar_lea.vmem %s1, 28
  %v80 = vld [vmem:[%s79] sm:$0xf]
  %81 = xla_tuple %v78, %v80
  %82 = xla_tuple %81
  %v83 = vsub.f32 %v78, %v80
  %84 = xla_tuple %v83
  %s85 = scalar_lea.vmem %s2, 14
  %v86 = vpack.c.bf16 0.0, %v83
  %87 = vst [vmem:[%s85] sm:$0x3] %v86

// kernel: main_forward.126
$region0: #{main_forward.126}
  #allocation0 [shape = 'u32[]', space=smem, size = 0x4, offset = 0x4, fixed_abs, tag = 'smem constant byte address 0x4 - core index']
  #allocation1 [shape = 'u32[144,128]{1,0:T(1,128)}', space=vmem, size = 0x12000, scoped, tag = 'internal scratch']
  %s0 = inlined_call_operand.vmem [shape: f32[2,16,16], index: 0, kind: input, shape index: {}]
  %s1 = inlined_call_operand.vmem [shape: f32[16,1], index: 1, kind: input, shape index: {}]
  %s2 = inlined_call_operand.vmem [shape: f32[16,1], index: 2, kind: input, shape index: {}]
  %s3 = inlined_call_operand.vmem [shape: f32[16,1], index: 3, kind: input, shape index: {}]
  %s4 = inlined_call_operand.vmem [shape: f32[2,16,16], index: 4, kind: output, shape index: {}]
  %s5 = sld [smem:[#allocation0]]
  $region49: #{main_forward.126} parent=0
    _
  %s7 = ssub.s32 1, %s5
  %s8 = scalar_select 0, %s7, %s5
  loop: start=0, step=1, limit=4
  $region2: #{main_forward.126} parent=0 // loop_pre_header
    _
  $region3: #{main_forward.126} parent=0 // loop_header
    %s10 = sphi 0, %s14
    %p11 = scmp.ge.s32.totalorder %s10, 4
    %s20 = sphi 0, %s22
    %s23 = sphi 0, %s20
    %s24 = sphi 0, %s23
    %s40 = sphi 0, %s24
    %s44 = sphi 0, %s44
    %s46 = sphi 0, %s44
    %s47 = sphi 0, %s46
    %s61 = sphi 0, %s47
    %s65 = sphi 0, %s65
    %s67 = sphi 0, %s65
    %s68 = sphi 0, %s67
    %s82 = sphi 0, %s68
    %s86 = sphi 0, %s86
    %s88 = sphi 0, %s86
    %s89 = sphi 0, %s88
    %s103 = sphi 0, %s89
    %s109 = sphi 0, %s111
    %s112 = sphi 0, %s109
    %s113 = sphi 0, %s112
    %s129 = sphi 0, %s113
  $region4: #{main_forward.126} parent=0 // loop_header_branch
    %13 = sbr.rel (%p11) target = $region8
  $region5: #{main_forward.126} parent=0 // loop_body
    %s15 = ssub.s32 %s10, 1
    %s16 = ssub.s32 %s10, 2
    %s17 = sadd.s32 %s10, 1
    %s18 = ssub.s32 %s10, %s17
    %p19 = scmp.eq.s32.totalorder %s18, 0
    %s21 = sadd.s32 %s20, 1
    %s22 = scalar_select %p19, %s20, %s21
    %p25 = pneg %p19
    %p26 = scmp.eq.s32.totalorder %s10, 1
    %p27 = por %p25, %p26
    %p28 = scmp.ne.s32.totalorder %s20, %s23
    %p29 = scmp.eq.s32.totalorder %s10, 0
    %p30 = por %p28, %p29
    %p31 = scmp.ne.s32.totalorder %s20, %s23
    %p32 = scmp.eq.s32.totalorder %s15, 1
    %p33 = por %p31, %p32
    %p34 = scmp.ne.s32.totalorder %s23, %s24
    %p35 = scmp.eq.s32.totalorder %s15, 0
    %p36 = por %p34, %p35
    %p37 = scmp.ne.s32.totalorder %s23, %s24
    %p38 = scmp.eq.s32.totalorder %s16, 1
    %p39 = por %p37, %p38
    %p41 = scmp.ne.s32.totalorder %s24, %s40
    %p42 = scmp.eq.s32.totalorder %s16, 0
    %p43 = por %p41, %p42
    %s45 = sadd.s32 %s44, 1
    %p48 = scmp.eq.s32.totalorder %s10, 1
    %p49 = scmp.ne.s32.totalorder %s44, %s46
    %p50 = scmp.eq.s32.totalorder %s10, 0
    %p51 = por %p49, %p50
    %p52 = scmp.ne.s32.totalorder %s44, %s46
    %p53 = scmp.eq.s32.totalorder %s15, 1
    %p54 = por %p52, %p53
    %p55 = scmp.ne.s32.totalorder %s46, %s47
    %p56 = scmp.eq.s32.totalorder %s15, 0
    %p57 = por %p55, %p56
    %p58 = scmp.ne.s32.totalorder %s46, %s47
    %p59 = scmp.eq.s32.totalorder %s16, 1
    %p60 = por %p58, %p59
    %p62 = scmp.ne.s32.totalorder %s47, %s61
    %p63 = scmp.eq.s32.totalorder %s16, 0
    %p64 = por %p62, %p63
    %s66 = sadd.s32 %s65, 1
    %p69 = scmp.eq.s32.totalorder %s10, 1
    %p70 = scmp.ne.s32.totalorder %s65, %s67
    %p71 = scmp.eq.s32.totalorder %s10, 0
    %p72 = por %p70, %p71
    %p73 = scmp.ne.s32.totalorder %s65, %s67
    %p74 = scmp.eq.s32.totalorder %s15, 1
    %p75 = por %p73, %p74
    %p76 = scmp.ne.s32.totalorder %s67, %s68
    %p77 = scmp.eq.s32.totalorder %s15, 0
    %p78 = por %p76, %p77
    %p79 = scmp.ne.s32.totalorder %s67, %s68
    %p80 = scmp.eq.s32.totalorder %s16, 1
    %p81 = por %p79, %p80
    %p83 = scmp.ne.s32.totalorder %s68, %s82
    %p84 = scmp.eq.s32.totalorder %s16, 0
    %p85 = por %p83, %p84
    %s87 = sadd.s32 %s86, 1
    %p90 = scmp.eq.s32.totalorder %s10, 1
    %p91 = scmp.ne.s32.totalorder %s86, %s88
    %p92 = scmp.eq.s32.totalorder %s10, 0
    %p93 = por %p91, %p92
    %p94 = scmp.ne.s32.totalorder %s86, %s88
    %p95 = scmp.eq.s32.totalorder %s15, 1
    %p96 = por %p94, %p95
    %p97 = scmp.ne.s32.totalorder %s88, %s89
    %p98 = scmp.eq.s32.totalorder %s15, 0
    %p99 = por %p97, %p98
    %p100 = scmp.ne.s32.totalorder %s88, %s89
    %p101 = scmp.eq.s32.totalorder %s16, 1
    %p102 = por %p100, %p101
    %p104 = scmp.ne.s32.totalorder %s89, %s103
    %p105 = scmp.eq.s32.totalorder %s16, 0
    %p106 = por %p104, %p105
    %s107 = ssub.s32 %s10, %s17
    %p108 = scmp.eq.s32.totalorder %s107, 0
    %s110 = sadd.s32 %s109, 1
    %s111 = scalar_select %p108, %s109, %s110
    %p114 = pneg %p108
    %p115 = scmp.eq.s32.totalorder %s10, 1
    %p116 = por %p114, %p115
    %p117 = scmp.ne.s32.totalorder %s109, %s112
    %p118 = scmp.eq.s32.totalorder %s10, 0
    %p119 = por %p117, %p118
    %p120 = scmp.ne.s32.totalorder %s109, %s112
    %p121 = scmp.eq.s32.totalorder %s15, 1
    %p122 = por %p120, %p121
    %p123 = scmp.ne.s32.totalorder %s112, %s113
    %p124 = scmp.eq.s32.totalorder %s15, 0
    %p125 = por %p123, %p124
    %p126 = scmp.ne.s32.totalorder %s112, %s113
    %p127 = scmp.eq.s32.totalorder %s16, 1
    %p128 = por %p126, %p127
    %p130 = scmp.ne.s32.totalorder %s113, %s129
    %p131 = scmp.eq.s32.totalorder %s16, 0
    %p132 = por %p130, %p131
    %p133 = scmp.le.s32.totalorder 1, %s10
    %p134 = scmp.lt.s32.totalorder %s10, 3
    %p135 = pnand %p133, %p134
    %p136 = pneg %p135
    // Predicated region
    $region9: #{main_forward.126} parent=5 // pred_check
      _
    $region10: #{main_forward.126} parent=5 // pred_check_branch
      %138 = sbr.rel (%p135) target = $region12
    $region11: #{main_forward.126} parent=5 // pred_region
      %s139 = ssub.s32 %s10, 1
      // Predicated region
      $region13: #{main_forward.126} parent=11 // pred_check
        %p140 = pneg %p57
      $region14: #{main_forward.126} parent=11 // pred_check_branch
        %142 = sbr.rel (%p140) target = $region16
      $region15: #{main_forward.126} parent=11 // pred_region
        _
      $region16: #{main_forward.126} parent=11 // pred_fallthru
        _
      // Predicated region
      $region17: #{main_forward.126} parent=11 // pred_check
        %p143 = pneg %p78
      $region18: #{main_forward.126} parent=11 // pred_check_branch
        %145 = sbr.rel (%p143) target = $region20
      $region19: #{main_forward.126} parent=11 // pred_region
        _
      $region20: #{main_forward.126} parent=11 // pred_fallthru
        _
      // Predicated region
      $region21: #{main_forward.126} parent=11 // pred_check
        %p146 = pneg %p99
      $region22: #{main_forward.126} parent=11 // pred_check_branch
        %148 = sbr.rel (%p146) target = $region24
      $region23: #{main_forward.126} parent=11 // pred_region
        _
      $region24: #{main_forward.126} parent=11 // pred_fallthru
        _
    $region12: #{main_forward.126} parent=5 // pred_fallthru
      _
    %p149 = scmp.lt.s32.totalorder %s10, 2
    // Predicated region
    $region25: #{main_forward.126} parent=5 // pred_check
      %p150 = pneg %p149
    $region26: #{main_forward.126} parent=5 // pred_check_branch
      %152 = sbr.rel (%p150) target = $region28
    $region27: #{main_forward.126} parent=5 // pred_region
      // Predicated region
      $region29: #{main_forward.126} parent=27 // pred_check
        %p153 = pneg %p30
      $region30: #{main_forward.126} parent=27 // pred_check_branch
        %155 = sbr.rel (%p153) target = $region32
      $region31: #{main_forward.126} parent=27 // pred_region
        %p156 = scmp.lt.s32.totalorder %s10, 1
        %s157 = scalar_select %p156, %s10, 1
        %s158 = smul.addr %s157, 2
        %s159 = smul.addr %s158, 8
        %s160 = scalar_lea.vmem %s0, %s159
      $region32: #{main_forward.126} parent=27 // pred_fallthru
        _
    $region28: #{main_forward.126} parent=5 // pred_fallthru
      _
    %p161 = scmp.le.s32.totalorder 1, %s10
    %p162 = scmp.lt.s32.totalorder %s10, 3
    %p163 = pnand %p161, %p162
    %p164 = pneg %p163
    // Predicated region
    $region33: #{main_forward.126} parent=5 // pred_check
      _
    $region34: #{main_forward.126} parent=5 // pred_check_branch
      %166 = sbr.rel (%p163) target = $region36
    $region35: #{main_forward.126} parent=5 // pred_region
      %s167 = ssub.s32 %s10, 1
      %p168 = scmp.lt.s32.totalorder %s15, 1
      %s169 = scalar_select %p168, %s15, 1
      %s170 = smul.addr %s169, 2
      %s171 = smul.addr %s170, 8
      %s172 = scalar_lea.vmem %s0, %s171
      %p173 = pneg %p36
      %p174 = pneg %p33
      %p175 = pneg %p57
      %p176 = pneg %p54
      %p177 = pneg %p78
      %p178 = pneg %p75
      %p179 = pneg %p99
      %p180 = pneg %p96
      %p181 = pneg %p125
      %p182 = pneg %p122
      %p183 = scmp.lt.s32.totalorder %s15, 1
      %s184 = scalar_select %p183, %s15, 1
      %s185 = smul.addr %s184, 2
      %s186 = smul.addr %s185, 8
      %s187 = scalar_lea.vmem %s4, %s186
      %p188 = scmp.lt.s32.totalorder %s15, 1
      %s189 = scalar_select %p188, %s15, 1
      %s190 = smul.addr %s189, 2
      %s191 = smul.addr %s190, 8
      %s192 = scalar_lea.vmem %s0, %s191
      %p193 = scmp.lt.s32.totalorder %s15, 1
      %s194 = scalar_select %p193, %s15, 1
      %s195 = smul.addr %s194, 2
      %s196 = smul.addr %s195, 8
      %s197 = scalar_lea.vmem %s4, %s196
      %v198 = vld [vmem:[%s192] sm:$0xff]
      %v199 = vld [vmem:[%s192 + $0x8] sm:$0xff]
      %vm200 = vcmask 130048
      %v201 = vsel %vm200, %v198, 0.0
      %v202 = vsel %vm200, %v199, 0.0
      %v203 = vadd.f32 %v201, %v202
      %204 = vadd.xlane.f32.xlu0 %v203
      %v205 = vpop.xlane.xlu0 %204
      %v206 = vrot.slane %v205, 4
      %v207 = vadd.f32 %v205, %v206
      %v208 = vrot.slane %v207, 2
      %v209 = vadd.f32 %v207, %v208
      %v210 = vrot.slane %v209, 1
      %v211 = vadd.f32 %v209, %v210
      %s212 = vtos %v211
      %v213 = vrcp.pop 256.0
      %s214 = vtos %v213
      %s215 = smul.f32 %s212, %s214
      %v216 = vstv %s215
      %v217 = vsub.f32 %v198, %v216
      %v218 = vsub.f32 %v199, %v216
      %v219 = vmul.f32 %v217, %v217
      %v220 = vmul.f32 %v218, %v218
      %v221 = vsel %vm200, %v219, 0.0
      %v222 = vsel %vm200, %v220, 0.0
      %v223 = vadd.f32 %v221, %v222
      %224 = vadd.xlane.f32.xlu0 %v223
      %v225 = vpop.xlane.xlu0 %224
      %v226 = vrot.slane %v225, 4
      %v227 = vadd.f32 %v225, %v226
      %v228 = vrot.slane %v227, 2
      %v229 = vadd.f32 %v227, %v228
      %v230 = vrot.slane %v229, 1
      %v231 = vadd.f32 %v229, %v230
      %s232 = vtos %v231
      %v233 = vrcp.pop 256.0
      %s234 = vtos %v233
      %s235 = smul.f32 %s232, %s234
      %s236 = sadd.f32 %s235, 1e-05
      %v237 = vstv %s236
      %v238 = vrsqrt.pop %v237
      %s239 = vtos %v238
      %v240 = vstv %s239
      %v241 = vmul.f32 %v217, %v240
      %v242 = vmul.f32 %v218, %v240
      %v243 = vld [vmem:[%s1] sm:$0xff]
      %v244 = vld [vmem:[%s1 + $0x8] sm:$0xff]
      %246 = vset.pattern.permute.xlu0 0
      %247 = vperm.xlu0 %246, %v243
      %v248 = vpop.permute.xlu0 %247
      %251 = vset.pattern.permute.xlu0 0
      %252 = vperm.xlu0 %251, %v244
      %v253 = vpop.permute.xlu0 %252
      %v255 = vmul.f32 %v241, %v248
      %v256 = vmul.f32 %v242, %v253
      %v257 = vld [vmem:[%s2] sm:$0xff]
      %v258 = vld [vmem:[%s2 + $0x8] sm:$0xff]
      %260 = vset.pattern.permute.xlu0 0
      %261 = vperm.xlu0 %260, %v257
      %v262 = vpop.permute.xlu0 %261
      %265 = vset.pattern.permute.xlu0 0
      %266 = vperm.xlu0 %265, %v258
      %v267 = vpop.permute.xlu0 %266
      %v269 = vadd.f32 %v255, %v262
      %v270 = vadd.f32 %v256, %v267
      %vm271 = vcmp.ge.f32.partialorder %v269, 0.0
      %vm272 = vcmp.ge.f32.partialorder %v270, 0.0
      %v273 = vld [vmem:[%s3] sm:$0xff]
      %v274 = vld [vmem:[%s3 + $0x8] sm:$0xff]
      %276 = vset.pattern.permute.xlu0 0
      %277 = vperm.xlu0 %276, %v273
      %v278 = vpop.permute.xlu0 %277
      %281 = vset.pattern.permute.xlu0 0
      %282 = vperm.xlu0 %281, %v274
      %v283 = vpop.permute.xlu0 %282
      %v285 = vmul.f32 %v278, %v269
      %v286 = vmul.f32 %v283, %v270
      %v287 = vsel %vm271, %v269, %v285
      %v288 = vsel %vm272, %v270, %v286
      %289 = vst.msk [vmem:[%s197] sm:$0xff] %vm200, %v287
      %290 = vst.msk [vmem:[%s197 + $0x8] sm:$0xff] %vm200, %v288
      %p291 = scmp.lt.s32.totalorder %s15, 1
      %s292 = scalar_select %p291, %s15, 1
      %s293 = smul.addr %s292, 2
      %s294 = smul.addr %s293, 8
      %s295 = scalar_lea.vmem %s4, %s294
      // Predicated region
      $region37: #{main_forward.126} parent=35 // pred_check
        %p296 = pneg %p122
      $region38: #{main_forward.126} parent=35 // pred_check_branch
        %298 = sbr.rel (%p296) target = $region40
      $region39: #{main_forward.126} parent=35 // pred_region
        _
      $region40: #{main_forward.126} parent=35 // pred_fallthru
        _
    $region36: #{main_forward.126} parent=5 // pred_fallthru
      _
    %p299 = scmp.le.s32.totalorder 2, %s10
    // Predicated region
    $region41: #{main_forward.126} parent=5 // pred_check
      %p300 = pneg %p299
    $region42: #{main_forward.126} parent=5 // pred_check_branch
      %302 = sbr.rel (%p300) target = $region44
    $region43: #{main_forward.126} parent=5 // pred_region
      %s303 = ssub.s32 %s10, 2
      // Predicated region
      $region45: #{main_forward.126} parent=43 // pred_check
        %p304 = pneg %p128
      $region46: #{main_forward.126} parent=43 // pred_check_branch
        %306 = sbr.rel (%p304) target = $region48
      $region47: #{main_forward.126} parent=43 // pred_region
        %p307 = scmp.lt.s32.totalorder %s16, 1
        %s308 = scalar_select %p307, %s16, 1
        %s309 = smul.addr %s308, 2
        %s310 = smul.addr %s309, 8
        %s311 = scalar_lea.vmem %s4, %s310
      $region48: #{main_forward.126} parent=43 // pred_fallthru
        _
    $region44: #{main_forward.126} parent=5 // pred_fallthru
      _
  $region6: #{main_forward.126} parent=0 // loop_footer
    %s14 = sadd.s32 1, %s10
  $region7: #{main_forward.126} parent=0 // loop_footer_branch
    %9 = sbr.rel target = $region3
  $region8: #{main_forward.126} parent=0 // loop_exit
    _

// kernel: main_forward.133
$region0: #{main_forward.133}
  #allocation0 [shape = 'u32[]', space=smem, size = 0x4, offset = 0x4, fixed_abs, tag = 'smem constant byte address 0x4 - core index']
  #allocation1 [shape = 'u32[144,128]{1,0:T(1,128)}', space=vmem, size = 0x12000, scoped, tag = 'internal scratch']
  %s0 = inlined_call_operand.vmem [shape: f32[2,16,16], index: 0, kind: input, shape index: {}]
  %s1 = inlined_call_operand.vmem [shape: f32[2,16,16], index: 1, kind: input, shape index: {}]
  %s2 = inlined_call_operand.vmem [shape: f32[16,1], index: 2, kind: input, shape index: {}]
  %s3 = inlined_call_operand.vmem [shape: f32[16,1], index: 3, kind: input, shape index: {}]
  %s4 = inlined_call_operand.vmem [shape: f32[16,1], index: 4, kind: input, shape index: {}]
  %s5 = inlined_call_operand.vmem [shape: f32[2,16,16], index: 5, kind: output, shape index: {}]
  %s6 = sld [smem:[#allocation0]]
  $region53: #{main_forward.133} parent=0
    _
  %s8 = ssub.s32 1, %s6
  %s9 = scalar_select 0, %s8, %s6
  loop: start=0, step=1, limit=4
  $region2: #{main_forward.133} parent=0 // loop_pre_header
    _
  $region3: #{main_forward.133} parent=0 // loop_header
    %s11 = sphi 0, %s15
    %p12 = scmp.ge.s32.totalorder %s11, 4
    %s21 = sphi 0, %s23
    %s24 = sphi 0, %s21
    %s25 = sphi 0, %s24
    %s41 = sphi 0, %s25
    %s47 = sphi 0, %s49
    %s50 = sphi 0, %s47
    %s51 = sphi 0, %s50
    %s67 = sphi 0, %s51
    %s71 = sphi 0, %s71
    %s73 = sphi 0, %s71
    %s74 = sphi 0, %s73
    %s88 = sphi 0, %s74
    %s92 = sphi 0, %s92
    %s94 = sphi 0, %s92
    %s95 = sphi 0, %s94
    %s109 = sphi 0, %s95
    %s113 = sphi 0, %s113
    %s115 = sphi 0, %s113
    %s116 = sphi 0, %s115
    %s130 = sphi 0, %s116
    %s136 = sphi 0, %s138
    %s139 = sphi 0, %s136
    %s140 = sphi 0, %s139
    %s156 = sphi 0, %s140
  $region4: #{main_forward.133} parent=0 // loop_header_branch
    %14 = sbr.rel (%p12) target = $region8
  $region5: #{main_forward.133} parent=0 // loop_body
    %s16 = ssub.s32 %s11, 1
    %s17 = ssub.s32 %s11, 2
    %s18 = sadd.s32 %s11, 1
    %s19 = ssub.s32 %s11, %s18
    %p20 = scmp.eq.s32.totalorder %s19, 0
    %s22 = sadd.s32 %s21, 1
    %s23 = scalar_select %p20, %s21, %s22
    %p26 = pneg %p20
    %p27 = scmp.eq.s32.totalorder %s11, 1
    %p28 = por %p26, %p27
    %p29 = scmp.ne.s32.totalorder %s21, %s24
    %p30 = scmp.eq.s32.totalorder %s11, 0
    %p31 = por %p29, %p30
    %p32 = scmp.ne.s32.totalorder %s21, %s24
    %p33 = scmp.eq.s32.totalorder %s16, 1
    %p34 = por %p32, %p33
    %p35 = scmp.ne.s32.totalorder %s24, %s25
    %p36 = scmp.eq.s32.totalorder %s16, 0
    %p37 = por %p35, %p36
    %p38 = scmp.ne.s32.totalorder %s24, %s25
    %p39 = scmp.eq.s32.totalorder %s17, 1
    %p40 = por %p38, %p39
    %p42 = scmp.ne.s32.totalorder %s25, %s41
    %p43 = scmp.eq.s32.totalorder %s17, 0
    %p44 = por %p42, %p43
    %s45 = ssub.s32 %s11, %s18
    %p46 = scmp.eq.s32.totalorder %s45, 0
    %s48 = sadd.s32 %s47, 1
    %s49 = scalar_select %p46, %s47, %s48
    %p52 = pneg %p46
    %p53 = scmp.eq.s32.totalorder %s11, 1
    %p54 = por %p52, %p53
    %p55 = scmp.ne.s32.totalorder %s47, %s50
    %p56 = scmp.eq.s32.totalorder %s11, 0
    %p57 = por %p55, %p56
    %p58 = scmp.ne.s32.totalorder %s47, %s50
    %p59 = scmp.eq.s32.totalorder %s16, 1
    %p60 = por %p58, %p59
    %p61 = scmp.ne.s32.totalorder %s50, %s51
    %p62 = scmp.eq.s32.totalorder %s16, 0
    %p63 = por %p61, %p62
    %p64 = scmp.ne.s32.totalorder %s50, %s51
    %p65 = scmp.eq.s32.totalorder %s17, 1
    %p66 = por %p64, %p65
    %p68 = scmp.ne.s32.totalorder %s51, %s67
    %p69 = scmp.eq.s32.totalorder %s17, 0
    %p70 = por %p68, %p69
    %s72 = sadd.s32 %s71, 1
    %p75 = scmp.eq.s32.totalorder %s11, 1
    %p76 = scmp.ne.s32.totalorder %s71, %s73
    %p77 = scmp.eq.s32.totalorder %s11, 0
    %p78 = por %p76, %p77
    %p79 = scmp.ne.s32.totalorder %s71, %s73
    %p80 = scmp.eq.s32.totalorder %s16, 1
    %p81 = por %p79, %p80
    %p82 = scmp.ne.s32.totalorder %s73, %s74
    %p83 = scmp.eq.s32.totalorder %s16, 0
    %p84 = por %p82, %p83
    %p85 = scmp.ne.s32.totalorder %s73, %s74
    %p86 = scmp.eq.s32.totalorder %s17, 1
    %p87 = por %p85, %p86
    %p89 = scmp.ne.s32.totalorder %s74, %s88
    %p90 = scmp.eq.s32.totalorder %s17, 0
    %p91 = por %p89, %p90
    %s93 = sadd.s32 %s92, 1
    %p96 = scmp.eq.s32.totalorder %s11, 1
    %p97 = scmp.ne.s32.totalorder %s92, %s94
    %p98 = scmp.eq.s32.totalorder %s11, 0
    %p99 = por %p97, %p98
    %p100 = scmp.ne.s32.totalorder %s92, %s94
    %p101 = scmp.eq.s32.totalorder %s16, 1
    %p102 = por %p100, %p101
    %p103 = scmp.ne.s32.totalorder %s94, %s95
    %p104 = scmp.eq.s32.totalorder %s16, 0
    %p105 = por %p103, %p104
    %p106 = scmp.ne.s32.totalorder %s94, %s95
    %p107 = scmp.eq.s32.totalorder %s17, 1
    %p108 = por %p106, %p107
    %p110 = scmp.ne.s32.totalorder %s95, %s109
    %p111 = scmp.eq.s32.totalorder %s17, 0
    %p112 = por %p110, %p111
    %s114 = sadd.s32 %s113, 1
    %p117 = scmp.eq.s32.totalorder %s11, 1
    %p118 = scmp.ne.s32.totalorder %s113, %s115
    %p119 = scmp.eq.s32.totalorder %s11, 0
    %p120 = por %p118, %p119
    %p121 = scmp.ne.s32.totalorder %s113, %s115
    %p122 = scmp.eq.s32.totalorder %s16, 1
    %p123 = por %p121, %p122
    %p124 = scmp.ne.s32.totalorder %s115, %s116
    %p125 = scmp.eq.s32.totalorder %s16, 0
    %p126 = por %p124, %p125
    %p127 = scmp.ne.s32.totalorder %s115, %s116
    %p128 = scmp.eq.s32.totalorder %s17, 1
    %p129 = por %p127, %p128
    %p131 = scmp.ne.s32.totalorder %s116, %s130
    %p132 = scmp.eq.s32.totalorder %s17, 0
    %p133 = por %p131, %p132
    %s134 = ssub.s32 %s11, %s18
    %p135 = scmp.eq.s32.totalorder %s134, 0
    %s137 = sadd.s32 %s136, 1
    %s138 = scalar_select %p135, %s136, %s137
    %p141 = pneg %p135
    %p142 = scmp.eq.s32.totalorder %s11, 1
    %p143 = por %p141, %p142
    %p144 = scmp.ne.s32.totalorder %s136, %s139
    %p145 = scmp.eq.s32.totalorder %s11, 0
    %p146 = por %p144, %p145
    %p147 = scmp.ne.s32.totalorder %s136, %s139
    %p148 = scmp.eq.s32.totalorder %s16, 1
    %p149 = por %p147, %p148
    %p150 = scmp.ne.s32.totalorder %s139, %s140
    %p151 = scmp.eq.s32.totalorder %s16, 0
    %p152 = por %p150, %p151
    %p153 = scmp.ne.s32.totalorder %s139, %s140
    %p154 = scmp.eq.s32.totalorder %s17, 1
    %p155 = por %p153, %p154
    %p157 = scmp.ne.s32.totalorder %s140, %s156
    %p158 = scmp.eq.s32.totalorder %s17, 0
    %p159 = por %p157, %p158
    %p160 = scmp.le.s32.totalorder 1, %s11
    %p161 = scmp.lt.s32.totalorder %s11, 3
    %p162 = pnand %p160, %p161
    %p163 = pneg %p162
    // Predicated region
    $region9: #{main_forward.133} parent=5 // pred_check
      _
    $region10: #{main_forward.133} parent=5 // pred_check_branch
      %165 = sbr.rel (%p162) target = $region12
    $region11: #{main_forward.133} parent=5 // pred_region
      %s166 = ssub.s32 %s11, 1
      // Predicated region
      $region13: #{main_forward.133} parent=11 // pred_check
        %p167 = pneg %p84
      $region14: #{main_forward.133} parent=11 // pred_check_branch
        %169 = sbr.rel (%p167) target = $region16
      $region15: #{main_forward.133} parent=11 // pred_region
        _
      $region16: #{main_forward.133} parent=11 // pred_fallthru
        _
      // Predicated region
      $region17: #{main_forward.133} parent=11 // pred_check
        %p170 = pneg %p105
      $region18: #{main_forward.133} parent=11 // pred_check_branch
        %172 = sbr.rel (%p170) target = $region20
      $region19: #{main_forward.133} parent=11 // pred_region
        _
      $region20: #{main_forward.133} parent=11 // pred_fallthru
        _
      // Predicated region
      $region21: #{main_forward.133} parent=11 // pred_check
        %p173 = pneg %p126
      $region22: #{main_forward.133} parent=11 // pred_check_branch
        %175 = sbr.rel (%p173) target = $region24
      $region23: #{main_forward.133} parent=11 // pred_region
        _
      $region24: #{main_forward.133} parent=11 // pred_fallthru
        _
    $region12: #{main_forward.133} parent=5 // pred_fallthru
      _
    %p176 = scmp.lt.s32.totalorder %s11, 2
    // Predicated region
    $region25: #{main_forward.133} parent=5 // pred_check
      %p177 = pneg %p176
    $region26: #{main_forward.133} parent=5 // pred_check_branch
      %179 = sbr.rel (%p177) target = $region28
    $region27: #{main_forward.133} parent=5 // pred_region
      // Predicated region
      $region29: #{main_forward.133} parent=27 // pred_check
        %p180 = pneg %p31
      $region30: #{main_forward.133} parent=27 // pred_check_branch
        %182 = sbr.rel (%p180) target = $region32
      $region31: #{main_forward.133} parent=27 // pred_region
        %p183 = scmp.lt.s32.totalorder %s11, 1
        %s184 = scalar_select %p183, %s11, 1
        %s185 = smul.addr %s184, 2
        %s186 = smul.addr %s185, 8
        %s187 = scalar_lea.vmem %s0, %s186
      $region32: #{main_forward.133} parent=27 // pred_fallthru
        _
      // Predicated region
      $region33: #{main_forward.133} parent=27 // pred_check
        %p188 = pneg %p57
      $region34: #{main_forward.133} parent=27 // pred_check_branch
        %190 = sbr.rel (%p188) target = $region36
      $region35: #{main_forward.133} parent=27 // pred_region
        %p191 = scmp.lt.s32.totalorder %s11, 1
        %s192 = scalar_select %p191, %s11, 1
        %s193 = smul.addr %s192, 2
        %s194 = smul.addr %s193, 8
        %s195 = scalar_lea.vmem %s1, %s194
      $region36: #{main_forward.133} parent=27 // pred_fallthru
        _
    $region28: #{main_forward.133} parent=5 // pred_fallthru
      _
    %p196 = scmp.le.s32.totalorder 1, %s11
    %p197 = scmp.lt.s32.totalorder %s11, 3
    %p198 = pnand %p196, %p197
    %p199 = pneg %p198
    // Predicated region
    $region37: #{main_forward.133} parent=5 // pred_check
      _
    $region38: #{main_forward.133} parent=5 // pred_check_branch
      %201 = sbr.rel (%p198) target = $region40
    $region39: #{main_forward.133} parent=5 // pred_region
      %s202 = ssub.s32 %s11, 1
      %p203 = scmp.lt.s32.totalorder %s16, 1
      %s204 = scalar_select %p203, %s16, 1
      %s205 = smul.addr %s204, 2
      %s206 = smul.addr %s205, 8
      %s207 = scalar_lea.vmem %s0, %s206
      %p208 = pneg %p37
      %p209 = pneg %p34
      %p210 = scmp.lt.s32.totalorder %s16, 1
      %s211 = scalar_select %p210, %s16, 1
      %s212 = smul.addr %s211, 2
      %s213 = smul.addr %s212, 8
      %s214 = scalar_lea.vmem %s1, %s213
      %p215 = pneg %p63
      %p216 = pneg %p60
      %p217 = pneg %p84
      %p218 = pneg %p81
      %p219 = pneg %p105
      %p220 = pneg %p102
      %p221 = pneg %p126
      %p222 = pneg %p123
      %p223 = pneg %p152
      %p224 = pneg %p149
      %p225 = scmp.lt.s32.totalorder %s16, 1
      %s226 = scalar_select %p225, %s16, 1
      %s227 = smul.addr %s226, 2
      %s228 = smul.addr %s227, 8
      %s229 = scalar_lea.vmem %s5, %s228
      %p230 = scmp.lt.s32.totalorder %s16, 1
      %s231 = scalar_select %p230, %s16, 1
      %s232 = smul.addr %s231, 2
      %s233 = smul.addr %s232, 8
      %s234 = scalar_lea.vmem %s0, %s233
      %p235 = scmp.lt.s32.totalorder %s16, 1
      %s236 = scalar_select %p235, %s16, 1
      %s237 = smul.addr %s236, 2
      %s238 = smul.addr %s237, 8
      %s239 = scalar_lea.vmem %s1, %s238
      %p240 = scmp.lt.s32.totalorder %s16, 1
      %s241 = scalar_select %p240, %s16, 1
      %s242 = smul.addr %s241, 2
      %s243 = smul.addr %s242, 8
      %s244 = scalar_lea.vmem %s5, %s243
      %v245 = vld [vmem:[%s234] sm:$0xff]
      %v246 = vld [vmem:[%s234 + $0x8] sm:$0xff]
      %vm247 = vcmask 130048
      %v248 = vsel %vm247, %v245, 0.0
      %v249 = vsel %vm247, %v246, 0.0
      %v250 = vadd.f32 %v248, %v249
      %251 = vadd.xlane.f32.xlu0 %v250
      %v252 = vpop.xlane.xlu0 %251
      %v253 = vrot.slane %v252, 4
      %v254 = vadd.f32 %v252, %v253
      %v255 = vrot.slane %v254, 2
      %v256 = vadd.f32 %v254, %v255
      %v257 = vrot.slane %v256, 1
      %v258 = vadd.f32 %v256, %v257
      %s259 = vtos %v258
      %v260 = vrcp.pop 256.0
      %s261 = vtos %v260
      %s262 = smul.f32 %s259, %s261
      %v263 = vstv %s262
      %v264 = vsub.f32 %v245, %v263
      %v265 = vsub.f32 %v246, %v263
      %v266 = vmul.f32 %v264, %v264
      %v267 = vmul.f32 %v265, %v265
      %v268 = vsel %vm247, %v266, 0.0
      %v269 = vsel %vm247, %v267, 0.0
      %v270 = vadd.f32 %v268, %v269
      %271 = vadd.xlane.f32.xlu0 %v270
      %v272 = vpop.xlane.xlu0 %271
      %v273 = vrot.slane %v272, 4
      %v274 = vadd.f32 %v272, %v273
      %v275 = vrot.slane %v274, 2
      %v276 = vadd.f32 %v274, %v275
      %v277 = vrot.slane %v276, 1
      %v278 = vadd.f32 %v276, %v277
      %s279 = vtos %v278
      %v280 = vrcp.pop 256.0
      %s281 = vtos %v280
      %s282 = smul.f32 %s279, %s281
      %s283 = sadd.f32 %s282, 1e-05
      %v284 = vstv %s283
      %v285 = vrsqrt.pop %v284
      %s286 = vtos %v285
      %v287 = vstv %s286
      %v288 = vmul.f32 %v264, %v287
      %v289 = vmul.f32 %v265, %v287
      %v290 = vld [vmem:[%s2] sm:$0xff]
      %v291 = vld [vmem:[%s2 + $0x8] sm:$0xff]
      %293 = vset.pattern.permute.xlu0 0
      %294 = vperm.xlu0 %293, %v290
      %v295 = vpop.permute.xlu0 %294
      %298 = vset.pattern.permute.xlu0 0
      %299 = vperm.xlu0 %298, %v291
      %v300 = vpop.permute.xlu0 %299
      %v302 = vmul.f32 %v288, %v295
      %v303 = vmul.f32 %v289, %v300
      %v304 = vld [vmem:[%s3] sm:$0xff]
      %v305 = vld [vmem:[%s3 + $0x8] sm:$0xff]
      %307 = vset.pattern.permute.xlu0 0
      %308 = vperm.xlu0 %307, %v304
      %v309 = vpop.permute.xlu0 %308
      %312 = vset.pattern.permute.xlu0 0
      %313 = vperm.xlu0 %312, %v305
      %v314 = vpop.permute.xlu0 %313
      %v316 = vadd.f32 %v302, %v309
      %v317 = vadd.f32 %v303, %v314
      %v318 = vld [vmem:[%s239] sm:$0xff]
      %v319 = vld [vmem:[%s239 + $0x8] sm:$0xff]
      %v320 = vadd.f32 %v316, %v318
      %v321 = vadd.f32 %v317, %v319
      %vm322 = vcmp.ge.f32.partialorder %v320, 0.0
      %vm323 = vcmp.ge.f32.partialorder %v321, 0.0
      %v324 = vld [vmem:[%s4] sm:$0xff]
      %v325 = vld [vmem:[%s4 + $0x8] sm:$0xff]
      %327 = vset.pattern.permute.xlu0 0
      %328 = vperm.xlu0 %327, %v324
      %v329 = vpop.permute.xlu0 %328
      %332 = vset.pattern.permute.xlu0 0
      %333 = vperm.xlu0 %332, %v325
      %v334 = vpop.permute.xlu0 %333
      %v336 = vmul.f32 %v329, %v320
      %v337 = vmul.f32 %v334, %v321
      %v338 = vsel %vm322, %v320, %v336
      %v339 = vsel %vm323, %v321, %v337
      %340 = vst.msk [vmem:[%s244] sm:$0xff] %vm247, %v338
      %341 = vst.msk [vmem:[%s244 + $0x8] sm:$0xff] %vm247, %v339
      %p342 = scmp.lt.s32.totalorder %s16, 1
      %s343 = scalar_select %p342, %s16, 1
      %s344 = smul.addr %s343, 2
      %s345 = smul.addr %s344, 8
      %s346 = scalar_lea.vmem %s5, %s345
      // Predicated region
      $region41: #{main_forward.133} parent=39 // pred_check
        %p347 = pneg %p149
      $region42: #{main_forward.133} parent=39 // pred_check_branch
        %349 = sbr.rel (%p347) target = $region44
      $region43: #{main_forward.133} parent=39 // pred_region
        _
      $region44: #{main_forward.133} parent=39 // pred_fallthru
        _
    $region40: #{main_forward.133} parent=5 // pred_fallthru
      _
    %p350 = scmp.le.s32.totalorder 2, %s11
    // Predicated region
    $region45: #{main_forward.133} parent=5 // pred_check
      %p351 = pneg %p350
    $region46: #{main_forward.133} parent=5 // pred_check_branch
      %353 = sbr.rel (%p351) target = $region48
    $region47: #{main_forward.133} parent=5 // pred_region
      %s354 = ssub.s32 %s11, 2
      // Predicated region
      $region49: #{main_forward.133} parent=47 // pred_check
        %p355 = pneg %p155
      $region50: #{main_forward.133} parent=47 // pred_check_branch
        %357 = sbr.rel (%p355) target = $region52
      $region51: #{main_forward.133} parent=47 // pred_region
        %p358 = scmp.lt.s32.totalorder %s17, 1
        %s359 = scalar_select %p358, %s17, 1
        %s360 = smul.addr %s359, 2
        %s361 = smul.addr %s360, 8
        %s362 = scalar_lea.vmem %s5, %s361
      $region52: #{main_forward.133} parent=47 // pred_fallthru
        _
    $region48: #{main_forward.133} parent=5 // pred_fallthru
      _
  $region6: #{main_forward.133} parent=0 // loop_footer
    %s15 = sadd.s32 1, %s11
  $region7: #{main_forward.133} parent=0 // loop_footer_branch
    %10 = sbr.rel target = $region3
  $region8: #{main_forward.133} parent=0 // loop_exit
    _

// kernel: main_forward.134
$region0: #{main_forward.134}
  #allocation0 [shape = 'u32[]', space=smem, size = 0x4, offset = 0x4, fixed_abs, tag = 'smem constant byte address 0x4 - core index']
  #allocation1 [shape = 'u32[144,128]{1,0:T(1,128)}', space=vmem, size = 0x12000, scoped, tag = 'internal scratch']
  %s0 = inlined_call_operand.vmem [shape: bf16[32,16], index: 0, kind: input, shape index: {}]
  %s1 = inlined_call_operand.vmem [shape: bf16[16,8], index: 1, kind: input, shape index: {}]
  %s2 = inlined_call_operand.vmem [shape: f32[32,8], index: 2, kind: output, shape index: {}]
  %s3 = sld [smem:[#allocation0]]
  $region18: #{main_forward.134} parent=0
    _
  %s5 = ssub.s32 1, %s3
  %s6 = scalar_select 0, %s5, %s3
  // Predicated region
  $region2: #{main_forward.134} parent=0 // pred_check
    _
  $region3: #{main_forward.134} parent=0 // pred_check_branch
    %8 = sbr.rel (0) target = $region5
  $region4: #{main_forward.134} parent=0 // pred_region
    _
  $region5: #{main_forward.134} parent=0 // pred_fallthru
    _
  // Predicated region
  $region6: #{main_forward.134} parent=0 // pred_check
    _
  $region7: #{main_forward.134} parent=0 // pred_check_branch
    %10 = sbr.rel (0) target = $region9
  $region8: #{main_forward.134} parent=0 // pred_region
    _
  $region9: #{main_forward.134} parent=0 // pred_fallthru
    _
  %v12 = vld [vmem:[%s0] sm:$0xf]
  %v13 = vld [vmem:[%s0 + $0x4] sm:$0xf]
  %v14 = vld [vmem:[%s0 + $0x8] sm:$0xf]
  %v15 = vld [vmem:[%s0 + $0xc] sm:$0xf]
  %v16 = vld [vmem:[%s1] sm:$0xf]
  %v17 = vld [vmem:[%s1 + $0x4] sm:$0xf]
  %v22 = vunpack.c.l.b16 %v12
  %v23 = vunpack.c.l.b16 %v13
  %v24 = vunpack.c.l.b16 %v14
  %v25 = vunpack.c.l.b16 %v15
  %v26 = vpack.c.b16 %v23, %v22
  %v27 = vpack.c.b16 %v25, %v24
  %v30 = vunpack.c.l.b16 %v16
  %v31 = vunpack.c.l.b16 %v17
  %v32 = vpack.c.b16 %v31, %v30
  %vm34 = vcmask 130048
  %v36 = vsel %vm34, %v26, 0
  %v39 = vsel %vm34, %v27, 0
  %41 = vmatprep.subr.bf16.mxu0 0
  %42 = vmatpush1.bf16.msra.mxu0 0
  %43 = vmatprep.subr.bf16.mxu0 0
  %44 = vmatpush1.bf16.msra.mxu0 0
  %45 = vmatprep.subr.bf16.mxu0 0
  %46 = vmatpush1.bf16.msra.mxu0 0
  %47 = vmatprep.subr.bf16.mxu0 0
  %48 = vmatpush1.bf16.msra.mxu0 0
  %49 = vmatprep.subr.bf16.mxu0 0
  %50 = vmatpush1.bf16.msra.mxu0 0
  %51 = vmatprep.subr.bf16.mxu0 0
  %52 = vmatpush1.bf16.msra.mxu0 0
  %53 = vmatprep.subr.bf16.mxu0 0
  %54 = vmatpush1.bf16.msra.mxu0 0
  %55 = vmatprep.subr.bf16.mxu0 0
  %56 = vmatpush1.bf16.msra.mxu0 %v32
  %57 = vmatprep.subr.bf16.mxu0 0
  %58 = vmatpush2.bf16.msra.mxu0 0
  %59 = vmatprep.subr.bf16.mxu0 0
  %60 = vmatpush2.bf16.msra.mxu0 0
  %61 = vmatprep.subr.bf16.mxu0 0
  %62 = vmatpush2.bf16.msra.mxu0 0
  %63 = vmatprep.subr.bf16.mxu0 0
  %64 = vmatpush2.bf16.msra.mxu0 0
  %65 = vmatprep.subr.bf16.mxu0 0
  %66 = vmatpush2.bf16.msra.mxu0 0
  %67 = vmatprep.subr.bf16.mxu0 0
  %68 = vmatpush2.bf16.msra.mxu0 0
  %69 = vmatprep.subr.bf16.mxu0 0
  %70 = vmatpush2.bf16.msra.mxu0 0
  %71 = vmatprep.subr.bf16.mxu0 0
  %72 = vmatpush2.bf16.msra.mxu0 0
  %73 = vmatprep.mubr.bf16.mxu0 0
  %74 = vmatmul.mubr.bf16.gmra.mxu0 %v36
  %v75 = vpop.f32.mrf.mxu0
  %v76 = vadd.f32 0.0, %v75
  %v77 = vpop.f32.mrf.mxu0
  %v78 = vpop.f32.mrf.mxu0
  %v79 = vadd.f32 0.0, %v78
  %v80 = vpop.f32.mrf.mxu0
  %81 = vmatprep.mubr.bf16.mxu0 0
  %82 = vmatmul.mubr.bf16.gmra.mxu0 %v39
  %v83 = vpop.f32.mrf.mxu0
  %v84 = vadd.f32 0.0, %v83
  %v85 = vpop.f32.mrf.mxu0
  %v86 = vpop.f32.mrf.mxu0
  %v87 = vadd.f32 0.0, %v86
  %v88 = vpop.f32.mrf.mxu0
  %89 = vdwg.mxu0
  %vm90 = vcmask 64512
  %91 = vst.msk [vmem:[%s2] sm:$0xff] %vm90, %v76
  %92 = vst.msk [vmem:[%s2 + $0x8] sm:$0xff] %vm90, %v79
  %93 = vst.msk [vmem:[%s2 + $0x10] sm:$0xff] %vm90, %v84
  %94 = vst.msk [vmem:[%s2 + $0x18] sm:$0xff] %vm90, %v87
  // Predicated region
  $region10: #{main_forward.134} parent=0 // pred_check
    _
  $region11: #{main_forward.134} parent=0 // pred_check_branch
    %96 = sbr.rel (0) target = $region13
  $region12: #{main_forward.134} parent=0 // pred_region
    _
  $region13: #{main_forward.134} parent=0 // pred_fallthru
    _
  // Predicated region
  $region14: #{main_forward.134} parent=0 // pred_check
    _
  $region15: #{main_forward.134} parent=0 // pred_check_branch
    %98 = sbr.rel (0) target = $region17
  $region16: #{main_forward.134} parent=0 // pred_region
    _
  $region17: #{main_forward.134} parent=0 // pred_fallthru
    _

// kernel: main_forward.135
$region0: #{main_forward.135}
  #allocation0 [shape = 'u32[]', space=smem, size = 0x4, offset = 0x4, fixed_abs, tag = 'smem constant byte address 0x4 - core index']
  #allocation1 [shape = 'u32[144,128]{1,0:T(1,128)}', space=vmem, size = 0x12000, scoped, tag = 'internal scratch']
  %s0 = inlined_call_operand.vmem [shape: bf16[32,288], index: 0, kind: input, shape index: {}]
  %s1 = inlined_call_operand.vmem [shape: bf16[288,8], index: 1, kind: input, shape index: {}]
  %s2 = inlined_call_operand.vmem [shape: f32[32,8], index: 2, kind: output, shape index: {}]
  %s3 = sld [smem:[#allocation0]]
  $region18: #{main_forward.135} parent=0
    _
  %s5 = ssub.s32 1, %s3
  %s6 = scalar_select 0, %s5, %s3
  // Predicated region
  $region2: #{main_forward.135} parent=0 // pred_check
    _
  $region3: #{main_forward.135} parent=0 // pred_check_branch
    %8 = sbr.rel (0) target = $region5
  $region4: #{main_forward.135} parent=0 // pred_region
    _
  $region5: #{main_forward.135} parent=0 // pred_fallthru
    _
  // Predicated region
  $region6: #{main_forward.135} parent=0 // pred_check
    _
  $region7: #{main_forward.135} parent=0 // pred_check_branch
    %10 = sbr.rel (0) target = $region9
  $region8: #{main_forward.135} parent=0 // pred_region
    _
  $region9: #{main_forward.135} parent=0 // pred_fallthru
    _
  %v12 = vld [vmem:[%s0] sm:$0xff]
  %v13 = vld [vmem:[%s0 + $0x8] sm:$0xf]
  %v14 = vld [vmem:[%s0 + $0xc] sm:$0xff]
  %v15 = vld [vmem:[%s0 + $0x14] sm:$0xf]
  %v16 = vld [vmem:[%s0 + $0x18] sm:$0xff]
  %v17 = vld [vmem:[%s0 + $0x20] sm:$0xf]
  %v18 = vld [vmem:[%s0 + $0x24] sm:$0xff]
  %v19 = vld [vmem:[%s0 + $0x2c] sm:$0xf]
  %v20 = vld [vmem:[%s1] sm:$0xf]
  %v21 = vld [vmem:[%s1 + $0x4] sm:$0xf]
  %v22 = vld [vmem:[%s1 + $0x8] sm:$0xf]
  %v23 = vld [vmem:[%s1 + $0xc] sm:$0xf]
  %v24 = vld [vmem:[%s1 + $0x10] sm:$0xf]
  %v25 = vld [vmem:[%s1 + $0x14] sm:$0xf]
  %v26 = vld [vmem:[%s1 + $0x18] sm:$0xf]
  %v27 = vld [vmem:[%s1 + $0x1c] sm:$0xf]
  %v28 = vld [vmem:[%s1 + $0x20] sm:$0xf]
  %v29 = vld [vmem:[%s1 + $0x24] sm:$0xf]
  %v30 = vld [vmem:[%s1 + $0x28] sm:$0xf]
  %v31 = vld [vmem:[%s1 + $0x2c] sm:$0xf]
  %v32 = vld [vmem:[%s1 + $0x30] sm:$0xf]
  %v33 = vld [vmem:[%s1 + $0x34] sm:$0xf]
  %v34 = vld [vmem:[%s1 + $0x38] sm:$0xf]
  %v35 = vld [vmem:[%s1 + $0x3c] sm:$0xf]
  %v36 = vld [vmem:[%s1 + $0x40] sm:$0xf]
  %v37 = vld [vmem:[%s1 + $0x44] sm:$0xf]
  %v38 = vld [vmem:[%s1 + $0x48] sm:$0xf]
  %v39 = vld [vmem:[%s1 + $0x4c] sm:$0xf]
  %v40 = vld [vmem:[%s1 + $0x50] sm:$0xf]
  %v41 = vld [vmem:[%s1 + $0x54] sm:$0xf]
  %v42 = vld [vmem:[%s1 + $0x58] sm:$0xf]
  %v43 = vld [vmem:[%s1 + $0x5c] sm:$0xf]
  %v44 = vld [vmem:[%s1 + $0x60] sm:$0xf]
  %v45 = vld [vmem:[%s1 + $0x64] sm:$0xf]
  %v46 = vld [vmem:[%s1 + $0x68] sm:$0xf]
  %v47 = vld [vmem:[%s1 + $0x6c] sm:$0xf]
  %v48 = vld [vmem:[%s1 + $0x70] sm:$0xf]
  %v49 = vld [vmem:[%s1 + $0x74] sm:$0xf]
  %v50 = vld [vmem:[%s1 + $0x78] sm:$0xf]
  %v51 = vld [vmem:[%s1 + $0x7c] sm:$0xf]
  %v52 = vld [vmem:[%s1 + $0x80] sm:$0xf]
  %v53 = vld [vmem:[%s1 + $0x84] sm:$0xf]
  %v54 = vld [vmem:[%s1 + $0x88] sm:$0xf]
  %v55 = vld [vmem:[%s1 + $0x8c] sm:$0xf]
  %v64 = vunpack.c.l.b16 %v12
  %v65 = vunpack.c.h.b16 %v12
  %v66 = vunpack.c.l.b16 %v13
  %v67 = vunpack.c.l.b16 %v14
  %v68 = vunpack.c.h.b16 %v14
  %v69 = vunpack.c.l.b16 %v15
  %v70 = vunpack.c.l.b16 %v16
  %v71 = vunpack.c.h.b16 %v16
  %v72 = vunpack.c.l.b16 %v17
  %v73 = vunpack.c.l.b16 %v18
  %v74 = vunpack.c.h.b16 %v18
  %v75 = vunpack.c.l.b16 %v19
  %v76 = vpack.c.b16 %v67, %v64
  %v77 = vpack.c.b16 %v68, %v65
  %v78 = vpack.c.b16 %v69, %v66
  %v79 = vpack.c.b16 %v73, %v70
  %v80 = vpack.c.b16 %v74, %v71
  %v81 = vpack.c.b16 %v75, %v72
  %v122 = vunpack.c.l.b16 %v20
  %v123 = vunpack.c.l.b16 %v21
  %v124 = vunpack.c.l.b16 %v22
  %v125 = vunpack.c.l.b16 %v23
  %v126 = vunpack.c.l.b16 %v24
  %v127 = vunpack.c.l.b16 %v25
  %v128 = vunpack.c.l.b16 %v26
  %v129 = vunpack.c.l.b16 %v27
  %v130 = vunpack.c.l.b16 %v28
  %v131 = vunpack.c.l.b16 %v29
  %v132 = vunpack.c.l.b16 %v30
  %v133 = vunpack.c.l.b16 %v31
  %v134 = vunpack.c.l.b16 %v32
  %v135 = vunpack.c.l.b16 %v33
  %v136 = vunpack.c.l.b16 %v34
  %v137 = vunpack.c.l.b16 %v35
  %v138 = vunpack.c.l.b16 %v36
  %v139 = vunpack.c.l.b16 %v37
  %v140 = vunpack.c.l.b16 %v38
  %v141 = vunpack.c.l.b16 %v39
  %v142 = vunpack.c.l.b16 %v40
  %v143 = vunpack.c.l.b16 %v41
  %v144 = vunpack.c.l.b16 %v42
  %v145 = vunpack.c.l.b16 %v43
  %v146 = vunpack.c.l.b16 %v44
  %v147 = vunpack.c.l.b16 %v45
  %v148 = vunpack.c.l.b16 %v46
  %v149 = vunpack.c.l.b16 %v47
  %v150 = vunpack.c.l.b16 %v48
  %v151 = vunpack.c.l.b16 %v49
  %v152 = vunpack.c.l.b16 %v50
  %v153 = vunpack.c.l.b16 %v51
  %v154 = vunpack.c.l.b16 %v52
  %v155 = vunpack.c.l.b16 %v53
  %v156 = vunpack.c.l.b16 %v54
  %v157 = vunpack.c.l.b16 %v55
  %v158 = vpack.c.b16 %v123, %v122
  %v159 = vpack.c.b16 %v125, %v124
  %v160 = vpack.c.b16 %v127, %v126
  %v161 = vpack.c.b16 %v129, %v128
  %v162 = vpack.c.b16 %v131, %v130
  %v163 = vpack.c.b16 %v133, %v132
  %v164 = vpack.c.b16 %v135, %v134
  %v165 = vpack.c.b16 %v137, %v136
  %v166 = vpack.c.b16 %v139, %v138
  %v167 = vpack.c.b16 %v141, %v140
  %v168 = vpack.c.b16 %v143, %v142
  %v169 = vpack.c.b16 %v145, %v144
  %v170 = vpack.c.b16 %v147, %v146
  %v171 = vpack.c.b16 %v149, %v148
  %v172 = vpack.c.b16 %v151, %v150
  %v173 = vpack.c.b16 %v153, %v152
  %v174 = vpack.c.b16 %v155, %v154
  %v175 = vpack.c.b16 %v157, %v156
  %vm194 = vcmask 261120
  %v196 = vsel %vm194, %v78, 0
  %v199 = vsel %vm194, %v81, 0
  %201 = vmatprep.subr.bf16.mxu0 0
  %202 = vmatpush1.bf16.msra.mxu0 %v165
  %203 = vmatprep.subr.bf16.mxu0 0
  %204 = vmatpush1.bf16.msra.mxu0 %v164
  %205 = vmatprep.subr.bf16.mxu0 0
  %206 = vmatpush1.bf16.msra.mxu0 %v163
  %207 = vmatprep.subr.bf16.mxu0 0
  %208 = vmatpush1.bf16.msra.mxu0 %v162
  %209 = vmatprep.subr.bf16.mxu0 0
  %210 = vmatpush1.bf16.msra.mxu0 %v161
  %211 = vmatprep.subr.bf16.mxu0 0
  %212 = vmatpush1.bf16.msra.mxu0 %v160
  %213 = vmatprep.subr.bf16.mxu0 0
  %214 = vmatpush1.bf16.msra.mxu0 %v159
  %215 = vmatprep.subr.bf16.mxu0 0
  %216 = vmatpush1.bf16.msra.mxu0 %v158
  %217 = vmatprep.subr.bf16.mxu0 0
  %218 = vmatpush2.bf16.msra.mxu0 %v173
  %219 = vmatprep.subr.bf16.mxu0 0
  %220 = vmatpush2.bf16.msra.mxu0 %v172
  %221 = vmatprep.subr.bf16.mxu0 0
  %222 = vmatpush2.bf16.msra.mxu0 %v171
  %223 = vmatprep.subr.bf16.mxu0 0
  %224 = vmatpush2.bf16.msra.mxu0 %v170
  %225 = vmatprep.subr.bf16.mxu0 0
  %226 = vmatpush2.bf16.msra.mxu0 %v169
  %227 = vmatprep.subr.bf16.mxu0 0
  %228 = vmatpush2.bf16.msra.mxu0 %v168
  %229 = vmatprep.subr.bf16.mxu0 0
  %230 = vmatpush2.bf16.msra.mxu0 %v167
  %231 = vmatprep.subr.bf16.mxu0 0
  %232 = vmatpush2.bf16.msra.mxu0 %v166
  %233 = vmatprep.mubr.bf16.mxu0 %v77
  %234 = vmatmul.mubr.bf16.gmra.mxu0 %v76
  %v235 = vpop.f32.mrf.mxu0
  %v236 = vadd.f32 0.0, %v235
  %v237 = vpop.f32.mrf.mxu0
  %v238 = vpop.f32.mrf.mxu0
  %v239 = vadd.f32 0.0, %v238
  %v240 = vpop.f32.mrf.mxu0
  %241 = vmatprep.mubr.bf16.mxu0 %v80
  %242 = vmatmul.mubr.bf16.gmra.mxu0 %v79
  %v243 = vpop.f32.mrf.mxu0
  %v244 = vadd.f32 0.0, %v243
  %v245 = vpop.f32.mrf.mxu0
  %v246 = vpop.f32.mrf.mxu0
  %v247 = vadd.f32 0.0, %v246
  %v248 = vpop.f32.mrf.mxu0
  %249 = vdwg.mxu0
  %250 = vmatprep.subr.bf16.mxu0 0
  %251 = vmatpush1.bf16.msra.mxu0 0
  %252 = vmatprep.subr.bf16.mxu0 0
  %253 = vmatpush1.bf16.msra.mxu0 0
  %254 = vmatprep.subr.bf16.mxu0 0
  %255 = vmatpush1.bf16.msra.mxu0 0
  %256 = vmatprep.subr.bf16.mxu0 0
  %257 = vmatpush1.bf16.msra.mxu0 0
  %258 = vmatprep.subr.bf16.mxu0 0
  %259 = vmatpush1.bf16.msra.mxu0 0
  %260 = vmatprep.subr.bf16.mxu0 0
  %261 = vmatpush1.bf16.msra.mxu0 0
  %262 = vmatprep.subr.bf16.mxu0 0
  %263 = vmatpush1.bf16.msra.mxu0 %v175
  %264 = vmatprep.subr.bf16.mxu0 0
  %265 = vmatpush1.bf16.msra.mxu0 %v174
  %266 = vmatprep.subr.bf16.mxu0 0
  %267 = vmatpush2.bf16.msra.mxu0 0
  %268 = vmatprep.subr.bf16.mxu0 0
  %269 = vmatpush2.bf16.msra.mxu0 0
  %270 = vmatprep.subr.bf16.mxu0 0
  %271 = vmatpush2.bf16.msra.mxu0 0
  %272 = vmatprep.subr.bf16.mxu0 0
  %273 = vmatpush2.bf16.msra.mxu0 0
  %274 = vmatprep.subr.bf16.mxu0 0
  %275 = vmatpush2.bf16.msra.mxu0 0
  %276 = vmatprep.subr.bf16.mxu0 0
  %277 = vmatpush2.bf16.msra.mxu0 0
  %278 = vmatprep.subr.bf16.mxu0 0
  %279 = vmatpush2.bf16.msra.mxu0 0
  %280 = vmatprep.subr.bf16.mxu0 0
  %281 = vmatpush2.bf16.msra.mxu0 0
  %282 = vmatprep.mubr.bf16.mxu0 0
  %283 = vmatmul.mubr.bf16.gmra.mxu0 %v196
  %v284 = vpop.f32.mrf.mxu0
  %v285 = vadd.f32 %v236, %v284
  %v286 = vpop.f32.mrf.mxu0
  %v287 = vpop.f32.mrf.mxu0
  %v288 = vadd.f32 %v239, %v287
  %v289 = vpop.f32.mrf.mxu0
  %290 = vmatprep.mubr.bf16.mxu0 0
  %291 = vmatmul.mubr.bf16.gmra.mxu0 %v199
  %v292 = vpop.f32.mrf.mxu0
  %v293 = vadd.f32 %v244, %v292
  %v294 = vpop.f32.mrf.mxu0
  %v295 = vpop.f32.mrf.mxu0
  %v296 = vadd.f32 %v247, %v295
  %v297 = vpop.f32.mrf.mxu0
  %298 = vdwg.mxu0
  %vm299 = vcmask 64512
  %300 = vst.msk [vmem:[%s2] sm:$0xff] %vm299, %v285
  %301 = vst.msk [vmem:[%s2 + $0x8] sm:$0xff] %vm299, %v288
  %302 = vst.msk [vmem:[%s2 + $0x10] sm:$0xff] %vm299, %v293
  %303 = vst.msk [vmem:[%s2 + $0x18] sm:$0xff] %vm299, %v296
  // Predicated region
  $region10: #{main_forward.135} parent=0 // pred_check
    _
  $region11: #{main_forward.135} parent=0 // pred_check_branch
    %305 = sbr.rel (0) target = $region13
  $region12: #{main_forward.135} parent=0 // pred_region
    _
  $region13: #{main_forward.135} parent=0 // pred_fallthru
    _
  // Predicated region
  $region14: #{main_forward.135} parent=0 // pred_check
    _
  $region15: #{main_forward.135} parent=0 // pred_check_branch
    %307 = sbr.rel (0) target = $region17
  $region16: #{main_forward.135} parent=0 // pred_region
    _
  $region17: #{main_forward.135} parent=0 // pred_fallthru
    _

// kernel: main_forward.136
$region0: #{main_forward.136}
  #allocation0 [shape = 'u32[]', space=smem, size = 0x4, offset = 0x4, fixed_abs, tag = 'smem constant byte address 0x4 - core index']
  #allocation1 [shape = 'u32[144,128]{1,0:T(1,128)}', space=vmem, size = 0x12000, scoped, tag = 'internal scratch']
  %s0 = inlined_call_operand.vmem [shape: f32[2,32,4], index: 0, kind: input, shape index: {}]
  %s1 = inlined_call_operand.vmem [shape: f32[32,1], index: 1, kind: input, shape index: {}]
  %s2 = inlined_call_operand.vmem [shape: f32[32,1], index: 2, kind: input, shape index: {}]
  %s3 = inlined_call_operand.vmem [shape: f32[32,1], index: 3, kind: input, shape index: {}]
  %s4 = inlined_call_operand.vmem [shape: f32[2,32,4], index: 4, kind: output, shape index: {}]
  %s5 = sld [smem:[#allocation0]]
  $region49: #{main_forward.136} parent=0
    _
  %s7 = ssub.s32 1, %s5
  %s8 = scalar_select 0, %s7, %s5
  loop: start=0, step=1, limit=4
  $region2: #{main_forward.136} parent=0 // loop_pre_header
    _
  $region3: #{main_forward.136} parent=0 // loop_header
    %s10 = sphi 0, %s14
    %p11 = scmp.ge.s32.totalorder %s10, 4
    %s20 = sphi 0, %s22
    %s23 = sphi 0, %s20
    %s24 = sphi 0, %s23
    %s40 = sphi 0, %s24
    %s44 = sphi 0, %s44
    %s46 = sphi 0, %s44
    %s47 = sphi 0, %s46
    %s61 = sphi 0, %s47
    %s65 = sphi 0, %s65
    %s67 = sphi 0, %s65
    %s68 = sphi 0, %s67
    %s82 = sphi 0, %s68
    %s86 = sphi 0, %s86
    %s88 = sphi 0, %s86
    %s89 = sphi 0, %s88
    %s103 = sphi 0, %s89
    %s109 = sphi 0, %s111
    %s112 = sphi 0, %s109
    %s113 = sphi 0, %s112
    %s129 = sphi 0, %s113
  $region4: #{main_forward.136} parent=0 // loop_header_branch
    %13 = sbr.rel (%p11) target = $region8
  $region5: #{main_forward.136} parent=0 // loop_body
    %s15 = ssub.s32 %s10, 1
    %s16 = ssub.s32 %s10, 2
    %s17 = sadd.s32 %s10, 1
    %s18 = ssub.s32 %s10, %s17
    %p19 = scmp.eq.s32.totalorder %s18, 0
    %s21 = sadd.s32 %s20, 1
    %s22 = scalar_select %p19, %s20, %s21
    %p25 = pneg %p19
    %p26 = scmp.eq.s32.totalorder %s10, 1
    %p27 = por %p25, %p26
    %p28 = scmp.ne.s32.totalorder %s20, %s23
    %p29 = scmp.eq.s32.totalorder %s10, 0
    %p30 = por %p28, %p29
    %p31 = scmp.ne.s32.totalorder %s20, %s23
    %p32 = scmp.eq.s32.totalorder %s15, 1
    %p33 = por %p31, %p32
    %p34 = scmp.ne.s32.totalorder %s23, %s24
    %p35 = scmp.eq.s32.totalorder %s15, 0
    %p36 = por %p34, %p35
    %p37 = scmp.ne.s32.totalorder %s23, %s24
    %p38 = scmp.eq.s32.totalorder %s16, 1
    %p39 = por %p37, %p38
    %p41 = scmp.ne.s32.totalorder %s24, %s40
    %p42 = scmp.eq.s32.totalorder %s16, 0
    %p43 = por %p41, %p42
    %s45 = sadd.s32 %s44, 1
    %p48 = scmp.eq.s32.totalorder %s10, 1
    %p49 = scmp.ne.s32.totalorder %s44, %s46
    %p50 = scmp.eq.s32.totalorder %s10, 0
    %p51 = por %p49, %p50
    %p52 = scmp.ne.s32.totalorder %s44, %s46
    %p53 = scmp.eq.s32.totalorder %s15, 1
    %p54 = por %p52, %p53
    %p55 = scmp.ne.s32.totalorder %s46, %s47
    %p56 = scmp.eq.s32.totalorder %s15, 0
    %p57 = por %p55, %p56
    %p58 = scmp.ne.s32.totalorder %s46, %s47
    %p59 = scmp.eq.s32.totalorder %s16, 1
    %p60 = por %p58, %p59
    %p62 = scmp.ne.s32.totalorder %s47, %s61
    %p63 = scmp.eq.s32.totalorder %s16, 0
    %p64 = por %p62, %p63
    %s66 = sadd.s32 %s65, 1
    %p69 = scmp.eq.s32.totalorder %s10, 1
    %p70 = scmp.ne.s32.totalorder %s65, %s67
    %p71 = scmp.eq.s32.totalorder %s10, 0
    %p72 = por %p70, %p71
    %p73 = scmp.ne.s32.totalorder %s65, %s67
    %p74 = scmp.eq.s32.totalorder %s15, 1
    %p75 = por %p73, %p74
    %p76 = scmp.ne.s32.totalorder %s67, %s68
    %p77 = scmp.eq.s32.totalorder %s15, 0
    %p78 = por %p76, %p77
    %p79 = scmp.ne.s32.totalorder %s67, %s68
    %p80 = scmp.eq.s32.totalorder %s16, 1
    %p81 = por %p79, %p80
    %p83 = scmp.ne.s32.totalorder %s68, %s82
    %p84 = scmp.eq.s32.totalorder %s16, 0
    %p85 = por %p83, %p84
    %s87 = sadd.s32 %s86, 1
    %p90 = scmp.eq.s32.totalorder %s10, 1
    %p91 = scmp.ne.s32.totalorder %s86, %s88
    %p92 = scmp.eq.s32.totalorder %s10, 0
    %p93 = por %p91, %p92
    %p94 = scmp.ne.s32.totalorder %s86, %s88
    %p95 = scmp.eq.s32.totalorder %s15, 1
    %p96 = por %p94, %p95
    %p97 = scmp.ne.s32.totalorder %s88, %s89
    %p98 = scmp.eq.s32.totalorder %s15, 0
    %p99 = por %p97, %p98
    %p100 = scmp.ne.s32.totalorder %s88, %s89
    %p101 = scmp.eq.s32.totalorder %s16, 1
    %p102 = por %p100, %p101
    %p104 = scmp.ne.s32.totalorder %s89, %s103
    %p105 = scmp.eq.s32.totalorder %s16, 0
    %p106 = por %p104, %p105
    %s107 = ssub.s32 %s10, %s17
    %p108 = scmp.eq.s32.totalorder %s107, 0
    %s110 = sadd.s32 %s109, 1
    %s111 = scalar_select %p108, %s109, %s110
    %p114 = pneg %p108
    %p115 = scmp.eq.s32.totalorder %s10, 1
    %p116 = por %p114, %p115
    %p117 = scmp.ne.s32.totalorder %s109, %s112
    %p118 = scmp.eq.s32.totalorder %s10, 0
    %p119 = por %p117, %p118
    %p120 = scmp.ne.s32.totalorder %s109, %s112
    %p121 = scmp.eq.s32.totalorder %s15, 1
    %p122 = por %p120, %p121
    %p123 = scmp.ne.s32.totalorder %s112, %s113
    %p124 = scmp.eq.s32.totalorder %s15, 0
    %p125 = por %p123, %p124
    %p126 = scmp.ne.s32.totalorder %s112, %s113
    %p127 = scmp.eq.s32.totalorder %s16, 1
    %p128 = por %p126, %p127
    %p130 = scmp.ne.s32.totalorder %s113, %s129
    %p131 = scmp.eq.s32.totalorder %s16, 0
    %p132 = por %p130, %p131
    %p133 = scmp.le.s32.totalorder 1, %s10
    %p134 = scmp.lt.s32.totalorder %s10, 3
    %p135 = pnand %p133, %p134
    %p136 = pneg %p135
    // Predicated region
    $region9: #{main_forward.136} parent=5 // pred_check
      _
    $region10: #{main_forward.136} parent=5 // pred_check_branch
      %138 = sbr.rel (%p135) target = $region12
    $region11: #{main_forward.136} parent=5 // pred_region
      %s139 = ssub.s32 %s10, 1
      // Predicated region
      $region13: #{main_forward.136} parent=11 // pred_check
        %p140 = pneg %p57
      $region14: #{main_forward.136} parent=11 // pred_check_branch
        %142 = sbr.rel (%p140) target = $region16
      $region15: #{main_forward.136} parent=11 // pred_region
        _
      $region16: #{main_forward.136} parent=11 // pred_fallthru
        _
      // Predicated region
      $region17: #{main_forward.136} parent=11 // pred_check
        %p143 = pneg %p78
      $region18: #{main_forward.136} parent=11 // pred_check_branch
        %145 = sbr.rel (%p143) target = $region20
      $region19: #{main_forward.136} parent=11 // pred_region
        _
      $region20: #{main_forward.136} parent=11 // pred_fallthru
        _
      // Predicated region
      $region21: #{main_forward.136} parent=11 // pred_check
        %p146 = pneg %p99
      $region22: #{main_forward.136} parent=11 // pred_check_branch
        %148 = sbr.rel (%p146) target = $region24
      $region23: #{main_forward.136} parent=11 // pred_region
        _
      $region24: #{main_forward.136} parent=11 // pred_fallthru
        _
    $region12: #{main_forward.136} parent=5 // pred_fallthru
      _
    %p149 = scmp.lt.s32.totalorder %s10, 2
    // Predicated region
    $region25: #{main_forward.136} parent=5 // pred_check
      %p150 = pneg %p149
    $region26: #{main_forward.136} parent=5 // pred_check_branch
      %152 = sbr.rel (%p150) target = $region28
    $region27: #{main_forward.136} parent=5 // pred_region
      // Predicated region
      $region29: #{main_forward.136} parent=27 // pred_check
        %p153 = pneg %p30
      $region30: #{main_forward.136} parent=27 // pred_check_branch
        %155 = sbr.rel (%p153) target = $region32
      $region31: #{main_forward.136} parent=27 // pred_region
        %p156 = scmp.lt.s32.totalorder %s10, 1
        %s157 = scalar_select %p156, %s10, 1
        %s158 = smul.addr %s157, 4
        %s159 = smul.addr %s158, 8
        %s160 = scalar_lea.vmem %s0, %s159
      $region32: #{main_forward.136} parent=27 // pred_fallthru
        _
    $region28: #{main_forward.136} parent=5 // pred_fallthru
      _
    %p161 = scmp.le.s32.totalorder 1, %s10
    %p162 = scmp.lt.s32.totalorder %s10, 3
    %p163 = pnand %p161, %p162
    %p164 = pneg %p163
    // Predicated region
    $region33: #{main_forward.136} parent=5 // pred_check
      _
    $region34: #{main_forward.136} parent=5 // pred_check_branch
      %166 = sbr.rel (%p163) target = $region36
    $region35: #{main_forward.136} parent=5 // pred_region
      %s167 = ssub.s32 %s10, 1
      %p168 = scmp.lt.s32.totalorder %s15, 1
      %s169 = scalar_select %p168, %s15, 1
      %s170 = smul.addr %s169, 4
      %s171 = smul.addr %s170, 8
      %s172 = scalar_lea.vmem %s0, %s171
      %p173 = pneg %p36
      %p174 = pneg %p33
      %p175 = pneg %p57
      %p176 = pneg %p54
      %p177 = pneg %p78
      %p178 = pneg %p75
      %p179 = pneg %p99
      %p180 = pneg %p96
      %p181 = pneg %p125
      %p182 = pneg %p122
      %p183 = scmp.lt.s32.totalorder %s15, 1
      %s184 = scalar_select %p183, %s15, 1
      %s185 = smul.addr %s184, 4
      %s186 = smul.addr %s185, 8
      %s187 = scalar_lea.vmem %s4, %s186
      %p188 = scmp.lt.s32.totalorder %s15, 1
      %s189 = scalar_select %p188, %s15, 1
      %s190 = smul.addr %s189, 4
      %s191 = smul.addr %s190, 8
      %s192 = scalar_lea.vmem %s0, %s191
      %p193 = scmp.lt.s32.totalorder %s15, 1
      %s194 = scalar_select %p193, %s15, 1
      %s195 = smul.addr %s194, 4
      %s196 = smul.addr %s195, 8
      %s197 = scalar_lea.vmem %s4, %s196
      %v198 = vld [vmem:[%s192] sm:$0xff]
      %v199 = vld [vmem:[%s192 + $0x8] sm:$0xff]
      %v200 = vld [vmem:[%s192 + $0x10] sm:$0xff]
      %v201 = vld [vmem:[%s192 + $0x18] sm:$0xff]
      %vm202 = vcmask 31744
      %v203 = vsel %vm202, %v198, 0.0
      %v204 = vsel %vm202, %v199, 0.0
      %v205 = vadd.f32 %v203, %v204
      %v206 = vsel %vm202, %v200, 0.0
      %v207 = vadd.f32 %v205, %v206
      %v208 = vsel %vm202, %v201, 0.0
      %v209 = vadd.f32 %v207, %v208
      %210 = vadd.xlane.f32.xlu0 %v209
      %v211 = vpop.xlane.xlu0 %210
      %v212 = vrot.slane %v211, 4
      %v213 = vadd.f32 %v211, %v212
      %v214 = vrot.slane %v213, 2
      %v215 = vadd.f32 %v213, %v214
      %v216 = vrot.slane %v215, 1
      %v217 = vadd.f32 %v215, %v216
      %s218 = vtos %v217
      %v219 = vrcp.pop 128.0
      %s220 = vtos %v219
      %s221 = smul.f32 %s218, %s220
      %v222 = vstv %s221
      %v223 = vsub.f32 %v198, %v222
      %v224 = vsub.f32 %v199, %v222
      %v225 = vsub.f32 %v200, %v222
      %v226 = vsub.f32 %v201, %v222
      %v227 = vmul.f32 %v223, %v223
      %v228 = vmul.f32 %v224, %v224
      %v229 = vmul.f32 %v225, %v225
      %v230 = vmul.f32 %v226, %v226
      %v231 = vsel %vm202, %v227, 0.0
      %v232 = vsel %vm202, %v228, 0.0
      %v233 = vadd.f32 %v231, %v232
      %v234 = vsel %vm202, %v229, 0.0
      %v235 = vadd.f32 %v233, %v234
      %v236 = vsel %vm202, %v230, 0.0
      %v237 = vadd.f32 %v235, %v236
      %238 = vadd.xlane.f32.xlu0 %v237
      %v239 = vpop.xlane.xlu0 %238
      %v240 = vrot.slane %v239, 4
      %v241 = vadd.f32 %v239, %v240
      %v242 = vrot.slane %v241, 2
      %v243 = vadd.f32 %v241, %v242
      %v244 = vrot.slane %v243, 1
      %v245 = vadd.f32 %v243, %v244
      %s246 = vtos %v245
      %v247 = vrcp.pop 128.0
      %s248 = vtos %v247
      %s249 = smul.f32 %s246, %s248
      %s250 = sadd.f32 %s249, 1e-05
      %v251 = vstv %s250
      %v252 = vrsqrt.pop %v251
      %s253 = vtos %v252
      %v254 = vstv %s253
      %v255 = vmul.f32 %v223, %v254
      %v256 = vmul.f32 %v224, %v254
      %v257 = vmul.f32 %v225, %v254
      %v258 = vmul.f32 %v226, %v254
      %v259 = vld [vmem:[%s1] sm:$0xff]
      %v260 = vld [vmem:[%s1 + $0x8] sm:$0xff]
      %v261 = vld [vmem:[%s1 + $0x10] sm:$0xff]
      %v262 = vld [vmem:[%s1 + $0x18] sm:$0xff]
      %264 = vset.pattern.permute.xlu0 0
      %265 = vperm.xlu0 %264, %v259
      %v266 = vpop.permute.xlu0 %265
      %269 = vset.pattern.permute.xlu0 0
      %270 = vperm.xlu0 %269, %v260
      %v271 = vpop.permute.xlu0 %270
      %274 = vset.pattern.permute.xlu0 0
      %275 = vperm.xlu0 %274, %v261
      %v276 = vpop.permute.xlu0 %275
      %279 = vset.pattern.permute.xlu0 0
      %280 = vperm.xlu0 %279, %v262
      %v281 = vpop.permute.xlu0 %280
      %v283 = vmul.f32 %v255, %v266
      %v284 = vmul.f32 %v256, %v271
      %v285 = vmul.f32 %v257, %v276
      %v286 = vmul.f32 %v258, %v281
      %v287 = vld [vmem:[%s2] sm:$0xff]
      %v288 = vld [vmem:[%s2 + $0x8] sm:$0xff]
      %v289 = vld [vmem:[%s2 + $0x10] sm:$0xff]
      %v290 = vld [vmem:[%s2 + $0x18] sm:$0xff]
      %292 = vset.pattern.permute.xlu0 0
      %293 = vperm.xlu0 %292, %v287
      %v294 = vpop.permute.xlu0 %293
      %297 = vset.pattern.permute.xlu0 0
      %298 = vperm.xlu0 %297, %v288
      %v299 = vpop.permute.xlu0 %298
      %302 = vset.pattern.permute.xlu0 0
      %303 = vperm.xlu0 %302, %v289
      %v304 = vpop.permute.xlu0 %303
      %307 = vset.pattern.permute.xlu0 0
      %308 = vperm.xlu0 %307, %v290
      %v309 = vpop.permute.xlu0 %308
      %v311 = vadd.f32 %v283, %v294
      %v312 = vadd.f32 %v284, %v299
      %v313 = vadd.f32 %v285, %v304
      %v314 = vadd.f32 %v286, %v309
      %vm315 = vcmp.ge.f32.partialorder %v311, 0.0
      %vm316 = vcmp.ge.f32.partialorder %v312, 0.0
      %vm317 = vcmp.ge.f32.partialorder %v313, 0.0
      %vm318 = vcmp.ge.f32.partialorder %v314, 0.0
      %v319 = vld [vmem:[%s3] sm:$0xff]
      %v320 = vld [vmem:[%s3 + $0x8] sm:$0xff]
      %v321 = vld [vmem:[%s3 + $0x10] sm:$0xff]
      %v322 = vld [vmem:[%s3 + $0x18] sm:$0xff]
      %324 = vset.pattern.permute.xlu0 0
      %325 = vperm.xlu0 %324, %v319
      %v326 = vpop.permute.xlu0 %325
      %329 = vset.pattern.permute.xlu0 0
      %330 = vperm.xlu0 %329, %v320
      %v331 = vpop.permute.xlu0 %330
      %334 = vset.pattern.permute.xlu0 0
      %335 = vperm.xlu0 %334, %v321
      %v336 = vpop.permute.xlu0 %335
      %339 = vset.pattern.permute.xlu0 0
      %340 = vperm.xlu0 %339, %v322
      %v341 = vpop.permute.xlu0 %340
      %v343 = vmul.f32 %v326, %v311
      %v344 = vmul.f32 %v331, %v312
      %v345 = vmul.f32 %v336, %v313
      %v346 = vmul.f32 %v341, %v314
      %v347 = vsel %vm315, %v311, %v343
      %v348 = vsel %vm316, %v312, %v344
      %v349 = vsel %vm317, %v313, %v345
      %v350 = vsel %vm318, %v314, %v346
      %351 = vst.msk [vmem:[%s197] sm:$0xff] %vm202, %v347
      %352 = vst.msk [vmem:[%s197 + $0x8] sm:$0xff] %vm202, %v348
      %353 = vst.msk [vmem:[%s197 + $0x10] sm:$0xff] %vm202, %v349
      %354 = vst.msk [vmem:[%s197 + $0x18] sm:$0xff] %vm202, %v350
      %p355 = scmp.lt.s32.totalorder %s15, 1
      %s356 = scalar_select %p355, %s15, 1
      %s357 = smul.addr %s356, 4
      %s358 = smul.addr %s357, 8
      %s359 = scalar_lea.vmem %s4, %s358
      // Predicated region
      $region37: #{main_forward.136} parent=35 // pred_check
        %p360 = pneg %p122
      $region38: #{main_forward.136} parent=35 // pred_check_branch
        %362 = sbr.rel (%p360) target = $region40
      $region39: #{main_forward.136} parent=35 // pred_region
        _
      $region40: #{main_forward.136} parent=35 // pred_fallthru
        _
    $region36: #{main_forward.136} parent=5 // pred_fallthru
      _
    %p363 = scmp.le.s32.totalorder 2, %s10
    // Predicated region
    $region41: #{main_forward.136} parent=5 // pred_check
      %p364 = pneg %p363
    $region42: #{main_forward.136} parent=5 // pred_check_branch
      %366 = sbr.rel (%p364) target = $region44
    $region43: #{main_forward.136} parent=5 // pred_region
      %s367 = ssub.s32 %s10, 2
      // Predicated region
      $region45: #{main_forward.136} parent=43 // pred_check
        %p368 = pneg %p128
      $region46: #{main_forward.136} parent=43 // pred_check_branch
        %370 = sbr.rel (%p368) target = $region48
      $region47: #{main_forward.136} parent=43 // pred_region
        %p371 = scmp.lt.s32.totalorder %s16, 1
        %s372 = scalar_select %p371, %s16, 1
        %s373 = smul.addr %s372, 4
        %s374 = smul.addr %s373, 8
        %s375 = scalar_lea.vmem %s4, %s374
      $region48: #{main_forward.136} parent=43 // pred_fallthru
        _
    $region44: #{main_forward.136} parent=5 // pred_fallthru
      _
  $region6: #{main_forward.136} parent=0 // loop_footer
    %s14 = sadd.s32 1, %s10
  $region7: #{main_forward.136} parent=0 // loop_footer_branch
    %9 = sbr.rel target = $region3
  $region8: #{main_forward.136} parent=0 // loop_exit
    _

// kernel: main_forward.143
$region0: #{main_forward.143}
  #allocation0 [shape = 'u32[]', space=smem, size = 0x4, offset = 0x4, fixed_abs, tag = 'smem constant byte address 0x4 - core index']
  #allocation1 [shape = 'u32[144,128]{1,0:T(1,128)}', space=vmem, size = 0x12000, scoped, tag = 'internal scratch']
  %s0 = inlined_call_operand.vmem [shape: f32[2,32,4], index: 0, kind: input, shape index: {}]
  %s1 = inlined_call_operand.vmem [shape: f32[2,32,4], index: 1, kind: input, shape index: {}]
  %s2 = inlined_call_operand.vmem [shape: f32[32,1], index: 2, kind: input, shape index: {}]
  %s3 = inlined_call_operand.vmem [shape: f32[32,1], index: 3, kind: input, shape index: {}]
  %s4 = inlined_call_operand.vmem [shape: f32[32,1], index: 4, kind: input, shape index: {}]
  %s5 = inlined_call_operand.vmem [shape: f32[2,32,4], index: 5, kind: output, shape index: {}]
  %s6 = sld [smem:[#allocation0]]
  $region53: #{main_forward.143} parent=0
    _
  %s8 = ssub.s32 1, %s6
  %s9 = scalar_select 0, %s8, %s6
  loop: start=0, step=1, limit=4
  $region2: #{main_forward.143} parent=0 // loop_pre_header
    _
  $region3: #{main_forward.143} parent=0 // loop_header
    %s11 = sphi 0, %s15
    %p12 = scmp.ge.s32.totalorder %s11, 4
    %s21 = sphi 0, %s23
    %s24 = sphi 0, %s21
    %s25 = sphi 0, %s24
    %s41 = sphi 0, %s25
    %s47 = sphi 0, %s49
    %s50 = sphi 0, %s47
    %s51 = sphi 0, %s50
    %s67 = sphi 0, %s51
    %s71 = sphi 0, %s71
    %s73 = sphi 0, %s71
    %s74 = sphi 0, %s73
    %s88 = sphi 0, %s74
    %s92 = sphi 0, %s92
    %s94 = sphi 0, %s92
    %s95 = sphi 0, %s94
    %s109 = sphi 0, %s95
    %s113 = sphi 0, %s113
    %s115 = sphi 0, %s113
    %s116 = sphi 0, %s115
    %s130 = sphi 0, %s116
    %s136 = sphi 0, %s138
    %s139 = sphi 0, %s136
    %s140 = sphi 0, %s139
    %s156 = sphi 0, %s140
  $region4: #{main_forward.143} parent=0 // loop_header_branch
    %14 = sbr.rel (%p12) target = $region8
  $region5: #{main_forward.143} parent=0 // loop_body
    %s16 = ssub.s32 %s11, 1
    %s17 = ssub.s32 %s11, 2
    %s18 = sadd.s32 %s11, 1
    %s19 = ssub.s32 %s11, %s18
    %p20 = scmp.eq.s32.totalorder %s19, 0
    %s22 = sadd.s32 %s21, 1
    %s23 = scalar_select %p20, %s21, %s22
    %p26 = pneg %p20
    %p27 = scmp.eq.s32.totalorder %s11, 1
    %p28 = por %p26, %p27
    %p29 = scmp.ne.s32.totalorder %s21, %s24
    %p30 = scmp.eq.s32.totalorder %s11, 0
    %p31 = por %p29, %p30
    %p32 = scmp.ne.s32.totalorder %s21, %s24
    %p33 = scmp.eq.s32.totalorder %s16, 1
    %p34 = por %p32, %p33
    %p35 = scmp.ne.s32.totalorder %s24, %s25
    %p36 = scmp.eq.s32.totalorder %s16, 0
    %p37 = por %p35, %p36
    %p38 = scmp.ne.s32.totalorder %s24, %s25
    %p39 = scmp.eq.s32.totalorder %s17, 1
    %p40 = por %p38, %p39
    %p42 = scmp.ne.s32.totalorder %s25, %s41
    %p43 = scmp.eq.s32.totalorder %s17, 0
    %p44 = por %p42, %p43
    %s45 = ssub.s32 %s11, %s18
    %p46 = scmp.eq.s32.totalorder %s45, 0
    %s48 = sadd.s32 %s47, 1
    %s49 = scalar_select %p46, %s47, %s48
    %p52 = pneg %p46
    %p53 = scmp.eq.s32.totalorder %s11, 1
    %p54 = por %p52, %p53
    %p55 = scmp.ne.s32.totalorder %s47, %s50
    %p56 = scmp.eq.s32.totalorder %s11, 0
    %p57 = por %p55, %p56
    %p58 = scmp.ne.s32.totalorder %s47, %s50
    %p59 = scmp.eq.s32.totalorder %s16, 1
    %p60 = por %p58, %p59
    %p61 = scmp.ne.s32.totalorder %s50, %s51
    %p62 = scmp.eq.s32.totalorder %s16, 0
    %p63 = por %p61, %p62
    %p64 = scmp.ne.s32.totalorder %s50, %s51
    %p65 = scmp.eq.s32.totalorder %s17, 1
    %p66 = por %p64, %p65
    %p68 = scmp.ne.s32.totalorder %s51, %s67
    %p69 = scmp.eq.s32.totalorder %s17, 0
    %p70 = por %p68, %p69
    %s72 = sadd.s32 %s71, 1
    %p75 = scmp.eq.s32.totalorder %s11, 1
    %p76 = scmp.ne.s32.totalorder %s71, %s73
    %p77 = scmp.eq.s32.totalorder %s11, 0
    %p78 = por %p76, %p77
    %p79 = scmp.ne.s32.totalorder %s71, %s73
    %p80 = scmp.eq.s32.totalorder %s16, 1
    %p81 = por %p79, %p80
    %p82 = scmp.ne.s32.totalorder %s73, %s74
    %p83 = scmp.eq.s32.totalorder %s16, 0
    %p84 = por %p82, %p83
    %p85 = scmp.ne.s32.totalorder %s73, %s74
    %p86 = scmp.eq.s32.totalorder %s17, 1
    %p87 = por %p85, %p86
    %p89 = scmp.ne.s32.totalorder %s74, %s88
    %p90 = scmp.eq.s32.totalorder %s17, 0
    %p91 = por %p89, %p90
    %s93 = sadd.s32 %s92, 1
    %p96 = scmp.eq.s32.totalorder %s11, 1
    %p97 = scmp.ne.s32.totalorder %s92, %s94
    %p98 = scmp.eq.s32.totalorder %s11, 0
    %p99 = por %p97, %p98
    %p100 = scmp.ne.s32.totalorder %s92, %s94
    %p101 = scmp.eq.s32.totalorder %s16, 1
    %p102 = por %p100, %p101
    %p103 = scmp.ne.s32.totalorder %s94, %s95
    %p104 = scmp.eq.s32.totalorder %s16, 0
    %p105 = por %p103, %p104
    %p106 = scmp.ne.s32.totalorder %s94, %s95
    %p107 = scmp.eq.s32.totalorder %s17, 1
    %p108 = por %p106, %p107
    %p110 = scmp.ne.s32.totalorder %s95, %s109
    %p111 = scmp.eq.s32.totalorder %s17, 0
    %p112 = por %p110, %p111
    %s114 = sadd.s32 %s113, 1
    %p117 = scmp.eq.s32.totalorder %s11, 1
    %p118 = scmp.ne.s32.totalorder %s113, %s115
    %p119 = scmp.eq.s32.totalorder %s11, 0
    %p120 = por %p118, %p119
    %p121 = scmp.ne.s32.totalorder %s113, %s115
    %p122 = scmp.eq.s32.totalorder %s16, 1
    %p123 = por %p121, %p122
    %p124 = scmp.ne.s32.totalorder %s115, %s116
    %p125 = scmp.eq.s32.totalorder %s16, 0
    %p126 = por %p124, %p125
    %p127 = scmp.ne.s32.totalorder %s115, %s116
    %p128 = scmp.eq.s32.totalorder %s17, 1
    %p129 = por %p127, %p128
    %p131 = scmp.ne.s32.totalorder %s116, %s130
    %p132 = scmp.eq.s32.totalorder %s17, 0
    %p133 = por %p131, %p132
    %s134 = ssub.s32 %s11, %s18
    %p135 = scmp.eq.s32.totalorder %s134, 0
    %s137 = sadd.s32 %s136, 1
    %s138 = scalar_select %p135, %s136, %s137
    %p141 = pneg %p135
    %p142 = scmp.eq.s32.totalorder %s11, 1
    %p143 = por %p141, %p142
    %p144 = scmp.ne.s32.totalorder %s136, %s139
    %p145 = scmp.eq.s32.totalorder %s11, 0
    %p146 = por %p144, %p145
    %p147 = scmp.ne.s32.totalorder %s136, %s139
    %p148 = scmp.eq.s32.totalorder %s16, 1
    %p149 = por %p147, %p148
    %p150 = scmp.ne.s32.totalorder %s139, %s140
    %p151 = scmp.eq.s32.totalorder %s16, 0
    %p152 = por %p150, %p151
    %p153 = scmp.ne.s32.totalorder %s139, %s140
    %p154 = scmp.eq.s32.totalorder %s17, 1
    %p155 = por %p153, %p154
    %p157 = scmp.ne.s32.totalorder %s140, %s156
    %p158 = scmp.eq.s32.totalorder %s17, 0
    %p159 = por %p157, %p158
    %p160 = scmp.le.s32.totalorder 1, %s11
    %p161 = scmp.lt.s32.totalorder %s11, 3
    %p162 = pnand %p160, %p161
    %p163 = pneg %p162
    // Predicated region
    $region9: #{main_forward.143} parent=5 // pred_check
      _
    $region10: #{main_forward.143} parent=5 // pred_check_branch
      %165 = sbr.rel (%p162) target = $region12
    $region11: #{main_forward.143} parent=5 // pred_region
      %s166 = ssub.s32 %s11, 1
      // Predicated region
      $region13: #{main_forward.143} parent=11 // pred_check
        %p167 = pneg %p84
      $region14: #{main_forward.143} parent=11 // pred_check_branch
        %169 = sbr.rel (%p167) target = $region16
      $region15: #{main_forward.143} parent=11 // pred_region
        _
      $region16: #{main_forward.143} parent=11 // pred_fallthru
        _
      // Predicated region
      $region17: #{main_forward.143} parent=11 // pred_check
        %p170 = pneg %p105
      $region18: #{main_forward.143} parent=11 // pred_check_branch
        %172 = sbr.rel (%p170) target = $region20
      $region19: #{main_forward.143} parent=11 // pred_region
        _
      $region20: #{main_forward.143} parent=11 // pred_fallthru
        _
      // Predicated region
      $region21: #{main_forward.143} parent=11 // pred_check
        %p173 = pneg %p126
      $region22: #{main_forward.143} parent=11 // pred_check_branch
        %175 = sbr.rel (%p173) target = $region24
      $region23: #{main_forward.143} parent=11 // pred_region
        _
      $region24: #{main_forward.143} parent=11 // pred_fallthru
        _
    $region12: #{main_forward.143} parent=5 // pred_fallthru
      _
    %p176 = scmp.lt.s32.totalorder %s11, 2
    // Predicated region
    $region25: #{main_forward.143} parent=5 // pred_check
      %p177 = pneg %p176
    $region26: #{main_forward.143} parent=5 // pred_check_branch
      %179 = sbr.rel (%p177) target = $region28
    $region27: #{main_forward.143} parent=5 // pred_region
      // Predicated region
      $region29: #{main_forward.143} parent=27 // pred_check
        %p180 = pneg %p31
      $region30: #{main_forward.143} parent=27 // pred_check_branch
        %182 = sbr.rel (%p180) target = $region32
      $region31: #{main_forward.143} parent=27 // pred_region
        %p183 = scmp.lt.s32.totalorder %s11, 1
        %s184 = scalar_select %p183, %s11, 1
        %s185 = smul.addr %s184, 4
        %s186 = smul.addr %s185, 8
        %s187 = scalar_lea.vmem %s0, %s186
      $region32: #{main_forward.143} parent=27 // pred_fallthru
        _
      // Predicated region
      $region33: #{main_forward.143} parent=27 // pred_check
        %p188 = pneg %p57
      $region34: #{main_forward.143} parent=27 // pred_check_branch
        %190 = sbr.rel (%p188) target = $region36
      $region35: #{main_forward.143} parent=27 // pred_region
        %p191 = scmp.lt.s32.totalorder %s11, 1
        %s192 = scalar_select %p191, %s11, 1
        %s193 = smul.addr %s192, 4
        %s194 = smul.addr %s193, 8
        %s195 = scalar_lea.vmem %s1, %s194
      $region36: #{main_forward.143} parent=27 // pred_fallthru
        _
    $region28: #{main_forward.143} parent=5 // pred_fallthru
      _
    %p196 = scmp.le.s32.totalorder 1, %s11
    %p197 = scmp.lt.s32.totalorder %s11, 3
    %p198 = pnand %p196, %p197
    %p199 = pneg %p198
    // Predicated region
    $region37: #{main_forward.143} parent=5 // pred_check
      _
    $region38: #{main_forward.143} parent=5 // pred_check_branch
      %201 = sbr.rel (%p198) target = $region40
    $region39: #{main_forward.143} parent=5 // pred_region
      %s202 = ssub.s32 %s11, 1
      %p203 = scmp.lt.s32.totalorder %s16, 1
      %s204 = scalar_select %p203, %s16, 1
      %s205 = smul.addr %s204, 4
      %s206 = smul.addr %s205, 8
      %s207 = scalar_lea.vmem %s0, %s206
      %p208 = pneg %p37
      %p209 = pneg %p34
      %p210 = scmp.lt.s32.totalorder %s16, 1
      %s211 = scalar_select %p210, %s16, 1
      %s212 = smul.addr %s211, 4
      %s213 = smul.addr %s212, 8
      %s214 = scalar_lea.vmem %s1, %s213
      %p215 = pneg %p63
      %p216 = pneg %p60
      %p217 = pneg %p84
      %p218 = pneg %p81
      %p219 = pneg %p105
      %p220 = pneg %p102
      %p221 = pneg %p126
      %p222 = pneg %p123
      %p223 = pneg %p152
      %p224 = pneg %p149
      %p225 = scmp.lt.s32.totalorder %s16, 1
      %s226 = scalar_select %p225, %s16, 1
      %s227 = smul.addr %s226, 4
      %s228 = smul.addr %s227, 8
      %s229 = scalar_lea.vmem %s5, %s228
      %p230 = scmp.lt.s32.totalorder %s16, 1
      %s231 = scalar_select %p230, %s16, 1
      %s232 = smul.addr %s231, 4
      %s233 = smul.addr %s232, 8
      %s234 = scalar_lea.vmem %s0, %s233
      %p235 = scmp.lt.s32.totalorder %s16, 1
      %s236 = scalar_select %p235, %s16, 1
      %s237 = smul.addr %s236, 4
      %s238 = smul.addr %s237, 8
      %s239 = scalar_lea.vmem %s1, %s238
      %p240 = scmp.lt.s32.totalorder %s16, 1
      %s241 = scalar_select %p240, %s16, 1
      %s242 = smul.addr %s241, 4
      %s243 = smul.addr %s242, 8
      %s244 = scalar_lea.vmem %s5, %s243
      %v245 = vld [vmem:[%s234] sm:$0xff]
      %v246 = vld [vmem:[%s234 + $0x8] sm:$0xff]
      %v247 = vld [vmem:[%s234 + $0x10] sm:$0xff]
      %v248 = vld [vmem:[%s234 + $0x18] sm:$0xff]
      %vm249 = vcmask 31744
      %v250 = vsel %vm249, %v245, 0.0
      %v251 = vsel %vm249, %v246, 0.0
      %v252 = vadd.f32 %v250, %v251
      %v253 = vsel %vm249, %v247, 0.0
      %v254 = vadd.f32 %v252, %v253
      %v255 = vsel %vm249, %v248, 0.0
      %v256 = vadd.f32 %v254, %v255
      %257 = vadd.xlane.f32.xlu0 %v256
      %v258 = vpop.xlane.xlu0 %257
      %v259 = vrot.slane %v258, 4
      %v260 = vadd.f32 %v258, %v259
      %v261 = vrot.slane %v260, 2
      %v262 = vadd.f32 %v260, %v261
      %v263 = vrot.slane %v262, 1
      %v264 = vadd.f32 %v262, %v263
      %s265 = vtos %v264
      %v266 = vrcp.pop 128.0
      %s267 = vtos %v266
      %s268 = smul.f32 %s265, %s267
      %v269 = vstv %s268
      %v270 = vsub.f32 %v245, %v269
      %v271 = vsub.f32 %v246, %v269
      %v272 = vsub.f32 %v247, %v269
      %v273 = vsub.f32 %v248, %v269
      %v274 = vmul.f32 %v270, %v270
      %v275 = vmul.f32 %v271, %v271
      %v276 = vmul.f32 %v272, %v272
      %v277 = vmul.f32 %v273, %v273
      %v278 = vsel %vm249, %v274, 0.0
      %v279 = vsel %vm249, %v275, 0.0
      %v280 = vadd.f32 %v278, %v279
      %v281 = vsel %vm249, %v276, 0.0
      %v282 = vadd.f32 %v280, %v281
      %v283 = vsel %vm249, %v277, 0.0
      %v284 = vadd.f32 %v282, %v283
      %285 = vadd.xlane.f32.xlu0 %v284
      %v286 = vpop.xlane.xlu0 %285
      %v287 = vrot.slane %v286, 4
      %v288 = vadd.f32 %v286, %v287
      %v289 = vrot.slane %v288, 2
      %v290 = vadd.f32 %v288, %v289
      %v291 = vrot.slane %v290, 1
      %v292 = vadd.f32 %v290, %v291
      %s293 = vtos %v292
      %v294 = vrcp.pop 128.0
      %s295 = vtos %v294
      %s296 = smul.f32 %s293, %s295
      %s297 = sadd.f32 %s296, 1e-05
      %v298 = vstv %s297
      %v299 = vrsqrt.pop %v298
      %s300 = vtos %v299
      %v301 = vstv %s300
      %v302 = vmul.f32 %v270, %v301
      %v303 = vmul.f32 %v271, %v301
      %v304 = vmul.f32 %v272, %v301
      %v305 = vmul.f32 %v273, %v301
      %v306 = vld [vmem:[%s2] sm:$0xff]
      %v307 = vld [vmem:[%s2 + $0x8] sm:$0xff]
      %v308 = vld [vmem:[%s2 + $0x10] sm:$0xff]
      %v309 = vld [vmem:[%s2 + $0x18] sm:$0xff]
      %311 = vset.pattern.permute.xlu0 0
      %312 = vperm.xlu0 %311, %v306
      %v313 = vpop.permute.xlu0 %312
      %316 = vset.pattern.permute.xlu0 0
      %317 = vperm.xlu0 %316, %v307
      %v318 = vpop.permute.xlu0 %317
      %321 = vset.pattern.permute.xlu0 0
      %322 = vperm.xlu0 %321, %v308
      %v323 = vpop.permute.xlu0 %322
      %326 = vset.pattern.permute.xlu0 0
      %327 = vperm.xlu0 %326, %v309
      %v328 = vpop.permute.xlu0 %327
      %v330 = vmul.f32 %v302, %v313
      %v331 = vmul.f32 %v303, %v318
      %v332 = vmul.f32 %v304, %v323
      %v333 = vmul.f32 %v305, %v328
      %v334 = vld [vmem:[%s3] sm:$0xff]
      %v335 = vld [vmem:[%s3 + $0x8] sm:$0xff]
      %v336 = vld [vmem:[%s3 + $0x10] sm:$0xff]
      %v337 = vld [vmem:[%s3 + $0x18] sm:$0xff]
      %339 = vset.pattern.permute.xlu0 0
      %340 = vperm.xlu0 %339, %v334
      %v341 = vpop.permute.xlu0 %340
      %344 = vset.pattern.permute.xlu0 0
      %345 = vperm.xlu0 %344, %v335
      %v346 = vpop.permute.xlu0 %345
      %349 = vset.pattern.permute.xlu0 0
      %350 = vperm.xlu0 %349, %v336
      %v351 = vpop.permute.xlu0 %350
      %354 = vset.pattern.permute.xlu0 0
      %355 = vperm.xlu0 %354, %v337
      %v356 = vpop.permute.xlu0 %355
      %v358 = vadd.f32 %v330, %v341
      %v359 = vadd.f32 %v331, %v346
      %v360 = vadd.f32 %v332, %v351
      %v361 = vadd.f32 %v333, %v356
      %v362 = vld [vmem:[%s239] sm:$0xff]
      %v363 = vld [vmem:[%s239 + $0x8] sm:$0xff]
      %v364 = vld [vmem:[%s239 + $0x10] sm:$0xff]
      %v365 = vld [vmem:[%s239 + $0x18] sm:$0xff]
      %v366 = vadd.f32 %v358, %v362
      %v367 = vadd.f32 %v359, %v363
      %v368 = vadd.f32 %v360, %v364
      %v369 = vadd.f32 %v361, %v365
      %vm370 = vcmp.ge.f32.partialorder %v366, 0.0
      %vm371 = vcmp.ge.f32.partialorder %v367, 0.0
      %vm372 = vcmp.ge.f32.partialorder %v368, 0.0
      %vm373 = vcmp.ge.f32.partialorder %v369, 0.0
      %v374 = vld [vmem:[%s4] sm:$0xff]
      %v375 = vld [vmem:[%s4 + $0x8] sm:$0xff]
      %v376 = vld [vmem:[%s4 + $0x10] sm:$0xff]
      %v377 = vld [vmem:[%s4 + $0x18] sm:$0xff]
      %379 = vset.pattern.permute.xlu0 0
      %380 = vperm.xlu0 %379, %v374
      %v381 = vpop.permute.xlu0 %380
      %384 = vset.pattern.permute.xlu0 0
      %385 = vperm.xlu0 %384, %v375
      %v386 = vpop.permute.xlu0 %385
      %389 = vset.pattern.permute.xlu0 0
      %390 = vperm.xlu0 %389, %v376
      %v391 = vpop.permute.xlu0 %390
      %394 = vset.pattern.permute.xlu0 0
      %395 = vperm.xlu0 %394, %v377
      %v396 = vpop.permute.xlu0 %395
      %v398 = vmul.f32 %v381, %v366
      %v399 = vmul.f32 %v386, %v367
      %v400 = vmul.f32 %v391, %v368
      %v401 = vmul.f32 %v396, %v369
      %v402 = vsel %vm370, %v366, %v398
      %v403 = vsel %vm371, %v367, %v399
      %v404 = vsel %vm372, %v368, %v400
      %v405 = vsel %vm373, %v369, %v401
      %406 = vst.msk [vmem:[%s244] sm:$0xff] %vm249, %v402
      %407 = vst.msk [vmem:[%s244 + $0x8] sm:$0xff] %vm249, %v403
      %408 = vst.msk [vmem:[%s244 + $0x10] sm:$0xff] %vm249, %v404
      %409 = vst.msk [vmem:[%s244 + $0x18] sm:$0xff] %vm249, %v405
      %p410 = scmp.lt.s32.totalorder %s16, 1
      %s411 = scalar_select %p410, %s16, 1
      %s412 = smul.addr %s411, 4
      %s413 = smul.addr %s412, 8
      %s414 = scalar_lea.vmem %s5, %s413
      // Predicated region
      $region41: #{main_forward.143} parent=39 // pred_check
        %p415 = pneg %p149
      $region42: #{main_forward.143} parent=39 // pred_check_branch
        %417 = sbr.rel (%p415) target = $region44
      $region43: #{main_forward.143} parent=39 // pred_region
        _
      $region44: #{main_forward.143} parent=39 // pred_fallthru
        _
    $region40: #{main_forward.143} parent=5 // pred_fallthru
      _
    %p418 = scmp.le.s32.totalorder 2, %s11
    // Predicated region
    $region45: #{main_forward.143} parent=5 // pred_check
      %p419 = pneg %p418
    $region46: #{main_forward.143} parent=5 // pred_check_branch
      %421 = sbr.rel (%p419) target = $region48
    $region47: #{main_forward.143} parent=5 // pred_region
      %s422 = ssub.s32 %s11, 2
      // Predicated region
      $region49: #{main_forward.143} parent=47 // pred_check
        %p423 = pneg %p155
      $region50: #{main_forward.143} parent=47 // pred_check_branch
        %425 = sbr.rel (%p423) target = $region52
      $region51: #{main_forward.143} parent=47 // pred_region
        %p426 = scmp.lt.s32.totalorder %s17, 1
        %s427 = scalar_select %p426, %s17, 1
        %s428 = smul.addr %s427, 4
        %s429 = smul.addr %s428, 8
        %s430 = scalar_lea.vmem %s5, %s429
      $region52: #{main_forward.143} parent=47 // pred_fallthru
        _
    $region48: #{main_forward.143} parent=5 // pred_fallthru
      _
  $region6: #{main_forward.143} parent=0 // loop_footer
    %s15 = sadd.s32 1, %s11
  $region7: #{main_forward.143} parent=0 // loop_footer_branch
    %10 = sbr.rel target = $region3
  $region8: #{main_forward.143} parent=0 // loop_exit
    _

// kernel: main_forward.158
$region0: #{main_forward.158}
  #allocation0 [shape = 'u32[]', space=smem, size = 0x4, offset = 0x4, fixed_abs, tag = 'smem constant byte address 0x4 - core index']
  #allocation1 [shape = 'u32[144,128]{1,0:T(1,128)}', space=vmem, size = 0x12000, scoped, tag = 'internal scratch']
  %s0 = inlined_call_operand.vmem [shape: bf16[16,32], index: 0, kind: input, shape index: {}]
  %s1 = inlined_call_operand.vmem [shape: bf16[32,8], index: 1, kind: input, shape index: {}]
  %s2 = inlined_call_operand.vmem [shape: f32[16,8], index: 2, kind: output, shape index: {}]
  %s3 = sld [smem:[#allocation0]]
  $region18: #{main_forward.158} parent=0
    _
  %s5 = ssub.s32 1, %s3
  %s6 = scalar_select 0, %s5, %s3
  // Predicated region
  $region2: #{main_forward.158} parent=0 // pred_check
    _
  $region3: #{main_forward.158} parent=0 // pred_check_branch
    %8 = sbr.rel (0) target = $region5
  $region4: #{main_forward.158} parent=0 // pred_region
    _
  $region5: #{main_forward.158} parent=0 // pred_fallthru
    _
  // Predicated region
  $region6: #{main_forward.158} parent=0 // pred_check
    _
  $region7: #{main_forward.158} parent=0 // pred_check_branch
    %10 = sbr.rel (0) target = $region9
  $region8: #{main_forward.158} parent=0 // pred_region
    _
  $region9: #{main_forward.158} parent=0 // pred_fallthru
    _
  %v12 = vld [vmem:[%s0] sm:$0xf]
  %v13 = vld [vmem:[%s0 + $0x4] sm:$0xf]
  %v14 = vld [vmem:[%s1] sm:$0xf]
  %v15 = vld [vmem:[%s1 + $0x4] sm:$0xf]
  %v16 = vld [vmem:[%s1 + $0x8] sm:$0xf]
  %v17 = vld [vmem:[%s1 + $0xc] sm:$0xf]
  %v20 = vunpack.c.l.b16 %v12
  %v21 = vunpack.c.l.b16 %v13
  %v22 = vpack.c.b16 %v21, %v20
  %v27 = vunpack.c.l.b16 %v14
  %v28 = vunpack.c.l.b16 %v15
  %v29 = vunpack.c.l.b16 %v16
  %v30 = vunpack.c.l.b16 %v17
  %v31 = vpack.c.b16 %v28, %v27
  %v32 = vpack.c.b16 %v30, %v29
  %vm35 = vcmask 261120
  %v37 = vsel %vm35, %v22, 0
  %39 = vmatprep.subr.bf16.mxu0 0
  %40 = vmatpush1.bf16.msra.mxu0 0
  %41 = vmatprep.subr.bf16.mxu0 0
  %42 = vmatpush1.bf16.msra.mxu0 0
  %43 = vmatprep.subr.bf16.mxu0 0
  %44 = vmatpush1.bf16.msra.mxu0 0
  %45 = vmatprep.subr.bf16.mxu0 0
  %46 = vmatpush1.bf16.msra.mxu0 0
  %47 = vmatprep.subr.bf16.mxu0 0
  %48 = vmatpush1.bf16.msra.mxu0 0
  %49 = vmatprep.subr.bf16.mxu0 0
  %50 = vmatpush1.bf16.msra.mxu0 0
  %51 = vmatprep.subr.bf16.mxu0 0
  %52 = vmatpush1.bf16.msra.mxu0 %v32
  %53 = vmatprep.subr.bf16.mxu0 0
  %54 = vmatpush1.bf16.msra.mxu0 %v31
  %55 = vmatprep.subr.bf16.mxu0 0
  %56 = vmatpush2.bf16.msra.mxu0 0
  %57 = vmatprep.subr.bf16.mxu0 0
  %58 = vmatpush2.bf16.msra.mxu0 0
  %59 = vmatprep.subr.bf16.mxu0 0
  %60 = vmatpush2.bf16.msra.mxu0 0
  %61 = vmatprep.subr.bf16.mxu0 0
  %62 = vmatpush2.bf16.msra.mxu0 0
  %63 = vmatprep.subr.bf16.mxu0 0
  %64 = vmatpush2.bf16.msra.mxu0 0
  %65 = vmatprep.subr.bf16.mxu0 0
  %66 = vmatpush2.bf16.msra.mxu0 0
  %67 = vmatprep.subr.bf16.mxu0 0
  %68 = vmatpush2.bf16.msra.mxu0 0
  %69 = vmatprep.subr.bf16.mxu0 0
  %70 = vmatpush2.bf16.msra.mxu0 0
  %71 = vmatprep.mubr.bf16.mxu0 0
  %72 = vmatmul.mubr.bf16.gmra.mxu0 %v37
  %v73 = vpop.f32.mrf.mxu0
  %v74 = vadd.f32 0.0, %v73
  %v75 = vpop.f32.mrf.mxu0
  %v76 = vpop.f32.mrf.mxu0
  %v77 = vadd.f32 0.0, %v76
  %v78 = vpop.f32.mrf.mxu0
  %79 = vdwg.mxu0
  %vm80 = vcmask 64512
  %81 = vst.msk [vmem:[%s2] sm:$0xff] %vm80, %v74
  %82 = vst.msk [vmem:[%s2 + $0x8] sm:$0xff] %vm80, %v77
  // Predicated region
  $region10: #{main_forward.158} parent=0 // pred_check
    _
  $region11: #{main_forward.158} parent=0 // pred_check_branch
    %84 = sbr.rel (0) target = $region13
  $region12: #{main_forward.158} parent=0 // pred_region
    _
  $region13: #{main_forward.158} parent=0 // pred_fallthru
    _
  // Predicated region
  $region14: #{main_forward.158} parent=0 // pred_check
    _
  $region15: #{main_forward.158} parent=0 // pred_check_branch
    %86 = sbr.rel (0) target = $region17
  $region16: #{main_forward.158} parent=0 // pred_region
    _
  $region17: #{main_forward.158} parent=0 // pred_fallthru
    _

// kernel: main_forward.146
$region0: #{main_forward.146}
  #allocation0 [shape = 'u32[]', space=smem, size = 0x4, offset = 0x4, fixed_abs, tag = 'smem constant byte address 0x4 - core index']
  #allocation1 [shape = 'u32[144,128]{1,0:T(1,128)}', space=vmem, size = 0x12000, scoped, tag = 'internal scratch']
  #allocation2 [shape = 'f32[1,1]{1,0:T(1,128)S(1)}', space=vmem, size = 0x200, scoped, tag = 'scoped memory for main_forward.146']
  %s0 = inlined_call_operand.vmem [shape: f32[2,32,4], index: 0, kind: input, shape index: {}]
  %s1 = inlined_call_operand.vmem [shape: f32[32,1], index: 1, kind: input, shape index: {}]
  %s2 = inlined_call_operand.<no memory space> [shape: f32[1,1], index: 2, kind: input, shape index: {}]
  %s3 = inlined_call_operand.vmem [shape: f32[8,32], index: 3, kind: input, shape index: {}]
  %s4 = inlined_call_operand.vmem [shape: f32[8,1], index: 4, kind: input, shape index: {}]
  %s5 = inlined_call_operand.vmem [shape: f32[8,1], index: 5, kind: input, shape index: {}]
  %s6 = inlined_call_operand.vmem [shape: f32[8,1], index: 6, kind: input, shape index: {}]
  %s7 = inlined_call_operand.vmem [shape: f32[8,1], index: 7, kind: input, shape index: {}]
  %s8 = inlined_call_operand.vmem [shape: f32[32,8], index: 8, kind: input, shape index: {}]
  %s9 = inlined_call_operand.vmem [shape: f32[32,1], index: 9, kind: input, shape index: {}]
  %s10 = inlined_call_operand.vmem [shape: f32[2,32,4], index: 10, kind: output, shape index: {}]
  %s11 = sld [smem:[#allocation0]]
  $region73: #{main_forward.146} parent=0
    _
  %s13 = ssub.s32 1, %s11
  %s14 = scalar_select 0, %s13, %s11
  %v15 = vstv %s2
  %16 = vst [vmem:[#allocation2] sm:$0x1] %v15
  loop: start=0, step=1, limit=4
  $region2: #{main_forward.146} parent=0 // loop_pre_header
    _
  $region3: #{main_forward.146} parent=0 // loop_header
    %s18 = sphi 0, %s22
    %p19 = scmp.ge.s32.totalorder %s18, 4
    %s28 = sphi 0, %s30
    %s31 = sphi 0, %s28
    %s32 = sphi 0, %s31
    %s48 = sphi 0, %s32
    %s52 = sphi 0, %s52
    %s54 = sphi 0, %s52
    %s55 = sphi 0, %s54
    %s69 = sphi 0, %s55
    %s73 = sphi 0, %s73
    %s75 = sphi 0, %s73
    %s76 = sphi 0, %s75
    %s90 = sphi 0, %s76
    %s94 = sphi 0, %s94
    %s96 = sphi 0, %s94
    %s97 = sphi 0, %s96
    %s111 = sphi 0, %s97
    %s115 = sphi 0, %s115
    %s117 = sphi 0, %s115
    %s118 = sphi 0, %s117
    %s132 = sphi 0, %s118
    %s136 = sphi 0, %s136
    %s138 = sphi 0, %s136
    %s139 = sphi 0, %s138
    %s153 = sphi 0, %s139
    %s157 = sphi 0, %s157
    %s159 = sphi 0, %s157
    %s160 = sphi 0, %s159
    %s174 = sphi 0, %s160
    %s178 = sphi 0, %s178
    %s180 = sphi 0, %s178
    %s181 = sphi 0, %s180
    %s195 = sphi 0, %s181
    %s199 = sphi 0, %s199
    %s201 = sphi 0, %s199
    %s202 = sphi 0, %s201
    %s216 = sphi 0, %s202
    %s220 = sphi 0, %s220
    %s222 = sphi 0, %s220
    %s223 = sphi 0, %s222
    %s237 = sphi 0, %s223
    %s243 = sphi 0, %s245
    %s246 = sphi 0, %s243
    %s247 = sphi 0, %s246
    %s263 = sphi 0, %s247
  $region4: #{main_forward.146} parent=0 // loop_header_branch
    %21 = sbr.rel (%p19) target = $region8
  $region5: #{main_forward.146} parent=0 // loop_body
    %s23 = ssub.s32 %s18, 1
    %s24 = ssub.s32 %s18, 2
    %s25 = sadd.s32 %s18, 1
    %s26 = ssub.s32 %s18, %s25
    %p27 = scmp.eq.s32.totalorder %s26, 0
    %s29 = sadd.s32 %s28, 1
    %s30 = scalar_select %p27, %s28, %s29
    %p33 = pneg %p27
    %p34 = scmp.eq.s32.totalorder %s18, 1
    %p35 = por %p33, %p34
    %p36 = scmp.ne.s32.totalorder %s28, %s31
    %p37 = scmp.eq.s32.totalorder %s18, 0
    %p38 = por %p36, %p37
    %p39 = scmp.ne.s32.totalorder %s28, %s31
    %p40 = scmp.eq.s32.totalorder %s23, 1
    %p41 = por %p39, %p40
    %p42 = scmp.ne.s32.totalorder %s31, %s32
    %p43 = scmp.eq.s32.totalorder %s23, 0
    %p44 = por %p42, %p43
    %p45 = scmp.ne.s32.totalorder %s31, %s32
    %p46 = scmp.eq.s32.totalorder %s24, 1
    %p47 = por %p45, %p46
    %p49 = scmp.ne.s32.totalorder %s32, %s48
    %p50 = scmp.eq.s32.totalorder %s24, 0
    %p51 = por %p49, %p50
    %s53 = sadd.s32 %s52, 1
    %p56 = scmp.eq.s32.totalorder %s18, 1
    %p57 = scmp.ne.s32.totalorder %s52, %s54
    %p58 = scmp.eq.s32.totalorder %s18, 0
    %p59 = por %p57, %p58
    %p60 = scmp.ne.s32.totalorder %s52, %s54
    %p61 = scmp.eq.s32.totalorder %s23, 1
    %p62 = por %p60, %p61
    %p63 = scmp.ne.s32.totalorder %s54, %s55
    %p64 = scmp.eq.s32.totalorder %s23, 0
    %p65 = por %p63, %p64
    %p66 = scmp.ne.s32.totalorder %s54, %s55
    %p67 = scmp.eq.s32.totalorder %s24, 1
    %p68 = por %p66, %p67
    %p70 = scmp.ne.s32.totalorder %s55, %s69
    %p71 = scmp.eq.s32.totalorder %s24, 0
    %p72 = por %p70, %p71
    %s74 = sadd.s32 %s73, 1
    %p77 = scmp.eq.s32.totalorder %s18, 1
    %p78 = scmp.ne.s32.totalorder %s73, %s75
    %p79 = scmp.eq.s32.totalorder %s18, 0
    %p80 = por %p78, %p79
    %p81 = scmp.ne.s32.totalorder %s73, %s75
    %p82 = scmp.eq.s32.totalorder %s23, 1
    %p83 = por %p81, %p82
    %p84 = scmp.ne.s32.totalorder %s75, %s76
    %p85 = scmp.eq.s32.totalorder %s23, 0
    %p86 = por %p84, %p85
    %p87 = scmp.ne.s32.totalorder %s75, %s76
    %p88 = scmp.eq.s32.totalorder %s24, 1
    %p89 = por %p87, %p88
    %p91 = scmp.ne.s32.totalorder %s76, %s90
    %p92 = scmp.eq.s32.totalorder %s24, 0
    %p93 = por %p91, %p92
    %s95 = sadd.s32 %s94, 1
    %p98 = scmp.eq.s32.totalorder %s18, 1
    %p99 = scmp.ne.s32.totalorder %s94, %s96
    %p100 = scmp.eq.s32.totalorder %s18, 0
    %p101 = por %p99, %p100
    %p102 = scmp.ne.s32.totalorder %s94, %s96
    %p103 = scmp.eq.s32.totalorder %s23, 1
    %p104 = por %p102, %p103
    %p105 = scmp.ne.s32.totalorder %s96, %s97
    %p106 = scmp.eq.s32.totalorder %s23, 0
    %p107 = por %p105, %p106
    %p108 = scmp.ne.s32.totalorder %s96, %s97
    %p109 = scmp.eq.s32.totalorder %s24, 1
    %p110 = por %p108, %p109
    %p112 = scmp.ne.s32.totalorder %s97, %s111
    %p113 = scmp.eq.s32.totalorder %s24, 0
    %p114 = por %p112, %p113
    %s116 = sadd.s32 %s115, 1
    %p119 = scmp.eq.s32.totalorder %s18, 1
    %p120 = scmp.ne.s32.totalorder %s115, %s117
    %p121 = scmp.eq.s32.totalorder %s18, 0
    %p122 = por %p120, %p121
    %p123 = scmp.ne.s32.totalorder %s115, %s117
    %p124 = scmp.eq.s32.totalorder %s23, 1
    %p125 = por %p123, %p124
    %p126 = scmp.ne.s32.totalorder %s117, %s118
    %p127 = scmp.eq.s32.totalorder %s23, 0
    %p128 = por %p126, %p127
    %p129 = scmp.ne.s32.totalorder %s117, %s118
    %p130 = scmp.eq.s32.totalorder %s24, 1
    %p131 = por %p129, %p130
    %p133 = scmp.ne.s32.totalorder %s118, %s132
    %p134 = scmp.eq.s32.totalorder %s24, 0
    %p135 = por %p133, %p134
    %s137 = sadd.s32 %s136, 1
    %p140 = scmp.eq.s32.totalorder %s18, 1
    %p141 = scmp.ne.s32.totalorder %s136, %s138
    %p142 = scmp.eq.s32.totalorder %s18, 0
    %p143 = por %p141, %p142
    %p144 = scmp.ne.s32.totalorder %s136, %s138
    %p145 = scmp.eq.s32.totalorder %s23, 1
    %p146 = por %p144, %p145
    %p147 = scmp.ne.s32.totalorder %s138, %s139
    %p148 = scmp.eq.s32.totalorder %s23, 0
    %p149 = por %p147, %p148
    %p150 = scmp.ne.s32.totalorder %s138, %s139
    %p151 = scmp.eq.s32.totalorder %s24, 1
    %p152 = por %p150, %p151
    %p154 = scmp.ne.s32.totalorder %s139, %s153
    %p155 = scmp.eq.s32.totalorder %s24, 0
    %p156 = por %p154, %p155
    %s158 = sadd.s32 %s157, 1
    %p161 = scmp.eq.s32.totalorder %s18, 1
    %p162 = scmp.ne.s32.totalorder %s157, %s159
    %p163 = scmp.eq.s32.totalorder %s18, 0
    %p164 = por %p162, %p163
    %p165 = scmp.ne.s32.totalorder %s157, %s159
    %p166 = scmp.eq.s32.totalorder %s23, 1
    %p167 = por %p165, %p166
    %p168 = scmp.ne.s32.totalorder %s159, %s160
    %p169 = scmp.eq.s32.totalorder %s23, 0
    %p170 = por %p168, %p169
    %p171 = scmp.ne.s32.totalorder %s159, %s160
    %p172 = scmp.eq.s32.totalorder %s24, 1
    %p173 = por %p171, %p172
    %p175 = scmp.ne.s32.totalorder %s160, %s174
    %p176 = scmp.eq.s32.totalorder %s24, 0
    %p177 = por %p175, %p176
    %s179 = sadd.s32 %s178, 1
    %p182 = scmp.eq.s32.totalorder %s18, 1
    %p183 = scmp.ne.s32.totalorder %s178, %s180
    %p184 = scmp.eq.s32.totalorder %s18, 0
    %p185 = por %p183, %p184
    %p186 = scmp.ne.s32.totalorder %s178, %s180
    %p187 = scmp.eq.s32.totalorder %s23, 1
    %p188 = por %p186, %p187
    %p189 = scmp.ne.s32.totalorder %s180, %s181
    %p190 = scmp.eq.s32.totalorder %s23, 0
    %p191 = por %p189, %p190
    %p192 = scmp.ne.s32.totalorder %s180, %s181
    %p193 = scmp.eq.s32.totalorder %s24, 1
    %p194 = por %p192, %p193
    %p196 = scmp.ne.s32.totalorder %s181, %s195
    %p197 = scmp.eq.s32.totalorder %s24, 0
    %p198 = por %p196, %p197
    %s200 = sadd.s32 %s199, 1
    %p203 = scmp.eq.s32.totalorder %s18, 1
    %p204 = scmp.ne.s32.totalorder %s199, %s201
    %p205 = scmp.eq.s32.totalorder %s18, 0
    %p206 = por %p204, %p205
    %p207 = scmp.ne.s32.totalorder %s199, %s201
    %p208 = scmp.eq.s32.totalorder %s23, 1
    %p209 = por %p207, %p208
    %p210 = scmp.ne.s32.totalorder %s201, %s202
    %p211 = scmp.eq.s32.totalorder %s23, 0
    %p212 = por %p210, %p211
    %p213 = scmp.ne.s32.totalorder %s201, %s202
    %p214 = scmp.eq.s32.totalorder %s24, 1
    %p215 = por %p213, %p214
    %p217 = scmp.ne.s32.totalorder %s202, %s216
    %p218 = scmp.eq.s32.totalorder %s24, 0
    %p219 = por %p217, %p218
    %s221 = sadd.s32 %s220, 1
    %p224 = scmp.eq.s32.totalorder %s18, 1
    %p225 = scmp.ne.s32.totalorder %s220, %s222
    %p226 = scmp.eq.s32.totalorder %s18, 0
    %p227 = por %p225, %p226
    %p228 = scmp.ne.s32.totalorder %s220, %s222
    %p229 = scmp.eq.s32.totalorder %s23, 1
    %p230 = por %p228, %p229
    %p231 = scmp.ne.s32.totalorder %s222, %s223
    %p232 = scmp.eq.s32.totalorder %s23, 0
    %p233 = por %p231, %p232
    %p234 = scmp.ne.s32.totalorder %s222, %s223
    %p235 = scmp.eq.s32.totalorder %s24, 1
    %p236 = por %p234, %p235
    %p238 = scmp.ne.s32.totalorder %s223, %s237
    %p239 = scmp.eq.s32.totalorder %s24, 0
    %p240 = por %p238, %p239
    %s241 = ssub.s32 %s18, %s25
    %p242 = scmp.eq.s32.totalorder %s241, 0
    %s244 = sadd.s32 %s243, 1
    %s245 = scalar_select %p242, %s243, %s244
    %p248 = pneg %p242
    %p249 = scmp.eq.s32.totalorder %s18, 1
    %p250 = por %p248, %p249
    %p251 = scmp.ne.s32.totalorder %s243, %s246
    %p252 = scmp.eq.s32.totalorder %s18, 0
    %p253 = por %p251, %p252
    %p254 = scmp.ne.s32.totalorder %s243, %s246
    %p255 = scmp.eq.s32.totalorder %s23, 1
    %p256 = por %p254, %p255
    %p257 = scmp.ne.s32.totalorder %s246, %s247
    %p258 = scmp.eq.s32.totalorder %s23, 0
    %p259 = por %p257, %p258
    %p260 = scmp.ne.s32.totalorder %s246, %s247
    %p261 = scmp.eq.s32.totalorder %s24, 1
    %p262 = por %p260, %p261
    %p264 = scmp.ne.s32.totalorder %s247, %s263
    %p265 = scmp.eq.s32.totalorder %s24, 0
    %p266 = por %p264, %p265
    %p267 = scmp.le.s32.totalorder 1, %s18
    %p268 = scmp.lt.s32.totalorder %s18, 3
    %p269 = pnand %p267, %p268
    %p270 = pneg %p269
    // Predicated region
    $region9: #{main_forward.146} parent=5 // pred_check
      _
    $region10: #{main_forward.146} parent=5 // pred_check_branch
      %272 = sbr.rel (%p269) target = $region12
    $region11: #{main_forward.146} parent=5 // pred_region
      %s273 = ssub.s32 %s18, 1
      // Predicated region
      $region13: #{main_forward.146} parent=11 // pred_check
        %p274 = pneg %p65
      $region14: #{main_forward.146} parent=11 // pred_check_branch
        %276 = sbr.rel (%p274) target = $region16
      $region15: #{main_forward.146} parent=11 // pred_region
        _
      $region16: #{main_forward.146} parent=11 // pred_fallthru
        _
      // Predicated region
      $region17: #{main_forward.146} parent=11 // pred_check
        %p277 = pneg %p86
      $region18: #{main_forward.146} parent=11 // pred_check_branch
        %279 = sbr.rel (%p277) target = $region20
      $region19: #{main_forward.146} parent=11 // pred_region
        _
      $region20: #{main_forward.146} parent=11 // pred_fallthru
        _
      // Predicated region
      $region21: #{main_forward.146} parent=11 // pred_check
        %p280 = pneg %p107
      $region22: #{main_forward.146} parent=11 // pred_check_branch
        %282 = sbr.rel (%p280) target = $region24
      $region23: #{main_forward.146} parent=11 // pred_region
        _
      $region24: #{main_forward.146} parent=11 // pred_fallthru
        _
      // Predicated region
      $region25: #{main_forward.146} parent=11 // pred_check
        %p283 = pneg %p128
      $region26: #{main_forward.146} parent=11 // pred_check_branch
        %285 = sbr.rel (%p283) target = $region28
      $region27: #{main_forward.146} parent=11 // pred_region
        _
      $region28: #{main_forward.146} parent=11 // pred_fallthru
        _
      // Predicated region
      $region29: #{main_forward.146} parent=11 // pred_check
        %p286 = pneg %p149
      $region30: #{main_forward.146} parent=11 // pred_check_branch
        %288 = sbr.rel (%p286) target = $region32
      $region31: #{main_forward.146} parent=11 // pred_region
        _
      $region32: #{main_forward.146} parent=11 // pred_fallthru
        _
      // Predicated region
      $region33: #{main_forward.146} parent=11 // pred_check
        %p289 = pneg %p170
      $region34: #{main_forward.146} parent=11 // pred_check_branch
        %291 = sbr.rel (%p289) target = $region36
      $region35: #{main_forward.146} parent=11 // pred_region
        _
      $region36: #{main_forward.146} parent=11 // pred_fallthru
        _
      // Predicated region
      $region37: #{main_forward.146} parent=11 // pred_check
        %p292 = pneg %p191
      $region38: #{main_forward.146} parent=11 // pred_check_branch
        %294 = sbr.rel (%p292) target = $region40
      $region39: #{main_forward.146} parent=11 // pred_region
        _
      $region40: #{main_forward.146} parent=11 // pred_fallthru
        _
      // Predicated region
      $region41: #{main_forward.146} parent=11 // pred_check
        %p295 = pneg %p212
      $region42: #{main_forward.146} parent=11 // pred_check_branch
        %297 = sbr.rel (%p295) target = $region44
      $region43: #{main_forward.146} parent=11 // pred_region
        _
      $region44: #{main_forward.146} parent=11 // pred_fallthru
        _
      // Predicated region
      $region45: #{main_forward.146} parent=11 // pred_check
        %p298 = pneg %p233
      $region46: #{main_forward.146} parent=11 // pred_check_branch
        %300 = sbr.rel (%p298) target = $region48
      $region47: #{main_forward.146} parent=11 // pred_region
        _
      $region48: #{main_forward.146} parent=11 // pred_fallthru
        _
    $region12: #{main_forward.146} parent=5 // pred_fallthru
      _
    %p301 = scmp.lt.s32.totalorder %s18, 2
    // Predicated region
    $region49: #{main_forward.146} parent=5 // pred_check
      %p302 = pneg %p301
    $region50: #{main_forward.146} parent=5 // pred_check_branch
      %304 = sbr.rel (%p302) target = $region52
    $region51: #{main_forward.146} parent=5 // pred_region
      // Predicated region
      $region53: #{main_forward.146} parent=51 // pred_check
        %p305 = pneg %p38
      $region54: #{main_forward.146} parent=51 // pred_check_branch
        %307 = sbr.rel (%p305) target = $region56
      $region55: #{main_forward.146} parent=51 // pred_region
        %p308 = scmp.lt.s32.totalorder %s18, 1
        %s309 = scalar_select %p308, %s18, 1
        %s310 = smul.addr %s309, 4
        %s311 = smul.addr %s310, 8
        %s312 = scalar_lea.vmem %s0, %s311
      $region56: #{main_forward.146} parent=51 // pred_fallthru
        _
    $region52: #{main_forward.146} parent=5 // pred_fallthru
      _
    %p313 = scmp.le.s32.totalorder 1, %s18
    %p314 = scmp.lt.s32.totalorder %s18, 3
    %p315 = pnand %p313, %p314
    %p316 = pneg %p315
    // Predicated region
    $region57: #{main_forward.146} parent=5 // pred_check
      _
    $region58: #{main_forward.146} parent=5 // pred_check_branch
      %318 = sbr.rel (%p315) target = $region60
    $region59: #{main_forward.146} parent=5 // pred_region
      %s319 = ssub.s32 %s18, 1
      %p320 = scmp.lt.s32.totalorder %s23, 1
      %s321 = scalar_select %p320, %s23, 1
      %s322 = smul.addr %s321, 4
      %s323 = smul.addr %s322, 8
      %s324 = scalar_lea.vmem %s0, %s323
      %p325 = pneg %p44
      %p326 = pneg %p41
      %p327 = pneg %p65
      %p328 = pneg %p62
      %p329 = pneg %p86
      %p330 = pneg %p83
      %p331 = pneg %p107
      %p332 = pneg %p104
      %p333 = pneg %p128
      %p334 = pneg %p125
      %p335 = pneg %p149
      %p336 = pneg %p146
      %p337 = pneg %p170
      %p338 = pneg %p167
      %p339 = pneg %p191
      %p340 = pneg %p188
      %p341 = pneg %p212
      %p342 = pneg %p209
      %p343 = pneg %p233
      %p344 = pneg %p230
      %p345 = pneg %p259
      %p346 = pneg %p256
      %p347 = scmp.lt.s32.totalorder %s23, 1
      %s348 = scalar_select %p347, %s23, 1
      %s349 = smul.addr %s348, 4
      %s350 = smul.addr %s349, 8
      %s351 = scalar_lea.vmem %s10, %s350
      %p352 = scmp.lt.s32.totalorder %s23, 1
      %s353 = scalar_select %p352, %s23, 1
      %s354 = smul.addr %s353, 4
      %s355 = smul.addr %s354, 8
      %s356 = scalar_lea.vmem %s0, %s355
      %p357 = scmp.lt.s32.totalorder %s23, 1
      %s358 = scalar_select %p357, %s23, 1
      %s359 = smul.addr %s358, 4
      %s360 = smul.addr %s359, 8
      %s361 = scalar_lea.vmem %s10, %s360
      %v362 = vld [vmem:[%s356] sm:$0xff]
      %v363 = vld [vmem:[%s356 + $0x8] sm:$0xff]
      %v364 = vld [vmem:[%s356 + $0x10] sm:$0xff]
      %v365 = vld [vmem:[%s356 + $0x18] sm:$0xff]
      %v366 = vld [vmem:[%s1] sm:$0xff]
      %v367 = vld [vmem:[%s1 + $0x8] sm:$0xff]
      %v368 = vld [vmem:[%s1 + $0x10] sm:$0xff]
      %v369 = vld [vmem:[%s1 + $0x18] sm:$0xff]
      %371 = vset.pattern.permute.xlu0 0
      %372 = vperm.xlu0 %371, %v366
      %v373 = vpop.permute.xlu0 %372
      %376 = vset.pattern.permute.xlu0 0
      %377 = vperm.xlu0 %376, %v367
      %v378 = vpop.permute.xlu0 %377
      %381 = vset.pattern.permute.xlu0 0
      %382 = vperm.xlu0 %381, %v368
      %v383 = vpop.permute.xlu0 %382
      %386 = vset.pattern.permute.xlu0 0
      %387 = vperm.xlu0 %386, %v369
      %v388 = vpop.permute.xlu0 %387
      %v390 = vmul.f32 %v362, %v373
      %v391 = vmul.f32 %v363, %v378
      %v392 = vmul.f32 %v364, %v383
      %v393 = vmul.f32 %v365, %v388
      %vm394 = vcmask 31744
      %v395 = vsel %vm394, %v390, 0.0
      %v396 = vsel %vm394, %v391, 0.0
      %v397 = vadd.f32 %v395, %v396
      %v398 = vsel %vm394, %v392, 0.0
      %v399 = vadd.f32 %v397, %v398
      %v400 = vsel %vm394, %v393, 0.0
      %v401 = vadd.f32 %v399, %v400
      %v402 = vrot.slane %v401, 4
      %v403 = vadd.f32 %v401, %v402
      %v404 = vrot.slane %v403, 2
      %v405 = vadd.f32 %v403, %v404
      %v406 = vrot.slane %v405, 1
      %v407 = vadd.f32 %v405, %v406
      %v408 = vld [vmem:[#allocation2] sm:$0x1]
      %410 = vset.pattern.permute.xlu0 0
      %411 = vperm.xlu0 %410, %v408
      %v412 = vpop.permute.xlu0 %411
      %v414 = vlaneseq
      %v415 = vshrl.u32 %v414, 7
      %v416 = vsub.s32 0, %v415
      %v417 = vrot.slane %v412, %v416
      %v418 = vadd.f32 %v407, %v417
      %v419 = vsel %vm394, %v418, -inf
      %420 = vmax.xlane.f32.xlu0 %v419
      %v421 = vpop.xlane.xlu0 %420
      %s422 = vtos %v421
      %v423 = vstv %s422
      %v424 = vsub.f32 %v418, %v423
      %v425 = vmul.f32 %v424, 1.442695
      %v426 = vpow.pop %v425
      %vm427 = vcmask 24576
      %v428 = vsel %vm427, %v426, 0.0
      %429 = vadd.xlane.f32.xlu0 %v428
      %v430 = vpop.xlane.xlu0 %429
      %v431 = vrot.slane %v430, 4
      %v432 = vadd.f32 %v430, %v431
      %v433 = vrot.slane %v432, 2
      %v434 = vadd.f32 %v432, %v433
      %v435 = vrot.slane %v434, 1
      %v436 = vadd.f32 %v434, %v435
      %s437 = vtos %v436
      %v438 = vstv %s437
      %v439 = vrcp.pop %v438
      %v440 = vmul.f32 %v426, %v439
      %v441 = vmul.f32 %v362, %v440
      %v442 = vmul.f32 %v363, %v440
      %v443 = vmul.f32 %v364, %v440
      %v444 = vmul.f32 %v365, %v440
      %v445 = vsel %vm394, %v441, 0.0
      %446 = vadd.xlane.f32.xlu0 %v445
      %v447 = vpop.xlane.xlu0 %446
      %v448 = vsel %vm394, %v442, 0.0
      %449 = vadd.xlane.f32.xlu0 %v448
      %v450 = vpop.xlane.xlu0 %449
      %v451 = vsel %vm394, %v443, 0.0
      %452 = vadd.xlane.f32.xlu0 %v451
      %v453 = vpop.xlane.xlu0 %452
      %v454 = vsel %vm394, %v444, 0.0
      %455 = vadd.xlane.f32.xlu0 %v454
      %v456 = vpop.xlane.xlu0 %455
      %v457 = vld [vmem:[%s3] sm:$0xff]
      %v458 = vld [vmem:[%s4] sm:$0xff]
      %vm459 = vcmask 261120
      %v461 = vsel %vm459, %v457, 0
      %463 = vmatprep.subr.mxu0 0.0
      %464 = vmatpush1.msra.mxu0 0.0
      %465 = vmatprep.subr.mxu0 0.0
      %466 = vmatpush1.msra.mxu0 0.0
      %467 = vmatprep.subr.mxu0 0.0
      %468 = vmatpush1.msra.mxu0 0.0
      %469 = vmatprep.subr.mxu0 0.0
      %470 = vmatpush1.msra.mxu0 0.0
      %471 = vmatprep.subr.mxu0 0.0
      %472 = vmatpush1.msra.mxu0 0.0
      %473 = vmatprep.subr.mxu0 0.0
      %474 = vmatpush1.msra.mxu0 0.0
      %475 = vmatprep.subr.mxu0 0.0
      %476 = vmatpush1.msra.mxu0 0.0
      %477 = vmatprep.subr.mxu0 0.0
      %478 = vmatpush1.msra.mxu0 0.0
      %479 = vmatprep.subr.mxu0 0.0
      %480 = vmatpush1.msra.mxu0 0.0
      %481 = vmatprep.subr.mxu0 0.0
      %482 = vmatpush1.msra.mxu0 0.0
      %483 = vmatprep.subr.mxu0 0.0
      %484 = vmatpush1.msra.mxu0 0.0
      %485 = vmatprep.subr.mxu0 0.0
      %486 = vmatpush1.msra.mxu0 0.0
      %487 = vmatprep.subr.mxu0 0.0
      %488 = vmatpush1.msra.mxu0 %v456
      %489 = vmatprep.subr.mxu0 0.0
      %490 = vmatpush1.msra.mxu0 %v453
      %491 = vmatprep.subr.mxu0 0.0
      %492 = vmatpush1.msra.mxu0 %v450
      %493 = vmatprep.subr.mxu0 0.0
      %494 = vmatpush1.msra.mxu0 %v447
      %495 = vmatprep.subr.mxu0 0.0
      %496 = vmatpush2.msra.mxu0 0.0
      %497 = vmatprep.subr.mxu0 0.0
      %498 = vmatpush2.msra.mxu0 0.0
      %499 = vmatprep.subr.mxu0 0.0
      %500 = vmatpush2.msra.mxu0 0.0
      %501 = vmatprep.subr.mxu0 0.0
      %502 = vmatpush2.msra.mxu0 0.0
      %503 = vmatprep.subr.mxu0 0.0
      %504 = vmatpush2.msra.mxu0 0.0
      %505 = vmatprep.subr.mxu0 0.0
      %506 = vmatpush2.msra.mxu0 0.0
      %507 = vmatprep.subr.mxu0 0.0
      %508 = vmatpush2.msra.mxu0 0.0
      %509 = vmatprep.subr.mxu0 0.0
      %510 = vmatpush2.msra.mxu0 0.0
      %511 = vmatprep.subr.mxu0 0.0
      %512 = vmatpush2.msra.mxu0 0.0
      %513 = vmatprep.subr.mxu0 0.0
      %514 = vmatpush2.msra.mxu0 0.0
      %515 = vmatprep.subr.mxu0 0.0
      %516 = vmatpush2.msra.mxu0 0.0
      %517 = vmatprep.subr.mxu0 0.0
      %518 = vmatpush2.msra.mxu0 0.0
      %519 = vmatprep.subr.mxu0 0.0
      %520 = vmatpush2.msra.mxu0 0.0
      %521 = vmatprep.subr.mxu0 0.0
      %522 = vmatpush2.msra.mxu0 0.0
      %523 = vmatprep.subr.mxu0 0.0
      %524 = vmatpush2.msra.mxu0 0.0
      %525 = vmatprep.subr.mxu0 0.0
      %526 = vmatpush2.msra.mxu0 0.0
      %527 = vmatprep.mubr.f32.mxu0 0.0
      %528 = vmatmul.mubr.f32.gmra.mxu0 %v461
      %v529 = vpop.f32.mrf.mxu0
      %v530 = vadd.f32 %v458, %v529
      %v531 = vpop.f32.mrf.mxu0
      %532 = vdwg.mxu0
      %vm533 = vcmask 7168
      %v534 = vsel %vm533, %v530, 0.0
      %535 = vadd.xlane.f32.xlu0 %v534
      %v536 = vpop.xlane.xlu0 %535
      %v537 = vrot.slane %v536, 4
      %v538 = vadd.f32 %v536, %v537
      %v539 = vrot.slane %v538, 2
      %v540 = vadd.f32 %v538, %v539
      %v541 = vrot.slane %v540, 1
      %v542 = vadd.f32 %v540, %v541
      %s543 = vtos %v542
      %v544 = vrcp.pop 8.0
      %s545 = vtos %v544
      %s546 = smul.f32 %s543, %s545
      %v547 = vstv %s546
      %v548 = vsub.f32 %v530, %v547
      %v549 = vmul.f32 %v548, %v548
      %v550 = vsel %vm533, %v549, 0.0
      %551 = vadd.xlane.f32.xlu0 %v550
      %v552 = vpop.xlane.xlu0 %551
      %v553 = vrot.slane %v552, 4
      %v554 = vadd.f32 %v552, %v553
      %v555 = vrot.slane %v554, 2
      %v556 = vadd.f32 %v554, %v555
      %v557 = vrot.slane %v556, 1
      %v558 = vadd.f32 %v556, %v557
      %s559 = vtos %v558
      %v560 = vrcp.pop 8.0
      %s561 = vtos %v560
      %s562 = smul.f32 %s559, %s561
      %s563 = sadd.f32 %s562, 1e-05
      %v564 = vstv %s563
      %v565 = vrsqrt.pop %v564
      %s566 = vtos %v565
      %v567 = vstv %s566
      %v568 = vmul.f32 %v548, %v567
      %v569 = vld [vmem:[%s5] sm:$0xff]
      %v570 = vmul.f32 %v568, %v569
      %v571 = vld [vmem:[%s6] sm:$0xff]
      %v572 = vadd.f32 %v570, %v571
      %vm573 = vcmp.ge.f32.partialorder %v572, 0.0
      %v574 = vld [vmem:[%s7] sm:$0xff]
      %v575 = vmul.f32 %v574, %v572
      %v576 = vsel %vm573, %v572, %v575
      %v577 = vld [vmem:[%s8] sm:$0xff]
      %v578 = vld [vmem:[%s8 + $0x8] sm:$0xff]
      %v579 = vld [vmem:[%s8 + $0x10] sm:$0xff]
      %v580 = vld [vmem:[%s8 + $0x18] sm:$0xff]
      %v581 = vld [vmem:[%s9] sm:$0xff]
      %v582 = vld [vmem:[%s9 + $0x8] sm:$0xff]
      %v583 = vld [vmem:[%s9 + $0x10] sm:$0xff]
      %v584 = vld [vmem:[%s9 + $0x18] sm:$0xff]
      %vm585 = vcmask 64512
      %v587 = vsel %vm585, %v577, 0
      %v590 = vsel %vm585, %v578, 0
      %v593 = vsel %vm585, %v579, 0
      %v596 = vsel %vm585, %v580, 0
      %598 = vmatprep.subr.mxu0 0.0
      %599 = vmatpush1.msra.mxu0 0.0
      %600 = vmatprep.subr.mxu0 0.0
      %601 = vmatpush1.msra.mxu0 0.0
      %602 = vmatprep.subr.mxu0 0.0
      %603 = vmatpush1.msra.mxu0 0.0
      %604 = vmatprep.subr.mxu0 0.0
      %605 = vmatpush1.msra.mxu0 0.0
      %606 = vmatprep.subr.mxu0 0.0
      %607 = vmatpush1.msra.mxu0 0.0
      %608 = vmatprep.subr.mxu0 0.0
      %609 = vmatpush1.msra.mxu0 0.0
      %610 = vmatprep.subr.mxu0 0.0
      %611 = vmatpush1.msra.mxu0 0.0
      %612 = vmatprep.subr.mxu0 0.0
      %613 = vmatpush1.msra.mxu0 0.0
      %614 = vmatprep.subr.mxu0 0.0
      %615 = vmatpush1.msra.mxu0 0.0
      %616 = vmatprep.subr.mxu0 0.0
      %617 = vmatpush1.msra.mxu0 0.0
      %618 = vmatprep.subr.mxu0 0.0
      %619 = vmatpush1.msra.mxu0 0.0
      %620 = vmatprep.subr.mxu0 0.0
      %621 = vmatpush1.msra.mxu0 0.0
      %622 = vmatprep.subr.mxu0 0.0
      %623 = vmatpush1.msra.mxu0 0.0
      %624 = vmatprep.subr.mxu0 0.0
      %625 = vmatpush1.msra.mxu0 0.0
      %626 = vmatprep.subr.mxu0 0.0
      %627 = vmatpush1.msra.mxu0 0.0
      %628 = vmatprep.subr.mxu0 0.0
      %629 = vmatpush1.msra.mxu0 %v576
      %630 = vmatprep.subr.mxu0 0.0
      %631 = vmatpush2.msra.mxu0 0.0
      %632 = vmatprep.subr.mxu0 0.0
      %633 = vmatpush2.msra.mxu0 0.0
      %634 = vmatprep.subr.mxu0 0.0
      %635 = vmatpush2.msra.mxu0 0.0
      %636 = vmatprep.subr.mxu0 0.0
      %637 = vmatpush2.msra.mxu0 0.0
      %638 = vmatprep.subr.mxu0 0.0
      %639 = vmatpush2.msra.mxu0 0.0
      %640 = vmatprep.subr.mxu0 0.0
      %641 = vmatpush2.msra.mxu0 0.0
      %642 = vmatprep.subr.mxu0 0.0
      %643 = vmatpush2.msra.mxu0 0.0
      %644 = vmatprep.subr.mxu0 0.0
      %645 = vmatpush2.msra.mxu0 0.0
      %646 = vmatprep.subr.mxu0 0.0
      %647 = vmatpush2.msra.mxu0 0.0
      %648 = vmatprep.subr.mxu0 0.0
      %649 = vmatpush2.msra.mxu0 0.0
      %650 = vmatprep.subr.mxu0 0.0
      %651 = vmatpush2.msra.mxu0 0.0
      %652 = vmatprep.subr.mxu0 0.0
      %653 = vmatpush2.msra.mxu0 0.0
      %654 = vmatprep.subr.mxu0 0.0
      %655 = vmatpush2.msra.mxu0 0.0
      %656 = vmatprep.subr.mxu0 0.0
      %657 = vmatpush2.msra.mxu0 0.0
      %658 = vmatprep.subr.mxu0 0.0
      %659 = vmatpush2.msra.mxu0 0.0
      %660 = vmatprep.subr.mxu0 0.0
      %661 = vmatpush2.msra.mxu0 0.0
      %662 = vmatprep.mubr.f32.mxu0 0.0
      %663 = vmatmul.mubr.f32.gmra.mxu0 %v587
      %v664 = vpop.f32.mrf.mxu0
      %v665 = vadd.f32 %v581, %v664
      %v666 = vpop.f32.mrf.mxu0
      %667 = vmatprep.mubr.f32.mxu0 0.0
      %668 = vmatmul.mubr.f32.gmra.mxu0 %v590
      %v669 = vpop.f32.mrf.mxu0
      %v670 = vadd.f32 %v582, %v669
      %v671 = vpop.f32.mrf.mxu0
      %672 = vmatprep.mubr.f32.mxu0 0.0
      %673 = vmatmul.mubr.f32.gmra.mxu0 %v593
      %v674 = vpop.f32.mrf.mxu0
      %v675 = vadd.f32 %v583, %v674
      %v676 = vpop.f32.mrf.mxu0
      %677 = vmatprep.mubr.f32.mxu0 0.0
      %678 = vmatmul.mubr.f32.gmra.mxu0 %v596
      %v679 = vpop.f32.mrf.mxu0
      %v680 = vadd.f32 %v584, %v679
      %v681 = vpop.f32.mrf.mxu0
      %682 = vdwg.mxu0
      %684 = vset.pattern.permute.xlu0 0
      %685 = vperm.xlu0 %684, %v665
      %v686 = vpop.permute.xlu0 %685
      %689 = vset.pattern.permute.xlu0 0
      %690 = vperm.xlu0 %689, %v670
      %v691 = vpop.permute.xlu0 %690
      %694 = vset.pattern.permute.xlu0 0
      %695 = vperm.xlu0 %694, %v675
      %v696 = vpop.permute.xlu0 %695
      %699 = vset.pattern.permute.xlu0 0
      %700 = vperm.xlu0 %699, %v680
      %v701 = vpop.permute.xlu0 %700
      %v703 = vadd.f32 %v362, %v686
      %v704 = vadd.f32 %v363, %v691
      %v705 = vadd.f32 %v364, %v696
      %v706 = vadd.f32 %v365, %v701
      %707 = vst.msk [vmem:[%s361] sm:$0xff] %vm394, %v703
      %708 = vst.msk [vmem:[%s361 + $0x8] sm:$0xff] %vm394, %v704
      %709 = vst.msk [vmem:[%s361 + $0x10] sm:$0xff] %vm394, %v705
      %710 = vst.msk [vmem:[%s361 + $0x18] sm:$0xff] %vm394, %v706
      %p711 = scmp.lt.s32.totalorder %s23, 1
      %s712 = scalar_select %p711, %s23, 1
      %s713 = smul.addr %s712, 4
      %s714 = smul.addr %s713, 8
      %s715 = scalar_lea.vmem %s10, %s714
      // Predicated region
      $region61: #{main_forward.146} parent=59 // pred_check
        %p716 = pneg %p256
      $region62: #{main_forward.146} parent=59 // pred_check_branch
        %718 = sbr.rel (%p716) target = $region64
      $region63: #{main_forward.146} parent=59 // pred_region
        _
      $region64: #{main_forward.146} parent=59 // pred_fallthru
        _
    $region60: #{main_forward.146} parent=5 // pred_fallthru
      _
    %p719 = scmp.le.s32.totalorder 2, %s18
    // Predicated region
    $region65: #{main_forward.146} parent=5 // pred_check
      %p720 = pneg %p719
    $region66: #{main_forward.146} parent=5 // pred_check_branch
      %722 = sbr.rel (%p720) target = $region68
    $region67: #{main_forward.146} parent=5 // pred_region
      %s723 = ssub.s32 %s18, 2
      // Predicated region
      $region69: #{main_forward.146} parent=67 // pred_check
        %p724 = pneg %p262
      $region70: #{main_forward.146} parent=67 // pred_check_branch
        %726 = sbr.rel (%p724) target = $region72
      $region71: #{main_forward.146} parent=67 // pred_region
        %p727 = scmp.lt.s32.totalorder %s24, 1
        %s728 = scalar_select %p727, %s24, 1
        %s729 = smul.addr %s728, 4
        %s730 = smul.addr %s729, 8
        %s731 = scalar_lea.vmem %s10, %s730
      $region72: #{main_forward.146} parent=67 // pred_fallthru
        _
    $region68: #{main_forward.146} parent=5 // pred_fallthru
      _
  $region6: #{main_forward.146} parent=0 // loop_footer
    %s22 = sadd.s32 1, %s18
  $region7: #{main_forward.146} parent=0 // loop_footer_branch
    %17 = sbr.rel target = $region3
  $region8: #{main_forward.146} parent=0 // loop_exit
    _

// kernel: main_forward.165
$region0: #{main_forward.165}
  #allocation0 [shape = 'u32[]', space=smem, size = 0x4, offset = 0x4, fixed_abs, tag = 'smem constant byte address 0x4 - core index']
  #allocation1 [shape = 'u32[144,128]{1,0:T(1,128)}', space=vmem, size = 0x12000, scoped, tag = 'internal scratch']
  %s0 = inlined_call_operand.vmem [shape: bf16[8,16], index: 0, kind: input, shape index: {}]
  %s1 = inlined_call_operand.vmem [shape: bf16[16,32], index: 1, kind: input, shape index: {}]
  %s2 = inlined_call_operand.vmem [shape: f32[8,32], index: 2, kind: output, shape index: {}]
  %s3 = sld [smem:[#allocation0]]
  $region18: #{main_forward.165} parent=0
    _
  %s5 = ssub.s32 1, %s3
  %s6 = scalar_select 0, %s5, %s3
  // Predicated region
  $region2: #{main_forward.165} parent=0 // pred_check
    _
  $region3: #{main_forward.165} parent=0 // pred_check_branch
    %8 = sbr.rel (0) target = $region5
  $region4: #{main_forward.165} parent=0 // pred_region
    _
  $region5: #{main_forward.165} parent=0 // pred_fallthru
    _
  // Predicated region
  $region6: #{main_forward.165} parent=0 // pred_check
    _
  $region7: #{main_forward.165} parent=0 // pred_check_branch
    %10 = sbr.rel (0) target = $region9
  $region8: #{main_forward.165} parent=0 // pred_region
    _
  $region9: #{main_forward.165} parent=0 // pred_fallthru
    _
  %v12 = vld [vmem:[%s0] sm:$0xf]
  %v13 = vld [vmem:[%s1] sm:$0xf]
  %v14 = vld [vmem:[%s1 + $0x4] sm:$0xf]
  %v17 = vunpack.c.l.b16 %v13
  %v18 = vunpack.c.l.b16 %v14
  %v19 = vpack.c.b16 %v18, %v17
  %vm21 = vcmask 130048
  %v23 = vsel %vm21, %v12, 0
  %25 = vmatprep.subr.bf16.mxu0 0
  %26 = vmatpush1.bf16.msra.mxu0 0
  %27 = vmatprep.subr.bf16.mxu0 0
  %28 = vmatpush1.bf16.msra.mxu0 0
  %29 = vmatprep.subr.bf16.mxu0 0
  %30 = vmatpush1.bf16.msra.mxu0 0
  %31 = vmatprep.subr.bf16.mxu0 0
  %32 = vmatpush1.bf16.msra.mxu0 0
  %33 = vmatprep.subr.bf16.mxu0 0
  %34 = vmatpush1.bf16.msra.mxu0 0
  %35 = vmatprep.subr.bf16.mxu0 0
  %36 = vmatpush1.bf16.msra.mxu0 0
  %37 = vmatprep.subr.bf16.mxu0 0
  %38 = vmatpush1.bf16.msra.mxu0 0
  %39 = vmatprep.subr.bf16.mxu0 0
  %40 = vmatpush1.bf16.msra.mxu0 %v19
  %41 = vmatprep.subr.bf16.mxu0 0
  %42 = vmatpush2.bf16.msra.mxu0 0
  %43 = vmatprep.subr.bf16.mxu0 0
  %44 = vmatpush2.bf16.msra.mxu0 0
  %45 = vmatprep.subr.bf16.mxu0 0
  %46 = vmatpush2.bf16.msra.mxu0 0
  %47 = vmatprep.subr.bf16.mxu0 0
  %48 = vmatpush2.bf16.msra.mxu0 0
  %49 = vmatprep.subr.bf16.mxu0 0
  %50 = vmatpush2.bf16.msra.mxu0 0
  %51 = vmatprep.subr.bf16.mxu0 0
  %52 = vmatpush2.bf16.msra.mxu0 0
  %53 = vmatprep.subr.bf16.mxu0 0
  %54 = vmatpush2.bf16.msra.mxu0 0
  %55 = vmatprep.subr.bf16.mxu0 0
  %56 = vmatpush2.bf16.msra.mxu0 0
  %57 = vmatprep.mubr.bf16.mxu0 0
  %58 = vmatmul.mubr.bf16.gmra.mxu0 %v23
  %v59 = vpop.f32.mrf.mxu0
  %v60 = vadd.f32 0.0, %v59
  %v61 = vpop.f32.mrf.mxu0
  %v62 = vpop.f32.mrf.mxu0
  %v63 = vpop.f32.mrf.mxu0
  %64 = vdwg.mxu0
  %vm65 = vcmask 261120
  %66 = vst.msk [vmem:[%s2] sm:$0xff] %vm65, %v60
  // Predicated region
  $region10: #{main_forward.165} parent=0 // pred_check
    _
  $region11: #{main_forward.165} parent=0 // pred_check_branch
    %68 = sbr.rel (0) target = $region13
  $region12: #{main_forward.165} parent=0 // pred_region
    _
  $region13: #{main_forward.165} parent=0 // pred_fallthru
    _
  // Predicated region
  $region14: #{main_forward.165} parent=0 // pred_check
    _
  $region15: #{main_forward.165} parent=0 // pred_check_branch
    %70 = sbr.rel (0) target = $region17
  $region16: #{main_forward.165} parent=0 // pred_region
    _
  $region17: #{main_forward.165} parent=0 // pred_fallthru
    _

// kernel: main_forward.172
$region0: #{main_forward.172}
  #allocation0 [shape = 'u32[]', space=smem, size = 0x4, offset = 0x4, fixed_abs, tag = 'smem constant byte address 0x4 - core index']
  #allocation1 [shape = 'u32[144,128]{1,0:T(1,128)}', space=vmem, size = 0x12000, scoped, tag = 'internal scratch']
  %s0 = inlined_call_operand.vmem [shape: bf16[4,8], index: 0, kind: input, shape index: {}]
  %s1 = inlined_call_operand.vmem [shape: bf16[8,128], index: 1, kind: input, shape index: {}]
  %s2 = inlined_call_operand.vmem [shape: f32[4,128], index: 2, kind: output, shape index: {}]
  %s3 = sld [smem:[#allocation0]]
  $region18: #{main_forward.172} parent=0
    _
  %s5 = ssub.s32 1, %s3
  %s6 = scalar_select 0, %s5, %s3
  // Predicated region
  $region2: #{main_forward.172} parent=0 // pred_check
    _
  $region3: #{main_forward.172} parent=0 // pred_check_branch
    %8 = sbr.rel (0) target = $region5
  $region4: #{main_forward.172} parent=0 // pred_region
    _
  $region5: #{main_forward.172} parent=0 // pred_fallthru
    _
  // Predicated region
  $region6: #{main_forward.172} parent=0 // pred_check
    _
  $region7: #{main_forward.172} parent=0 // pred_check_branch
    %10 = sbr.rel (0) target = $region9
  $region8: #{main_forward.172} parent=0 // pred_region
    _
  $region9: #{main_forward.172} parent=0 // pred_fallthru
    _
  %v12 = vld [vmem:[%s0] sm:$0x3]
  %v13 = vld [vmem:[%s1] sm:$0xf]
  %vm14 = vcmask 64512
  %v16 = vsel %vm14, %v12, 0
  %vm18 = vcmask 1043456
  %v20 = vsel %vm18, %v13, 0
  %22 = vmatprep.subr.bf16.mxu0 0
  %23 = vmatpush1.bf16.msra.mxu0 0
  %24 = vmatprep.subr.bf16.mxu0 0
  %25 = vmatpush1.bf16.msra.mxu0 0
  %26 = vmatprep.subr.bf16.mxu0 0
  %27 = vmatpush1.bf16.msra.mxu0 0
  %28 = vmatprep.subr.bf16.mxu0 0
  %29 = vmatpush1.bf16.msra.mxu0 0
  %30 = vmatprep.subr.bf16.mxu0 0
  %31 = vmatpush1.bf16.msra.mxu0 0
  %32 = vmatprep.subr.bf16.mxu0 0
  %33 = vmatpush1.bf16.msra.mxu0 0
  %34 = vmatprep.subr.bf16.mxu0 0
  %35 = vmatpush1.bf16.msra.mxu0 0
  %36 = vmatprep.subr.bf16.mxu0 0
  %37 = vmatpush1.bf16.msra.mxu0 %v20
  %38 = vmatprep.subr.bf16.mxu0 0
  %39 = vmatpush2.bf16.msra.mxu0 0
  %40 = vmatprep.subr.bf16.mxu0 0
  %41 = vmatpush2.bf16.msra.mxu0 0
  %42 = vmatprep.subr.bf16.mxu0 0
  %43 = vmatpush2.bf16.msra.mxu0 0
  %44 = vmatprep.subr.bf16.mxu0 0
  %45 = vmatpush2.bf16.msra.mxu0 0
  %46 = vmatprep.subr.bf16.mxu0 0
  %47 = vmatpush2.bf16.msra.mxu0 0
  %48 = vmatprep.subr.bf16.mxu0 0
  %49 = vmatpush2.bf16.msra.mxu0 0
  %50 = vmatprep.subr.bf16.mxu0 0
  %51 = vmatpush2.bf16.msra.mxu0 0
  %52 = vmatprep.subr.bf16.mxu0 0
  %53 = vmatpush2.bf16.msra.mxu0 0
  %54 = vmatprep.mubr.bf16.mxu0 0
  %55 = vmatmul.mubr.bf16.gmra.mxu0 %v16
  %v56 = vpop.f32.mrf.mxu0
  %v57 = vadd.f32 0.0, %v56
  %v58 = vpop.f32.mrf.mxu0
  %v59 = vpop.f32.mrf.mxu0
  %v60 = vpop.f32.mrf.mxu0
  %61 = vdwg.mxu0
  %62 = vst [vmem:[%s2] sm:$0xf] %v57
  // Predicated region
  $region10: #{main_forward.172} parent=0 // pred_check
    _
  $region11: #{main_forward.172} parent=0 // pred_check_branch
    %64 = sbr.rel (0) target = $region13
  $region12: #{main_forward.172} parent=0 // pred_region
    _
  $region13: #{main_forward.172} parent=0 // pred_fallthru
    _
  // Predicated region
  $region14: #{main_forward.172} parent=0 // pred_check
    _
  $region15: #{main_forward.172} parent=0 // pred_check_branch
    %66 = sbr.rel (0) target = $region17
  $region16: #{main_forward.172} parent=0 // pred_region
    _
  $region17: #{main_forward.172} parent=0 // pred_fallthru
    _

// kernel: main_forward.206
$region0: #{main_forward.206}
  #allocation0 [shape = 'u32[]', space=smem, size = 0x4, offset = 0x4, fixed_abs, tag = 'smem constant byte address 0x4 - core index']
  #allocation1 [shape = 'u32[144,128]{1,0:T(1,128)}', space=vmem, size = 0x12000, scoped, tag = 'internal scratch']
  %s0 = inlined_call_operand.vmem [shape: bf16[1,36], index: 0, kind: input, shape index: {}]
  %s1 = inlined_call_operand.vmem [shape: bf16[36,512], index: 1, kind: input, shape index: {}]
  %s2 = inlined_call_operand.vmem [shape: f32[1,512], index: 2, kind: output, shape index: {}]
  %s3 = sld [smem:[#allocation0]]
  $region79: #{main_forward.206} parent=0
    _
  %s5 = ssub.s32 1, %s3
  %s6 = scalar_select 0, %s5, %s3
  $region1: #{main_forward.206} parent=0
    #allocation2 [shape = 'u8[40960]{0}', space=vmem, size = 0xa000, scoped, tag = 'input window, operand 1']
    loop: start=0, step=1, limit=4
    $region2: #{main_forward.206} parent=1 // loop_pre_header
      _
    $region3: #{main_forward.206} parent=1 // loop_header
      %s8 = sphi 0, %s12
      %p9 = scmp.ge.s32.totalorder %s8, 4
      %s16 = sphi 0, %s16
      %s18 = sphi 0, %s16
      %s19 = sphi 0, %s18
      %s33 = sphi 0, %s19
      %s39 = sphi 0, %s41
      %s42 = sphi 0, %s39
      %s43 = sphi 0, %s42
      %s59 = sphi 0, %s43
      %s65 = sphi 0, %s67
      %s68 = sphi 0, %s65
      %s69 = sphi 0, %s68
      %s85 = sphi 0, %s69
    $region4: #{main_forward.206} parent=1 // loop_header_branch
      %11 = sbr.rel (%p9) target = $region8
    $region5: #{main_forward.206} parent=1 // loop_body
      %s13 = ssub.s32 %s8, 1
      %s14 = ssub.s32 %s8, 2
      %s15 = sadd.s32 %s8, 1
      %s17 = sadd.s32 %s16, 1
      %p20 = scmp.eq.s32.totalorder %s8, 1
      %p21 = scmp.ne.s32.totalorder %s16, %s18
      %p22 = scmp.eq.s32.totalorder %s8, 0
      %p23 = por %p21, %p22
      %p24 = scmp.ne.s32.totalorder %s16, %s18
      %p25 = scmp.eq.s32.totalorder %s13, 1
      %p26 = por %p24, %p25
      %p27 = scmp.ne.s32.totalorder %s18, %s19
      %p28 = scmp.eq.s32.totalorder %s13, 0
      %p29 = por %p27, %p28
      %p30 = scmp.ne.s32.totalorder %s18, %s19
      %p31 = scmp.eq.s32.totalorder %s14, 1
      %p32 = por %p30, %p31
      %p34 = scmp.ne.s32.totalorder %s19, %s33
      %p35 = scmp.eq.s32.totalorder %s14, 0
      %p36 = por %p34, %p35
      %s37 = ssub.s32 %s8, %s15
      %p38 = scmp.eq.s32.totalorder %s37, 0
      %s40 = sadd.s32 %s39, 1
      %s41 = scalar_select %p38, %s39, %s40
      %p44 = pneg %p38
      %p45 = scmp.eq.s32.totalorder %s8, 1
      %p46 = por %p44, %p45
      %p47 = scmp.ne.s32.totalorder %s39, %s42
      %p48 = scmp.eq.s32.totalorder %s8, 0
      %p49 = por %p47, %p48
      %p50 = scmp.ne.s32.totalorder %s39, %s42
      %p51 = scmp.eq.s32.totalorder %s13, 1
      %p52 = por %p50, %p51
      %p53 = scmp.ne.s32.totalorder %s42, %s43
      %p54 = scmp.eq.s32.totalorder %s13, 0
      %p55 = por %p53, %p54
      %p56 = scmp.ne.s32.totalorder %s42, %s43
      %p57 = scmp.eq.s32.totalorder %s14, 1
      %p58 = por %p56, %p57
      %p60 = scmp.ne.s32.totalorder %s43, %s59
      %p61 = scmp.eq.s32.totalorder %s14, 0
      %p62 = por %p60, %p61
      %s63 = ssub.s32 %s8, %s15
      %p64 = scmp.eq.s32.totalorder %s63, 0
      %s66 = sadd.s32 %s65, 1
      %s67 = scalar_select %p64, %s65, %s66
      %p70 = pneg %p64
      %p71 = scmp.eq.s32.totalorder %s8, 1
      %p72 = por %p70, %p71
      %p73 = scmp.ne.s32.totalorder %s65, %s68
      %p74 = scmp.eq.s32.totalorder %s8, 0
      %p75 = por %p73, %p74
      %p76 = scmp.ne.s32.totalorder %s65, %s68
      %p77 = scmp.eq.s32.totalorder %s13, 1
      %p78 = por %p76, %p77
      %p79 = scmp.ne.s32.totalorder %s68, %s69
      %p80 = scmp.eq.s32.totalorder %s13, 0
      %p81 = por %p79, %p80
      %p82 = scmp.ne.s32.totalorder %s68, %s69
      %p83 = scmp.eq.s32.totalorder %s14, 1
      %p84 = por %p82, %p83
      %p86 = scmp.ne.s32.totalorder %s69, %s85
      %p87 = scmp.eq.s32.totalorder %s14, 0
      %p88 = por %p86, %p87
      %p89 = scmp.le.s32.totalorder 1, %s8
      %p90 = scmp.lt.s32.totalorder %s8, 3
      %p91 = pnand %p89, %p90
      %p92 = pneg %p91
      // Predicated region
      $region9: #{main_forward.206} parent=5 // pred_check
        _
      $region10: #{main_forward.206} parent=5 // pred_check_branch
        %94 = sbr.rel (%p91) target = $region12
      $region11: #{main_forward.206} parent=5 // pred_region
        %s95 = ssub.s32 %s8, 1
        // Predicated region
        $region13: #{main_forward.206} parent=11 // pred_check
          %p96 = pneg %p29
        $region14: #{main_forward.206} parent=11 // pred_check_branch
          %98 = sbr.rel (%p96) target = $region16
        $region15: #{main_forward.206} parent=11 // pred_region
          _
        $region16: #{main_forward.206} parent=11 // pred_fallthru
          _
      $region12: #{main_forward.206} parent=5 // pred_fallthru
        _
      %p99 = scmp.lt.s32.totalorder %s8, 2
      // Predicated region
      $region17: #{main_forward.206} parent=5 // pred_check
        %p100 = pneg %p99
      $region18: #{main_forward.206} parent=5 // pred_check_branch
        %102 = sbr.rel (%p100) target = $region20
      $region19: #{main_forward.206} parent=5 // pred_region
        // Predicated region
        $region21: #{main_forward.206} parent=19 // pred_check
          %p103 = pneg %p49
        $region22: #{main_forward.206} parent=19 // pred_check_branch
          %105 = sbr.rel (%p103) target = $region24
        $region23: #{main_forward.206} parent=19 // pred_region
          %s106 = sand.u32 %s39, 1
          %s107 = sand.u32 %s39, 1
          %s108 = smul.addr %s107, 40
          %s109 = scalar_lea.vmem [#allocation2], %s108
          %s110 = smul.u32 2, %s8
          %s111 = smul.addr %s110, 4
          %s112 = scalar_lea.vmem %s1, %s111
          // Predicated region
          $region25: #{main_forward.206} parent=23 // pred_check
            _
          $region26: #{main_forward.206} parent=23 // pred_check_branch
            %114 = sbr.rel (0) target = $region28
          $region27: #{main_forward.206} parent=23 // pred_region
            // Predicated region
            $region29: #{main_forward.206} parent=27 // pred_check
              _
            $region30: #{main_forward.206} parent=27 // pred_check_branch
              %116 = sbr.rel (0) target = $region32
            $region31: #{main_forward.206} parent=27 // pred_region
              // Predicated region
              $region44: #{main_forward.206} parent=31 // pred_check
                _
              $region45: #{main_forward.206} parent=31 // pred_check_branch
                %140 = sbr.rel (0) target = $region47
              $region46: #{main_forward.206} parent=31 // pred_region
                loop: start=0, step=1, limit=1
                $region48: #{main_forward.206} parent=46 // loop_pre_header
                  _
                $region49: #{main_forward.206} parent=46 // loop_header
                  %s142 = sphi 0, %s146
                  %p143 = scmp.ge.s32.totalorder %s142, 1
                  %s147 = sphi %s112, %s112
                  %s148 = sphi %s109, %s109
                $region50: #{main_forward.206} parent=46 // loop_header_branch
                  %145 = sbr.rel (%p143) target = $region54
                $region51: #{main_forward.206} parent=46 // loop_body
                  %v149 = vld [vmem:[%s147] sm:$0xff]
                  %150 = vst [vmem:[%s148] sm:$0xff] %v149
                  %v151 = vld [vmem:[%s147 + $0x10] sm:$0xff]
                  %152 = vst [vmem:[%s148 + $0x8] sm:$0xff] %v151
                  %v153 = vld [vmem:[%s147 + $0x20] sm:$0xff]
                  %154 = vst [vmem:[%s148 + $0x10] sm:$0xff] %v153
                  %v155 = vld [vmem:[%s147 + $0x30] sm:$0xff]
                  %156 = vst [vmem:[%s148 + $0x18] sm:$0xff] %v155
                  %v157 = vld [vmem:[%s147 + $0x40] sm:$0xff]
                  %158 = vst [vmem:[%s148 + $0x20] sm:$0xff] %v157
                $region52: #{main_forward.206} parent=46 // loop_footer
                  %s146 = sadd.s32 1, %s142
                $region53: #{main_forward.206} parent=46 // loop_footer_branch
                  %141 = sbr.rel target = $region49
                $region54: #{main_forward.206} parent=46 // loop_exit
                  _
              $region47: #{main_forward.206} parent=31 // pred_fallthru
                _
              // Predicated region
              $region55: #{main_forward.206} parent=31 // pred_check
                _
              $region56: #{main_forward.206} parent=31 // pred_check_branch
                %160 = sbr.rel target = $region58
              $region57: #{main_forward.206} parent=31 // pred_region
                _
              $region58: #{main_forward.206} parent=31 // pred_fallthru
                _
            $region32: #{main_forward.206} parent=27 // pred_fallthru
              _
            // Predicated region
            $region33: #{main_forward.206} parent=27 // pred_check
              _
            $region34: #{main_forward.206} parent=27 // pred_check_branch
              %118 = sbr.rel target = $region36
            $region35: #{main_forward.206} parent=27 // pred_region
              %s120 = ssub.s32 256, 1
              loop: start=0, step=1, limit=1
              $region37: #{main_forward.206} parent=35 // loop_pre_header
                _
              $region38: #{main_forward.206} parent=35 // loop_header
                %s122 = sphi 0, %s126
                %p123 = scmp.ge.s32.totalorder %s122, 1
                %s127 = sphi %s112, %s112
                %s128 = sphi %s109, %s109
              $region39: #{main_forward.206} parent=35 // loop_header_branch
                %125 = sbr.rel (%p123) target = $region43
              $region40: #{main_forward.206} parent=35 // loop_body
                %v129 = vld [vmem:[%s127] sm:%s120]
                %130 = vst [vmem:[%s128] sm:%s120] %v129
                %v131 = vld [vmem:[%s127 + $0x10] sm:%s120]
                %132 = vst [vmem:[%s128 + $0x8] sm:%s120] %v131
                %v133 = vld [vmem:[%s127 + $0x20] sm:%s120]
                %134 = vst [vmem:[%s128 + $0x10] sm:%s120] %v133
                %v135 = vld [vmem:[%s127 + $0x30] sm:%s120]
                %136 = vst [vmem:[%s128 + $0x18] sm:%s120] %v135
                %v137 = vld [vmem:[%s127 + $0x40] sm:%s120]
                %138 = vst [vmem:[%s128 + $0x20] sm:%s120] %v137
              $region41: #{main_forward.206} parent=35 // loop_footer
                %s126 = sadd.s32 1, %s122
              $region42: #{main_forward.206} parent=35 // loop_footer_branch
                %121 = sbr.rel target = $region38
              $region43: #{main_forward.206} parent=35 // loop_exit
                _
            $region36: #{main_forward.206} parent=27 // pred_fallthru
              _
          $region28: #{main_forward.206} parent=23 // pred_fallthru
            _
          %161 = vnop
        $region24: #{main_forward.206} parent=19 // pred_fallthru
          _
      $region20: #{main_forward.206} parent=5 // pred_fallthru
        _
      %p162 = scmp.le.s32.totalorder 1, %s8
      %p163 = scmp.lt.s32.totalorder %s8, 3
      %p164 = pnand %p162, %p163
      %p165 = pneg %p164
      // Predicated region
      $region59: #{main_forward.206} parent=5 // pred_check
        _
      $region60: #{main_forward.206} parent=5 // pred_check_branch
        %167 = sbr.rel (%p164) target = $region62
      $region61: #{main_forward.206} parent=5 // pred_region
        %s168 = ssub.s32 %s8, 1
        %s169 = sand.u32 %s42, 1
        %s170 = sand.u32 %s42, 1
        %s171 = smul.addr %s170, 40
        %s172 = scalar_lea.vmem [#allocation2], %s171
        // Predicated region
        $region63: #{main_forward.206} parent=61 // pred_check
          %p173 = pneg %p55
        $region64: #{main_forward.206} parent=61 // pred_check_branch
          %175 = sbr.rel (%p173) target = $region66
        $region65: #{main_forward.206} parent=61 // pred_region
          _
        $region66: #{main_forward.206} parent=61 // pred_fallthru
          _
        %p176 = pneg %p29
        %p177 = pneg %p26
        %s178 = sand.u32 %s42, 1
        %s179 = sand.u32 %s42, 1
        %s180 = smul.addr %s179, 40
        %s181 = scalar_lea.vmem [#allocation2], %s180
        %p182 = pneg %p55
        %p183 = pneg %p52
        %p184 = pneg %p81
        %p185 = pneg %p78
        %s186 = smul.u32 2, %s13
        %p187 = scmp.lt.s32.totalorder %s186, 3
        %s188 = scalar_select %p187, %s186, 3
        %s189 = scalar_lea.vmem %s2, %s188
        %s190 = smul.u32 2, %s13
        %s191 = smul.u32 2, %s13
        %p192 = scmp.lt.s32.totalorder %s191, 3
        %s193 = scalar_select %p192, %s191, 3
        %s194 = scalar_lea.vmem %s2, %s193
        %s195 = smul.u32 2, %s13
        %v197 = vld [vmem:[%s0] sm:$0x1]
        %v198 = vld [vmem:[%s172] sm:$0xff]
        %v199 = vld [vmem:[%s172 + $0x8] sm:$0xff]
        %v200 = vld [vmem:[%s172 + $0x10] sm:$0xff]
        %v201 = vld [vmem:[%s172 + $0x18] sm:$0xff]
        %v202 = vld [vmem:[%s172 + $0x20] sm:$0x33]
        %v208 = vunpack.c.l.b16 %v198
        %v209 = vunpack.c.h.b16 %v198
        %v210 = vunpack.c.l.b16 %v199
        %v211 = vunpack.c.h.b16 %v199
        %v212 = vunpack.c.l.b16 %v200
        %v213 = vunpack.c.h.b16 %v200
        %v214 = vunpack.c.l.b16 %v201
        %v215 = vunpack.c.h.b16 %v201
        %v216 = vunpack.c.l.b16 %v202
        %v217 = vunpack.c.h.b16 %v202
        %v218 = vpack.c.b16 %v210, %v208
        %v219 = vpack.c.b16 %v211, %v209
        %v220 = vpack.c.b16 %v214, %v212
        %v221 = vpack.c.b16 %v215, %v213
        %v222 = vpack.c.b16 %v216, %v216
        %v223 = vpack.c.b16 %v217, %v217
        %vm228 = vcmask 293888
        %v230 = vsel %vm228, %v197, 0
        %vm232 = vcmask 1041408
        %v234 = vsel %vm232, %v222, 0
        %v237 = vsel %vm232, %v223, 0
        %239 = vmatprep.subr.bf16.mxu0 0
        %240 = vmatpush1.bf16.msra.mxu0 0
        %241 = vmatprep.subr.bf16.mxu0 0
        %242 = vmatpush1.bf16.msra.mxu0 0
        %243 = vmatprep.subr.bf16.mxu0 0
        %244 = vmatpush1.bf16.msra.mxu0 0
        %245 = vmatprep.subr.bf16.mxu0 0
        %246 = vmatpush1.bf16.msra.mxu0 0
        %247 = vmatprep.subr.bf16.mxu0 0
        %248 = vmatpush1.bf16.msra.mxu0 0
        %249 = vmatprep.subr.bf16.mxu0 %v237
        %250 = vmatpush1.bf16.msra.mxu0 %v234
        %251 = vmatprep.subr.bf16.mxu0 %v221
        %252 = vmatpush1.bf16.msra.mxu0 %v220
        %253 = vmatprep.subr.bf16.mxu0 %v219
        %254 = vmatpush1.bf16.msra.mxu0 %v218
        %255 = vmatprep.subr.bf16.mxu0 0
        %256 = vmatpush2.bf16.msra.mxu0 0
        %257 = vmatprep.subr.bf16.mxu0 0
        %258 = vmatpush2.bf16.msra.mxu0 0
        %259 = vmatprep.subr.bf16.mxu0 0
        %260 = vmatpush2.bf16.msra.mxu0 0
        %261 = vmatprep.subr.bf16.mxu0 0
        %262 = vmatpush2.bf16.msra.mxu0 0
        %263 = vmatprep.subr.bf16.mxu0 0
        %264 = vmatpush2.bf16.msra.mxu0 0
        %265 = vmatprep.subr.bf16.mxu0 0
        %266 = vmatpush2.bf16.msra.mxu0 0
        %267 = vmatprep.subr.bf16.mxu0 0
        %268 = vmatpush2.bf16.msra.mxu0 0
        %269 = vmatprep.subr.bf16.mxu0 0
        %270 = vmatpush2.bf16.msra.mxu0 0
        %271 = vmatprep.mubr.bf16.mxu0 0
        %272 = vmatmul.mubr.bf16.gmra.mxu0 %v230
        %v273 = vpop.f32.mrf.mxu0
        %v274 = vadd.f32 0.0, %v273
        %v275 = vpop.f32.mrf.mxu0
        %v276 = vadd.f32 0.0, %v275
        %v277 = vpop.f32.mrf.mxu0
        %v278 = vpop.f32.mrf.mxu0
        %279 = vdwg.mxu0
        %v282 = vcombine.low %v274, %v276
        %v284 = vunpack.c.l.s4 1966171168
        %v285 = vunpack.c.0.s8 %v284
        %v286 = vlaneseq
        %v287 = vshrl.u32 %v286, 7
        %v288 = vsub.s32 %v285, %v287
        %v289 = vrot.slane %v282, %v288
        %v291 = vunpack.c.l.s4 1966171168
        %v292 = vunpack.c.0.s8 %v291
        %v293 = vlaneseq
        %v294 = vshrl.u32 %v293, 7
        %v295 = vsub.s32 %v292, %v294
        %v296 = vrot.slane %v289, %v295
        %v298 = vlaneseq
        %vm299 = vcmp.ge.s32.totalorder %v298, 0
        %vm300 = vcmp.lt.s32.totalorder %v298, 256
        %vm301 = vmand %vm299, %vm300
        %302 = vst.msk [vmem:[%s194] sm:$0x3] %vm301, %v296
        %s303 = smul.u32 2, %s13
        %p304 = scmp.lt.s32.totalorder %s303, 3
        %s305 = scalar_select %p304, %s303, 3
        %s306 = scalar_lea.vmem %s2, %s305
        // Predicated region
        $region67: #{main_forward.206} parent=61 // pred_check
          %p307 = pneg %p78
        $region68: #{main_forward.206} parent=61 // pred_check_branch
          %309 = sbr.rel (%p307) target = $region70
        $region69: #{main_forward.206} parent=61 // pred_region
          %s310 = smul.u32 2, %s13
        $region70: #{main_forward.206} parent=61 // pred_fallthru
          _
      $region62: #{main_forward.206} parent=5 // pred_fallthru
        _
      %p311 = scmp.le.s32.totalorder 2, %s8
      // Predicated region
      $region71: #{main_forward.206} parent=5 // pred_check
        %p312 = pneg %p311
      $region72: #{main_forward.206} parent=5 // pred_check_branch
        %314 = sbr.rel (%p312) target = $region74
      $region73: #{main_forward.206} parent=5 // pred_region
        %s315 = ssub.s32 %s8, 2
        // Predicated region
        $region75: #{main_forward.206} parent=73 // pred_check
          %p316 = pneg %p84
        $region76: #{main_forward.206} parent=73 // pred_check_branch
          %318 = sbr.rel (%p316) target = $region78
        $region77: #{main_forward.206} parent=73 // pred_region
          %s319 = smul.u32 2, %s14
          %p320 = scmp.lt.s32.totalorder %s319, 3
          %s321 = scalar_select %p320, %s319, 3
          %s322 = scalar_lea.vmem %s2, %s321
        $region78: #{main_forward.206} parent=73 // pred_fallthru
          _
      $region74: #{main_forward.206} parent=5 // pred_fallthru
        _
    $region6: #{main_forward.206} parent=1 // loop_footer
      %s12 = sadd.s32 1, %s8
    $region7: #{main_forward.206} parent=1 // loop_footer_branch
      %7 = sbr.rel target = $region3
    $region8: #{main_forward.206} parent=1 // loop_exit
      _

// kernel: main_forward.207
$region0: #{main_forward.207}
  #allocation0 [shape = 'u32[]', space=smem, size = 0x4, offset = 0x4, fixed_abs, tag = 'smem constant byte address 0x4 - core index']
  #allocation1 [shape = 'u32[144,128]{1,0:T(1,128)}', space=vmem, size = 0x12000, scoped, tag = 'internal scratch']
  %s0 = inlined_call_operand.vmem [shape: bf16[3,36], index: 0, kind: input, shape index: {}]
  %s1 = inlined_call_operand.vmem [shape: bf16[36,512], index: 1, kind: input, shape index: {}]
  %s2 = inlined_call_operand.vmem [shape: f32[3,512], index: 2, kind: output, shape index: {}]
  %s3 = sld [smem:[#allocation0]]
  $region79: #{main_forward.207} parent=0
    _
  %s5 = ssub.s32 1, %s3
  %s6 = scalar_select 0, %s5, %s3
  $region1: #{main_forward.207} parent=0
    #allocation2 [shape = 'u8[40960]{0}', space=vmem, size = 0xa000, scoped, tag = 'input window, operand 1']
    loop: start=0, step=1, limit=4
    $region2: #{main_forward.207} parent=1 // loop_pre_header
      _
    $region3: #{main_forward.207} parent=1 // loop_header
      %s8 = sphi 0, %s12
      %p9 = scmp.ge.s32.totalorder %s8, 4
      %s16 = sphi 0, %s16
      %s18 = sphi 0, %s16
      %s19 = sphi 0, %s18
      %s33 = sphi 0, %s19
      %s39 = sphi 0, %s41
      %s42 = sphi 0, %s39
      %s43 = sphi 0, %s42
      %s59 = sphi 0, %s43
      %s65 = sphi 0, %s67
      %s68 = sphi 0, %s65
      %s69 = sphi 0, %s68
      %s85 = sphi 0, %s69
    $region4: #{main_forward.207} parent=1 // loop_header_branch
      %11 = sbr.rel (%p9) target = $region8
    $region5: #{main_forward.207} parent=1 // loop_body
      %s13 = ssub.s32 %s8, 1
      %s14 = ssub.s32 %s8, 2
      %s15 = sadd.s32 %s8, 1
      %s17 = sadd.s32 %s16, 1
      %p20 = scmp.eq.s32.totalorder %s8, 1
      %p21 = scmp.ne.s32.totalorder %s16, %s18
      %p22 = scmp.eq.s32.totalorder %s8, 0
      %p23 = por %p21, %p22
      %p24 = scmp.ne.s32.totalorder %s16, %s18
      %p25 = scmp.eq.s32.totalorder %s13, 1
      %p26 = por %p24, %p25
      %p27 = scmp.ne.s32.totalorder %s18, %s19
      %p28 = scmp.eq.s32.totalorder %s13, 0
      %p29 = por %p27, %p28
      %p30 = scmp.ne.s32.totalorder %s18, %s19
      %p31 = scmp.eq.s32.totalorder %s14, 1
      %p32 = por %p30, %p31
      %p34 = scmp.ne.s32.totalorder %s19, %s33
      %p35 = scmp.eq.s32.totalorder %s14, 0
      %p36 = por %p34, %p35
      %s37 = ssub.s32 %s8, %s15
      %p38 = scmp.eq.s32.totalorder %s37, 0
      %s40 = sadd.s32 %s39, 1
      %s41 = scalar_select %p38, %s39, %s40
      %p44 = pneg %p38
      %p45 = scmp.eq.s32.totalorder %s8, 1
      %p46 = por %p44, %p45
      %p47 = scmp.ne.s32.totalorder %s39, %s42
      %p48 = scmp.eq.s32.totalorder %s8, 0
      %p49 = por %p47, %p48
      %p50 = scmp.ne.s32.totalorder %s39, %s42
      %p51 = scmp.eq.s32.totalorder %s13, 1
      %p52 = por %p50, %p51
      %p53 = scmp.ne.s32.totalorder %s42, %s43
      %p54 = scmp.eq.s32.totalorder %s13, 0
      %p55 = por %p53, %p54
      %p56 = scmp.ne.s32.totalorder %s42, %s43
      %p57 = scmp.eq.s32.totalorder %s14, 1
      %p58 = por %p56, %p57
      %p60 = scmp.ne.s32.totalorder %s43, %s59
      %p61 = scmp.eq.s32.totalorder %s14, 0
      %p62 = por %p60, %p61
      %s63 = ssub.s32 %s8, %s15
      %p64 = scmp.eq.s32.totalorder %s63, 0
      %s66 = sadd.s32 %s65, 1
      %s67 = scalar_select %p64, %s65, %s66
      %p70 = pneg %p64
      %p71 = scmp.eq.s32.totalorder %s8, 1
      %p72 = por %p70, %p71
      %p73 = scmp.ne.s32.totalorder %s65, %s68
      %p74 = scmp.eq.s32.totalorder %s8, 0
      %p75 = por %p73, %p74
      %p76 = scmp.ne.s32.totalorder %s65, %s68
      %p77 = scmp.eq.s32.totalorder %s13, 1
      %p78 = por %p76, %p77
      %p79 = scmp.ne.s32.totalorder %s68, %s69
      %p80 = scmp.eq.s32.totalorder %s13, 0
      %p81 = por %p79, %p80
      %p82 = scmp.ne.s32.totalorder %s68, %s69
      %p83 = scmp.eq.s32.totalorder %s14, 1
      %p84 = por %p82, %p83
      %p86 = scmp.ne.s32.totalorder %s69, %s85
      %p87 = scmp.eq.s32.totalorder %s14, 0
      %p88 = por %p86, %p87
      %p89 = scmp.le.s32.totalorder 1, %s8
      %p90 = scmp.lt.s32.totalorder %s8, 3
      %p91 = pnand %p89, %p90
      %p92 = pneg %p91
      // Predicated region
      $region9: #{main_forward.207} parent=5 // pred_check
        _
      $region10: #{main_forward.207} parent=5 // pred_check_branch
        %94 = sbr.rel (%p91) target = $region12
      $region11: #{main_forward.207} parent=5 // pred_region
        %s95 = ssub.s32 %s8, 1
        // Predicated region
        $region13: #{main_forward.207} parent=11 // pred_check
          %p96 = pneg %p29
        $region14: #{main_forward.207} parent=11 // pred_check_branch
          %98 = sbr.rel (%p96) target = $region16
        $region15: #{main_forward.207} parent=11 // pred_region
          _
        $region16: #{main_forward.207} parent=11 // pred_fallthru
          _
      $region12: #{main_forward.207} parent=5 // pred_fallthru
        _
      %p99 = scmp.lt.s32.totalorder %s8, 2
      // Predicated region
      $region17: #{main_forward.207} parent=5 // pred_check
        %p100 = pneg %p99
      $region18: #{main_forward.207} parent=5 // pred_check_branch
        %102 = sbr.rel (%p100) target = $region20
      $region19: #{main_forward.207} parent=5 // pred_region
        // Predicated region
        $region21: #{main_forward.207} parent=19 // pred_check
          %p103 = pneg %p49
        $region22: #{main_forward.207} parent=19 // pred_check_branch
          %105 = sbr.rel (%p103) target = $region24
        $region23: #{main_forward.207} parent=19 // pred_region
          %s106 = sand.u32 %s39, 1
          %s107 = sand.u32 %s39, 1
          %s108 = smul.addr %s107, 40
          %s109 = scalar_lea.vmem [#allocation2], %s108
          %s110 = smul.u32 2, %s8
          %s111 = smul.addr %s110, 4
          %s112 = scalar_lea.vmem %s1, %s111
          // Predicated region
          $region25: #{main_forward.207} parent=23 // pred_check
            _
          $region26: #{main_forward.207} parent=23 // pred_check_branch
            %114 = sbr.rel (0) target = $region28
          $region27: #{main_forward.207} parent=23 // pred_region
            // Predicated region
            $region29: #{main_forward.207} parent=27 // pred_check
              _
            $region30: #{main_forward.207} parent=27 // pred_check_branch
              %116 = sbr.rel (0) target = $region32
            $region31: #{main_forward.207} parent=27 // pred_region
              // Predicated region
              $region44: #{main_forward.207} parent=31 // pred_check
                _
              $region45: #{main_forward.207} parent=31 // pred_check_branch
                %140 = sbr.rel (0) target = $region47
              $region46: #{main_forward.207} parent=31 // pred_region
                loop: start=0, step=1, limit=1
                $region48: #{main_forward.207} parent=46 // loop_pre_header
                  _
                $region49: #{main_forward.207} parent=46 // loop_header
                  %s142 = sphi 0, %s146
                  %p143 = scmp.ge.s32.totalorder %s142, 1
                  %s147 = sphi %s112, %s112
                  %s148 = sphi %s109, %s109
                $region50: #{main_forward.207} parent=46 // loop_header_branch
                  %145 = sbr.rel (%p143) target = $region54
                $region51: #{main_forward.207} parent=46 // loop_body
                  %v149 = vld [vmem:[%s147] sm:$0xff]
                  %150 = vst [vmem:[%s148] sm:$0xff] %v149
                  %v151 = vld [vmem:[%s147 + $0x10] sm:$0xff]
                  %152 = vst [vmem:[%s148 + $0x8] sm:$0xff] %v151
                  %v153 = vld [vmem:[%s147 + $0x20] sm:$0xff]
                  %154 = vst [vmem:[%s148 + $0x10] sm:$0xff] %v153
                  %v155 = vld [vmem:[%s147 + $0x30] sm:$0xff]
                  %156 = vst [vmem:[%s148 + $0x18] sm:$0xff] %v155
                  %v157 = vld [vmem:[%s147 + $0x40] sm:$0xff]
                  %158 = vst [vmem:[%s148 + $0x20] sm:$0xff] %v157
                $region52: #{main_forward.207} parent=46 // loop_footer
                  %s146 = sadd.s32 1, %s142
                $region53: #{main_forward.207} parent=46 // loop_footer_branch
                  %141 = sbr.rel target = $region49
                $region54: #{main_forward.207} parent=46 // loop_exit
                  _
              $region47: #{main_forward.207} parent=31 // pred_fallthru
                _
              // Predicated region
              $region55: #{main_forward.207} parent=31 // pred_check
                _
              $region56: #{main_forward.207} parent=31 // pred_check_branch
                %160 = sbr.rel target = $region58
              $region57: #{main_forward.207} parent=31 // pred_region
                _
              $region58: #{main_forward.207} parent=31 // pred_fallthru
                _
            $region32: #{main_forward.207} parent=27 // pred_fallthru
              _
            // Predicated region
            $region33: #{main_forward.207} parent=27 // pred_check
              _
            $region34: #{main_forward.207} parent=27 // pred_check_branch
              %118 = sbr.rel target = $region36
            $region35: #{main_forward.207} parent=27 // pred_region
              %s120 = ssub.s32 256, 1
              loop: start=0, step=1, limit=1
              $region37: #{main_forward.207} parent=35 // loop_pre_header
                _
              $region38: #{main_forward.207} parent=35 // loop_header
                %s122 = sphi 0, %s126
                %p123 = scmp.ge.s32.totalorder %s122, 1
                %s127 = sphi %s112, %s112
                %s128 = sphi %s109, %s109
              $region39: #{main_forward.207} parent=35 // loop_header_branch
                %125 = sbr.rel (%p123) target = $region43
              $region40: #{main_forward.207} parent=35 // loop_body
                %v129 = vld [vmem:[%s127] sm:%s120]
                %130 = vst [vmem:[%s128] sm:%s120] %v129
                %v131 = vld [vmem:[%s127 + $0x10] sm:%s120]
                %132 = vst [vmem:[%s128 + $0x8] sm:%s120] %v131
                %v133 = vld [vmem:[%s127 + $0x20] sm:%s120]
                %134 = vst [vmem:[%s128 + $0x10] sm:%s120] %v133
                %v135 = vld [vmem:[%s127 + $0x30] sm:%s120]
                %136 = vst [vmem:[%s128 + $0x18] sm:%s120] %v135
                %v137 = vld [vmem:[%s127 + $0x40] sm:%s120]
                %138 = vst [vmem:[%s128 + $0x20] sm:%s120] %v137
              $region41: #{main_forward.207} parent=35 // loop_footer
                %s126 = sadd.s32 1, %s122
              $region42: #{main_forward.207} parent=35 // loop_footer_branch
                %121 = sbr.rel target = $region38
              $region43: #{main_forward.207} parent=35 // loop_exit
                _
            $region36: #{main_forward.207} parent=27 // pred_fallthru
              _
          $region28: #{main_forward.207} parent=23 // pred_fallthru
            _
          %161 = vnop
        $region24: #{main_forward.207} parent=19 // pred_fallthru
          _
      $region20: #{main_forward.207} parent=5 // pred_fallthru
        _
      %p162 = scmp.le.s32.totalorder 1, %s8
      %p163 = scmp.lt.s32.totalorder %s8, 3
      %p164 = pnand %p162, %p163
      %p165 = pneg %p164
      // Predicated region
      $region59: #{main_forward.207} parent=5 // pred_check
        _
      $region60: #{main_forward.207} parent=5 // pred_check_branch
        %167 = sbr.rel (%p164) target = $region62
      $region61: #{main_forward.207} parent=5 // pred_region
        %s168 = ssub.s32 %s8, 1
        %s169 = sand.u32 %s42, 1
        %s170 = sand.u32 %s42, 1
        %s171 = smul.addr %s170, 40
        %s172 = scalar_lea.vmem [#allocation2], %s171
        // Predicated region
        $region63: #{main_forward.207} parent=61 // pred_check
          %p173 = pneg %p55
        $region64: #{main_forward.207} parent=61 // pred_check_branch
          %175 = sbr.rel (%p173) target = $region66
        $region65: #{main_forward.207} parent=61 // pred_region
          _
        $region66: #{main_forward.207} parent=61 // pred_fallthru
          _
        %p176 = pneg %p29
        %p177 = pneg %p26
        %s178 = sand.u32 %s42, 1
        %s179 = sand.u32 %s42, 1
        %s180 = smul.addr %s179, 40
        %s181 = scalar_lea.vmem [#allocation2], %s180
        %p182 = pneg %p55
        %p183 = pneg %p52
        %p184 = pneg %p81
        %p185 = pneg %p78
        %s186 = smul.u32 2, %s13
        %p187 = scmp.lt.s32.totalorder %s186, 3
        %s188 = scalar_select %p187, %s186, 3
        %s189 = smul.addr %s188, 4
        %s190 = scalar_lea.vmem %s2, %s189
        %s191 = smul.u32 2, %s13
        %s192 = smul.u32 2, %s13
        %p193 = scmp.lt.s32.totalorder %s192, 3
        %s194 = scalar_select %p193, %s192, 3
        %s195 = smul.addr %s194, 4
        %s196 = scalar_lea.vmem %s2, %s195
        %s197 = smul.u32 2, %s13
        %v199 = vld [vmem:[%s0] sm:$0x3]
        %v200 = vld [vmem:[%s172] sm:$0xff]
        %v201 = vld [vmem:[%s172 + $0x8] sm:$0xff]
        %v202 = vld [vmem:[%s172 + $0x10] sm:$0xff]
        %v203 = vld [vmem:[%s172 + $0x18] sm:$0xff]
        %v204 = vld [vmem:[%s172 + $0x20] sm:$0x33]
        %v210 = vunpack.c.l.b16 %v200
        %v211 = vunpack.c.h.b16 %v200
        %v212 = vunpack.c.l.b16 %v201
        %v213 = vunpack.c.h.b16 %v201
        %v214 = vunpack.c.l.b16 %v202
        %v215 = vunpack.c.h.b16 %v202
        %v216 = vunpack.c.l.b16 %v203
        %v217 = vunpack.c.h.b16 %v203
        %v218 = vunpack.c.l.b16 %v204
        %v219 = vunpack.c.h.b16 %v204
        %v220 = vpack.c.b16 %v212, %v210
        %v221 = vpack.c.b16 %v213, %v211
        %v222 = vpack.c.b16 %v216, %v214
        %v223 = vpack.c.b16 %v217, %v215
        %v224 = vpack.c.b16 %v218, %v218
        %v225 = vpack.c.b16 %v219, %v219
        %vm230 = vcmask 293888
        %v232 = vsel %vm230, %v199, 0
        %vm234 = vcmask 1041408
        %v236 = vsel %vm234, %v224, 0
        %v239 = vsel %vm234, %v225, 0
        %241 = vmatprep.subr.bf16.mxu0 0
        %242 = vmatpush1.bf16.msra.mxu0 0
        %243 = vmatprep.subr.bf16.mxu0 0
        %244 = vmatpush1.bf16.msra.mxu0 0
        %245 = vmatprep.subr.bf16.mxu0 0
        %246 = vmatpush1.bf16.msra.mxu0 0
        %247 = vmatprep.subr.bf16.mxu0 0
        %248 = vmatpush1.bf16.msra.mxu0 0
        %249 = vmatprep.subr.bf16.mxu0 0
        %250 = vmatpush1.bf16.msra.mxu0 0
        %251 = vmatprep.subr.bf16.mxu0 %v239
        %252 = vmatpush1.bf16.msra.mxu0 %v236
        %253 = vmatprep.subr.bf16.mxu0 %v223
        %254 = vmatpush1.bf16.msra.mxu0 %v222
        %255 = vmatprep.subr.bf16.mxu0 %v221
        %256 = vmatpush1.bf16.msra.mxu0 %v220
        %257 = vmatprep.subr.bf16.mxu0 0
        %258 = vmatpush2.bf16.msra.mxu0 0
        %259 = vmatprep.subr.bf16.mxu0 0
        %260 = vmatpush2.bf16.msra.mxu0 0
        %261 = vmatprep.subr.bf16.mxu0 0
        %262 = vmatpush2.bf16.msra.mxu0 0
        %263 = vmatprep.subr.bf16.mxu0 0
        %264 = vmatpush2.bf16.msra.mxu0 0
        %265 = vmatprep.subr.bf16.mxu0 0
        %266 = vmatpush2.bf16.msra.mxu0 0
        %267 = vmatprep.subr.bf16.mxu0 0
        %268 = vmatpush2.bf16.msra.mxu0 0
        %269 = vmatprep.subr.bf16.mxu0 0
        %270 = vmatpush2.bf16.msra.mxu0 0
        %271 = vmatprep.subr.bf16.mxu0 0
        %272 = vmatpush2.bf16.msra.mxu0 0
        %273 = vmatprep.mubr.bf16.mxu0 0
        %274 = vmatmul.mubr.bf16.gmra.mxu0 %v232
        %v275 = vpop.f32.mrf.mxu0
        %v276 = vadd.f32 0.0, %v275
        %v277 = vpop.f32.mrf.mxu0
        %v278 = vadd.f32 0.0, %v277
        %v279 = vpop.f32.mrf.mxu0
        %v280 = vpop.f32.mrf.mxu0
        %281 = vdwg.mxu0
        %v284 = vcombine.low %v276, %v278
        %286 = vst [vmem:[%s196] sm:$0x77] %v284
        %s287 = smul.u32 2, %s13
        %p288 = scmp.lt.s32.totalorder %s287, 3
        %s289 = scalar_select %p288, %s287, 3
        %s290 = smul.addr %s289, 4
        %s291 = scalar_lea.vmem %s2, %s290
        // Predicated region
        $region67: #{main_forward.207} parent=61 // pred_check
          %p292 = pneg %p78
        $region68: #{main_forward.207} parent=61 // pred_check_branch
          %294 = sbr.rel (%p292) target = $region70
        $region69: #{main_forward.207} parent=61 // pred_region
          %s295 = smul.u32 2, %s13
        $region70: #{main_forward.207} parent=61 // pred_fallthru
          _
      $region62: #{main_forward.207} parent=5 // pred_fallthru
        _
      %p296 = scmp.le.s32.totalorder 2, %s8
      // Predicated region
      $region71: #{main_forward.207} parent=5 // pred_check
        %p297 = pneg %p296
      $region72: #{main_forward.207} parent=5 // pred_check_branch
        %299 = sbr.rel (%p297) target = $region74
      $region73: #{main_forward.207} parent=5 // pred_region
        %s300 = ssub.s32 %s8, 2
        // Predicated region
        $region75: #{main_forward.207} parent=73 // pred_check
          %p301 = pneg %p84
        $region76: #{main_forward.207} parent=73 // pred_check_branch
          %303 = sbr.rel (%p301) target = $region78
        $region77: #{main_forward.207} parent=73 // pred_region
          %s304 = smul.u32 2, %s14
          %p305 = scmp.lt.s32.totalorder %s304, 3
          %s306 = scalar_select %p305, %s304, 3
          %s307 = smul.addr %s306, 4
          %s308 = scalar_lea.vmem %s2, %s307
        $region78: #{main_forward.207} parent=73 // pred_fallthru
          _
      $region74: #{main_forward.207} parent=5 // pred_fallthru
        _
    $region6: #{main_forward.207} parent=1 // loop_footer
      %s12 = sadd.s32 1, %s8
    $region7: #{main_forward.207} parent=1 // loop_footer_branch
      %7 = sbr.rel target = $region3
    $region8: #{main_forward.207} parent=1 // loop_exit
      _

</llo_original>
